<compile_context>
chip_gen: v5e
topology: v5e:2x2
jax: 0.10.0
libtpu: 0.0.40
codegen_flags: <defaults>
</compile_context>

<pallas_src>
import functools

import jax
import jax.numpy as jnp
from jax import lax
from jax.experimental import pallas as pl
from jax.experimental.pallas import tpu as pltpu

NEG_SLOPE = 0.2   # LeakyReLU(0.2)
BN_EPS = 1e-5     # PyTorch BatchNorm2d default eps


def _round_up(x, m):
    return ((x + m - 1) // m) * m


def _lrelu(v):
    # mul+max instead of cmp+select (review micro-opt)
    return jnp.maximum(v, NEG_SLOPE * v)


# =============================== Pallas kernels ===============================

def _conv_s2d_kernel(x_ref, w_ref, b_ref, *rest, toh, ow, cin4, chunk,
                     apply_act, emit_stats):
    """4x4 / stride-2 / pad-1 conv expressed as a GEMM on a space-to-depth input.

    x_ref : (1, Hs, Ws, cin4)  bf16  -- full s2d image of one batch element
    w_ref : (4*chunk, F)       bf16  -- pre-reordered / chunk-padded at init
    b_ref : (1, F)             f32
    o_ref : (1, toh*ow, F)           -- bf16 (fused LeakyReLU) or f32 (pre-BN)
    st_ref: (1, 1, 2, F) f32         -- per-tile channel sum / sum-of-squares
    p_ref : (toh*ow, 4*chunk)  bf16  -- VMEM scratch holding the patch matrix
    """
    if emit_stats:
        o_ref, st_ref, p_ref = rest
    else:
        (o_ref, p_ref), st_ref = rest, None

    row0 = pl.program_id(1) * toh          # first output row of this tile

    # When the per-position channel block is lane-padded, zero the scratch so
    # the padded lanes are 0 (their weight rows are 0, but uninitialized VMEM
    # could hold NaNs and NaN * 0 = NaN).
    if chunk != cin4:
        p_ref[...] = jnp.zeros(p_ref.shape, p_ref.dtype)

    # Assemble the patch matrix: output pixel (r, ow') needs the 4 s2d pixels
    # (row0 + r + di, ow' + dj), di, dj in {0, 1}.
    for r in range(toh):
        for k4, (di, dj) in enumerate(((0, 0), (0, 1), (1, 0), (1, 1))):
            piece = x_ref[0, pl.ds(row0 + r + di, 1), dj:dj + ow, :]   # (1,ow,cin4)
            p_ref[r * ow:(r + 1) * ow, k4 * chunk:k4 * chunk + cin4] = piece[0]

    acc = jnp.dot(p_ref[...], w_ref[...], preferred_element_type=jnp.float32)
    acc = acc + b_ref[...]
    if apply_act:
        acc = _lrelu(acc)
    o_ref[...] = acc[None].astype(o_ref.dtype)

    if emit_stats:
        st_ref[0, 0, 0:1, :] = jnp.sum(acc, axis=0, keepdims=True)
        st_ref[0, 0, 1:2, :] = jnp.sum(acc * acc, axis=0, keepdims=True)


def _affine_act_kernel(y_ref, s_ref, t_ref, o_ref):
    """Folded BatchNorm (per-channel affine) + LeakyReLU, f32 in -> bf16 out."""
    v = y_ref[...] * s_ref[...] + t_ref[...]
    o_ref[...] = _lrelu(v).astype(o_ref.dtype)


def _gemm_bias_kernel(a_ref, w_ref, b_ref, o_ref):
    """Plain GEMM + bias (final 4x4/stride-1/pad-0 conv on a 4x4 map)."""
    o_ref[...] = (jnp.dot(a_ref[...], w_ref[...],
                          preferred_element_type=jnp.float32)
                  + b_ref[...]).astype(o_ref.dtype)


# ============================== Pallas wrappers ===============================

def _pick_toh(oh, ow):
    """Largest output-row tile <= 8 that divides OH and keeps the block aligned."""
    for cand in (8, 4, 2, 1):
        if oh % cand == 0 and (cand == oh or (cand * ow) % 8 == 0):
            return cand
    return oh


def conv4x4_s2d(xs, wm, b2, *, oh, ow, cin, fout, out_dtype, apply_act,
                emit_stats):
    """xs: (N, OH+1, OW+1, 4*cin) bf16 s2d input.  Returns (N, OH*OW, F)[, stats]."""
    n, hs, ws, cin4 = xs.shape
    assert cin4 == 4 * cin and hs == oh + 1 and ws == ow + 1
    chunk = _round_up(cin4, 128)
    kpad = 4 * chunk
    toh = _pick_toh(oh, ow)
    t = oh // toh
    m_tile = toh * ow

    out_shapes = [jax.ShapeDtypeStruct((n, oh * ow, fout), out_dtype)]
    out_specs = [pl.BlockSpec((1, m_tile, fout), lambda i, j: (i, j, 0))]
    if emit_stats:
        out_shapes.append(jax.ShapeDtypeStruct((n, t, 2, fout), jnp.float32))
        out_specs.append(pl.BlockSpec((1, 1, 2, fout), lambda i, j: (i, j, 0, 0)))

    kern = functools.partial(_conv_s2d_kernel, toh=toh, ow=ow, cin4=cin4,
                             chunk=chunk, apply_act=apply_act,
                             emit_stats=emit_stats)

    flops = 2 * n * oh * ow * (16 * cin) * fout
    bytes_accessed = (xs.size * 2 + wm.size * 2
                      + n * oh * ow * fout * jnp.dtype(out_dtype).itemsize)

    res = pl.pallas_call(
        kern,
        out_shape=tuple(out_shapes) if emit_stats else out_shapes[0],
        grid=(n, t),
        in_specs=[
            pl.BlockSpec((1, hs, ws, cin4), lambda i, j: (i, 0, 0, 0)),
            pl.BlockSpec((kpad, fout), lambda i, j: (0, 0)),
            pl.BlockSpec((1, fout), lambda i, j: (0, 0)),
        ],
        out_specs=tuple(out_specs) if emit_stats else out_specs[0],
        scratch_shapes=[pltpu.VMEM((m_tile, kpad), jnp.bfloat16)],
        compiler_params=pltpu.CompilerParams(
            dimension_semantics=("parallel", "parallel")),
        cost_estimate=pl.CostEstimate(flops=int(flops), transcendentals=0,
                                      bytes_accessed=int(bytes_accessed)),
    )(xs, wm, b2)
    return res


def affine_lrelu(y, scale, shift, out_dtype=jnp.bfloat16):
    """y: (N, M, F) f32; scale/shift: (1, F) f32.  Returns bf16 (N, M, F)."""
    n, m, f = y.shape
    return pl.pallas_call(
        _affine_act_kernel,
        out_shape=jax.ShapeDtypeStruct((n, m, f), out_dtype),
        grid=(n,),
        in_specs=[pl.BlockSpec((1, m, f), lambda i: (i, 0, 0)),
                  pl.BlockSpec((1, f), lambda i: (0, 0)),
                  pl.BlockSpec((1, f), lambda i: (0, 0))],
        out_specs=pl.BlockSpec((1, m, f), lambda i: (i, 0, 0)),
        compiler_params=pltpu.CompilerParams(dimension_semantics=("parallel",)),
    )(y, scale, shift)


def gemm_bias(a, wm, b2):
    """a: (M, K) bf16, wm: (K, F) bf16, b2: (1, F) f32 -> (M, F) f32."""
    m, k = a.shape
    f = wm.shape[1]
    return pl.pallas_call(
        _gemm_bias_kernel,
        out_shape=jax.ShapeDtypeStruct((m, f), jnp.float32),
        grid=(1,),
        in_specs=[pl.BlockSpec((m, k), lambda i: (0, 0)),
                  pl.BlockSpec((k, f), lambda i: (0, 0)),
                  pl.BlockSpec((1, f), lambda i: (0, 0))],
        out_specs=pl.BlockSpec((m, f), lambda i: (0, 0)),
    )(a, wm, b2)


# ================================ glue (XLA) ==================================

def _pad_s2d(x_nhwc):
    """pad=1 then space-to-depth by 2: (N,H,W,C) -> bf16 (N,H/2+1,W/2+1,4C).

    s2d channel layout: index (bi*2 + bj)*C + c holds x_pad[2r+bi, 2q+bj, c].
    XLA fuses the pad + reshape + transpose into a single pass.
    """
    n, h, w, c = x_nhwc.shape
    xp = jnp.pad(x_nhwc, ((0, 0), (1, 1), (1, 1), (0, 0)))
    hp, wp = h + 2, w + 2
    xs = xp.reshape(n, hp // 2, 2, wp // 2, 2, c)
    xs = xs.transpose(0, 1, 3, 2, 4, 5).reshape(n, hp // 2, wp // 2, 4 * c)
    return xs.astype(jnp.bfloat16)


# ============================= Encoder (DCGAN) ================================

def layer_config(num_channels, input_size):
    f = input_size
    # (c_in, c_out, kernel, stride, pad, leaky_after_conv, batchnorm)
    return [
        (num_channels, f,     4, 2, 1, True,  False),
        (f,            f * 2, 4, 2, 1, False, True),
        (f * 2,        f * 4, 4, 2, 1, False, True),
        (f * 4,        f * 8, 4, 2, 1, False, True),
        (f * 8,        f * 8, 4, 1, 0, False, False),
    ]
    # NOTE: Dropout2d only exists in the 'DCGAN_MNIST' branch, not here.


def init_params(key, num_channels, input_size, use_bias=True):
    cfg = layer_config(num_channels, input_size)
    params = []
    for (cin, cout, k, _, _, _, bn) in cfg:
        key, kw_ = jax.random.split(key)
        w = 0.05 * jax.random.normal(kw_, (cout, cin, k, k), jnp.float32)
        if use_bias:
            key, kb = jax.random.split(key)
            b = 0.05 * jax.random.normal(kb, (cout,), jnp.float32)
        else:
            b = jnp.zeros((cout,), jnp.float32)
        gamma = jnp.ones((cout,), jnp.float32) if bn else None   # PyTorch default
        beta = jnp.zeros((cout,), jnp.float32) if bn else None
        params.append(dict(w=w, b=b, gamma=gamma, beta=beta))
    return params


def prepare_params(params):
    """One-time weight re-layout: s2d patch ordering, lane-chunk padding, bf16."""
    packed = []
    for li, p in enumerate(params):
        w = p["w"]                                   # (F, C, 4, 4)
        f, c = w.shape[0], w.shape[1]
        if li < 4:
            cin4 = 4 * c
            chunk = _round_up(cin4, 128)
            # (F, C, KH, KW) -> (di, dj, bi, bj, c, f) with i = 2*di + bi, j = 2*dj + bj
            core = w.reshape(f, c, 2, 2, 2, 2).transpose(2, 4, 3, 5, 1, 0)
            core = core.reshape(16 * c, f)
            wm = jnp.zeros((4 * chunk, f), jnp.float32)
            for k4 in range(4):
                wm = wm.at[k4 * chunk:k4 * chunk + cin4, :].set(
                    core[k4 * cin4:(k4 + 1) * cin4, :])
            wm = wm.astype(jnp.bfloat16)
        else:
            # final layer: (F, C, 4, 4) -> (KH*KW*C, F), matching a row-major
            # flatten of the NHWC 4x4 feature map.
            wm = w.transpose(2, 3, 1, 0).reshape(16 * c, f).astype(jnp.bfloat16)
        packed.append(dict(w=wm,
                           b=p["b"].reshape(1, f).astype(jnp.float32),
                           gamma=p["gamma"], beta=p["beta"]))
    return packed


def encoder_forward(x_nchw, packed, num_channels, input_size):
    cfg = layer_config(num_channels, input_size)
    n = x_nchw.shape[0]
    h = x_nchw.transpose(0, 2, 3, 1)          # NCHW -> NHWC, once, at the boundary

    # Layers 1..4: 4x4 / stride-2 / pad-1 convs via space-to-depth GEMM.
    for li in range(4):
        cin, cout, k, s, pad, act, bn = cfg[li]
        assert (k, s, pad) == (4, 2, 1)
        pk = packed[li]
        hh, ww = h.shape[1], h.shape[2]
        oh, ow = hh // 2, ww // 2
        xs = _pad_s2d(h)                      # (N, oh+1, ow+1, 4*cin) bf16
        outs = conv4x4_s2d(xs, pk["w"], pk["b"], oh=oh, ow=ow, cin=cin,
                           fout=cout,
                           out_dtype=(jnp.float32 if bn else jnp.bfloat16),
                           apply_act=act, emit_stats=bn)
        if bn:
            y, stats = outs                   # y: (N, OH*OW, F) f32
            count = n * oh * ow
            s1 = stats[:, :, 0, :].sum(axis=(0, 1))
            s2 = stats[:, :, 1, :].sum(axis=(0, 1))
            mean = s1 / count
            var = s2 / count - mean * mean    # biased var, as PyTorch uses
            scale = pk["gamma"] * lax.rsqrt(var + BN_EPS)
            shift = pk["beta"] - mean * scale
            y = affine_lrelu(y, scale.reshape(1, -1), shift.reshape(1, -1))
        else:
            y = outs                          # bf16, LeakyReLU fused in the conv
        h = y.reshape(n, oh, ow, cout)        # free reshape, stays NHWC

    # Layer 5: 4x4 / stride-1 / pad-0 conv on a 4x4 map == one GEMM.
    pk = packed[4]
    a = h.reshape(n, -1)                      # (N, 4*4*C), (kh, kw, c) ordering
    out = gemm_bias(a, pk["w"], pk["b"])      # (N, 8*input_size) f32
    return out.reshape(n, -1, 1, 1)           # NCHW (N, F, 1, 1)


# ============================ pure-JAX reference ==============================

def reference_forward(x, params, num_channels, input_size):
    cfg = layer_config(num_channels, input_size)

    def lrelu(v):
        return jnp.where(v >= 0.0, v, NEG_SLOPE * v)

    h = x
    for p, (_, _, _, stride, pad, act, bn) in zip(params, cfg):
        h = lax.conv_general_dilated(
            h, p["w"], (stride, stride), [(pad, pad), (pad, pad)],
            dimension_numbers=("NCHW", "OIHW", "NCHW"))
        h = h + p["b"][None, :, None, None]
        if act:
            h = lrelu(h)
        if bn:
            mean = h.mean(axis=(0, 2, 3), keepdims=True)
            var = h.var(axis=(0, 2, 3), keepdims=True)
            h = (h - mean) / jnp.sqrt(var + BN_EPS)
            h = h * p["gamma"][None, :, None, None] + p["beta"][None, :, None, None]
            h = lrelu(h)
    return h


# =================================== main =====================================

if __name__ == "__main__":
    key = jax.random.PRNGKey(0)
    batch, num_channels, input_size, hw = 2, 3, 8, 64   # small DCGAN config
    key, kx = jax.random.split(key)
    x = jax.random.normal(kx, (batch, num_channels, hw, hw), jnp.float32)

    params = init_params(key, num_channels, input_size, use_bias=True)
    packed = prepare_params(params)          # one-time weight re-layout

    fwd = jax.jit(functools.partial(encoder_forward,
                                    num_channels=num_channels,
                                    input_size=input_size))
    out = jax.block_until_ready(fwd(x, packed))

    ref = reference_forward(x, params, num_channels, input_size)
    assert out.shape == (batch, input_size * 8, 1, 1), out.shape
    max_err = float(jnp.max(jnp.abs(out - ref)))
    # bf16 MXU operands -> loosened tolerance vs the f32 reference.
    assert jnp.allclose(out, ref, atol=5e-2, rtol=5e-2), max_err

    print("KERNEL_OK")
</pallas_src>

<mosaic_0001>
module attributes {stable_mosaic.version = 11 : i64} {
  func.func @_conv_s2d_kernel(%arg0: i32, %arg1: i32, %arg2: memref<1x33x33x12xbf16, #tpu.memory_space<vmem>>, %arg3: memref<512x8xbf16, #tpu.memory_space<vmem>>, %arg4: memref<1x8xf32, #tpu.memory_space<vmem>>, %arg5: memref<1x256x8xbf16, #tpu.memory_space<vmem>>, %arg6: memref<256x512xbf16, #tpu.memory_space<vmem>>) attributes {dimension_semantics = [#tpu.dimension_semantics<parallel>, #tpu.dimension_semantics<parallel>], iteration_bounds = array<i64: 2, 4>, scalar_prefetch = 0 : i64, scratch_operands = 1 : i64, tpu.core_type = #tpu.core_type<tc>, window_params = [{transform_indices = @transform_0, window_bounds = array<i64: 1, 33, 33, 12>}, {pipeline_mode = #tpu.pipeline_mode<synchronous>, transform_indices = @transform_1, window_bounds = array<i64: 512, 8>}, {pipeline_mode = #tpu.pipeline_mode<synchronous>, transform_indices = @transform_2, window_bounds = array<i64: 1, 8>}, {transform_indices = @transform_3, window_bounds = array<i64: 1, 256, 8>}]} {
    %c8_i32 = arith.constant 8 : i32
    %0 = arith.muli %arg1, %c8_i32 : i32
    %cst = arith.constant 0.000000e+00 : bf16
    %1 = vector.broadcast %cst : bf16 to vector<256x512xbf16>
    %c0 = arith.constant 0 : index
    %c0_0 = arith.constant 0 : index
    %2 = vector.load %arg6[%c0, %c0_0] : memref<256x512xbf16, #tpu.memory_space<vmem>>, vector<256x512xbf16>
    tpu.vector_store %arg6[%c0, %c0_0], %1 {strides = array<i32>} : memref<256x512xbf16, #tpu.memory_space<vmem>>, vector<256x512xbf16>,
    %c0_i32 = arith.constant 0 : i32
    %3 = arith.addi %0, %c0_i32 : i32
    %c0_i32_1 = arith.constant 0 : i32
    %4 = arith.addi %3, %c0_i32_1 : i32
    %c0_2 = arith.constant 0 : index
    %5 = arith.index_cast %4 : i32 to index
    %c0_3 = arith.constant 0 : index
    %c0_4 = arith.constant 0 : index
    %6 = vector.load %arg2[%c0_2, %5, %c0_3, %c0_4] : memref<1x33x33x12xbf16, #tpu.memory_space<vmem>>, vector<1x1x32x12xbf16>
    %7 = vector.shape_cast %6 : vector<1x1x32x12xbf16> to vector<1x32x12xbf16>
    %8 = vector.shape_cast %7 : vector<1x32x12xbf16> to vector<32x12xbf16>
    %c0_5 = arith.constant 0 : index
    %c0_6 = arith.constant 0 : index
    %9 = vector.load %arg6[%c0_5, %c0_6] : memref<256x512xbf16, #tpu.memory_space<vmem>>, vector<32x12xbf16>
    tpu.vector_store %arg6[%c0_5, %c0_6], %8 {strides = array<i32>} : memref<256x512xbf16, #tpu.memory_space<vmem>>, vector<32x12xbf16>,
    %c0_i32_7 = arith.constant 0 : i32
    %10 = arith.addi %0, %c0_i32_7 : i32
    %c0_i32_8 = arith.constant 0 : i32
    %11 = arith.addi %10, %c0_i32_8 : i32
    %c0_9 = arith.constant 0 : index
    %12 = arith.index_cast %11 : i32 to index
    %c1 = arith.constant 1 : index
    %c0_10 = arith.constant 0 : index
    %13 = vector.load %arg2[%c0_9, %12, %c1, %c0_10] : memref<1x33x33x12xbf16, #tpu.memory_space<vmem>>, vector<1x1x32x12xbf16>
    %14 = vector.shape_cast %13 : vector<1x1x32x12xbf16> to vector<1x32x12xbf16>
    %15 = vector.shape_cast %14 : vector<1x32x12xbf16> to vector<32x12xbf16>
    %c0_11 = arith.constant 0 : index
    %c128 = arith.constant 128 : index
    %16 = vector.load %arg6[%c0_11, %c128] : memref<256x512xbf16, #tpu.memory_space<vmem>>, vector<32x12xbf16>
    tpu.vector_store %arg6[%c0_11, %c128], %15 {strides = array<i32>} : memref<256x512xbf16, #tpu.memory_space<vmem>>, vector<32x12xbf16>,
    %c0_i32_12 = arith.constant 0 : i32
    %17 = arith.addi %0, %c0_i32_12 : i32
    %c1_i32 = arith.constant 1 : i32
    %18 = arith.addi %17, %c1_i32 : i32
    %c0_13 = arith.constant 0 : index
    %19 = arith.index_cast %18 : i32 to index
    %c0_14 = arith.constant 0 : index
    %c0_15 = arith.constant 0 : index
    %20 = vector.load %arg2[%c0_13, %19, %c0_14, %c0_15] : memref<1x33x33x12xbf16, #tpu.memory_space<vmem>>, vector<1x1x32x12xbf16>
    %21 = vector.shape_cast %20 : vector<1x1x32x12xbf16> to vector<1x32x12xbf16>
    %22 = vector.shape_cast %21 : vector<1x32x12xbf16> to vector<32x12xbf16>
    %c0_16 = arith.constant 0 : index
    %c256 = arith.constant 256 : index
    %23 = vector.load %arg6[%c0_16, %c256] : memref<256x512xbf16, #tpu.memory_space<vmem>>, vector<32x12xbf16>
    tpu.vector_store %arg6[%c0_16, %c256], %22 {strides = array<i32>} : memref<256x512xbf16, #tpu.memory_space<vmem>>, vector<32x12xbf16>,
    %c0_i32_17 = arith.constant 0 : i32
    %24 = arith.addi %0, %c0_i32_17 : i32
    %c1_i32_18 = arith.constant 1 : i32
    %25 = arith.addi %24, %c1_i32_18 : i32
    %c0_19 = arith.constant 0 : index
    %26 = arith.index_cast %25 : i32 to index
    %c1_20 = arith.constant 1 : index
    %c0_21 = arith.constant 0 : index
    %27 = vector.load %arg2[%c0_19, %26, %c1_20, %c0_21] : memref<1x33x33x12xbf16, #tpu.memory_space<vmem>>, vector<1x1x32x12xbf16>
    %28 = vector.shape_cast %27 : vector<1x1x32x12xbf16> to vector<1x32x12xbf16>
    %29 = vector.shape_cast %28 : vector<1x32x12xbf16> to vector<32x12xbf16>
    %c0_22 = arith.constant 0 : index
    %c384 = arith.constant 384 : index
    %30 = vector.load %arg6[%c0_22, %c384] : memref<256x512xbf16, #tpu.memory_space<vmem>>, vector<32x12xbf16>
    tpu.vector_store %arg6[%c0_22, %c384], %29 {strides = array<i32>} : memref<256x512xbf16, #tpu.memory_space<vmem>>, vector<32x12xbf16>,
    %c1_i32_23 = arith.constant 1 : i32
    %31 = arith.addi %0, %c1_i32_23 : i32
    %c0_i32_24 = arith.constant 0 : i32
    %32 = arith.addi %31, %c0_i32_24 : i32
    %c0_25 = arith.constant 0 : index
    %33 = arith.index_cast %32 : i32 to index
    %c0_26 = arith.constant 0 : index
    %c0_27 = arith.constant 0 : index
    %34 = vector.load %arg2[%c0_25, %33, %c0_26, %c0_27] : memref<1x33x33x12xbf16, #tpu.memory_space<vmem>>, vector<1x1x32x12xbf16>
    %35 = vector.shape_cast %34 : vector<1x1x32x12xbf16> to vector<1x32x12xbf16>
    %36 = vector.shape_cast %35 : vector<1x32x12xbf16> to vector<32x12xbf16>
    %c32 = arith.constant 32 : index
    %c0_28 = arith.constant 0 : index
    %37 = vector.load %arg6[%c32, %c0_28] : memref<256x512xbf16, #tpu.memory_space<vmem>>, vector<32x12xbf16>
    tpu.vector_store %arg6[%c32, %c0_28], %36 {strides = array<i32>} : memref<256x512xbf16, #tpu.memory_space<vmem>>, vector<32x12xbf16>,
    %c1_i32_29 = arith.constant 1 : i32
    %38 = arith.addi %0, %c1_i32_29 : i32
    %c0_i32_30 = arith.constant 0 : i32
    %39 = arith.addi %38, %c0_i32_30 : i32
    %c0_31 = arith.constant 0 : index
    %40 = arith.index_cast %39 : i32 to index
    %c1_32 = arith.constant 1 : index
    %c0_33 = arith.constant 0 : index
    %41 = vector.load %arg2[%c0_31, %40, %c1_32, %c0_33] : memref<1x33x33x12xbf16, #tpu.memory_space<vmem>>, vector<1x1x32x12xbf16>
    %42 = vector.shape_cast %41 : vector<1x1x32x12xbf16> to vector<1x32x12xbf16>
    %43 = vector.shape_cast %42 : vector<1x32x12xbf16> to vector<32x12xbf16>
    %c32_34 = arith.constant 32 : index
    %c128_35 = arith.constant 128 : index
    %44 = vector.load %arg6[%c32_34, %c128_35] : memref<256x512xbf16, #tpu.memory_space<vmem>>, vector<32x12xbf16>
    tpu.vector_store %arg6[%c32_34, %c128_35], %43 {strides = array<i32>} : memref<256x512xbf16, #tpu.memory_space<vmem>>, vector<32x12xbf16>,
    %c1_i32_36 = arith.constant 1 : i32
    %45 = arith.addi %0, %c1_i32_36 : i32
    %c1_i32_37 = arith.constant 1 : i32
    %46 = arith.addi %45, %c1_i32_37 : i32
    %c0_38 = arith.constant 0 : index
    %47 = arith.index_cast %46 : i32 to index
    %c0_39 = arith.constant 0 : index
    %c0_40 = arith.constant 0 : index
    %48 = vector.load %arg2[%c0_38, %47, %c0_39, %c0_40] : memref<1x33x33x12xbf16, #tpu.memory_space<vmem>>, vector<1x1x32x12xbf16>
    %49 = vector.shape_cast %48 : vector<1x1x32x12xbf16> to vector<1x32x12xbf16>
    %50 = vector.shape_cast %49 : vector<1x32x12xbf16> to vector<32x12xbf16>
    %c32_41 = arith.constant 32 : index
    %c256_42 = arith.constant 256 : index
    %51 = vector.load %arg6[%c32_41, %c256_42] : memref<256x512xbf16, #tpu.memory_space<vmem>>, vector<32x12xbf16>
    tpu.vector_store %arg6[%c32_41, %c256_42], %50 {strides = array<i32>} : memref<256x512xbf16, #tpu.memory_space<vmem>>, vector<32x12xbf16>,
    %c1_i32_43 = arith.constant 1 : i32
    %52 = arith.addi %0, %c1_i32_43 : i32
    %c1_i32_44 = arith.constant 1 : i32
    %53 = arith.addi %52, %c1_i32_44 : i32
    %c0_45 = arith.constant 0 : index
    %54 = arith.index_cast %53 : i32 to index
    %c1_46 = arith.constant 1 : index
    %c0_47 = arith.constant 0 : index
    %55 = vector.load %arg2[%c0_45, %54, %c1_46, %c0_47] : memref<1x33x33x12xbf16, #tpu.memory_space<vmem>>, vector<1x1x32x12xbf16>
    %56 = vector.shape_cast %55 : vector<1x1x32x12xbf16> to vector<1x32x12xbf16>
    %57 = vector.shape_cast %56 : vector<1x32x12xbf16> to vector<32x12xbf16>
    %c32_48 = arith.constant 32 : index
    %c384_49 = arith.constant 384 : index
    %58 = vector.load %arg6[%c32_48, %c384_49] : memref<256x512xbf16, #tpu.memory_space<vmem>>, vector<32x12xbf16>
    tpu.vector_store %arg6[%c32_48, %c384_49], %57 {strides = array<i32>} : memref<256x512xbf16, #tpu.memory_space<vmem>>, vector<32x12xbf16>,
    %c2_i32 = arith.constant 2 : i32
    %59 = arith.addi %0, %c2_i32 : i32
    %c0_i32_50 = arith.constant 0 : i32
    %60 = arith.addi %59, %c0_i32_50 : i32
    %c0_51 = arith.constant 0 : index
    %61 = arith.index_cast %60 : i32 to index
    %c0_52 = arith.constant 0 : index
    %c0_53 = arith.constant 0 : index
    %62 = vector.load %arg2[%c0_51, %61, %c0_52, %c0_53] : memref<1x33x33x12xbf16, #tpu.memory_space<vmem>>, vector<1x1x32x12xbf16>
    %63 = vector.shape_cast %62 : vector<1x1x32x12xbf16> to vector<1x32x12xbf16>
    %64 = vector.shape_cast %63 : vector<1x32x12xbf16> to vector<32x12xbf16>
    %c64 = arith.constant 64 : index
    %c0_54 = arith.constant 0 : index
    %65 = vector.load %arg6[%c64, %c0_54] : memref<256x512xbf16, #tpu.memory_space<vmem>>, vector<32x12xbf16>
    tpu.vector_store %arg6[%c64, %c0_54], %64 {strides = array<i32>} : memref<256x512xbf16, #tpu.memory_space<vmem>>, vector<32x12xbf16>,
    %c2_i32_55 = arith.constant 2 : i32
    %66 = arith.addi %0, %c2_i32_55 : i32
    %c0_i32_56 = arith.constant 0 : i32
    %67 = arith.addi %66, %c0_i32_56 : i32
    %c0_57 = arith.constant 0 : index
    %68 = arith.index_cast %67 : i32 to index
    %c1_58 = arith.constant 1 : index
    %c0_59 = arith.constant 0 : index
    %69 = vector.load %arg2[%c0_57, %68, %c1_58, %c0_59] : memref<1x33x33x12xbf16, #tpu.memory_space<vmem>>, vector<1x1x32x12xbf16>
    %70 = vector.shape_cast %69 : vector<1x1x32x12xbf16> to vector<1x32x12xbf16>
    %71 = vector.shape_cast %70 : vector<1x32x12xbf16> to vector<32x12xbf16>
    %c64_60 = arith.constant 64 : index
    %c128_61 = arith.constant 128 : index
    %72 = vector.load %arg6[%c64_60, %c128_61] : memref<256x512xbf16, #tpu.memory_space<vmem>>, vector<32x12xbf16>
    tpu.vector_store %arg6[%c64_60, %c128_61], %71 {strides = array<i32>} : memref<256x512xbf16, #tpu.memory_space<vmem>>, vector<32x12xbf16>,
    %c2_i32_62 = arith.constant 2 : i32
    %73 = arith.addi %0, %c2_i32_62 : i32
    %c1_i32_63 = arith.constant 1 : i32
    %74 = arith.addi %73, %c1_i32_63 : i32
    %c0_64 = arith.constant 0 : index
    %75 = arith.index_cast %74 : i32 to index
    %c0_65 = arith.constant 0 : index
    %c0_66 = arith.constant 0 : index
    %76 = vector.load %arg2[%c0_64, %75, %c0_65, %c0_66] : memref<1x33x33x12xbf16, #tpu.memory_space<vmem>>, vector<1x1x32x12xbf16>
    %77 = vector.shape_cast %76 : vector<1x1x32x12xbf16> to vector<1x32x12xbf16>
    %78 = vector.shape_cast %77 : vector<1x32x12xbf16> to vector<32x12xbf16>
    %c64_67 = arith.constant 64 : index
    %c256_68 = arith.constant 256 : index
    %79 = vector.load %arg6[%c64_67, %c256_68] : memref<256x512xbf16, #tpu.memory_space<vmem>>, vector<32x12xbf16>
    tpu.vector_store %arg6[%c64_67, %c256_68], %78 {strides = array<i32>} : memref<256x512xbf16, #tpu.memory_space<vmem>>, vector<32x12xbf16>,
    %c2_i32_69 = arith.constant 2 : i32
    %80 = arith.addi %0, %c2_i32_69 : i32
    %c1_i32_70 = arith.constant 1 : i32
    %81 = arith.addi %80, %c1_i32_70 : i32
    %c0_71 = arith.constant 0 : index
    %82 = arith.index_cast %81 : i32 to index
    %c1_72 = arith.constant 1 : index
    %c0_73 = arith.constant 0 : index
    %83 = vector.load %arg2[%c0_71, %82, %c1_72, %c0_73] : memref<1x33x33x12xbf16, #tpu.memory_space<vmem>>, vector<1x1x32x12xbf16>
    %84 = vector.shape_cast %83 : vector<1x1x32x12xbf16> to vector<1x32x12xbf16>
    %85 = vector.shape_cast %84 : vector<1x32x12xbf16> to vector<32x12xbf16>
    %c64_74 = arith.constant 64 : index
    %c384_75 = arith.constant 384 : index
    %86 = vector.load %arg6[%c64_74, %c384_75] : memref<256x512xbf16, #tpu.memory_space<vmem>>, vector<32x12xbf16>
    tpu.vector_store %arg6[%c64_74, %c384_75], %85 {strides = array<i32>} : memref<256x512xbf16, #tpu.memory_space<vmem>>, vector<32x12xbf16>,
    %c3_i32 = arith.constant 3 : i32
    %87 = arith.addi %0, %c3_i32 : i32
    %c0_i32_76 = arith.constant 0 : i32
    %88 = arith.addi %87, %c0_i32_76 : i32
    %c0_77 = arith.constant 0 : index
    %89 = arith.index_cast %88 : i32 to index
    %c0_78 = arith.constant 0 : index
    %c0_79 = arith.constant 0 : index
    %90 = vector.load %arg2[%c0_77, %89, %c0_78, %c0_79] : memref<1x33x33x12xbf16, #tpu.memory_space<vmem>>, vector<1x1x32x12xbf16>
    %91 = vector.shape_cast %90 : vector<1x1x32x12xbf16> to vector<1x32x12xbf16>
    %92 = vector.shape_cast %91 : vector<1x32x12xbf16> to vector<32x12xbf16>
    %c96 = arith.constant 96 : index
    %c0_80 = arith.constant 0 : index
    %93 = vector.load %arg6[%c96, %c0_80] : memref<256x512xbf16, #tpu.memory_space<vmem>>, vector<32x12xbf16>
    tpu.vector_store %arg6[%c96, %c0_80], %92 {strides = array<i32>} : memref<256x512xbf16, #tpu.memory_space<vmem>>, vector<32x12xbf16>,
    %c3_i32_81 = arith.constant 3 : i32
    %94 = arith.addi %0, %c3_i32_81 : i32
    %c0_i32_82 = arith.constant 0 : i32
    %95 = arith.addi %94, %c0_i32_82 : i32
    %c0_83 = arith.constant 0 : index
    %96 = arith.index_cast %95 : i32 to index
    %c1_84 = arith.constant 1 : index
    %c0_85 = arith.constant 0 : index
    %97 = vector.load %arg2[%c0_83, %96, %c1_84, %c0_85] : memref<1x33x33x12xbf16, #tpu.memory_space<vmem>>, vector<1x1x32x12xbf16>
    %98 = vector.shape_cast %97 : vector<1x1x32x12xbf16> to vector<1x32x12xbf16>
    %99 = vector.shape_cast %98 : vector<1x32x12xbf16> to vector<32x12xbf16>
    %c96_86 = arith.constant 96 : index
    %c128_87 = arith.constant 128 : index
    %100 = vector.load %arg6[%c96_86, %c128_87] : memref<256x512xbf16, #tpu.memory_space<vmem>>, vector<32x12xbf16>
    tpu.vector_store %arg6[%c96_86, %c128_87], %99 {strides = array<i32>} : memref<256x512xbf16, #tpu.memory_space<vmem>>, vector<32x12xbf16>,
    %c3_i32_88 = arith.constant 3 : i32
    %101 = arith.addi %0, %c3_i32_88 : i32
    %c1_i32_89 = arith.constant 1 : i32
    %102 = arith.addi %101, %c1_i32_89 : i32
    %c0_90 = arith.constant 0 : index
    %103 = arith.index_cast %102 : i32 to index
    %c0_91 = arith.constant 0 : index
    %c0_92 = arith.constant 0 : index
    %104 = vector.load %arg2[%c0_90, %103, %c0_91, %c0_92] : memref<1x33x33x12xbf16, #tpu.memory_space<vmem>>, vector<1x1x32x12xbf16>
    %105 = vector.shape_cast %104 : vector<1x1x32x12xbf16> to vector<1x32x12xbf16>
    %106 = vector.shape_cast %105 : vector<1x32x12xbf16> to vector<32x12xbf16>
    %c96_93 = arith.constant 96 : index
    %c256_94 = arith.constant 256 : index
    %107 = vector.load %arg6[%c96_93, %c256_94] : memref<256x512xbf16, #tpu.memory_space<vmem>>, vector<32x12xbf16>
    tpu.vector_store %arg6[%c96_93, %c256_94], %106 {strides = array<i32>} : memref<256x512xbf16, #tpu.memory_space<vmem>>, vector<32x12xbf16>,
    %c3_i32_95 = arith.constant 3 : i32
    %108 = arith.addi %0, %c3_i32_95 : i32
    %c1_i32_96 = arith.constant 1 : i32
    %109 = arith.addi %108, %c1_i32_96 : i32
    %c0_97 = arith.constant 0 : index
    %110 = arith.index_cast %109 : i32 to index
    %c1_98 = arith.constant 1 : index
    %c0_99 = arith.constant 0 : index
    %111 = vector.load %arg2[%c0_97, %110, %c1_98, %c0_99] : memref<1x33x33x12xbf16, #tpu.memory_space<vmem>>, vector<1x1x32x12xbf16>
    %112 = vector.shape_cast %111 : vector<1x1x32x12xbf16> to vector<1x32x12xbf16>
    %113 = vector.shape_cast %112 : vector<1x32x12xbf16> to vector<32x12xbf16>
    %c96_100 = arith.constant 96 : index
    %c384_101 = arith.constant 384 : index
    %114 = vector.load %arg6[%c96_100, %c384_101] : memref<256x512xbf16, #tpu.memory_space<vmem>>, vector<32x12xbf16>
    tpu.vector_store %arg6[%c96_100, %c384_101], %113 {strides = array<i32>} : memref<256x512xbf16, #tpu.memory_space<vmem>>, vector<32x12xbf16>,
    %c4_i32 = arith.constant 4 : i32
    %115 = arith.addi %0, %c4_i32 : i32
    %c0_i32_102 = arith.constant 0 : i32
    %116 = arith.addi %115, %c0_i32_102 : i32
    %c0_103 = arith.constant 0 : index
    %117 = arith.index_cast %116 : i32 to index
    %c0_104 = arith.constant 0 : index
    %c0_105 = arith.constant 0 : index
    %118 = vector.load %arg2[%c0_103, %117, %c0_104, %c0_105] : memref<1x33x33x12xbf16, #tpu.memory_space<vmem>>, vector<1x1x32x12xbf16>
    %119 = vector.shape_cast %118 : vector<1x1x32x12xbf16> to vector<1x32x12xbf16>
    %120 = vector.shape_cast %119 : vector<1x32x12xbf16> to vector<32x12xbf16>
    %c128_106 = arith.constant 128 : index
    %c0_107 = arith.constant 0 : index
    %121 = vector.load %arg6[%c128_106, %c0_107] : memref<256x512xbf16, #tpu.memory_space<vmem>>, vector<32x12xbf16>
    tpu.vector_store %arg6[%c128_106, %c0_107], %120 {strides = array<i32>} : memref<256x512xbf16, #tpu.memory_space<vmem>>, vector<32x12xbf16>,
    %c4_i32_108 = arith.constant 4 : i32
    %122 = arith.addi %0, %c4_i32_108 : i32
    %c0_i32_109 = arith.constant 0 : i32
    %123 = arith.addi %122, %c0_i32_109 : i32
    %c0_110 = arith.constant 0 : index
    %124 = arith.index_cast %123 : i32 to index
    %c1_111 = arith.constant 1 : index
    %c0_112 = arith.constant 0 : index
    %125 = vector.load %arg2[%c0_110, %124, %c1_111, %c0_112] : memref<1x33x33x12xbf16, #tpu.memory_space<vmem>>, vector<1x1x32x12xbf16>
    %126 = vector.shape_cast %125 : vector<1x1x32x12xbf16> to vector<1x32x12xbf16>
    %127 = vector.shape_cast %126 : vector<1x32x12xbf16> to vector<32x12xbf16>
    %c128_113 = arith.constant 128 : index
    %c128_114 = arith.constant 128 : index
    %128 = vector.load %arg6[%c128_113, %c128_114] : memref<256x512xbf16, #tpu.memory_space<vmem>>, vector<32x12xbf16>
    tpu.vector_store %arg6[%c128_113, %c128_114], %127 {strides = array<i32>} : memref<256x512xbf16, #tpu.memory_space<vmem>>, vector<32x12xbf16>,
    %c4_i32_115 = arith.constant 4 : i32
    %129 = arith.addi %0, %c4_i32_115 : i32
    %c1_i32_116 = arith.constant 1 : i32
    %130 = arith.addi %129, %c1_i32_116 : i32
    %c0_117 = arith.constant 0 : index
    %131 = arith.index_cast %130 : i32 to index
    %c0_118 = arith.constant 0 : index
    %c0_119 = arith.constant 0 : index
    %132 = vector.load %arg2[%c0_117, %131, %c0_118, %c0_119] : memref<1x33x33x12xbf16, #tpu.memory_space<vmem>>, vector<1x1x32x12xbf16>
    %133 = vector.shape_cast %132 : vector<1x1x32x12xbf16> to vector<1x32x12xbf16>
    %134 = vector.shape_cast %133 : vector<1x32x12xbf16> to vector<32x12xbf16>
    %c128_120 = arith.constant 128 : index
    %c256_121 = arith.constant 256 : index
    %135 = vector.load %arg6[%c128_120, %c256_121] : memref<256x512xbf16, #tpu.memory_space<vmem>>, vector<32x12xbf16>
    tpu.vector_store %arg6[%c128_120, %c256_121], %134 {strides = array<i32>} : memref<256x512xbf16, #tpu.memory_space<vmem>>, vector<32x12xbf16>,
    %c4_i32_122 = arith.constant 4 : i32
    %136 = arith.addi %0, %c4_i32_122 : i32
    %c1_i32_123 = arith.constant 1 : i32
    %137 = arith.addi %136, %c1_i32_123 : i32
    %c0_124 = arith.constant 0 : index
    %138 = arith.index_cast %137 : i32 to index
    %c1_125 = arith.constant 1 : index
    %c0_126 = arith.constant 0 : index
    %139 = vector.load %arg2[%c0_124, %138, %c1_125, %c0_126] : memref<1x33x33x12xbf16, #tpu.memory_space<vmem>>, vector<1x1x32x12xbf16>
    %140 = vector.shape_cast %139 : vector<1x1x32x12xbf16> to vector<1x32x12xbf16>
    %141 = vector.shape_cast %140 : vector<1x32x12xbf16> to vector<32x12xbf16>
    %c128_127 = arith.constant 128 : index
    %c384_128 = arith.constant 384 : index
    %142 = vector.load %arg6[%c128_127, %c384_128] : memref<256x512xbf16, #tpu.memory_space<vmem>>, vector<32x12xbf16>
    tpu.vector_store %arg6[%c128_127, %c384_128], %141 {strides = array<i32>} : memref<256x512xbf16, #tpu.memory_space<vmem>>, vector<32x12xbf16>,
    %c5_i32 = arith.constant 5 : i32
    %143 = arith.addi %0, %c5_i32 : i32
    %c0_i32_129 = arith.constant 0 : i32
    %144 = arith.addi %143, %c0_i32_129 : i32
    %c0_130 = arith.constant 0 : index
    %145 = arith.index_cast %144 : i32 to index
    %c0_131 = arith.constant 0 : index
    %c0_132 = arith.constant 0 : index
    %146 = vector.load %arg2[%c0_130, %145, %c0_131, %c0_132] : memref<1x33x33x12xbf16, #tpu.memory_space<vmem>>, vector<1x1x32x12xbf16>
    %147 = vector.shape_cast %146 : vector<1x1x32x12xbf16> to vector<1x32x12xbf16>
    %148 = vector.shape_cast %147 : vector<1x32x12xbf16> to vector<32x12xbf16>
    %c160 = arith.constant 160 : index
    %c0_133 = arith.constant 0 : index
    %149 = vector.load %arg6[%c160, %c0_133] : memref<256x512xbf16, #tpu.memory_space<vmem>>, vector<32x12xbf16>
    tpu.vector_store %arg6[%c160, %c0_133], %148 {strides = array<i32>} : memref<256x512xbf16, #tpu.memory_space<vmem>>, vector<32x12xbf16>,
    %c5_i32_134 = arith.constant 5 : i32
    %150 = arith.addi %0, %c5_i32_134 : i32
    %c0_i32_135 = arith.constant 0 : i32
    %151 = arith.addi %150, %c0_i32_135 : i32
    %c0_136 = arith.constant 0 : index
    %152 = arith.index_cast %151 : i32 to index
    %c1_137 = arith.constant 1 : index
    %c0_138 = arith.constant 0 : index
    %153 = vector.load %arg2[%c0_136, %152, %c1_137, %c0_138] : memref<1x33x33x12xbf16, #tpu.memory_space<vmem>>, vector<1x1x32x12xbf16>
    %154 = vector.shape_cast %153 : vector<1x1x32x12xbf16> to vector<1x32x12xbf16>
    %155 = vector.shape_cast %154 : vector<1x32x12xbf16> to vector<32x12xbf16>
    %c160_139 = arith.constant 160 : index
    %c128_140 = arith.constant 128 : index
    %156 = vector.load %arg6[%c160_139, %c128_140] : memref<256x512xbf16, #tpu.memory_space<vmem>>, vector<32x12xbf16>
    tpu.vector_store %arg6[%c160_139, %c128_140], %155 {strides = array<i32>} : memref<256x512xbf16, #tpu.memory_space<vmem>>, vector<32x12xbf16>,
    %c5_i32_141 = arith.constant 5 : i32
    %157 = arith.addi %0, %c5_i32_141 : i32
    %c1_i32_142 = arith.constant 1 : i32
    %158 = arith.addi %157, %c1_i32_142 : i32
    %c0_143 = arith.constant 0 : index
    %159 = arith.index_cast %158 : i32 to index
    %c0_144 = arith.constant 0 : index
    %c0_145 = arith.constant 0 : index
    %160 = vector.load %arg2[%c0_143, %159, %c0_144, %c0_145] : memref<1x33x33x12xbf16, #tpu.memory_space<vmem>>, vector<1x1x32x12xbf16>
    %161 = vector.shape_cast %160 : vector<1x1x32x12xbf16> to vector<1x32x12xbf16>
    %162 = vector.shape_cast %161 : vector<1x32x12xbf16> to vector<32x12xbf16>
    %c160_146 = arith.constant 160 : index
    %c256_147 = arith.constant 256 : index
    %163 = vector.load %arg6[%c160_146, %c256_147] : memref<256x512xbf16, #tpu.memory_space<vmem>>, vector<32x12xbf16>
    tpu.vector_store %arg6[%c160_146, %c256_147], %162 {strides = array<i32>} : memref<256x512xbf16, #tpu.memory_space<vmem>>, vector<32x12xbf16>,
    %c5_i32_148 = arith.constant 5 : i32
    %164 = arith.addi %0, %c5_i32_148 : i32
    %c1_i32_149 = arith.constant 1 : i32
    %165 = arith.addi %164, %c1_i32_149 : i32
    %c0_150 = arith.constant 0 : index
    %166 = arith.index_cast %165 : i32 to index
    %c1_151 = arith.constant 1 : index
    %c0_152 = arith.constant 0 : index
    %167 = vector.load %arg2[%c0_150, %166, %c1_151, %c0_152] : memref<1x33x33x12xbf16, #tpu.memory_space<vmem>>, vector<1x1x32x12xbf16>
    %168 = vector.shape_cast %167 : vector<1x1x32x12xbf16> to vector<1x32x12xbf16>
    %169 = vector.shape_cast %168 : vector<1x32x12xbf16> to vector<32x12xbf16>
    %c160_153 = arith.constant 160 : index
    %c384_154 = arith.constant 384 : index
    %170 = vector.load %arg6[%c160_153, %c384_154] : memref<256x512xbf16, #tpu.memory_space<vmem>>, vector<32x12xbf16>
    tpu.vector_store %arg6[%c160_153, %c384_154], %169 {strides = array<i32>} : memref<256x512xbf16, #tpu.memory_space<vmem>>, vector<32x12xbf16>,
    %c6_i32 = arith.constant 6 : i32
    %171 = arith.addi %0, %c6_i32 : i32
    %c0_i32_155 = arith.constant 0 : i32
    %172 = arith.addi %171, %c0_i32_155 : i32
    %c0_156 = arith.constant 0 : index
    %173 = arith.index_cast %172 : i32 to index
    %c0_157 = arith.constant 0 : index
    %c0_158 = arith.constant 0 : index
    %174 = vector.load %arg2[%c0_156, %173, %c0_157, %c0_158] : memref<1x33x33x12xbf16, #tpu.memory_space<vmem>>, vector<1x1x32x12xbf16>
    %175 = vector.shape_cast %174 : vector<1x1x32x12xbf16> to vector<1x32x12xbf16>
    %176 = vector.shape_cast %175 : vector<1x32x12xbf16> to vector<32x12xbf16>
    %c192 = arith.constant 192 : index
    %c0_159 = arith.constant 0 : index
    %177 = vector.load %arg6[%c192, %c0_159] : memref<256x512xbf16, #tpu.memory_space<vmem>>, vector<32x12xbf16>
    tpu.vector_store %arg6[%c192, %c0_159], %176 {strides = array<i32>} : memref<256x512xbf16, #tpu.memory_space<vmem>>, vector<32x12xbf16>,
    %c6_i32_160 = arith.constant 6 : i32
    %178 = arith.addi %0, %c6_i32_160 : i32
    %c0_i32_161 = arith.constant 0 : i32
    %179 = arith.addi %178, %c0_i32_161 : i32
    %c0_162 = arith.constant 0 : index
    %180 = arith.index_cast %179 : i32 to index
    %c1_163 = arith.constant 1 : index
    %c0_164 = arith.constant 0 : index
    %181 = vector.load %arg2[%c0_162, %180, %c1_163, %c0_164] : memref<1x33x33x12xbf16, #tpu.memory_space<vmem>>, vector<1x1x32x12xbf16>
    %182 = vector.shape_cast %181 : vector<1x1x32x12xbf16> to vector<1x32x12xbf16>
    %183 = vector.shape_cast %182 : vector<1x32x12xbf16> to vector<32x12xbf16>
    %c192_165 = arith.constant 192 : index
    %c128_166 = arith.constant 128 : index
    %184 = vector.load %arg6[%c192_165, %c128_166] : memref<256x512xbf16, #tpu.memory_space<vmem>>, vector<32x12xbf16>
    tpu.vector_store %arg6[%c192_165, %c128_166], %183 {strides = array<i32>} : memref<256x512xbf16, #tpu.memory_space<vmem>>, vector<32x12xbf16>,
    %c6_i32_167 = arith.constant 6 : i32
    %185 = arith.addi %0, %c6_i32_167 : i32
    %c1_i32_168 = arith.constant 1 : i32
    %186 = arith.addi %185, %c1_i32_168 : i32
    %c0_169 = arith.constant 0 : index
    %187 = arith.index_cast %186 : i32 to index
    %c0_170 = arith.constant 0 : index
    %c0_171 = arith.constant 0 : index
    %188 = vector.load %arg2[%c0_169, %187, %c0_170, %c0_171] : memref<1x33x33x12xbf16, #tpu.memory_space<vmem>>, vector<1x1x32x12xbf16>
    %189 = vector.shape_cast %188 : vector<1x1x32x12xbf16> to vector<1x32x12xbf16>
    %190 = vector.shape_cast %189 : vector<1x32x12xbf16> to vector<32x12xbf16>
    %c192_172 = arith.constant 192 : index
    %c256_173 = arith.constant 256 : index
    %191 = vector.load %arg6[%c192_172, %c256_173] : memref<256x512xbf16, #tpu.memory_space<vmem>>, vector<32x12xbf16>
    tpu.vector_store %arg6[%c192_172, %c256_173], %190 {strides = array<i32>} : memref<256x512xbf16, #tpu.memory_space<vmem>>, vector<32x12xbf16>,
    %c6_i32_174 = arith.constant 6 : i32
    %192 = arith.addi %0, %c6_i32_174 : i32
    %c1_i32_175 = arith.constant 1 : i32
    %193 = arith.addi %192, %c1_i32_175 : i32
    %c0_176 = arith.constant 0 : index
    %194 = arith.index_cast %193 : i32 to index
    %c1_177 = arith.constant 1 : index
    %c0_178 = arith.constant 0 : index
    %195 = vector.load %arg2[%c0_176, %194, %c1_177, %c0_178] : memref<1x33x33x12xbf16, #tpu.memory_space<vmem>>, vector<1x1x32x12xbf16>
    %196 = vector.shape_cast %195 : vector<1x1x32x12xbf16> to vector<1x32x12xbf16>
    %197 = vector.shape_cast %196 : vector<1x32x12xbf16> to vector<32x12xbf16>
    %c192_179 = arith.constant 192 : index
    %c384_180 = arith.constant 384 : index
    %198 = vector.load %arg6[%c192_179, %c384_180] : memref<256x512xbf16, #tpu.memory_space<vmem>>, vector<32x12xbf16>
    tpu.vector_store %arg6[%c192_179, %c384_180], %197 {strides = array<i32>} : memref<256x512xbf16, #tpu.memory_space<vmem>>, vector<32x12xbf16>,
    %c7_i32 = arith.constant 7 : i32
    %199 = arith.addi %0, %c7_i32 : i32
    %c0_i32_181 = arith.constant 0 : i32
    %200 = arith.addi %199, %c0_i32_181 : i32
    %c0_182 = arith.constant 0 : index
    %201 = arith.index_cast %200 : i32 to index
    %c0_183 = arith.constant 0 : index
    %c0_184 = arith.constant 0 : index
    %202 = vector.load %arg2[%c0_182, %201, %c0_183, %c0_184] : memref<1x33x33x12xbf16, #tpu.memory_space<vmem>>, vector<1x1x32x12xbf16>
    %203 = vector.shape_cast %202 : vector<1x1x32x12xbf16> to vector<1x32x12xbf16>
    %204 = vector.shape_cast %203 : vector<1x32x12xbf16> to vector<32x12xbf16>
    %c224 = arith.constant 224 : index
    %c0_185 = arith.constant 0 : index
    %205 = vector.load %arg6[%c224, %c0_185] : memref<256x512xbf16, #tpu.memory_space<vmem>>, vector<32x12xbf16>
    tpu.vector_store %arg6[%c224, %c0_185], %204 {strides = array<i32>} : memref<256x512xbf16, #tpu.memory_space<vmem>>, vector<32x12xbf16>,
    %c7_i32_186 = arith.constant 7 : i32
    %206 = arith.addi %0, %c7_i32_186 : i32
    %c0_i32_187 = arith.constant 0 : i32
    %207 = arith.addi %206, %c0_i32_187 : i32
    %c0_188 = arith.constant 0 : index
    %208 = arith.index_cast %207 : i32 to index
    %c1_189 = arith.constant 1 : index
    %c0_190 = arith.constant 0 : index
    %209 = vector.load %arg2[%c0_188, %208, %c1_189, %c0_190] : memref<1x33x33x12xbf16, #tpu.memory_space<vmem>>, vector<1x1x32x12xbf16>
    %210 = vector.shape_cast %209 : vector<1x1x32x12xbf16> to vector<1x32x12xbf16>
    %211 = vector.shape_cast %210 : vector<1x32x12xbf16> to vector<32x12xbf16>
    %c224_191 = arith.constant 224 : index
    %c128_192 = arith.constant 128 : index
    %212 = vector.load %arg6[%c224_191, %c128_192] : memref<256x512xbf16, #tpu.memory_space<vmem>>, vector<32x12xbf16>
    tpu.vector_store %arg6[%c224_191, %c128_192], %211 {strides = array<i32>} : memref<256x512xbf16, #tpu.memory_space<vmem>>, vector<32x12xbf16>,
    %c7_i32_193 = arith.constant 7 : i32
    %213 = arith.addi %0, %c7_i32_193 : i32
    %c1_i32_194 = arith.constant 1 : i32
    %214 = arith.addi %213, %c1_i32_194 : i32
    %c0_195 = arith.constant 0 : index
    %215 = arith.index_cast %214 : i32 to index
    %c0_196 = arith.constant 0 : index
    %c0_197 = arith.constant 0 : index
    %216 = vector.load %arg2[%c0_195, %215, %c0_196, %c0_197] : memref<1x33x33x12xbf16, #tpu.memory_space<vmem>>, vector<1x1x32x12xbf16>
    %217 = vector.shape_cast %216 : vector<1x1x32x12xbf16> to vector<1x32x12xbf16>
    %218 = vector.shape_cast %217 : vector<1x32x12xbf16> to vector<32x12xbf16>
    %c224_198 = arith.constant 224 : index
    %c256_199 = arith.constant 256 : index
    %219 = vector.load %arg6[%c224_198, %c256_199] : memref<256x512xbf16, #tpu.memory_space<vmem>>, vector<32x12xbf16>
    tpu.vector_store %arg6[%c224_198, %c256_199], %218 {strides = array<i32>} : memref<256x512xbf16, #tpu.memory_space<vmem>>, vector<32x12xbf16>,
    %c7_i32_200 = arith.constant 7 : i32
    %220 = arith.addi %0, %c7_i32_200 : i32
    %c1_i32_201 = arith.constant 1 : i32
    %221 = arith.addi %220, %c1_i32_201 : i32
    %c0_202 = arith.constant 0 : index
    %222 = arith.index_cast %221 : i32 to index
    %c1_203 = arith.constant 1 : index
    %c0_204 = arith.constant 0 : index
    %223 = vector.load %arg2[%c0_202, %222, %c1_203, %c0_204] : memref<1x33x33x12xbf16, #tpu.memory_space<vmem>>, vector<1x1x32x12xbf16>
    %224 = vector.shape_cast %223 : vector<1x1x32x12xbf16> to vector<1x32x12xbf16>
    %225 = vector.shape_cast %224 : vector<1x32x12xbf16> to vector<32x12xbf16>
    %c224_205 = arith.constant 224 : index
    %c384_206 = arith.constant 384 : index
    %226 = vector.load %arg6[%c224_205, %c384_206] : memref<256x512xbf16, #tpu.memory_space<vmem>>, vector<32x12xbf16>
    tpu.vector_store %arg6[%c224_205, %c384_206], %225 {strides = array<i32>} : memref<256x512xbf16, #tpu.memory_space<vmem>>, vector<32x12xbf16>,
    %c0_207 = arith.constant 0 : index
    %c0_208 = arith.constant 0 : index
    %227 = vector.load %arg6[%c0_207, %c0_208] : memref<256x512xbf16, #tpu.memory_space<vmem>>, vector<256x512xbf16>
    %c0_209 = arith.constant 0 : index
    %c0_210 = arith.constant 0 : index
    %228 = vector.load %arg3[%c0_209, %c0_210] : memref<512x8xbf16, #tpu.memory_space<vmem>>, vector<512x8xbf16>
    %cst_211 = arith.constant dense<0.000000e+00> : vector<256x8xf32>
    %229 = tpu.matmul %227, %228, %cst_211 {dimension_numbers = #tpu.dot_dimension_numbers<[1], [0], [0], [1], [0, 0, 1, 1], [], []>} : vector<256x512xbf16>, vector<512x8xbf16>, vector<256x8xf32> -> vector<256x8xf32>
    %c0_212 = arith.constant 0 : index
    %c0_213 = arith.constant 0 : index
    %230 = vector.load %arg4[%c0_212, %c0_213] : memref<1x8xf32, #tpu.memory_space<vmem>>, vector<1x8xf32>
    %231 = vector.broadcast %230 : vector<1x8xf32> to vector<256x8xf32>
    %232 = arith.addf %229, %231 : vector<256x8xf32>
    %cst_214 = arith.constant 2.000000e-01 : f32
    %233 = vector.broadcast %cst_214 : f32 to vector<256x8xf32>
    %234 = arith.mulf %233, %232 : vector<256x8xf32>
    %235 = arith.maximumf %232, %234 : vector<256x8xf32>
    %236 = vector.shape_cast %235 : vector<256x8xf32> to vector<1x256x8xf32>
    %237 = arith.truncf %236 : vector<1x256x8xf32> to vector<1x256x8xbf16>
    %c0_215 = arith.constant 0 : index
    %c0_216 = arith.constant 0 : index
    %c0_217 = arith.constant 0 : index
    %238 = vector.load %arg5[%c0_215, %c0_216, %c0_217] : memref<1x256x8xbf16, #tpu.memory_space<vmem>>, vector<1x256x8xbf16>
    tpu.vector_store %arg5[%c0_215, %c0_216, %c0_217], %237 {strides = array<i32>} : memref<1x256x8xbf16, #tpu.memory_space<vmem>>, vector<1x256x8xbf16>,
    return
  }
  func.func @transform_0(%arg0: i32, %arg1: i32) -> (i32, i32, i32, i32) {
    %c0_i32 = arith.constant 0 : i32
    %c0_i32_0 = arith.constant 0 : i32
    %c0_i32_1 = arith.constant 0 : i32
    %c0_i32_2 = arith.constant 0 : i32
    return %arg0, %c0_i32, %c0_i32_0, %c0_i32_1 : i32, i32, i32, i32
  }
  func.func @transform_1(%arg0: i32, %arg1: i32) -> (i32, i32) {
    %c0_i32 = arith.constant 0 : i32
    %c0_i32_0 = arith.constant 0 : i32
    %c0_i32_1 = arith.constant 0 : i32
    return %c0_i32, %c0_i32_0 : i32, i32
  }
  func.func @transform_2(%arg0: i32, %arg1: i32) -> (i32, i32) {
    %c0_i32 = arith.constant 0 : i32
    %c0_i32_0 = arith.constant 0 : i32
    %c0_i32_1 = arith.constant 0 : i32
    return %c0_i32, %c0_i32_0 : i32, i32
  }
  func.func @transform_3(%arg0: i32, %arg1: i32) -> (i32, i32, i32) {
    %c0_i32 = arith.constant 0 : i32
    %c0_i32_0 = arith.constant 0 : i32
    return %arg0, %arg1, %c0_i32 : i32, i32, i32
  }
}

module attributes {stable_mosaic.version = 11 : i64} {
  func.func @_conv_s2d_kernel(%arg0: i32, %arg1: i32, %arg2: memref<1x17x17x32xbf16, #tpu.memory_space<vmem>>, %arg3: memref<512x16xbf16, #tpu.memory_space<vmem>>, %arg4: memref<1x16xf32, #tpu.memory_space<vmem>>, %arg5: memref<1x128x16xf32, #tpu.memory_space<vmem>>, %arg6: memref<1x1x2x16xf32, #tpu.memory_space<vmem>>, %arg7: memref<128x512xbf16, #tpu.memory_space<vmem>>) attributes {dimension_semantics = [#tpu.dimension_semantics<parallel>, #tpu.dimension_semantics<parallel>], iteration_bounds = array<i64: 2, 2>, scalar_prefetch = 0 : i64, scratch_operands = 1 : i64, tpu.core_type = #tpu.core_type<tc>, window_params = [{transform_indices = @transform_0, window_bounds = array<i64: 1, 17, 17, 32>}, {pipeline_mode = #tpu.pipeline_mode<synchronous>, transform_indices = @transform_1, window_bounds = array<i64: 512, 16>}, {pipeline_mode = #tpu.pipeline_mode<synchronous>, transform_indices = @transform_2, window_bounds = array<i64: 1, 16>}, {transform_indices = @transform_3, window_bounds = array<i64: 1, 128, 16>}, {transform_indices = @transform_4, window_bounds = array<i64: 1, 1, 2, 16>}]} {
    %c8_i32 = arith.constant 8 : i32
    %0 = arith.muli %arg1, %c8_i32 : i32
    %cst = arith.constant 0.000000e+00 : bf16
    %1 = vector.broadcast %cst : bf16 to vector<128x512xbf16>
    %c0 = arith.constant 0 : index
    %c0_0 = arith.constant 0 : index
    %2 = vector.load %arg7[%c0, %c0_0] : memref<128x512xbf16, #tpu.memory_space<vmem>>, vector<128x512xbf16>
    tpu.vector_store %arg7[%c0, %c0_0], %1 {strides = array<i32>} : memref<128x512xbf16, #tpu.memory_space<vmem>>, vector<128x512xbf16>,
    %c0_i32 = arith.constant 0 : i32
    %3 = arith.addi %0, %c0_i32 : i32
    %c0_i32_1 = arith.constant 0 : i32
    %4 = arith.addi %3, %c0_i32_1 : i32
    %c0_2 = arith.constant 0 : index
    %5 = arith.index_cast %4 : i32 to index
    %c0_3 = arith.constant 0 : index
    %c0_4 = arith.constant 0 : index
    %6 = vector.load %arg2[%c0_2, %5, %c0_3, %c0_4] : memref<1x17x17x32xbf16, #tpu.memory_space<vmem>>, vector<1x1x16x32xbf16>
    %7 = vector.shape_cast %6 : vector<1x1x16x32xbf16> to vector<1x16x32xbf16>
    %8 = vector.shape_cast %7 : vector<1x16x32xbf16> to vector<16x32xbf16>
    %c0_5 = arith.constant 0 : index
    %c0_6 = arith.constant 0 : index
    %9 = vector.load %arg7[%c0_5, %c0_6] : memref<128x512xbf16, #tpu.memory_space<vmem>>, vector<16x32xbf16>
    tpu.vector_store %arg7[%c0_5, %c0_6], %8 {strides = array<i32>} : memref<128x512xbf16, #tpu.memory_space<vmem>>, vector<16x32xbf16>,
    %c0_i32_7 = arith.constant 0 : i32
    %10 = arith.addi %0, %c0_i32_7 : i32
    %c0_i32_8 = arith.constant 0 : i32
    %11 = arith.addi %10, %c0_i32_8 : i32
    %c0_9 = arith.constant 0 : index
    %12 = arith.index_cast %11 : i32 to index
    %c1 = arith.constant 1 : index
    %c0_10 = arith.constant 0 : index
    %13 = vector.load %arg2[%c0_9, %12, %c1, %c0_10] : memref<1x17x17x32xbf16, #tpu.memory_space<vmem>>, vector<1x1x16x32xbf16>
    %14 = vector.shape_cast %13 : vector<1x1x16x32xbf16> to vector<1x16x32xbf16>
    %15 = vector.shape_cast %14 : vector<1x16x32xbf16> to vector<16x32xbf16>
    %c0_11 = arith.constant 0 : index
    %c128 = arith.constant 128 : index
    %16 = vector.load %arg7[%c0_11, %c128] : memref<128x512xbf16, #tpu.memory_space<vmem>>, vector<16x32xbf16>
    tpu.vector_store %arg7[%c0_11, %c128], %15 {strides = array<i32>} : memref<128x512xbf16, #tpu.memory_space<vmem>>, vector<16x32xbf16>,
    %c0_i32_12 = arith.constant 0 : i32
    %17 = arith.addi %0, %c0_i32_12 : i32
    %c1_i32 = arith.constant 1 : i32
    %18 = arith.addi %17, %c1_i32 : i32
    %c0_13 = arith.constant 0 : index
    %19 = arith.index_cast %18 : i32 to index
    %c0_14 = arith.constant 0 : index
    %c0_15 = arith.constant 0 : index
    %20 = vector.load %arg2[%c0_13, %19, %c0_14, %c0_15] : memref<1x17x17x32xbf16, #tpu.memory_space<vmem>>, vector<1x1x16x32xbf16>
    %21 = vector.shape_cast %20 : vector<1x1x16x32xbf16> to vector<1x16x32xbf16>
    %22 = vector.shape_cast %21 : vector<1x16x32xbf16> to vector<16x32xbf16>
    %c0_16 = arith.constant 0 : index
    %c256 = arith.constant 256 : index
    %23 = vector.load %arg7[%c0_16, %c256] : memref<128x512xbf16, #tpu.memory_space<vmem>>, vector<16x32xbf16>
    tpu.vector_store %arg7[%c0_16, %c256], %22 {strides = array<i32>} : memref<128x512xbf16, #tpu.memory_space<vmem>>, vector<16x32xbf16>,
    %c0_i32_17 = arith.constant 0 : i32
    %24 = arith.addi %0, %c0_i32_17 : i32
    %c1_i32_18 = arith.constant 1 : i32
    %25 = arith.addi %24, %c1_i32_18 : i32
    %c0_19 = arith.constant 0 : index
    %26 = arith.index_cast %25 : i32 to index
    %c1_20 = arith.constant 1 : index
    %c0_21 = arith.constant 0 : index
    %27 = vector.load %arg2[%c0_19, %26, %c1_20, %c0_21] : memref<1x17x17x32xbf16, #tpu.memory_space<vmem>>, vector<1x1x16x32xbf16>
    %28 = vector.shape_cast %27 : vector<1x1x16x32xbf16> to vector<1x16x32xbf16>
    %29 = vector.shape_cast %28 : vector<1x16x32xbf16> to vector<16x32xbf16>
    %c0_22 = arith.constant 0 : index
    %c384 = arith.constant 384 : index
    %30 = vector.load %arg7[%c0_22, %c384] : memref<128x512xbf16, #tpu.memory_space<vmem>>, vector<16x32xbf16>
    tpu.vector_store %arg7[%c0_22, %c384], %29 {strides = array<i32>} : memref<128x512xbf16, #tpu.memory_space<vmem>>, vector<16x32xbf16>,
    %c1_i32_23 = arith.constant 1 : i32
    %31 = arith.addi %0, %c1_i32_23 : i32
    %c0_i32_24 = arith.constant 0 : i32
    %32 = arith.addi %31, %c0_i32_24 : i32
    %c0_25 = arith.constant 0 : index
    %33 = arith.index_cast %32 : i32 to index
    %c0_26 = arith.constant 0 : index
    %c0_27 = arith.constant 0 : index
    %34 = vector.load %arg2[%c0_25, %33, %c0_26, %c0_27] : memref<1x17x17x32xbf16, #tpu.memory_space<vmem>>, vector<1x1x16x32xbf16>
    %35 = vector.shape_cast %34 : vector<1x1x16x32xbf16> to vector<1x16x32xbf16>
    %36 = vector.shape_cast %35 : vector<1x16x32xbf16> to vector<16x32xbf16>
    %c16 = arith.constant 16 : index
    %c0_28 = arith.constant 0 : index
    %37 = vector.load %arg7[%c16, %c0_28] : memref<128x512xbf16, #tpu.memory_space<vmem>>, vector<16x32xbf16>
    tpu.vector_store %arg7[%c16, %c0_28], %36 {strides = array<i32>} : memref<128x512xbf16, #tpu.memory_space<vmem>>, vector<16x32xbf16>,
    %c1_i32_29 = arith.constant 1 : i32
    %38 = arith.addi %0, %c1_i32_29 : i32
    %c0_i32_30 = arith.constant 0 : i32
    %39 = arith.addi %38, %c0_i32_30 : i32
    %c0_31 = arith.constant 0 : index
    %40 = arith.index_cast %39 : i32 to index
    %c1_32 = arith.constant 1 : index
    %c0_33 = arith.constant 0 : index
    %41 = vector.load %arg2[%c0_31, %40, %c1_32, %c0_33] : memref<1x17x17x32xbf16, #tpu.memory_space<vmem>>, vector<1x1x16x32xbf16>
    %42 = vector.shape_cast %41 : vector<1x1x16x32xbf16> to vector<1x16x32xbf16>
    %43 = vector.shape_cast %42 : vector<1x16x32xbf16> to vector<16x32xbf16>
    %c16_34 = arith.constant 16 : index
    %c128_35 = arith.constant 128 : index
    %44 = vector.load %arg7[%c16_34, %c128_35] : memref<128x512xbf16, #tpu.memory_space<vmem>>, vector<16x32xbf16>
    tpu.vector_store %arg7[%c16_34, %c128_35], %43 {strides = array<i32>} : memref<128x512xbf16, #tpu.memory_space<vmem>>, vector<16x32xbf16>,
    %c1_i32_36 = arith.constant 1 : i32
    %45 = arith.addi %0, %c1_i32_36 : i32
    %c1_i32_37 = arith.constant 1 : i32
    %46 = arith.addi %45, %c1_i32_37 : i32
    %c0_38 = arith.constant 0 : index
    %47 = arith.index_cast %46 : i32 to index
    %c0_39 = arith.constant 0 : index
    %c0_40 = arith.constant 0 : index
    %48 = vector.load %arg2[%c0_38, %47, %c0_39, %c0_40] : memref<1x17x17x32xbf16, #tpu.memory_space<vmem>>, vector<1x1x16x32xbf16>
    %49 = vector.shape_cast %48 : vector<1x1x16x32xbf16> to vector<1x16x32xbf16>
    %50 = vector.shape_cast %49 : vector<1x16x32xbf16> to vector<16x32xbf16>
    %c16_41 = arith.constant 16 : index
    %c256_42 = arith.constant 256 : index
    %51 = vector.load %arg7[%c16_41, %c256_42] : memref<128x512xbf16, #tpu.memory_space<vmem>>, vector<16x32xbf16>
    tpu.vector_store %arg7[%c16_41, %c256_42], %50 {strides = array<i32>} : memref<128x512xbf16, #tpu.memory_space<vmem>>, vector<16x32xbf16>,
    %c1_i32_43 = arith.constant 1 : i32
    %52 = arith.addi %0, %c1_i32_43 : i32
    %c1_i32_44 = arith.constant 1 : i32
    %53 = arith.addi %52, %c1_i32_44 : i32
    %c0_45 = arith.constant 0 : index
    %54 = arith.index_cast %53 : i32 to index
    %c1_46 = arith.constant 1 : index
    %c0_47 = arith.constant 0 : index
    %55 = vector.load %arg2[%c0_45, %54, %c1_46, %c0_47] : memref<1x17x17x32xbf16, #tpu.memory_space<vmem>>, vector<1x1x16x32xbf16>
    %56 = vector.shape_cast %55 : vector<1x1x16x32xbf16> to vector<1x16x32xbf16>
    %57 = vector.shape_cast %56 : vector<1x16x32xbf16> to vector<16x32xbf16>
    %c16_48 = arith.constant 16 : index
    %c384_49 = arith.constant 384 : index
    %58 = vector.load %arg7[%c16_48, %c384_49] : memref<128x512xbf16, #tpu.memory_space<vmem>>, vector<16x32xbf16>
    tpu.vector_store %arg7[%c16_48, %c384_49], %57 {strides = array<i32>} : memref<128x512xbf16, #tpu.memory_space<vmem>>, vector<16x32xbf16>,
    %c2_i32 = arith.constant 2 : i32
    %59 = arith.addi %0, %c2_i32 : i32
    %c0_i32_50 = arith.constant 0 : i32
    %60 = arith.addi %59, %c0_i32_50 : i32
    %c0_51 = arith.constant 0 : index
    %61 = arith.index_cast %60 : i32 to index
    %c0_52 = arith.constant 0 : index
    %c0_53 = arith.constant 0 : index
    %62 = vector.load %arg2[%c0_51, %61, %c0_52, %c0_53] : memref<1x17x17x32xbf16, #tpu.memory_space<vmem>>, vector<1x1x16x32xbf16>
    %63 = vector.shape_cast %62 : vector<1x1x16x32xbf16> to vector<1x16x32xbf16>
    %64 = vector.shape_cast %63 : vector<1x16x32xbf16> to vector<16x32xbf16>
    %c32 = arith.constant 32 : index
    %c0_54 = arith.constant 0 : index
    %65 = vector.load %arg7[%c32, %c0_54] : memref<128x512xbf16, #tpu.memory_space<vmem>>, vector<16x32xbf16>
    tpu.vector_store %arg7[%c32, %c0_54], %64 {strides = array<i32>} : memref<128x512xbf16, #tpu.memory_space<vmem>>, vector<16x32xbf16>,
    %c2_i32_55 = arith.constant 2 : i32
    %66 = arith.addi %0, %c2_i32_55 : i32
    %c0_i32_56 = arith.constant 0 : i32
    %67 = arith.addi %66, %c0_i32_56 : i32
    %c0_57 = arith.constant 0 : index
    %68 = arith.index_cast %67 : i32 to index
    %c1_58 = arith.constant 1 : index
    %c0_59 = arith.constant 0 : index
    %69 = vector.load %arg2[%c0_57, %68, %c1_58, %c0_59] : memref<1x17x17x32xbf16, #tpu.memory_space<vmem>>, vector<1x1x16x32xbf16>
    %70 = vector.shape_cast %69 : vector<1x1x16x32xbf16> to vector<1x16x32xbf16>
    %71 = vector.shape_cast %70 : vector<1x16x32xbf16> to vector<16x32xbf16>
    %c32_60 = arith.constant 32 : index
    %c128_61 = arith.constant 128 : index
    %72 = vector.load %arg7[%c32_60, %c128_61] : memref<128x512xbf16, #tpu.memory_space<vmem>>, vector<16x32xbf16>
    tpu.vector_store %arg7[%c32_60, %c128_61], %71 {strides = array<i32>} : memref<128x512xbf16, #tpu.memory_space<vmem>>, vector<16x32xbf16>,
    %c2_i32_62 = arith.constant 2 : i32
    %73 = arith.addi %0, %c2_i32_62 : i32
    %c1_i32_63 = arith.constant 1 : i32
    %74 = arith.addi %73, %c1_i32_63 : i32
    %c0_64 = arith.constant 0 : index
    %75 = arith.index_cast %74 : i32 to index
    %c0_65 = arith.constant 0 : index
    %c0_66 = arith.constant 0 : index
    %76 = vector.load %arg2[%c0_64, %75, %c0_65, %c0_66] : memref<1x17x17x32xbf16, #tpu.memory_space<vmem>>, vector<1x1x16x32xbf16>
    %77 = vector.shape_cast %76 : vector<1x1x16x32xbf16> to vector<1x16x32xbf16>
    %78 = vector.shape_cast %77 : vector<1x16x32xbf16> to vector<16x32xbf16>
    %c32_67 = arith.constant 32 : index
    %c256_68 = arith.constant 256 : index
    %79 = vector.load %arg7[%c32_67, %c256_68] : memref<128x512xbf16, #tpu.memory_space<vmem>>, vector<16x32xbf16>
    tpu.vector_store %arg7[%c32_67, %c256_68], %78 {strides = array<i32>} : memref<128x512xbf16, #tpu.memory_space<vmem>>, vector<16x32xbf16>,
    %c2_i32_69 = arith.constant 2 : i32
    %80 = arith.addi %0, %c2_i32_69 : i32
    %c1_i32_70 = arith.constant 1 : i32
    %81 = arith.addi %80, %c1_i32_70 : i32
    %c0_71 = arith.constant 0 : index
    %82 = arith.index_cast %81 : i32 to index
    %c1_72 = arith.constant 1 : index
    %c0_73 = arith.constant 0 : index
    %83 = vector.load %arg2[%c0_71, %82, %c1_72, %c0_73] : memref<1x17x17x32xbf16, #tpu.memory_space<vmem>>, vector<1x1x16x32xbf16>
    %84 = vector.shape_cast %83 : vector<1x1x16x32xbf16> to vector<1x16x32xbf16>
    %85 = vector.shape_cast %84 : vector<1x16x32xbf16> to vector<16x32xbf16>
    %c32_74 = arith.constant 32 : index
    %c384_75 = arith.constant 384 : index
    %86 = vector.load %arg7[%c32_74, %c384_75] : memref<128x512xbf16, #tpu.memory_space<vmem>>, vector<16x32xbf16>
    tpu.vector_store %arg7[%c32_74, %c384_75], %85 {strides = array<i32>} : memref<128x512xbf16, #tpu.memory_space<vmem>>, vector<16x32xbf16>,
    %c3_i32 = arith.constant 3 : i32
    %87 = arith.addi %0, %c3_i32 : i32
    %c0_i32_76 = arith.constant 0 : i32
    %88 = arith.addi %87, %c0_i32_76 : i32
    %c0_77 = arith.constant 0 : index
    %89 = arith.index_cast %88 : i32 to index
    %c0_78 = arith.constant 0 : index
    %c0_79 = arith.constant 0 : index
    %90 = vector.load %arg2[%c0_77, %89, %c0_78, %c0_79] : memref<1x17x17x32xbf16, #tpu.memory_space<vmem>>, vector<1x1x16x32xbf16>
    %91 = vector.shape_cast %90 : vector<1x1x16x32xbf16> to vector<1x16x32xbf16>
    %92 = vector.shape_cast %91 : vector<1x16x32xbf16> to vector<16x32xbf16>
    %c48 = arith.constant 48 : index
    %c0_80 = arith.constant 0 : index
    %93 = vector.load %arg7[%c48, %c0_80] : memref<128x512xbf16, #tpu.memory_space<vmem>>, vector<16x32xbf16>
    tpu.vector_store %arg7[%c48, %c0_80], %92 {strides = array<i32>} : memref<128x512xbf16, #tpu.memory_space<vmem>>, vector<16x32xbf16>,
    %c3_i32_81 = arith.constant 3 : i32
    %94 = arith.addi %0, %c3_i32_81 : i32
    %c0_i32_82 = arith.constant 0 : i32
    %95 = arith.addi %94, %c0_i32_82 : i32
    %c0_83 = arith.constant 0 : index
    %96 = arith.index_cast %95 : i32 to index
    %c1_84 = arith.constant 1 : index
    %c0_85 = arith.constant 0 : index
    %97 = vector.load %arg2[%c0_83, %96, %c1_84, %c0_85] : memref<1x17x17x32xbf16, #tpu.memory_space<vmem>>, vector<1x1x16x32xbf16>
    %98 = vector.shape_cast %97 : vector<1x1x16x32xbf16> to vector<1x16x32xbf16>
    %99 = vector.shape_cast %98 : vector<1x16x32xbf16> to vector<16x32xbf16>
    %c48_86 = arith.constant 48 : index
    %c128_87 = arith.constant 128 : index
    %100 = vector.load %arg7[%c48_86, %c128_87] : memref<128x512xbf16, #tpu.memory_space<vmem>>, vector<16x32xbf16>
    tpu.vector_store %arg7[%c48_86, %c128_87], %99 {strides = array<i32>} : memref<128x512xbf16, #tpu.memory_space<vmem>>, vector<16x32xbf16>,
    %c3_i32_88 = arith.constant 3 : i32
    %101 = arith.addi %0, %c3_i32_88 : i32
    %c1_i32_89 = arith.constant 1 : i32
    %102 = arith.addi %101, %c1_i32_89 : i32
    %c0_90 = arith.constant 0 : index
    %103 = arith.index_cast %102 : i32 to index
    %c0_91 = arith.constant 0 : index
    %c0_92 = arith.constant 0 : index
    %104 = vector.load %arg2[%c0_90, %103, %c0_91, %c0_92] : memref<1x17x17x32xbf16, #tpu.memory_space<vmem>>, vector<1x1x16x32xbf16>
    %105 = vector.shape_cast %104 : vector<1x1x16x32xbf16> to vector<1x16x32xbf16>
    %106 = vector.shape_cast %105 : vector<1x16x32xbf16> to vector<16x32xbf16>
    %c48_93 = arith.constant 48 : index
    %c256_94 = arith.constant 256 : index
    %107 = vector.load %arg7[%c48_93, %c256_94] : memref<128x512xbf16, #tpu.memory_space<vmem>>, vector<16x32xbf16>
    tpu.vector_store %arg7[%c48_93, %c256_94], %106 {strides = array<i32>} : memref<128x512xbf16, #tpu.memory_space<vmem>>, vector<16x32xbf16>,
    %c3_i32_95 = arith.constant 3 : i32
    %108 = arith.addi %0, %c3_i32_95 : i32
    %c1_i32_96 = arith.constant 1 : i32
    %109 = arith.addi %108, %c1_i32_96 : i32
    %c0_97 = arith.constant 0 : index
    %110 = arith.index_cast %109 : i32 to index
    %c1_98 = arith.constant 1 : index
    %c0_99 = arith.constant 0 : index
    %111 = vector.load %arg2[%c0_97, %110, %c1_98, %c0_99] : memref<1x17x17x32xbf16, #tpu.memory_space<vmem>>, vector<1x1x16x32xbf16>
    %112 = vector.shape_cast %111 : vector<1x1x16x32xbf16> to vector<1x16x32xbf16>
    %113 = vector.shape_cast %112 : vector<1x16x32xbf16> to vector<16x32xbf16>
    %c48_100 = arith.constant 48 : index
    %c384_101 = arith.constant 384 : index
    %114 = vector.load %arg7[%c48_100, %c384_101] : memref<128x512xbf16, #tpu.memory_space<vmem>>, vector<16x32xbf16>
    tpu.vector_store %arg7[%c48_100, %c384_101], %113 {strides = array<i32>} : memref<128x512xbf16, #tpu.memory_space<vmem>>, vector<16x32xbf16>,
    %c4_i32 = arith.constant 4 : i32
    %115 = arith.addi %0, %c4_i32 : i32
    %c0_i32_102 = arith.constant 0 : i32
    %116 = arith.addi %115, %c0_i32_102 : i32
    %c0_103 = arith.constant 0 : index
    %117 = arith.index_cast %116 : i32 to index
    %c0_104 = arith.constant 0 : index
    %c0_105 = arith.constant 0 : index
    %118 = vector.load %arg2[%c0_103, %117, %c0_104, %c0_105] : memref<1x17x17x32xbf16, #tpu.memory_space<vmem>>, vector<1x1x16x32xbf16>
    %119 = vector.shape_cast %118 : vector<1x1x16x32xbf16> to vector<1x16x32xbf16>
    %120 = vector.shape_cast %119 : vector<1x16x32xbf16> to vector<16x32xbf16>
    %c64 = arith.constant 64 : index
    %c0_106 = arith.constant 0 : index
    %121 = vector.load %arg7[%c64, %c0_106] : memref<128x512xbf16, #tpu.memory_space<vmem>>, vector<16x32xbf16>
    tpu.vector_store %arg7[%c64, %c0_106], %120 {strides = array<i32>} : memref<128x512xbf16, #tpu.memory_space<vmem>>, vector<16x32xbf16>,
    %c4_i32_107 = arith.constant 4 : i32
    %122 = arith.addi %0, %c4_i32_107 : i32
    %c0_i32_108 = arith.constant 0 : i32
    %123 = arith.addi %122, %c0_i32_108 : i32
    %c0_109 = arith.constant 0 : index
    %124 = arith.index_cast %123 : i32 to index
    %c1_110 = arith.constant 1 : index
    %c0_111 = arith.constant 0 : index
    %125 = vector.load %arg2[%c0_109, %124, %c1_110, %c0_111] : memref<1x17x17x32xbf16, #tpu.memory_space<vmem>>, vector<1x1x16x32xbf16>
    %126 = vector.shape_cast %125 : vector<1x1x16x32xbf16> to vector<1x16x32xbf16>
    %127 = vector.shape_cast %126 : vector<1x16x32xbf16> to vector<16x32xbf16>
    %c64_112 = arith.constant 64 : index
    %c128_113 = arith.constant 128 : index
    %128 = vector.load %arg7[%c64_112, %c128_113] : memref<128x512xbf16, #tpu.memory_space<vmem>>, vector<16x32xbf16>
    tpu.vector_store %arg7[%c64_112, %c128_113], %127 {strides = array<i32>} : memref<128x512xbf16, #tpu.memory_space<vmem>>, vector<16x32xbf16>,
    %c4_i32_114 = arith.constant 4 : i32
    %129 = arith.addi %0, %c4_i32_114 : i32
    %c1_i32_115 = arith.constant 1 : i32
    %130 = arith.addi %129, %c1_i32_115 : i32
    %c0_116 = arith.constant 0 : index
    %131 = arith.index_cast %130 : i32 to index
    %c0_117 = arith.constant 0 : index
    %c0_118 = arith.constant 0 : index
    %132 = vector.load %arg2[%c0_116, %131, %c0_117, %c0_118] : memref<1x17x17x32xbf16, #tpu.memory_space<vmem>>, vector<1x1x16x32xbf16>
    %133 = vector.shape_cast %132 : vector<1x1x16x32xbf16> to vector<1x16x32xbf16>
    %134 = vector.shape_cast %133 : vector<1x16x32xbf16> to vector<16x32xbf16>
    %c64_119 = arith.constant 64 : index
    %c256_120 = arith.constant 256 : index
    %135 = vector.load %arg7[%c64_119, %c256_120] : memref<128x512xbf16, #tpu.memory_space<vmem>>, vector<16x32xbf16>
    tpu.vector_store %arg7[%c64_119, %c256_120], %134 {strides = array<i32>} : memref<128x512xbf16, #tpu.memory_space<vmem>>, vector<16x32xbf16>,
    %c4_i32_121 = arith.constant 4 : i32
    %136 = arith.addi %0, %c4_i32_121 : i32
    %c1_i32_122 = arith.constant 1 : i32
    %137 = arith.addi %136, %c1_i32_122 : i32
    %c0_123 = arith.constant 0 : index
    %138 = arith.index_cast %137 : i32 to index
    %c1_124 = arith.constant 1 : index
    %c0_125 = arith.constant 0 : index
    %139 = vector.load %arg2[%c0_123, %138, %c1_124, %c0_125] : memref<1x17x17x32xbf16, #tpu.memory_space<vmem>>, vector<1x1x16x32xbf16>
    %140 = vector.shape_cast %139 : vector<1x1x16x32xbf16> to vector<1x16x32xbf16>
    %141 = vector.shape_cast %140 : vector<1x16x32xbf16> to vector<16x32xbf16>
    %c64_126 = arith.constant 64 : index
    %c384_127 = arith.constant 384 : index
    %142 = vector.load %arg7[%c64_126, %c384_127] : memref<128x512xbf16, #tpu.memory_space<vmem>>, vector<16x32xbf16>
    tpu.vector_store %arg7[%c64_126, %c384_127], %141 {strides = array<i32>} : memref<128x512xbf16, #tpu.memory_space<vmem>>, vector<16x32xbf16>,
    %c5_i32 = arith.constant 5 : i32
    %143 = arith.addi %0, %c5_i32 : i32
    %c0_i32_128 = arith.constant 0 : i32
    %144 = arith.addi %143, %c0_i32_128 : i32
    %c0_129 = arith.constant 0 : index
    %145 = arith.index_cast %144 : i32 to index
    %c0_130 = arith.constant 0 : index
    %c0_131 = arith.constant 0 : index
    %146 = vector.load %arg2[%c0_129, %145, %c0_130, %c0_131] : memref<1x17x17x32xbf16, #tpu.memory_space<vmem>>, vector<1x1x16x32xbf16>
    %147 = vector.shape_cast %146 : vector<1x1x16x32xbf16> to vector<1x16x32xbf16>
    %148 = vector.shape_cast %147 : vector<1x16x32xbf16> to vector<16x32xbf16>
    %c80 = arith.constant 80 : index
    %c0_132 = arith.constant 0 : index
    %149 = vector.load %arg7[%c80, %c0_132] : memref<128x512xbf16, #tpu.memory_space<vmem>>, vector<16x32xbf16>
    tpu.vector_store %arg7[%c80, %c0_132], %148 {strides = array<i32>} : memref<128x512xbf16, #tpu.memory_space<vmem>>, vector<16x32xbf16>,
    %c5_i32_133 = arith.constant 5 : i32
    %150 = arith.addi %0, %c5_i32_133 : i32
    %c0_i32_134 = arith.constant 0 : i32
    %151 = arith.addi %150, %c0_i32_134 : i32
    %c0_135 = arith.constant 0 : index
    %152 = arith.index_cast %151 : i32 to index
    %c1_136 = arith.constant 1 : index
    %c0_137 = arith.constant 0 : index
    %153 = vector.load %arg2[%c0_135, %152, %c1_136, %c0_137] : memref<1x17x17x32xbf16, #tpu.memory_space<vmem>>, vector<1x1x16x32xbf16>
    %154 = vector.shape_cast %153 : vector<1x1x16x32xbf16> to vector<1x16x32xbf16>
    %155 = vector.shape_cast %154 : vector<1x16x32xbf16> to vector<16x32xbf16>
    %c80_138 = arith.constant 80 : index
    %c128_139 = arith.constant 128 : index
    %156 = vector.load %arg7[%c80_138, %c128_139] : memref<128x512xbf16, #tpu.memory_space<vmem>>, vector<16x32xbf16>
    tpu.vector_store %arg7[%c80_138, %c128_139], %155 {strides = array<i32>} : memref<128x512xbf16, #tpu.memory_space<vmem>>, vector<16x32xbf16>,
    %c5_i32_140 = arith.constant 5 : i32
    %157 = arith.addi %0, %c5_i32_140 : i32
    %c1_i32_141 = arith.constant 1 : i32
    %158 = arith.addi %157, %c1_i32_141 : i32
    %c0_142 = arith.constant 0 : index
    %159 = arith.index_cast %158 : i32 to index
    %c0_143 = arith.constant 0 : index
    %c0_144 = arith.constant 0 : index
    %160 = vector.load %arg2[%c0_142, %159, %c0_143, %c0_144] : memref<1x17x17x32xbf16, #tpu.memory_space<vmem>>, vector<1x1x16x32xbf16>
    %161 = vector.shape_cast %160 : vector<1x1x16x32xbf16> to vector<1x16x32xbf16>
    %162 = vector.shape_cast %161 : vector<1x16x32xbf16> to vector<16x32xbf16>
    %c80_145 = arith.constant 80 : index
    %c256_146 = arith.constant 256 : index
    %163 = vector.load %arg7[%c80_145, %c256_146] : memref<128x512xbf16, #tpu.memory_space<vmem>>, vector<16x32xbf16>
    tpu.vector_store %arg7[%c80_145, %c256_146], %162 {strides = array<i32>} : memref<128x512xbf16, #tpu.memory_space<vmem>>, vector<16x32xbf16>,
    %c5_i32_147 = arith.constant 5 : i32
    %164 = arith.addi %0, %c5_i32_147 : i32
    %c1_i32_148 = arith.constant 1 : i32
    %165 = arith.addi %164, %c1_i32_148 : i32
    %c0_149 = arith.constant 0 : index
    %166 = arith.index_cast %165 : i32 to index
    %c1_150 = arith.constant 1 : index
    %c0_151 = arith.constant 0 : index
    %167 = vector.load %arg2[%c0_149, %166, %c1_150, %c0_151] : memref<1x17x17x32xbf16, #tpu.memory_space<vmem>>, vector<1x1x16x32xbf16>
    %168 = vector.shape_cast %167 : vector<1x1x16x32xbf16> to vector<1x16x32xbf16>
    %169 = vector.shape_cast %168 : vector<1x16x32xbf16> to vector<16x32xbf16>
    %c80_152 = arith.constant 80 : index
    %c384_153 = arith.constant 384 : index
    %170 = vector.load %arg7[%c80_152, %c384_153] : memref<128x512xbf16, #tpu.memory_space<vmem>>, vector<16x32xbf16>
    tpu.vector_store %arg7[%c80_152, %c384_153], %169 {strides = array<i32>} : memref<128x512xbf16, #tpu.memory_space<vmem>>, vector<16x32xbf16>,
    %c6_i32 = arith.constant 6 : i32
    %171 = arith.addi %0, %c6_i32 : i32
    %c0_i32_154 = arith.constant 0 : i32
    %172 = arith.addi %171, %c0_i32_154 : i32
    %c0_155 = arith.constant 0 : index
    %173 = arith.index_cast %172 : i32 to index
    %c0_156 = arith.constant 0 : index
    %c0_157 = arith.constant 0 : index
    %174 = vector.load %arg2[%c0_155, %173, %c0_156, %c0_157] : memref<1x17x17x32xbf16, #tpu.memory_space<vmem>>, vector<1x1x16x32xbf16>
    %175 = vector.shape_cast %174 : vector<1x1x16x32xbf16> to vector<1x16x32xbf16>
    %176 = vector.shape_cast %175 : vector<1x16x32xbf16> to vector<16x32xbf16>
    %c96 = arith.constant 96 : index
    %c0_158 = arith.constant 0 : index
    %177 = vector.load %arg7[%c96, %c0_158] : memref<128x512xbf16, #tpu.memory_space<vmem>>, vector<16x32xbf16>
    tpu.vector_store %arg7[%c96, %c0_158], %176 {strides = array<i32>} : memref<128x512xbf16, #tpu.memory_space<vmem>>, vector<16x32xbf16>,
    %c6_i32_159 = arith.constant 6 : i32
    %178 = arith.addi %0, %c6_i32_159 : i32
    %c0_i32_160 = arith.constant 0 : i32
    %179 = arith.addi %178, %c0_i32_160 : i32
    %c0_161 = arith.constant 0 : index
    %180 = arith.index_cast %179 : i32 to index
    %c1_162 = arith.constant 1 : index
    %c0_163 = arith.constant 0 : index
    %181 = vector.load %arg2[%c0_161, %180, %c1_162, %c0_163] : memref<1x17x17x32xbf16, #tpu.memory_space<vmem>>, vector<1x1x16x32xbf16>
    %182 = vector.shape_cast %181 : vector<1x1x16x32xbf16> to vector<1x16x32xbf16>
    %183 = vector.shape_cast %182 : vector<1x16x32xbf16> to vector<16x32xbf16>
    %c96_164 = arith.constant 96 : index
    %c128_165 = arith.constant 128 : index
    %184 = vector.load %arg7[%c96_164, %c128_165] : memref<128x512xbf16, #tpu.memory_space<vmem>>, vector<16x32xbf16>
    tpu.vector_store %arg7[%c96_164, %c128_165], %183 {strides = array<i32>} : memref<128x512xbf16, #tpu.memory_space<vmem>>, vector<16x32xbf16>,
    %c6_i32_166 = arith.constant 6 : i32
    %185 = arith.addi %0, %c6_i32_166 : i32
    %c1_i32_167 = arith.constant 1 : i32
    %186 = arith.addi %185, %c1_i32_167 : i32
    %c0_168 = arith.constant 0 : index
    %187 = arith.index_cast %186 : i32 to index
    %c0_169 = arith.constant 0 : index
    %c0_170 = arith.constant 0 : index
    %188 = vector.load %arg2[%c0_168, %187, %c0_169, %c0_170] : memref<1x17x17x32xbf16, #tpu.memory_space<vmem>>, vector<1x1x16x32xbf16>
    %189 = vector.shape_cast %188 : vector<1x1x16x32xbf16> to vector<1x16x32xbf16>
    %190 = vector.shape_cast %189 : vector<1x16x32xbf16> to vector<16x32xbf16>
    %c96_171 = arith.constant 96 : index
    %c256_172 = arith.constant 256 : index
    %191 = vector.load %arg7[%c96_171, %c256_172] : memref<128x512xbf16, #tpu.memory_space<vmem>>, vector<16x32xbf16>
    tpu.vector_store %arg7[%c96_171, %c256_172], %190 {strides = array<i32>} : memref<128x512xbf16, #tpu.memory_space<vmem>>, vector<16x32xbf16>,
    %c6_i32_173 = arith.constant 6 : i32
    %192 = arith.addi %0, %c6_i32_173 : i32
    %c1_i32_174 = arith.constant 1 : i32
    %193 = arith.addi %192, %c1_i32_174 : i32
    %c0_175 = arith.constant 0 : index
    %194 = arith.index_cast %193 : i32 to index
    %c1_176 = arith.constant 1 : index
    %c0_177 = arith.constant 0 : index
    %195 = vector.load %arg2[%c0_175, %194, %c1_176, %c0_177] : memref<1x17x17x32xbf16, #tpu.memory_space<vmem>>, vector<1x1x16x32xbf16>
    %196 = vector.shape_cast %195 : vector<1x1x16x32xbf16> to vector<1x16x32xbf16>
    %197 = vector.shape_cast %196 : vector<1x16x32xbf16> to vector<16x32xbf16>
    %c96_178 = arith.constant 96 : index
    %c384_179 = arith.constant 384 : index
    %198 = vector.load %arg7[%c96_178, %c384_179] : memref<128x512xbf16, #tpu.memory_space<vmem>>, vector<16x32xbf16>
    tpu.vector_store %arg7[%c96_178, %c384_179], %197 {strides = array<i32>} : memref<128x512xbf16, #tpu.memory_space<vmem>>, vector<16x32xbf16>,
    %c7_i32 = arith.constant 7 : i32
    %199 = arith.addi %0, %c7_i32 : i32
    %c0_i32_180 = arith.constant 0 : i32
    %200 = arith.addi %199, %c0_i32_180 : i32
    %c0_181 = arith.constant 0 : index
    %201 = arith.index_cast %200 : i32 to index
    %c0_182 = arith.constant 0 : index
    %c0_183 = arith.constant 0 : index
    %202 = vector.load %arg2[%c0_181, %201, %c0_182, %c0_183] : memref<1x17x17x32xbf16, #tpu.memory_space<vmem>>, vector<1x1x16x32xbf16>
    %203 = vector.shape_cast %202 : vector<1x1x16x32xbf16> to vector<1x16x32xbf16>
    %204 = vector.shape_cast %203 : vector<1x16x32xbf16> to vector<16x32xbf16>
    %c112 = arith.constant 112 : index
    %c0_184 = arith.constant 0 : index
    %205 = vector.load %arg7[%c112, %c0_184] : memref<128x512xbf16, #tpu.memory_space<vmem>>, vector<16x32xbf16>
    tpu.vector_store %arg7[%c112, %c0_184], %204 {strides = array<i32>} : memref<128x512xbf16, #tpu.memory_space<vmem>>, vector<16x32xbf16>,
    %c7_i32_185 = arith.constant 7 : i32
    %206 = arith.addi %0, %c7_i32_185 : i32
    %c0_i32_186 = arith.constant 0 : i32
    %207 = arith.addi %206, %c0_i32_186 : i32
    %c0_187 = arith.constant 0 : index
    %208 = arith.index_cast %207 : i32 to index
    %c1_188 = arith.constant 1 : index
    %c0_189 = arith.constant 0 : index
    %209 = vector.load %arg2[%c0_187, %208, %c1_188, %c0_189] : memref<1x17x17x32xbf16, #tpu.memory_space<vmem>>, vector<1x1x16x32xbf16>
    %210 = vector.shape_cast %209 : vector<1x1x16x32xbf16> to vector<1x16x32xbf16>
    %211 = vector.shape_cast %210 : vector<1x16x32xbf16> to vector<16x32xbf16>
    %c112_190 = arith.constant 112 : index
    %c128_191 = arith.constant 128 : index
    %212 = vector.load %arg7[%c112_190, %c128_191] : memref<128x512xbf16, #tpu.memory_space<vmem>>, vector<16x32xbf16>
    tpu.vector_store %arg7[%c112_190, %c128_191], %211 {strides = array<i32>} : memref<128x512xbf16, #tpu.memory_space<vmem>>, vector<16x32xbf16>,
    %c7_i32_192 = arith.constant 7 : i32
    %213 = arith.addi %0, %c7_i32_192 : i32
    %c1_i32_193 = arith.constant 1 : i32
    %214 = arith.addi %213, %c1_i32_193 : i32
    %c0_194 = arith.constant 0 : index
    %215 = arith.index_cast %214 : i32 to index
    %c0_195 = arith.constant 0 : index
    %c0_196 = arith.constant 0 : index
    %216 = vector.load %arg2[%c0_194, %215, %c0_195, %c0_196] : memref<1x17x17x32xbf16, #tpu.memory_space<vmem>>, vector<1x1x16x32xbf16>
    %217 = vector.shape_cast %216 : vector<1x1x16x32xbf16> to vector<1x16x32xbf16>
    %218 = vector.shape_cast %217 : vector<1x16x32xbf16> to vector<16x32xbf16>
    %c112_197 = arith.constant 112 : index
    %c256_198 = arith.constant 256 : index
    %219 = vector.load %arg7[%c112_197, %c256_198] : memref<128x512xbf16, #tpu.memory_space<vmem>>, vector<16x32xbf16>
    tpu.vector_store %arg7[%c112_197, %c256_198], %218 {strides = array<i32>} : memref<128x512xbf16, #tpu.memory_space<vmem>>, vector<16x32xbf16>,
    %c7_i32_199 = arith.constant 7 : i32
    %220 = arith.addi %0, %c7_i32_199 : i32
    %c1_i32_200 = arith.constant 1 : i32
    %221 = arith.addi %220, %c1_i32_200 : i32
    %c0_201 = arith.constant 0 : index
    %222 = arith.index_cast %221 : i32 to index
    %c1_202 = arith.constant 1 : index
    %c0_203 = arith.constant 0 : index
    %223 = vector.load %arg2[%c0_201, %222, %c1_202, %c0_203] : memref<1x17x17x32xbf16, #tpu.memory_space<vmem>>, vector<1x1x16x32xbf16>
    %224 = vector.shape_cast %223 : vector<1x1x16x32xbf16> to vector<1x16x32xbf16>
    %225 = vector.shape_cast %224 : vector<1x16x32xbf16> to vector<16x32xbf16>
    %c112_204 = arith.constant 112 : index
    %c384_205 = arith.constant 384 : index
    %226 = vector.load %arg7[%c112_204, %c384_205] : memref<128x512xbf16, #tpu.memory_space<vmem>>, vector<16x32xbf16>
    tpu.vector_store %arg7[%c112_204, %c384_205], %225 {strides = array<i32>} : memref<128x512xbf16, #tpu.memory_space<vmem>>, vector<16x32xbf16>,
    %c0_206 = arith.constant 0 : index
    %c0_207 = arith.constant 0 : index
    %227 = vector.load %arg7[%c0_206, %c0_207] : memref<128x512xbf16, #tpu.memory_space<vmem>>, vector<128x512xbf16>
    %c0_208 = arith.constant 0 : index
    %c0_209 = arith.constant 0 : index
    %228 = vector.load %arg3[%c0_208, %c0_209] : memref<512x16xbf16, #tpu.memory_space<vmem>>, vector<512x16xbf16>
    %cst_210 = arith.constant dense<0.000000e+00> : vector<128x16xf32>
    %229 = tpu.matmul %227, %228, %cst_210 {dimension_numbers = #tpu.dot_dimension_numbers<[1], [0], [0], [1], [0, 0, 1, 1], [], []>} : vector<128x512xbf16>, vector<512x16xbf16>, vector<128x16xf32> -> vector<128x16xf32>
    %c0_211 = arith.constant 0 : index
    %c0_212 = arith.constant 0 : index
    %230 = vector.load %arg4[%c0_211, %c0_212] : memref<1x16xf32, #tpu.memory_space<vmem>>, vector<1x16xf32>
    %231 = vector.broadcast %230 : vector<1x16xf32> to vector<128x16xf32>
    %232 = arith.addf %229, %231 : vector<128x16xf32>
    %233 = vector.shape_cast %232 : vector<128x16xf32> to vector<1x128x16xf32>
    %c0_213 = arith.constant 0 : index
    %c0_214 = arith.constant 0 : index
    %c0_215 = arith.constant 0 : index
    %234 = vector.load %arg5[%c0_213, %c0_214, %c0_215] : memref<1x128x16xf32, #tpu.memory_space<vmem>>, vector<1x128x16xf32>
    tpu.vector_store %arg5[%c0_213, %c0_214, %c0_215], %233 {strides = array<i32>} : memref<1x128x16xf32, #tpu.memory_space<vmem>>, vector<1x128x16xf32>,
    %cst_216 = arith.constant dense<0.000000e+00> : vector<16xf32>
    %235 = vector.multi_reduction <add>, %232, %cst_216 [0] : vector<128x16xf32> to vector<16xf32>
    %236 = vector.shape_cast %235 : vector<16xf32> to vector<1x16xf32>
    %c0_217 = arith.constant 0 : index
    %c0_218 = arith.constant 0 : index
    %c0_219 = arith.constant 0 : index
    %c0_220 = arith.constant 0 : index
    %237 = vector.load %arg6[%c0_217, %c0_218, %c0_219, %c0_220] : memref<1x1x2x16xf32, #tpu.memory_space<vmem>>, vector<1x1x1x16xf32>
    %238 = vector.shape_cast %237 : vector<1x1x1x16xf32> to vector<1x16xf32>
    %239 = vector.shape_cast %236 : vector<1x16xf32> to vector<1x1x1x16xf32>
    tpu.vector_store %arg6[%c0_217, %c0_218, %c0_219, %c0_220], %239 {strides = array<i32>} : memref<1x1x2x16xf32, #tpu.memory_space<vmem>>, vector<1x1x1x16xf32>,
    %240 = arith.mulf %232, %232 : vector<128x16xf32>
    %cst_221 = arith.constant dense<0.000000e+00> : vector<16xf32>
    %241 = vector.multi_reduction <add>, %240, %cst_221 [0] : vector<128x16xf32> to vector<16xf32>
    %242 = vector.shape_cast %241 : vector<16xf32> to vector<1x16xf32>
    %c0_222 = arith.constant 0 : index
    %c0_223 = arith.constant 0 : index
    %c1_224 = arith.constant 1 : index
    %c0_225 = arith.constant 0 : index
    %243 = vector.load %arg6[%c0_222, %c0_223, %c1_224, %c0_225] : memref<1x1x2x16xf32, #tpu.memory_space<vmem>>, vector<1x1x1x16xf32>
    %244 = vector.shape_cast %243 : vector<1x1x1x16xf32> to vector<1x16xf32>
    %245 = vector.shape_cast %242 : vector<1x16xf32> to vector<1x1x1x16xf32>
    tpu.vector_store %arg6[%c0_222, %c0_223, %c1_224, %c0_225], %245 {strides = array<i32>} : memref<1x1x2x16xf32, #tpu.memory_space<vmem>>, vector<1x1x1x16xf32>,
    return
  }
  func.func @transform_0(%arg0: i32, %arg1: i32) -> (i32, i32, i32, i32) {
    %c0_i32 = arith.constant 0 : i32
    %c0_i32_0 = arith.constant 0 : i32
    %c0_i32_1 = arith.constant 0 : i32
    %c0_i32_2 = arith.constant 0 : i32
    return %arg0, %c0_i32, %c0_i32_0, %c0_i32_1 : i32, i32, i32, i32
  }
  func.func @transform_1(%arg0: i32, %arg1: i32) -> (i32, i32) {
    %c0_i32 = arith.constant 0 : i32
    %c0_i32_0 = arith.constant 0 : i32
    %c0_i32_1 = arith.constant 0 : i32
    return %c0_i32, %c0_i32_0 : i32, i32
  }
  func.func @transform_2(%arg0: i32, %arg1: i32) -> (i32, i32) {
    %c0_i32 = arith.constant 0 : i32
    %c0_i32_0 = arith.constant 0 : i32
    %c0_i32_1 = arith.constant 0 : i32
    return %c0_i32, %c0_i32_0 : i32, i32
  }
  func.func @transform_3(%arg0: i32, %arg1: i32) -> (i32, i32, i32) {
    %c0_i32 = arith.constant 0 : i32
    %c0_i32_0 = arith.constant 0 : i32
    return %arg0, %arg1, %c0_i32 : i32, i32, i32
  }
  func.func @transform_4(%arg0: i32, %arg1: i32) -> (i32, i32, i32, i32) {
    %c0_i32 = arith.constant 0 : i32
    %c0_i32_0 = arith.constant 0 : i32
    %c0_i32_1 = arith.constant 0 : i32
    return %arg0, %arg1, %c0_i32, %c0_i32_0 : i32, i32, i32, i32
  }
}

module attributes {stable_mosaic.version = 11 : i64} {
  func.func @_affine_act_kernel(%arg0: i32, %arg1: memref<1x256x16xf32, #tpu.memory_space<vmem>>, %arg2: memref<1x16xf32, #tpu.memory_space<vmem>>, %arg3: memref<1x16xf32, #tpu.memory_space<vmem>>, %arg4: memref<1x256x16xbf16, #tpu.memory_space<vmem>>) attributes {dimension_semantics = [#tpu.dimension_semantics<parallel>], iteration_bounds = array<i64: 2>, scalar_prefetch = 0 : i64, scratch_operands = 0 : i64, tpu.core_type = #tpu.core_type<tc>, window_params = [{transform_indices = @transform_0, window_bounds = array<i64: 1, 256, 16>}, {pipeline_mode = #tpu.pipeline_mode<synchronous>, transform_indices = @transform_1, window_bounds = array<i64: 1, 16>}, {pipeline_mode = #tpu.pipeline_mode<synchronous>, transform_indices = @transform_2, window_bounds = array<i64: 1, 16>}, {transform_indices = @transform_3, window_bounds = array<i64: 1, 256, 16>}]} {
    %c0 = arith.constant 0 : index
    %c0_0 = arith.constant 0 : index
    %c0_1 = arith.constant 0 : index
    %0 = vector.load %arg1[%c0, %c0_0, %c0_1] : memref<1x256x16xf32, #tpu.memory_space<vmem>>, vector<1x256x16xf32>
    %c0_2 = arith.constant 0 : index
    %c0_3 = arith.constant 0 : index
    %1 = vector.load %arg2[%c0_2, %c0_3] : memref<1x16xf32, #tpu.memory_space<vmem>>, vector<1x16xf32>
    %2 = vector.shape_cast %1 : vector<1x16xf32> to vector<1x1x16xf32>
    %3 = vector.broadcast %2 : vector<1x1x16xf32> to vector<1x256x16xf32>
    %4 = arith.mulf %0, %3 : vector<1x256x16xf32>
    %c0_4 = arith.constant 0 : index
    %c0_5 = arith.constant 0 : index
    %5 = vector.load %arg3[%c0_4, %c0_5] : memref<1x16xf32, #tpu.memory_space<vmem>>, vector<1x16xf32>
    %6 = vector.shape_cast %5 : vector<1x16xf32> to vector<1x1x16xf32>
    %7 = vector.broadcast %6 : vector<1x1x16xf32> to vector<1x256x16xf32>
    %8 = arith.addf %4, %7 : vector<1x256x16xf32>
    %cst = arith.constant 2.000000e-01 : f32
    %9 = vector.broadcast %cst : f32 to vector<1x256x16xf32>
    %10 = arith.mulf %9, %8 : vector<1x256x16xf32>
    %11 = arith.maximumf %8, %10 : vector<1x256x16xf32>
    %12 = arith.truncf %11 : vector<1x256x16xf32> to vector<1x256x16xbf16>
    %c0_6 = arith.constant 0 : index
    %c0_7 = arith.constant 0 : index
    %c0_8 = arith.constant 0 : index
    %13 = vector.load %arg4[%c0_6, %c0_7, %c0_8] : memref<1x256x16xbf16, #tpu.memory_space<vmem>>, vector<1x256x16xbf16>
    tpu.vector_store %arg4[%c0_6, %c0_7, %c0_8], %12 {strides = array<i32>} : memref<1x256x16xbf16, #tpu.memory_space<vmem>>, vector<1x256x16xbf16>,
    return
  }
  func.func @transform_0(%arg0: i32) -> (i32, i32, i32) {
    %c0_i32 = arith.constant 0 : i32
    %c0_i32_0 = arith.constant 0 : i32
    %c0_i32_1 = arith.constant 0 : i32
    return %arg0, %c0_i32, %c0_i32_0 : i32, i32, i32
  }
  func.func @transform_1(%arg0: i32) -> (i32, i32) {
    %c0_i32 = arith.constant 0 : i32
    %c0_i32_0 = arith.constant 0 : i32
    %c0_i32_1 = arith.constant 0 : i32
    return %c0_i32, %c0_i32_0 : i32, i32
  }
  func.func @transform_2(%arg0: i32) -> (i32, i32) {
    %c0_i32 = arith.constant 0 : i32
    %c0_i32_0 = arith.constant 0 : i32
    %c0_i32_1 = arith.constant 0 : i32
    return %c0_i32, %c0_i32_0 : i32, i32
  }
  func.func @transform_3(%arg0: i32) -> (i32, i32, i32) {
    %c0_i32 = arith.constant 0 : i32
    %c0_i32_0 = arith.constant 0 : i32
    %c0_i32_1 = arith.constant 0 : i32
    return %arg0, %c0_i32, %c0_i32_0 : i32, i32, i32
  }
}

module attributes {stable_mosaic.version = 11 : i64} {
  func.func @_affine_act_kernel(%arg0: i32, %arg1: memref<1x64x32xf32, #tpu.memory_space<vmem>>, %arg2: memref<1x32xf32, #tpu.memory_space<vmem>>, %arg3: memref<1x32xf32, #tpu.memory_space<vmem>>, %arg4: memref<1x64x32xbf16, #tpu.memory_space<vmem>>) attributes {dimension_semantics = [#tpu.dimension_semantics<parallel>], iteration_bounds = array<i64: 2>, scalar_prefetch = 0 : i64, scratch_operands = 0 : i64, tpu.core_type = #tpu.core_type<tc>, window_params = [{transform_indices = @transform_0, window_bounds = array<i64: 1, 64, 32>}, {pipeline_mode = #tpu.pipeline_mode<synchronous>, transform_indices = @transform_1, window_bounds = array<i64: 1, 32>}, {pipeline_mode = #tpu.pipeline_mode<synchronous>, transform_indices = @transform_2, window_bounds = array<i64: 1, 32>}, {transform_indices = @transform_3, window_bounds = array<i64: 1, 64, 32>}]} {
    %c0 = arith.constant 0 : index
    %c0_0 = arith.constant 0 : index
    %c0_1 = arith.constant 0 : index
    %0 = vector.load %arg1[%c0, %c0_0, %c0_1] : memref<1x64x32xf32, #tpu.memory_space<vmem>>, vector<1x64x32xf32>
    %c0_2 = arith.constant 0 : index
    %c0_3 = arith.constant 0 : index
    %1 = vector.load %arg2[%c0_2, %c0_3] : memref<1x32xf32, #tpu.memory_space<vmem>>, vector<1x32xf32>
    %2 = vector.shape_cast %1 : vector<1x32xf32> to vector<1x1x32xf32>
    %3 = vector.broadcast %2 : vector<1x1x32xf32> to vector<1x64x32xf32>
    %4 = arith.mulf %0, %3 : vector<1x64x32xf32>
    %c0_4 = arith.constant 0 : index
    %c0_5 = arith.constant 0 : index
    %5 = vector.load %arg3[%c0_4, %c0_5] : memref<1x32xf32, #tpu.memory_space<vmem>>, vector<1x32xf32>
    %6 = vector.shape_cast %5 : vector<1x32xf32> to vector<1x1x32xf32>
    %7 = vector.broadcast %6 : vector<1x1x32xf32> to vector<1x64x32xf32>
    %8 = arith.addf %4, %7 : vector<1x64x32xf32>
    %cst = arith.constant 2.000000e-01 : f32
    %9 = vector.broadcast %cst : f32 to vector<1x64x32xf32>
    %10 = arith.mulf %9, %8 : vector<1x64x32xf32>
    %11 = arith.maximumf %8, %10 : vector<1x64x32xf32>
    %12 = arith.truncf %11 : vector<1x64x32xf32> to vector<1x64x32xbf16>
    %c0_6 = arith.constant 0 : index
    %c0_7 = arith.constant 0 : index
    %c0_8 = arith.constant 0 : index
    %13 = vector.load %arg4[%c0_6, %c0_7, %c0_8] : memref<1x64x32xbf16, #tpu.memory_space<vmem>>, vector<1x64x32xbf16>
    tpu.vector_store %arg4[%c0_6, %c0_7, %c0_8], %12 {strides = array<i32>} : memref<1x64x32xbf16, #tpu.memory_space<vmem>>, vector<1x64x32xbf16>,
    return
  }
  func.func @transform_0(%arg0: i32) -> (i32, i32, i32) {
    %c0_i32 = arith.constant 0 : i32
    %c0_i32_0 = arith.constant 0 : i32
    %c0_i32_1 = arith.constant 0 : i32
    return %arg0, %c0_i32, %c0_i32_0 : i32, i32, i32
  }
  func.func @transform_1(%arg0: i32) -> (i32, i32) {
    %c0_i32 = arith.constant 0 : i32
    %c0_i32_0 = arith.constant 0 : i32
    %c0_i32_1 = arith.constant 0 : i32
    return %c0_i32, %c0_i32_0 : i32, i32
  }
  func.func @transform_2(%arg0: i32) -> (i32, i32) {
    %c0_i32 = arith.constant 0 : i32
    %c0_i32_0 = arith.constant 0 : i32
    %c0_i32_1 = arith.constant 0 : i32
    return %c0_i32, %c0_i32_0 : i32, i32
  }
  func.func @transform_3(%arg0: i32) -> (i32, i32, i32) {
    %c0_i32 = arith.constant 0 : i32
    %c0_i32_0 = arith.constant 0 : i32
    %c0_i32_1 = arith.constant 0 : i32
    return %arg0, %c0_i32, %c0_i32_0 : i32, i32, i32
  }
}

module attributes {stable_mosaic.version = 11 : i64} {
  func.func @_conv_s2d_kernel(%arg0: i32, %arg1: i32, %arg2: memref<1x9x9x64xbf16, #tpu.memory_space<vmem>>, %arg3: memref<512x32xbf16, #tpu.memory_space<vmem>>, %arg4: memref<1x32xf32, #tpu.memory_space<vmem>>, %arg5: memref<1x64x32xf32, #tpu.memory_space<vmem>>, %arg6: memref<1x1x2x32xf32, #tpu.memory_space<vmem>>, %arg7: memref<64x512xbf16, #tpu.memory_space<vmem>>) attributes {dimension_semantics = [#tpu.dimension_semantics<parallel>, #tpu.dimension_semantics<parallel>], iteration_bounds = array<i64: 2, 1>, scalar_prefetch = 0 : i64, scratch_operands = 1 : i64, tpu.core_type = #tpu.core_type<tc>, window_params = [{transform_indices = @transform_0, window_bounds = array<i64: 1, 9, 9, 64>}, {pipeline_mode = #tpu.pipeline_mode<synchronous>, transform_indices = @transform_1, window_bounds = array<i64: 512, 32>}, {pipeline_mode = #tpu.pipeline_mode<synchronous>, transform_indices = @transform_2, window_bounds = array<i64: 1, 32>}, {transform_indices = @transform_3, window_bounds = array<i64: 1, 64, 32>}, {transform_indices = @transform_4, window_bounds = array<i64: 1, 1, 2, 32>}]} {
    %c8_i32 = arith.constant 8 : i32
    %0 = arith.muli %arg1, %c8_i32 : i32
    %cst = arith.constant 0.000000e+00 : bf16
    %1 = vector.broadcast %cst : bf16 to vector<64x512xbf16>
    %c0 = arith.constant 0 : index
    %c0_0 = arith.constant 0 : index
    %2 = vector.load %arg7[%c0, %c0_0] : memref<64x512xbf16, #tpu.memory_space<vmem>>, vector<64x512xbf16>
    tpu.vector_store %arg7[%c0, %c0_0], %1 {strides = array<i32>} : memref<64x512xbf16, #tpu.memory_space<vmem>>, vector<64x512xbf16>,
    %c0_i32 = arith.constant 0 : i32
    %3 = arith.addi %0, %c0_i32 : i32
    %c0_i32_1 = arith.constant 0 : i32
    %4 = arith.addi %3, %c0_i32_1 : i32
    %c0_2 = arith.constant 0 : index
    %5 = arith.index_cast %4 : i32 to index
    %c0_3 = arith.constant 0 : index
    %c0_4 = arith.constant 0 : index
    %6 = vector.load %arg2[%c0_2, %5, %c0_3, %c0_4] : memref<1x9x9x64xbf16, #tpu.memory_space<vmem>>, vector<1x1x8x64xbf16>
    %7 = vector.shape_cast %6 : vector<1x1x8x64xbf16> to vector<1x8x64xbf16>
    %8 = vector.shape_cast %7 : vector<1x8x64xbf16> to vector<8x64xbf16>
    %c0_5 = arith.constant 0 : index
    %c0_6 = arith.constant 0 : index
    %9 = vector.load %arg7[%c0_5, %c0_6] : memref<64x512xbf16, #tpu.memory_space<vmem>>, vector<8x64xbf16>
    tpu.vector_store %arg7[%c0_5, %c0_6], %8 {strides = array<i32>} : memref<64x512xbf16, #tpu.memory_space<vmem>>, vector<8x64xbf16>,
    %c0_i32_7 = arith.constant 0 : i32
    %10 = arith.addi %0, %c0_i32_7 : i32
    %c0_i32_8 = arith.constant 0 : i32
    %11 = arith.addi %10, %c0_i32_8 : i32
    %c0_9 = arith.constant 0 : index
    %12 = arith.index_cast %11 : i32 to index
    %c1 = arith.constant 1 : index
    %c0_10 = arith.constant 0 : index
    %13 = vector.load %arg2[%c0_9, %12, %c1, %c0_10] : memref<1x9x9x64xbf16, #tpu.memory_space<vmem>>, vector<1x1x8x64xbf16>
    %14 = vector.shape_cast %13 : vector<1x1x8x64xbf16> to vector<1x8x64xbf16>
    %15 = vector.shape_cast %14 : vector<1x8x64xbf16> to vector<8x64xbf16>
    %c0_11 = arith.constant 0 : index
    %c128 = arith.constant 128 : index
    %16 = vector.load %arg7[%c0_11, %c128] : memref<64x512xbf16, #tpu.memory_space<vmem>>, vector<8x64xbf16>
    tpu.vector_store %arg7[%c0_11, %c128], %15 {strides = array<i32>} : memref<64x512xbf16, #tpu.memory_space<vmem>>, vector<8x64xbf16>,
    %c0_i32_12 = arith.constant 0 : i32
    %17 = arith.addi %0, %c0_i32_12 : i32
    %c1_i32 = arith.constant 1 : i32
    %18 = arith.addi %17, %c1_i32 : i32
    %c0_13 = arith.constant 0 : index
    %19 = arith.index_cast %18 : i32 to index
    %c0_14 = arith.constant 0 : index
    %c0_15 = arith.constant 0 : index
    %20 = vector.load %arg2[%c0_13, %19, %c0_14, %c0_15] : memref<1x9x9x64xbf16, #tpu.memory_space<vmem>>, vector<1x1x8x64xbf16>
    %21 = vector.shape_cast %20 : vector<1x1x8x64xbf16> to vector<1x8x64xbf16>
    %22 = vector.shape_cast %21 : vector<1x8x64xbf16> to vector<8x64xbf16>
    %c0_16 = arith.constant 0 : index
    %c256 = arith.constant 256 : index
    %23 = vector.load %arg7[%c0_16, %c256] : memref<64x512xbf16, #tpu.memory_space<vmem>>, vector<8x64xbf16>
    tpu.vector_store %arg7[%c0_16, %c256], %22 {strides = array<i32>} : memref<64x512xbf16, #tpu.memory_space<vmem>>, vector<8x64xbf16>,
    %c0_i32_17 = arith.constant 0 : i32
    %24 = arith.addi %0, %c0_i32_17 : i32
    %c1_i32_18 = arith.constant 1 : i32
    %25 = arith.addi %24, %c1_i32_18 : i32
    %c0_19 = arith.constant 0 : index
    %26 = arith.index_cast %25 : i32 to index
    %c1_20 = arith.constant 1 : index
    %c0_21 = arith.constant 0 : index
    %27 = vector.load %arg2[%c0_19, %26, %c1_20, %c0_21] : memref<1x9x9x64xbf16, #tpu.memory_space<vmem>>, vector<1x1x8x64xbf16>
    %28 = vector.shape_cast %27 : vector<1x1x8x64xbf16> to vector<1x8x64xbf16>
    %29 = vector.shape_cast %28 : vector<1x8x64xbf16> to vector<8x64xbf16>
    %c0_22 = arith.constant 0 : index
    %c384 = arith.constant 384 : index
    %30 = vector.load %arg7[%c0_22, %c384] : memref<64x512xbf16, #tpu.memory_space<vmem>>, vector<8x64xbf16>
    tpu.vector_store %arg7[%c0_22, %c384], %29 {strides = array<i32>} : memref<64x512xbf16, #tpu.memory_space<vmem>>, vector<8x64xbf16>,
    %c1_i32_23 = arith.constant 1 : i32
    %31 = arith.addi %0, %c1_i32_23 : i32
    %c0_i32_24 = arith.constant 0 : i32
    %32 = arith.addi %31, %c0_i32_24 : i32
    %c0_25 = arith.constant 0 : index
    %33 = arith.index_cast %32 : i32 to index
    %c0_26 = arith.constant 0 : index
    %c0_27 = arith.constant 0 : index
    %34 = vector.load %arg2[%c0_25, %33, %c0_26, %c0_27] : memref<1x9x9x64xbf16, #tpu.memory_space<vmem>>, vector<1x1x8x64xbf16>
    %35 = vector.shape_cast %34 : vector<1x1x8x64xbf16> to vector<1x8x64xbf16>
    %36 = vector.shape_cast %35 : vector<1x8x64xbf16> to vector<8x64xbf16>
    %c8 = arith.constant 8 : index
    %c0_28 = arith.constant 0 : index
    %37 = vector.load %arg7[%c8, %c0_28] : memref<64x512xbf16, #tpu.memory_space<vmem>>, vector<8x64xbf16>
    tpu.vector_store %arg7[%c8, %c0_28], %36 {strides = array<i32>} : memref<64x512xbf16, #tpu.memory_space<vmem>>, vector<8x64xbf16>,
    %c1_i32_29 = arith.constant 1 : i32
    %38 = arith.addi %0, %c1_i32_29 : i32
    %c0_i32_30 = arith.constant 0 : i32
    %39 = arith.addi %38, %c0_i32_30 : i32
    %c0_31 = arith.constant 0 : index
    %40 = arith.index_cast %39 : i32 to index
    %c1_32 = arith.constant 1 : index
    %c0_33 = arith.constant 0 : index
    %41 = vector.load %arg2[%c0_31, %40, %c1_32, %c0_33] : memref<1x9x9x64xbf16, #tpu.memory_space<vmem>>, vector<1x1x8x64xbf16>
    %42 = vector.shape_cast %41 : vector<1x1x8x64xbf16> to vector<1x8x64xbf16>
    %43 = vector.shape_cast %42 : vector<1x8x64xbf16> to vector<8x64xbf16>
    %c8_34 = arith.constant 8 : index
    %c128_35 = arith.constant 128 : index
    %44 = vector.load %arg7[%c8_34, %c128_35] : memref<64x512xbf16, #tpu.memory_space<vmem>>, vector<8x64xbf16>
    tpu.vector_store %arg7[%c8_34, %c128_35], %43 {strides = array<i32>} : memref<64x512xbf16, #tpu.memory_space<vmem>>, vector<8x64xbf16>,
    %c1_i32_36 = arith.constant 1 : i32
    %45 = arith.addi %0, %c1_i32_36 : i32
    %c1_i32_37 = arith.constant 1 : i32
    %46 = arith.addi %45, %c1_i32_37 : i32
    %c0_38 = arith.constant 0 : index
    %47 = arith.index_cast %46 : i32 to index
    %c0_39 = arith.constant 0 : index
    %c0_40 = arith.constant 0 : index
    %48 = vector.load %arg2[%c0_38, %47, %c0_39, %c0_40] : memref<1x9x9x64xbf16, #tpu.memory_space<vmem>>, vector<1x1x8x64xbf16>
    %49 = vector.shape_cast %48 : vector<1x1x8x64xbf16> to vector<1x8x64xbf16>
    %50 = vector.shape_cast %49 : vector<1x8x64xbf16> to vector<8x64xbf16>
    %c8_41 = arith.constant 8 : index
    %c256_42 = arith.constant 256 : index
    %51 = vector.load %arg7[%c8_41, %c256_42] : memref<64x512xbf16, #tpu.memory_space<vmem>>, vector<8x64xbf16>
    tpu.vector_store %arg7[%c8_41, %c256_42], %50 {strides = array<i32>} : memref<64x512xbf16, #tpu.memory_space<vmem>>, vector<8x64xbf16>,
    %c1_i32_43 = arith.constant 1 : i32
    %52 = arith.addi %0, %c1_i32_43 : i32
    %c1_i32_44 = arith.constant 1 : i32
    %53 = arith.addi %52, %c1_i32_44 : i32
    %c0_45 = arith.constant 0 : index
    %54 = arith.index_cast %53 : i32 to index
    %c1_46 = arith.constant 1 : index
    %c0_47 = arith.constant 0 : index
    %55 = vector.load %arg2[%c0_45, %54, %c1_46, %c0_47] : memref<1x9x9x64xbf16, #tpu.memory_space<vmem>>, vector<1x1x8x64xbf16>
    %56 = vector.shape_cast %55 : vector<1x1x8x64xbf16> to vector<1x8x64xbf16>
    %57 = vector.shape_cast %56 : vector<1x8x64xbf16> to vector<8x64xbf16>
    %c8_48 = arith.constant 8 : index
    %c384_49 = arith.constant 384 : index
    %58 = vector.load %arg7[%c8_48, %c384_49] : memref<64x512xbf16, #tpu.memory_space<vmem>>, vector<8x64xbf16>
    tpu.vector_store %arg7[%c8_48, %c384_49], %57 {strides = array<i32>} : memref<64x512xbf16, #tpu.memory_space<vmem>>, vector<8x64xbf16>,
    %c2_i32 = arith.constant 2 : i32
    %59 = arith.addi %0, %c2_i32 : i32
    %c0_i32_50 = arith.constant 0 : i32
    %60 = arith.addi %59, %c0_i32_50 : i32
    %c0_51 = arith.constant 0 : index
    %61 = arith.index_cast %60 : i32 to index
    %c0_52 = arith.constant 0 : index
    %c0_53 = arith.constant 0 : index
    %62 = vector.load %arg2[%c0_51, %61, %c0_52, %c0_53] : memref<1x9x9x64xbf16, #tpu.memory_space<vmem>>, vector<1x1x8x64xbf16>
    %63 = vector.shape_cast %62 : vector<1x1x8x64xbf16> to vector<1x8x64xbf16>
    %64 = vector.shape_cast %63 : vector<1x8x64xbf16> to vector<8x64xbf16>
    %c16 = arith.constant 16 : index
    %c0_54 = arith.constant 0 : index
    %65 = vector.load %arg7[%c16, %c0_54] : memref<64x512xbf16, #tpu.memory_space<vmem>>, vector<8x64xbf16>
    tpu.vector_store %arg7[%c16, %c0_54], %64 {strides = array<i32>} : memref<64x512xbf16, #tpu.memory_space<vmem>>, vector<8x64xbf16>,
    %c2_i32_55 = arith.constant 2 : i32
    %66 = arith.addi %0, %c2_i32_55 : i32
    %c0_i32_56 = arith.constant 0 : i32
    %67 = arith.addi %66, %c0_i32_56 : i32
    %c0_57 = arith.constant 0 : index
    %68 = arith.index_cast %67 : i32 to index
    %c1_58 = arith.constant 1 : index
    %c0_59 = arith.constant 0 : index
    %69 = vector.load %arg2[%c0_57, %68, %c1_58, %c0_59] : memref<1x9x9x64xbf16, #tpu.memory_space<vmem>>, vector<1x1x8x64xbf16>
    %70 = vector.shape_cast %69 : vector<1x1x8x64xbf16> to vector<1x8x64xbf16>
    %71 = vector.shape_cast %70 : vector<1x8x64xbf16> to vector<8x64xbf16>
    %c16_60 = arith.constant 16 : index
    %c128_61 = arith.constant 128 : index
    %72 = vector.load %arg7[%c16_60, %c128_61] : memref<64x512xbf16, #tpu.memory_space<vmem>>, vector<8x64xbf16>
    tpu.vector_store %arg7[%c16_60, %c128_61], %71 {strides = array<i32>} : memref<64x512xbf16, #tpu.memory_space<vmem>>, vector<8x64xbf16>,
    %c2_i32_62 = arith.constant 2 : i32
    %73 = arith.addi %0, %c2_i32_62 : i32
    %c1_i32_63 = arith.constant 1 : i32
    %74 = arith.addi %73, %c1_i32_63 : i32
    %c0_64 = arith.constant 0 : index
    %75 = arith.index_cast %74 : i32 to index
    %c0_65 = arith.constant 0 : index
    %c0_66 = arith.constant 0 : index
    %76 = vector.load %arg2[%c0_64, %75, %c0_65, %c0_66] : memref<1x9x9x64xbf16, #tpu.memory_space<vmem>>, vector<1x1x8x64xbf16>
    %77 = vector.shape_cast %76 : vector<1x1x8x64xbf16> to vector<1x8x64xbf16>
    %78 = vector.shape_cast %77 : vector<1x8x64xbf16> to vector<8x64xbf16>
    %c16_67 = arith.constant 16 : index
    %c256_68 = arith.constant 256 : index
    %79 = vector.load %arg7[%c16_67, %c256_68] : memref<64x512xbf16, #tpu.memory_space<vmem>>, vector<8x64xbf16>
    tpu.vector_store %arg7[%c16_67, %c256_68], %78 {strides = array<i32>} : memref<64x512xbf16, #tpu.memory_space<vmem>>, vector<8x64xbf16>,
    %c2_i32_69 = arith.constant 2 : i32
    %80 = arith.addi %0, %c2_i32_69 : i32
    %c1_i32_70 = arith.constant 1 : i32
    %81 = arith.addi %80, %c1_i32_70 : i32
    %c0_71 = arith.constant 0 : index
    %82 = arith.index_cast %81 : i32 to index
    %c1_72 = arith.constant 1 : index
    %c0_73 = arith.constant 0 : index
    %83 = vector.load %arg2[%c0_71, %82, %c1_72, %c0_73] : memref<1x9x9x64xbf16, #tpu.memory_space<vmem>>, vector<1x1x8x64xbf16>
    %84 = vector.shape_cast %83 : vector<1x1x8x64xbf16> to vector<1x8x64xbf16>
    %85 = vector.shape_cast %84 : vector<1x8x64xbf16> to vector<8x64xbf16>
    %c16_74 = arith.constant 16 : index
    %c384_75 = arith.constant 384 : index
    %86 = vector.load %arg7[%c16_74, %c384_75] : memref<64x512xbf16, #tpu.memory_space<vmem>>, vector<8x64xbf16>
    tpu.vector_store %arg7[%c16_74, %c384_75], %85 {strides = array<i32>} : memref<64x512xbf16, #tpu.memory_space<vmem>>, vector<8x64xbf16>,
    %c3_i32 = arith.constant 3 : i32
    %87 = arith.addi %0, %c3_i32 : i32
    %c0_i32_76 = arith.constant 0 : i32
    %88 = arith.addi %87, %c0_i32_76 : i32
    %c0_77 = arith.constant 0 : index
    %89 = arith.index_cast %88 : i32 to index
    %c0_78 = arith.constant 0 : index
    %c0_79 = arith.constant 0 : index
    %90 = vector.load %arg2[%c0_77, %89, %c0_78, %c0_79] : memref<1x9x9x64xbf16, #tpu.memory_space<vmem>>, vector<1x1x8x64xbf16>
    %91 = vector.shape_cast %90 : vector<1x1x8x64xbf16> to vector<1x8x64xbf16>
    %92 = vector.shape_cast %91 : vector<1x8x64xbf16> to vector<8x64xbf16>
    %c24 = arith.constant 24 : index
    %c0_80 = arith.constant 0 : index
    %93 = vector.load %arg7[%c24, %c0_80] : memref<64x512xbf16, #tpu.memory_space<vmem>>, vector<8x64xbf16>
    tpu.vector_store %arg7[%c24, %c0_80], %92 {strides = array<i32>} : memref<64x512xbf16, #tpu.memory_space<vmem>>, vector<8x64xbf16>,
    %c3_i32_81 = arith.constant 3 : i32
    %94 = arith.addi %0, %c3_i32_81 : i32
    %c0_i32_82 = arith.constant 0 : i32
    %95 = arith.addi %94, %c0_i32_82 : i32
    %c0_83 = arith.constant 0 : index
    %96 = arith.index_cast %95 : i32 to index
    %c1_84 = arith.constant 1 : index
    %c0_85 = arith.constant 0 : index
    %97 = vector.load %arg2[%c0_83, %96, %c1_84, %c0_85] : memref<1x9x9x64xbf16, #tpu.memory_space<vmem>>, vector<1x1x8x64xbf16>
    %98 = vector.shape_cast %97 : vector<1x1x8x64xbf16> to vector<1x8x64xbf16>
    %99 = vector.shape_cast %98 : vector<1x8x64xbf16> to vector<8x64xbf16>
    %c24_86 = arith.constant 24 : index
    %c128_87 = arith.constant 128 : index
    %100 = vector.load %arg7[%c24_86, %c128_87] : memref<64x512xbf16, #tpu.memory_space<vmem>>, vector<8x64xbf16>
    tpu.vector_store %arg7[%c24_86, %c128_87], %99 {strides = array<i32>} : memref<64x512xbf16, #tpu.memory_space<vmem>>, vector<8x64xbf16>,
    %c3_i32_88 = arith.constant 3 : i32
    %101 = arith.addi %0, %c3_i32_88 : i32
    %c1_i32_89 = arith.constant 1 : i32
    %102 = arith.addi %101, %c1_i32_89 : i32
    %c0_90 = arith.constant 0 : index
    %103 = arith.index_cast %102 : i32 to index
    %c0_91 = arith.constant 0 : index
    %c0_92 = arith.constant 0 : index
    %104 = vector.load %arg2[%c0_90, %103, %c0_91, %c0_92] : memref<1x9x9x64xbf16, #tpu.memory_space<vmem>>, vector<1x1x8x64xbf16>
    %105 = vector.shape_cast %104 : vector<1x1x8x64xbf16> to vector<1x8x64xbf16>
    %106 = vector.shape_cast %105 : vector<1x8x64xbf16> to vector<8x64xbf16>
    %c24_93 = arith.constant 24 : index
    %c256_94 = arith.constant 256 : index
    %107 = vector.load %arg7[%c24_93, %c256_94] : memref<64x512xbf16, #tpu.memory_space<vmem>>, vector<8x64xbf16>
    tpu.vector_store %arg7[%c24_93, %c256_94], %106 {strides = array<i32>} : memref<64x512xbf16, #tpu.memory_space<vmem>>, vector<8x64xbf16>,
    %c3_i32_95 = arith.constant 3 : i32
    %108 = arith.addi %0, %c3_i32_95 : i32
    %c1_i32_96 = arith.constant 1 : i32
    %109 = arith.addi %108, %c1_i32_96 : i32
    %c0_97 = arith.constant 0 : index
    %110 = arith.index_cast %109 : i32 to index
    %c1_98 = arith.constant 1 : index
    %c0_99 = arith.constant 0 : index
    %111 = vector.load %arg2[%c0_97, %110, %c1_98, %c0_99] : memref<1x9x9x64xbf16, #tpu.memory_space<vmem>>, vector<1x1x8x64xbf16>
    %112 = vector.shape_cast %111 : vector<1x1x8x64xbf16> to vector<1x8x64xbf16>
    %113 = vector.shape_cast %112 : vector<1x8x64xbf16> to vector<8x64xbf16>
    %c24_100 = arith.constant 24 : index
    %c384_101 = arith.constant 384 : index
    %114 = vector.load %arg7[%c24_100, %c384_101] : memref<64x512xbf16, #tpu.memory_space<vmem>>, vector<8x64xbf16>
    tpu.vector_store %arg7[%c24_100, %c384_101], %113 {strides = array<i32>} : memref<64x512xbf16, #tpu.memory_space<vmem>>, vector<8x64xbf16>,
    %c4_i32 = arith.constant 4 : i32
    %115 = arith.addi %0, %c4_i32 : i32
    %c0_i32_102 = arith.constant 0 : i32
    %116 = arith.addi %115, %c0_i32_102 : i32
    %c0_103 = arith.constant 0 : index
    %117 = arith.index_cast %116 : i32 to index
    %c0_104 = arith.constant 0 : index
    %c0_105 = arith.constant 0 : index
    %118 = vector.load %arg2[%c0_103, %117, %c0_104, %c0_105] : memref<1x9x9x64xbf16, #tpu.memory_space<vmem>>, vector<1x1x8x64xbf16>
    %119 = vector.shape_cast %118 : vector<1x1x8x64xbf16> to vector<1x8x64xbf16>
    %120 = vector.shape_cast %119 : vector<1x8x64xbf16> to vector<8x64xbf16>
    %c32 = arith.constant 32 : index
    %c0_106 = arith.constant 0 : index
    %121 = vector.load %arg7[%c32, %c0_106] : memref<64x512xbf16, #tpu.memory_space<vmem>>, vector<8x64xbf16>
    tpu.vector_store %arg7[%c32, %c0_106], %120 {strides = array<i32>} : memref<64x512xbf16, #tpu.memory_space<vmem>>, vector<8x64xbf16>,
    %c4_i32_107 = arith.constant 4 : i32
    %122 = arith.addi %0, %c4_i32_107 : i32
    %c0_i32_108 = arith.constant 0 : i32
    %123 = arith.addi %122, %c0_i32_108 : i32
    %c0_109 = arith.constant 0 : index
    %124 = arith.index_cast %123 : i32 to index
    %c1_110 = arith.constant 1 : index
    %c0_111 = arith.constant 0 : index
    %125 = vector.load %arg2[%c0_109, %124, %c1_110, %c0_111] : memref<1x9x9x64xbf16, #tpu.memory_space<vmem>>, vector<1x1x8x64xbf16>
    %126 = vector.shape_cast %125 : vector<1x1x8x64xbf16> to vector<1x8x64xbf16>
    %127 = vector.shape_cast %126 : vector<1x8x64xbf16> to vector<8x64xbf16>
    %c32_112 = arith.constant 32 : index
    %c128_113 = arith.constant 128 : index
    %128 = vector.load %arg7[%c32_112, %c128_113] : memref<64x512xbf16, #tpu.memory_space<vmem>>, vector<8x64xbf16>
    tpu.vector_store %arg7[%c32_112, %c128_113], %127 {strides = array<i32>} : memref<64x512xbf16, #tpu.memory_space<vmem>>, vector<8x64xbf16>,
    %c4_i32_114 = arith.constant 4 : i32
    %129 = arith.addi %0, %c4_i32_114 : i32
    %c1_i32_115 = arith.constant 1 : i32
    %130 = arith.addi %129, %c1_i32_115 : i32
    %c0_116 = arith.constant 0 : index
    %131 = arith.index_cast %130 : i32 to index
    %c0_117 = arith.constant 0 : index
    %c0_118 = arith.constant 0 : index
    %132 = vector.load %arg2[%c0_116, %131, %c0_117, %c0_118] : memref<1x9x9x64xbf16, #tpu.memory_space<vmem>>, vector<1x1x8x64xbf16>
    %133 = vector.shape_cast %132 : vector<1x1x8x64xbf16> to vector<1x8x64xbf16>
    %134 = vector.shape_cast %133 : vector<1x8x64xbf16> to vector<8x64xbf16>
    %c32_119 = arith.constant 32 : index
    %c256_120 = arith.constant 256 : index
    %135 = vector.load %arg7[%c32_119, %c256_120] : memref<64x512xbf16, #tpu.memory_space<vmem>>, vector<8x64xbf16>
    tpu.vector_store %arg7[%c32_119, %c256_120], %134 {strides = array<i32>} : memref<64x512xbf16, #tpu.memory_space<vmem>>, vector<8x64xbf16>,
    %c4_i32_121 = arith.constant 4 : i32
    %136 = arith.addi %0, %c4_i32_121 : i32
    %c1_i32_122 = arith.constant 1 : i32
    %137 = arith.addi %136, %c1_i32_122 : i32
    %c0_123 = arith.constant 0 : index
    %138 = arith.index_cast %137 : i32 to index
    %c1_124 = arith.constant 1 : index
    %c0_125 = arith.constant 0 : index
    %139 = vector.load %arg2[%c0_123, %138, %c1_124, %c0_125] : memref<1x9x9x64xbf16, #tpu.memory_space<vmem>>, vector<1x1x8x64xbf16>
    %140 = vector.shape_cast %139 : vector<1x1x8x64xbf16> to vector<1x8x64xbf16>
    %141 = vector.shape_cast %140 : vector<1x8x64xbf16> to vector<8x64xbf16>
    %c32_126 = arith.constant 32 : index
    %c384_127 = arith.constant 384 : index
    %142 = vector.load %arg7[%c32_126, %c384_127] : memref<64x512xbf16, #tpu.memory_space<vmem>>, vector<8x64xbf16>
    tpu.vector_store %arg7[%c32_126, %c384_127], %141 {strides = array<i32>} : memref<64x512xbf16, #tpu.memory_space<vmem>>, vector<8x64xbf16>,
    %c5_i32 = arith.constant 5 : i32
    %143 = arith.addi %0, %c5_i32 : i32
    %c0_i32_128 = arith.constant 0 : i32
    %144 = arith.addi %143, %c0_i32_128 : i32
    %c0_129 = arith.constant 0 : index
    %145 = arith.index_cast %144 : i32 to index
    %c0_130 = arith.constant 0 : index
    %c0_131 = arith.constant 0 : index
    %146 = vector.load %arg2[%c0_129, %145, %c0_130, %c0_131] : memref<1x9x9x64xbf16, #tpu.memory_space<vmem>>, vector<1x1x8x64xbf16>
    %147 = vector.shape_cast %146 : vector<1x1x8x64xbf16> to vector<1x8x64xbf16>
    %148 = vector.shape_cast %147 : vector<1x8x64xbf16> to vector<8x64xbf16>
    %c40 = arith.constant 40 : index
    %c0_132 = arith.constant 0 : index
    %149 = vector.load %arg7[%c40, %c0_132] : memref<64x512xbf16, #tpu.memory_space<vmem>>, vector<8x64xbf16>
    tpu.vector_store %arg7[%c40, %c0_132], %148 {strides = array<i32>} : memref<64x512xbf16, #tpu.memory_space<vmem>>, vector<8x64xbf16>,
    %c5_i32_133 = arith.constant 5 : i32
    %150 = arith.addi %0, %c5_i32_133 : i32
    %c0_i32_134 = arith.constant 0 : i32
    %151 = arith.addi %150, %c0_i32_134 : i32
    %c0_135 = arith.constant 0 : index
    %152 = arith.index_cast %151 : i32 to index
    %c1_136 = arith.constant 1 : index
    %c0_137 = arith.constant 0 : index
    %153 = vector.load %arg2[%c0_135, %152, %c1_136, %c0_137] : memref<1x9x9x64xbf16, #tpu.memory_space<vmem>>, vector<1x1x8x64xbf16>
    %154 = vector.shape_cast %153 : vector<1x1x8x64xbf16> to vector<1x8x64xbf16>
    %155 = vector.shape_cast %154 : vector<1x8x64xbf16> to vector<8x64xbf16>
    %c40_138 = arith.constant 40 : index
    %c128_139 = arith.constant 128 : index
    %156 = vector.load %arg7[%c40_138, %c128_139] : memref<64x512xbf16, #tpu.memory_space<vmem>>, vector<8x64xbf16>
    tpu.vector_store %arg7[%c40_138, %c128_139], %155 {strides = array<i32>} : memref<64x512xbf16, #tpu.memory_space<vmem>>, vector<8x64xbf16>,
    %c5_i32_140 = arith.constant 5 : i32
    %157 = arith.addi %0, %c5_i32_140 : i32
    %c1_i32_141 = arith.constant 1 : i32
    %158 = arith.addi %157, %c1_i32_141 : i32
    %c0_142 = arith.constant 0 : index
    %159 = arith.index_cast %158 : i32 to index
    %c0_143 = arith.constant 0 : index
    %c0_144 = arith.constant 0 : index
    %160 = vector.load %arg2[%c0_142, %159, %c0_143, %c0_144] : memref<1x9x9x64xbf16, #tpu.memory_space<vmem>>, vector<1x1x8x64xbf16>
    %161 = vector.shape_cast %160 : vector<1x1x8x64xbf16> to vector<1x8x64xbf16>
    %162 = vector.shape_cast %161 : vector<1x8x64xbf16> to vector<8x64xbf16>
    %c40_145 = arith.constant 40 : index
    %c256_146 = arith.constant 256 : index
    %163 = vector.load %arg7[%c40_145, %c256_146] : memref<64x512xbf16, #tpu.memory_space<vmem>>, vector<8x64xbf16>
    tpu.vector_store %arg7[%c40_145, %c256_146], %162 {strides = array<i32>} : memref<64x512xbf16, #tpu.memory_space<vmem>>, vector<8x64xbf16>,
    %c5_i32_147 = arith.constant 5 : i32
    %164 = arith.addi %0, %c5_i32_147 : i32
    %c1_i32_148 = arith.constant 1 : i32
    %165 = arith.addi %164, %c1_i32_148 : i32
    %c0_149 = arith.constant 0 : index
    %166 = arith.index_cast %165 : i32 to index
    %c1_150 = arith.constant 1 : index
    %c0_151 = arith.constant 0 : index
    %167 = vector.load %arg2[%c0_149, %166, %c1_150, %c0_151] : memref<1x9x9x64xbf16, #tpu.memory_space<vmem>>, vector<1x1x8x64xbf16>
    %168 = vector.shape_cast %167 : vector<1x1x8x64xbf16> to vector<1x8x64xbf16>
    %169 = vector.shape_cast %168 : vector<1x8x64xbf16> to vector<8x64xbf16>
    %c40_152 = arith.constant 40 : index
    %c384_153 = arith.constant 384 : index
    %170 = vector.load %arg7[%c40_152, %c384_153] : memref<64x512xbf16, #tpu.memory_space<vmem>>, vector<8x64xbf16>
    tpu.vector_store %arg7[%c40_152, %c384_153], %169 {strides = array<i32>} : memref<64x512xbf16, #tpu.memory_space<vmem>>, vector<8x64xbf16>,
    %c6_i32 = arith.constant 6 : i32
    %171 = arith.addi %0, %c6_i32 : i32
    %c0_i32_154 = arith.constant 0 : i32
    %172 = arith.addi %171, %c0_i32_154 : i32
    %c0_155 = arith.constant 0 : index
    %173 = arith.index_cast %172 : i32 to index
    %c0_156 = arith.constant 0 : index
    %c0_157 = arith.constant 0 : index
    %174 = vector.load %arg2[%c0_155, %173, %c0_156, %c0_157] : memref<1x9x9x64xbf16, #tpu.memory_space<vmem>>, vector<1x1x8x64xbf16>
    %175 = vector.shape_cast %174 : vector<1x1x8x64xbf16> to vector<1x8x64xbf16>
    %176 = vector.shape_cast %175 : vector<1x8x64xbf16> to vector<8x64xbf16>
    %c48 = arith.constant 48 : index
    %c0_158 = arith.constant 0 : index
    %177 = vector.load %arg7[%c48, %c0_158] : memref<64x512xbf16, #tpu.memory_space<vmem>>, vector<8x64xbf16>
    tpu.vector_store %arg7[%c48, %c0_158], %176 {strides = array<i32>} : memref<64x512xbf16, #tpu.memory_space<vmem>>, vector<8x64xbf16>,
    %c6_i32_159 = arith.constant 6 : i32
    %178 = arith.addi %0, %c6_i32_159 : i32
    %c0_i32_160 = arith.constant 0 : i32
    %179 = arith.addi %178, %c0_i32_160 : i32
    %c0_161 = arith.constant 0 : index
    %180 = arith.index_cast %179 : i32 to index
    %c1_162 = arith.constant 1 : index
    %c0_163 = arith.constant 0 : index
    %181 = vector.load %arg2[%c0_161, %180, %c1_162, %c0_163] : memref<1x9x9x64xbf16, #tpu.memory_space<vmem>>, vector<1x1x8x64xbf16>
    %182 = vector.shape_cast %181 : vector<1x1x8x64xbf16> to vector<1x8x64xbf16>
    %183 = vector.shape_cast %182 : vector<1x8x64xbf16> to vector<8x64xbf16>
    %c48_164 = arith.constant 48 : index
    %c128_165 = arith.constant 128 : index
    %184 = vector.load %arg7[%c48_164, %c128_165] : memref<64x512xbf16, #tpu.memory_space<vmem>>, vector<8x64xbf16>
    tpu.vector_store %arg7[%c48_164, %c128_165], %183 {strides = array<i32>} : memref<64x512xbf16, #tpu.memory_space<vmem>>, vector<8x64xbf16>,
    %c6_i32_166 = arith.constant 6 : i32
    %185 = arith.addi %0, %c6_i32_166 : i32
    %c1_i32_167 = arith.constant 1 : i32
    %186 = arith.addi %185, %c1_i32_167 : i32
    %c0_168 = arith.constant 0 : index
    %187 = arith.index_cast %186 : i32 to index
    %c0_169 = arith.constant 0 : index
    %c0_170 = arith.constant 0 : index
    %188 = vector.load %arg2[%c0_168, %187, %c0_169, %c0_170] : memref<1x9x9x64xbf16, #tpu.memory_space<vmem>>, vector<1x1x8x64xbf16>
    %189 = vector.shape_cast %188 : vector<1x1x8x64xbf16> to vector<1x8x64xbf16>
    %190 = vector.shape_cast %189 : vector<1x8x64xbf16> to vector<8x64xbf16>
    %c48_171 = arith.constant 48 : index
    %c256_172 = arith.constant 256 : index
    %191 = vector.load %arg7[%c48_171, %c256_172] : memref<64x512xbf16, #tpu.memory_space<vmem>>, vector<8x64xbf16>
    tpu.vector_store %arg7[%c48_171, %c256_172], %190 {strides = array<i32>} : memref<64x512xbf16, #tpu.memory_space<vmem>>, vector<8x64xbf16>,
    %c6_i32_173 = arith.constant 6 : i32
    %192 = arith.addi %0, %c6_i32_173 : i32
    %c1_i32_174 = arith.constant 1 : i32
    %193 = arith.addi %192, %c1_i32_174 : i32
    %c0_175 = arith.constant 0 : index
    %194 = arith.index_cast %193 : i32 to index
    %c1_176 = arith.constant 1 : index
    %c0_177 = arith.constant 0 : index
    %195 = vector.load %arg2[%c0_175, %194, %c1_176, %c0_177] : memref<1x9x9x64xbf16, #tpu.memory_space<vmem>>, vector<1x1x8x64xbf16>
    %196 = vector.shape_cast %195 : vector<1x1x8x64xbf16> to vector<1x8x64xbf16>
    %197 = vector.shape_cast %196 : vector<1x8x64xbf16> to vector<8x64xbf16>
    %c48_178 = arith.constant 48 : index
    %c384_179 = arith.constant 384 : index
    %198 = vector.load %arg7[%c48_178, %c384_179] : memref<64x512xbf16, #tpu.memory_space<vmem>>, vector<8x64xbf16>
    tpu.vector_store %arg7[%c48_178, %c384_179], %197 {strides = array<i32>} : memref<64x512xbf16, #tpu.memory_space<vmem>>, vector<8x64xbf16>,
    %c7_i32 = arith.constant 7 : i32
    %199 = arith.addi %0, %c7_i32 : i32
    %c0_i32_180 = arith.constant 0 : i32
    %200 = arith.addi %199, %c0_i32_180 : i32
    %c0_181 = arith.constant 0 : index
    %201 = arith.index_cast %200 : i32 to index
    %c0_182 = arith.constant 0 : index
    %c0_183 = arith.constant 0 : index
    %202 = vector.load %arg2[%c0_181, %201, %c0_182, %c0_183] : memref<1x9x9x64xbf16, #tpu.memory_space<vmem>>, vector<1x1x8x64xbf16>
    %203 = vector.shape_cast %202 : vector<1x1x8x64xbf16> to vector<1x8x64xbf16>
    %204 = vector.shape_cast %203 : vector<1x8x64xbf16> to vector<8x64xbf16>
    %c56 = arith.constant 56 : index
    %c0_184 = arith.constant 0 : index
    %205 = vector.load %arg7[%c56, %c0_184] : memref<64x512xbf16, #tpu.memory_space<vmem>>, vector<8x64xbf16>
    tpu.vector_store %arg7[%c56, %c0_184], %204 {strides = array<i32>} : memref<64x512xbf16, #tpu.memory_space<vmem>>, vector<8x64xbf16>,
    %c7_i32_185 = arith.constant 7 : i32
    %206 = arith.addi %0, %c7_i32_185 : i32
    %c0_i32_186 = arith.constant 0 : i32
    %207 = arith.addi %206, %c0_i32_186 : i32
    %c0_187 = arith.constant 0 : index
    %208 = arith.index_cast %207 : i32 to index
    %c1_188 = arith.constant 1 : index
    %c0_189 = arith.constant 0 : index
    %209 = vector.load %arg2[%c0_187, %208, %c1_188, %c0_189] : memref<1x9x9x64xbf16, #tpu.memory_space<vmem>>, vector<1x1x8x64xbf16>
    %210 = vector.shape_cast %209 : vector<1x1x8x64xbf16> to vector<1x8x64xbf16>
    %211 = vector.shape_cast %210 : vector<1x8x64xbf16> to vector<8x64xbf16>
    %c56_190 = arith.constant 56 : index
    %c128_191 = arith.constant 128 : index
    %212 = vector.load %arg7[%c56_190, %c128_191] : memref<64x512xbf16, #tpu.memory_space<vmem>>, vector<8x64xbf16>
    tpu.vector_store %arg7[%c56_190, %c128_191], %211 {strides = array<i32>} : memref<64x512xbf16, #tpu.memory_space<vmem>>, vector<8x64xbf16>,
    %c7_i32_192 = arith.constant 7 : i32
    %213 = arith.addi %0, %c7_i32_192 : i32
    %c1_i32_193 = arith.constant 1 : i32
    %214 = arith.addi %213, %c1_i32_193 : i32
    %c0_194 = arith.constant 0 : index
    %215 = arith.index_cast %214 : i32 to index
    %c0_195 = arith.constant 0 : index
    %c0_196 = arith.constant 0 : index
    %216 = vector.load %arg2[%c0_194, %215, %c0_195, %c0_196] : memref<1x9x9x64xbf16, #tpu.memory_space<vmem>>, vector<1x1x8x64xbf16>
    %217 = vector.shape_cast %216 : vector<1x1x8x64xbf16> to vector<1x8x64xbf16>
    %218 = vector.shape_cast %217 : vector<1x8x64xbf16> to vector<8x64xbf16>
    %c56_197 = arith.constant 56 : index
    %c256_198 = arith.constant 256 : index
    %219 = vector.load %arg7[%c56_197, %c256_198] : memref<64x512xbf16, #tpu.memory_space<vmem>>, vector<8x64xbf16>
    tpu.vector_store %arg7[%c56_197, %c256_198], %218 {strides = array<i32>} : memref<64x512xbf16, #tpu.memory_space<vmem>>, vector<8x64xbf16>,
    %c7_i32_199 = arith.constant 7 : i32
    %220 = arith.addi %0, %c7_i32_199 : i32
    %c1_i32_200 = arith.constant 1 : i32
    %221 = arith.addi %220, %c1_i32_200 : i32
    %c0_201 = arith.constant 0 : index
    %222 = arith.index_cast %221 : i32 to index
    %c1_202 = arith.constant 1 : index
    %c0_203 = arith.constant 0 : index
    %223 = vector.load %arg2[%c0_201, %222, %c1_202, %c0_203] : memref<1x9x9x64xbf16, #tpu.memory_space<vmem>>, vector<1x1x8x64xbf16>
    %224 = vector.shape_cast %223 : vector<1x1x8x64xbf16> to vector<1x8x64xbf16>
    %225 = vector.shape_cast %224 : vector<1x8x64xbf16> to vector<8x64xbf16>
    %c56_204 = arith.constant 56 : index
    %c384_205 = arith.constant 384 : index
    %226 = vector.load %arg7[%c56_204, %c384_205] : memref<64x512xbf16, #tpu.memory_space<vmem>>, vector<8x64xbf16>
    tpu.vector_store %arg7[%c56_204, %c384_205], %225 {strides = array<i32>} : memref<64x512xbf16, #tpu.memory_space<vmem>>, vector<8x64xbf16>,
    %c0_206 = arith.constant 0 : index
    %c0_207 = arith.constant 0 : index
    %227 = vector.load %arg7[%c0_206, %c0_207] : memref<64x512xbf16, #tpu.memory_space<vmem>>, vector<64x512xbf16>
    %c0_208 = arith.constant 0 : index
    %c0_209 = arith.constant 0 : index
    %228 = vector.load %arg3[%c0_208, %c0_209] : memref<512x32xbf16, #tpu.memory_space<vmem>>, vector<512x32xbf16>
    %cst_210 = arith.constant dense<0.000000e+00> : vector<64x32xf32>
    %229 = tpu.matmul %227, %228, %cst_210 {dimension_numbers = #tpu.dot_dimension_numbers<[1], [0], [0], [1], [0, 0, 1, 1], [], []>} : vector<64x512xbf16>, vector<512x32xbf16>, vector<64x32xf32> -> vector<64x32xf32>
    %c0_211 = arith.constant 0 : index
    %c0_212 = arith.constant 0 : index
    %230 = vector.load %arg4[%c0_211, %c0_212] : memref<1x32xf32, #tpu.memory_space<vmem>>, vector<1x32xf32>
    %231 = vector.broadcast %230 : vector<1x32xf32> to vector<64x32xf32>
    %232 = arith.addf %229, %231 : vector<64x32xf32>
    %233 = vector.shape_cast %232 : vector<64x32xf32> to vector<1x64x32xf32>
    %c0_213 = arith.constant 0 : index
    %c0_214 = arith.constant 0 : index
    %c0_215 = arith.constant 0 : index
    %234 = vector.load %arg5[%c0_213, %c0_214, %c0_215] : memref<1x64x32xf32, #tpu.memory_space<vmem>>, vector<1x64x32xf32>
    tpu.vector_store %arg5[%c0_213, %c0_214, %c0_215], %233 {strides = array<i32>} : memref<1x64x32xf32, #tpu.memory_space<vmem>>, vector<1x64x32xf32>,
    %cst_216 = arith.constant dense<0.000000e+00> : vector<32xf32>
    %235 = vector.multi_reduction <add>, %232, %cst_216 [0] : vector<64x32xf32> to vector<32xf32>
    %236 = vector.shape_cast %235 : vector<32xf32> to vector<1x32xf32>
    %c0_217 = arith.constant 0 : index
    %c0_218 = arith.constant 0 : index
    %c0_219 = arith.constant 0 : index
    %c0_220 = arith.constant 0 : index
    %237 = vector.load %arg6[%c0_217, %c0_218, %c0_219, %c0_220] : memref<1x1x2x32xf32, #tpu.memory_space<vmem>>, vector<1x1x1x32xf32>
    %238 = vector.shape_cast %237 : vector<1x1x1x32xf32> to vector<1x32xf32>
    %239 = vector.shape_cast %236 : vector<1x32xf32> to vector<1x1x1x32xf32>
    tpu.vector_store %arg6[%c0_217, %c0_218, %c0_219, %c0_220], %239 {strides = array<i32>} : memref<1x1x2x32xf32, #tpu.memory_space<vmem>>, vector<1x1x1x32xf32>,
    %240 = arith.mulf %232, %232 : vector<64x32xf32>
    %cst_221 = arith.constant dense<0.000000e+00> : vector<32xf32>
    %241 = vector.multi_reduction <add>, %240, %cst_221 [0] : vector<64x32xf32> to vector<32xf32>
    %242 = vector.shape_cast %241 : vector<32xf32> to vector<1x32xf32>
    %c0_222 = arith.constant 0 : index
    %c0_223 = arith.constant 0 : index
    %c1_224 = arith.constant 1 : index
    %c0_225 = arith.constant 0 : index
    %243 = vector.load %arg6[%c0_222, %c0_223, %c1_224, %c0_225] : memref<1x1x2x32xf32, #tpu.memory_space<vmem>>, vector<1x1x1x32xf32>
    %244 = vector.shape_cast %243 : vector<1x1x1x32xf32> to vector<1x32xf32>
    %245 = vector.shape_cast %242 : vector<1x32xf32> to vector<1x1x1x32xf32>
    tpu.vector_store %arg6[%c0_222, %c0_223, %c1_224, %c0_225], %245 {strides = array<i32>} : memref<1x1x2x32xf32, #tpu.memory_space<vmem>>, vector<1x1x1x32xf32>,
    return
  }
  func.func @transform_0(%arg0: i32, %arg1: i32) -> (i32, i32, i32, i32) {
    %c0_i32 = arith.constant 0 : i32
    %c0_i32_0 = arith.constant 0 : i32
    %c0_i32_1 = arith.constant 0 : i32
    %c0_i32_2 = arith.constant 0 : i32
    return %arg0, %c0_i32, %c0_i32_0, %c0_i32_1 : i32, i32, i32, i32
  }
  func.func @transform_1(%arg0: i32, %arg1: i32) -> (i32, i32) {
    %c0_i32 = arith.constant 0 : i32
    %c0_i32_0 = arith.constant 0 : i32
    %c0_i32_1 = arith.constant 0 : i32
    return %c0_i32, %c0_i32_0 : i32, i32
  }
  func.func @transform_2(%arg0: i32, %arg1: i32) -> (i32, i32) {
    %c0_i32 = arith.constant 0 : i32
    %c0_i32_0 = arith.constant 0 : i32
    %c0_i32_1 = arith.constant 0 : i32
    return %c0_i32, %c0_i32_0 : i32, i32
  }
  func.func @transform_3(%arg0: i32, %arg1: i32) -> (i32, i32, i32) {
    %c0_i32 = arith.constant 0 : i32
    %c0_i32_0 = arith.constant 0 : i32
    return %arg0, %arg1, %c0_i32 : i32, i32, i32
  }
  func.func @transform_4(%arg0: i32, %arg1: i32) -> (i32, i32, i32, i32) {
    %c0_i32 = arith.constant 0 : i32
    %c0_i32_0 = arith.constant 0 : i32
    %c0_i32_1 = arith.constant 0 : i32
    return %arg0, %arg1, %c0_i32, %c0_i32_0 : i32, i32, i32, i32
  }
}

module attributes {stable_mosaic.version = 11 : i64} {
  func.func @_conv_s2d_kernel(%arg0: i32, %arg1: i32, %arg2: memref<1x5x5x128xbf16, #tpu.memory_space<vmem>>, %arg3: memref<512x64xbf16, #tpu.memory_space<vmem>>, %arg4: memref<1x64xf32, #tpu.memory_space<vmem>>, %arg5: memref<1x16x64xf32, #tpu.memory_space<vmem>>, %arg6: memref<1x1x2x64xf32, #tpu.memory_space<vmem>>, %arg7: memref<16x512xbf16, #tpu.memory_space<vmem>>) attributes {dimension_semantics = [#tpu.dimension_semantics<parallel>, #tpu.dimension_semantics<parallel>], iteration_bounds = array<i64: 2, 1>, scalar_prefetch = 0 : i64, scratch_operands = 1 : i64, tpu.core_type = #tpu.core_type<tc>, window_params = [{transform_indices = @transform_0, window_bounds = array<i64: 1, 5, 5, 128>}, {pipeline_mode = #tpu.pipeline_mode<synchronous>, transform_indices = @transform_1, window_bounds = array<i64: 512, 64>}, {pipeline_mode = #tpu.pipeline_mode<synchronous>, transform_indices = @transform_2, window_bounds = array<i64: 1, 64>}, {transform_indices = @transform_3, window_bounds = array<i64: 1, 16, 64>}, {transform_indices = @transform_4, window_bounds = array<i64: 1, 1, 2, 64>}]} {
    %c4_i32 = arith.constant 4 : i32
    %0 = arith.muli %arg1, %c4_i32 : i32
    %c0_i32 = arith.constant 0 : i32
    %1 = arith.addi %0, %c0_i32 : i32
    %c0_i32_0 = arith.constant 0 : i32
    %2 = arith.addi %1, %c0_i32_0 : i32
    %c0 = arith.constant 0 : index
    %3 = arith.index_cast %2 : i32 to index
    %c0_1 = arith.constant 0 : index
    %c0_2 = arith.constant 0 : index
    %4 = vector.load %arg2[%c0, %3, %c0_1, %c0_2] : memref<1x5x5x128xbf16, #tpu.memory_space<vmem>>, vector<1x1x4x128xbf16>
    %5 = vector.shape_cast %4 : vector<1x1x4x128xbf16> to vector<1x4x128xbf16>
    %6 = vector.shape_cast %5 : vector<1x4x128xbf16> to vector<4x128xbf16>
    %c0_3 = arith.constant 0 : index
    %c0_4 = arith.constant 0 : index
    %7 = vector.load %arg7[%c0_3, %c0_4] : memref<16x512xbf16, #tpu.memory_space<vmem>>, vector<4x128xbf16>
    tpu.vector_store %arg7[%c0_3, %c0_4], %6 {strides = array<i32>} : memref<16x512xbf16, #tpu.memory_space<vmem>>, vector<4x128xbf16>,
    %c0_i32_5 = arith.constant 0 : i32
    %8 = arith.addi %0, %c0_i32_5 : i32
    %c0_i32_6 = arith.constant 0 : i32
    %9 = arith.addi %8, %c0_i32_6 : i32
    %c0_7 = arith.constant 0 : index
    %10 = arith.index_cast %9 : i32 to index
    %c1 = arith.constant 1 : index
    %c0_8 = arith.constant 0 : index
    %11 = vector.load %arg2[%c0_7, %10, %c1, %c0_8] : memref<1x5x5x128xbf16, #tpu.memory_space<vmem>>, vector<1x1x4x128xbf16>
    %12 = vector.shape_cast %11 : vector<1x1x4x128xbf16> to vector<1x4x128xbf16>
    %13 = vector.shape_cast %12 : vector<1x4x128xbf16> to vector<4x128xbf16>
    %c0_9 = arith.constant 0 : index
    %c128 = arith.constant 128 : index
    %14 = vector.load %arg7[%c0_9, %c128] : memref<16x512xbf16, #tpu.memory_space<vmem>>, vector<4x128xbf16>
    tpu.vector_store %arg7[%c0_9, %c128], %13 {strides = array<i32>} : memref<16x512xbf16, #tpu.memory_space<vmem>>, vector<4x128xbf16>,
    %c0_i32_10 = arith.constant 0 : i32
    %15 = arith.addi %0, %c0_i32_10 : i32
    %c1_i32 = arith.constant 1 : i32
    %16 = arith.addi %15, %c1_i32 : i32
    %c0_11 = arith.constant 0 : index
    %17 = arith.index_cast %16 : i32 to index
    %c0_12 = arith.constant 0 : index
    %c0_13 = arith.constant 0 : index
    %18 = vector.load %arg2[%c0_11, %17, %c0_12, %c0_13] : memref<1x5x5x128xbf16, #tpu.memory_space<vmem>>, vector<1x1x4x128xbf16>
    %19 = vector.shape_cast %18 : vector<1x1x4x128xbf16> to vector<1x4x128xbf16>
    %20 = vector.shape_cast %19 : vector<1x4x128xbf16> to vector<4x128xbf16>
    %c0_14 = arith.constant 0 : index
    %c256 = arith.constant 256 : index
    %21 = vector.load %arg7[%c0_14, %c256] : memref<16x512xbf16, #tpu.memory_space<vmem>>, vector<4x128xbf16>
    tpu.vector_store %arg7[%c0_14, %c256], %20 {strides = array<i32>} : memref<16x512xbf16, #tpu.memory_space<vmem>>, vector<4x128xbf16>,
    %c0_i32_15 = arith.constant 0 : i32
    %22 = arith.addi %0, %c0_i32_15 : i32
    %c1_i32_16 = arith.constant 1 : i32
    %23 = arith.addi %22, %c1_i32_16 : i32
    %c0_17 = arith.constant 0 : index
    %24 = arith.index_cast %23 : i32 to index
    %c1_18 = arith.constant 1 : index
    %c0_19 = arith.constant 0 : index
    %25 = vector.load %arg2[%c0_17, %24, %c1_18, %c0_19] : memref<1x5x5x128xbf16, #tpu.memory_space<vmem>>, vector<1x1x4x128xbf16>
    %26 = vector.shape_cast %25 : vector<1x1x4x128xbf16> to vector<1x4x128xbf16>
    %27 = vector.shape_cast %26 : vector<1x4x128xbf16> to vector<4x128xbf16>
    %c0_20 = arith.constant 0 : index
    %c384 = arith.constant 384 : index
    %28 = vector.load %arg7[%c0_20, %c384] : memref<16x512xbf16, #tpu.memory_space<vmem>>, vector<4x128xbf16>
    tpu.vector_store %arg7[%c0_20, %c384], %27 {strides = array<i32>} : memref<16x512xbf16, #tpu.memory_space<vmem>>, vector<4x128xbf16>,
    %c1_i32_21 = arith.constant 1 : i32
    %29 = arith.addi %0, %c1_i32_21 : i32
    %c0_i32_22 = arith.constant 0 : i32
    %30 = arith.addi %29, %c0_i32_22 : i32
    %c0_23 = arith.constant 0 : index
    %31 = arith.index_cast %30 : i32 to index
    %c0_24 = arith.constant 0 : index
    %c0_25 = arith.constant 0 : index
    %32 = vector.load %arg2[%c0_23, %31, %c0_24, %c0_25] : memref<1x5x5x128xbf16, #tpu.memory_space<vmem>>, vector<1x1x4x128xbf16>
    %33 = vector.shape_cast %32 : vector<1x1x4x128xbf16> to vector<1x4x128xbf16>
    %34 = vector.shape_cast %33 : vector<1x4x128xbf16> to vector<4x128xbf16>
    %c4 = arith.constant 4 : index
    %c0_26 = arith.constant 0 : index
    %35 = vector.load %arg7[%c4, %c0_26] : memref<16x512xbf16, #tpu.memory_space<vmem>>, vector<4x128xbf16>
    tpu.vector_store %arg7[%c4, %c0_26], %34 {strides = array<i32>} : memref<16x512xbf16, #tpu.memory_space<vmem>>, vector<4x128xbf16>,
    %c1_i32_27 = arith.constant 1 : i32
    %36 = arith.addi %0, %c1_i32_27 : i32
    %c0_i32_28 = arith.constant 0 : i32
    %37 = arith.addi %36, %c0_i32_28 : i32
    %c0_29 = arith.constant 0 : index
    %38 = arith.index_cast %37 : i32 to index
    %c1_30 = arith.constant 1 : index
    %c0_31 = arith.constant 0 : index
    %39 = vector.load %arg2[%c0_29, %38, %c1_30, %c0_31] : memref<1x5x5x128xbf16, #tpu.memory_space<vmem>>, vector<1x1x4x128xbf16>
    %40 = vector.shape_cast %39 : vector<1x1x4x128xbf16> to vector<1x4x128xbf16>
    %41 = vector.shape_cast %40 : vector<1x4x128xbf16> to vector<4x128xbf16>
    %c4_32 = arith.constant 4 : index
    %c128_33 = arith.constant 128 : index
    %42 = vector.load %arg7[%c4_32, %c128_33] : memref<16x512xbf16, #tpu.memory_space<vmem>>, vector<4x128xbf16>
    tpu.vector_store %arg7[%c4_32, %c128_33], %41 {strides = array<i32>} : memref<16x512xbf16, #tpu.memory_space<vmem>>, vector<4x128xbf16>,
    %c1_i32_34 = arith.constant 1 : i32
    %43 = arith.addi %0, %c1_i32_34 : i32
    %c1_i32_35 = arith.constant 1 : i32
    %44 = arith.addi %43, %c1_i32_35 : i32
    %c0_36 = arith.constant 0 : index
    %45 = arith.index_cast %44 : i32 to index
    %c0_37 = arith.constant 0 : index
    %c0_38 = arith.constant 0 : index
    %46 = vector.load %arg2[%c0_36, %45, %c0_37, %c0_38] : memref<1x5x5x128xbf16, #tpu.memory_space<vmem>>, vector<1x1x4x128xbf16>
    %47 = vector.shape_cast %46 : vector<1x1x4x128xbf16> to vector<1x4x128xbf16>
    %48 = vector.shape_cast %47 : vector<1x4x128xbf16> to vector<4x128xbf16>
    %c4_39 = arith.constant 4 : index
    %c256_40 = arith.constant 256 : index
    %49 = vector.load %arg7[%c4_39, %c256_40] : memref<16x512xbf16, #tpu.memory_space<vmem>>, vector<4x128xbf16>
    tpu.vector_store %arg7[%c4_39, %c256_40], %48 {strides = array<i32>} : memref<16x512xbf16, #tpu.memory_space<vmem>>, vector<4x128xbf16>,
    %c1_i32_41 = arith.constant 1 : i32
    %50 = arith.addi %0, %c1_i32_41 : i32
    %c1_i32_42 = arith.constant 1 : i32
    %51 = arith.addi %50, %c1_i32_42 : i32
    %c0_43 = arith.constant 0 : index
    %52 = arith.index_cast %51 : i32 to index
    %c1_44 = arith.constant 1 : index
    %c0_45 = arith.constant 0 : index
    %53 = vector.load %arg2[%c0_43, %52, %c1_44, %c0_45] : memref<1x5x5x128xbf16, #tpu.memory_space<vmem>>, vector<1x1x4x128xbf16>
    %54 = vector.shape_cast %53 : vector<1x1x4x128xbf16> to vector<1x4x128xbf16>
    %55 = vector.shape_cast %54 : vector<1x4x128xbf16> to vector<4x128xbf16>
    %c4_46 = arith.constant 4 : index
    %c384_47 = arith.constant 384 : index
    %56 = vector.load %arg7[%c4_46, %c384_47] : memref<16x512xbf16, #tpu.memory_space<vmem>>, vector<4x128xbf16>
    tpu.vector_store %arg7[%c4_46, %c384_47], %55 {strides = array<i32>} : memref<16x512xbf16, #tpu.memory_space<vmem>>, vector<4x128xbf16>,
    %c2_i32 = arith.constant 2 : i32
    %57 = arith.addi %0, %c2_i32 : i32
    %c0_i32_48 = arith.constant 0 : i32
    %58 = arith.addi %57, %c0_i32_48 : i32
    %c0_49 = arith.constant 0 : index
    %59 = arith.index_cast %58 : i32 to index
    %c0_50 = arith.constant 0 : index
    %c0_51 = arith.constant 0 : index
    %60 = vector.load %arg2[%c0_49, %59, %c0_50, %c0_51] : memref<1x5x5x128xbf16, #tpu.memory_space<vmem>>, vector<1x1x4x128xbf16>
    %61 = vector.shape_cast %60 : vector<1x1x4x128xbf16> to vector<1x4x128xbf16>
    %62 = vector.shape_cast %61 : vector<1x4x128xbf16> to vector<4x128xbf16>
    %c8 = arith.constant 8 : index
    %c0_52 = arith.constant 0 : index
    %63 = vector.load %arg7[%c8, %c0_52] : memref<16x512xbf16, #tpu.memory_space<vmem>>, vector<4x128xbf16>
    tpu.vector_store %arg7[%c8, %c0_52], %62 {strides = array<i32>} : memref<16x512xbf16, #tpu.memory_space<vmem>>, vector<4x128xbf16>,
    %c2_i32_53 = arith.constant 2 : i32
    %64 = arith.addi %0, %c2_i32_53 : i32
    %c0_i32_54 = arith.constant 0 : i32
    %65 = arith.addi %64, %c0_i32_54 : i32
    %c0_55 = arith.constant 0 : index
    %66 = arith.index_cast %65 : i32 to index
    %c1_56 = arith.constant 1 : index
    %c0_57 = arith.constant 0 : index
    %67 = vector.load %arg2[%c0_55, %66, %c1_56, %c0_57] : memref<1x5x5x128xbf16, #tpu.memory_space<vmem>>, vector<1x1x4x128xbf16>
    %68 = vector.shape_cast %67 : vector<1x1x4x128xbf16> to vector<1x4x128xbf16>
    %69 = vector.shape_cast %68 : vector<1x4x128xbf16> to vector<4x128xbf16>
    %c8_58 = arith.constant 8 : index
    %c128_59 = arith.constant 128 : index
    %70 = vector.load %arg7[%c8_58, %c128_59] : memref<16x512xbf16, #tpu.memory_space<vmem>>, vector<4x128xbf16>
    tpu.vector_store %arg7[%c8_58, %c128_59], %69 {strides = array<i32>} : memref<16x512xbf16, #tpu.memory_space<vmem>>, vector<4x128xbf16>,
    %c2_i32_60 = arith.constant 2 : i32
    %71 = arith.addi %0, %c2_i32_60 : i32
    %c1_i32_61 = arith.constant 1 : i32
    %72 = arith.addi %71, %c1_i32_61 : i32
    %c0_62 = arith.constant 0 : index
    %73 = arith.index_cast %72 : i32 to index
    %c0_63 = arith.constant 0 : index
    %c0_64 = arith.constant 0 : index
    %74 = vector.load %arg2[%c0_62, %73, %c0_63, %c0_64] : memref<1x5x5x128xbf16, #tpu.memory_space<vmem>>, vector<1x1x4x128xbf16>
    %75 = vector.shape_cast %74 : vector<1x1x4x128xbf16> to vector<1x4x128xbf16>
    %76 = vector.shape_cast %75 : vector<1x4x128xbf16> to vector<4x128xbf16>
    %c8_65 = arith.constant 8 : index
    %c256_66 = arith.constant 256 : index
    %77 = vector.load %arg7[%c8_65, %c256_66] : memref<16x512xbf16, #tpu.memory_space<vmem>>, vector<4x128xbf16>
    tpu.vector_store %arg7[%c8_65, %c256_66], %76 {strides = array<i32>} : memref<16x512xbf16, #tpu.memory_space<vmem>>, vector<4x128xbf16>,
    %c2_i32_67 = arith.constant 2 : i32
    %78 = arith.addi %0, %c2_i32_67 : i32
    %c1_i32_68 = arith.constant 1 : i32
    %79 = arith.addi %78, %c1_i32_68 : i32
    %c0_69 = arith.constant 0 : index
    %80 = arith.index_cast %79 : i32 to index
    %c1_70 = arith.constant 1 : index
    %c0_71 = arith.constant 0 : index
    %81 = vector.load %arg2[%c0_69, %80, %c1_70, %c0_71] : memref<1x5x5x128xbf16, #tpu.memory_space<vmem>>, vector<1x1x4x128xbf16>
    %82 = vector.shape_cast %81 : vector<1x1x4x128xbf16> to vector<1x4x128xbf16>
    %83 = vector.shape_cast %82 : vector<1x4x128xbf16> to vector<4x128xbf16>
    %c8_72 = arith.constant 8 : index
    %c384_73 = arith.constant 384 : index
    %84 = vector.load %arg7[%c8_72, %c384_73] : memref<16x512xbf16, #tpu.memory_space<vmem>>, vector<4x128xbf16>
    tpu.vector_store %arg7[%c8_72, %c384_73], %83 {strides = array<i32>} : memref<16x512xbf16, #tpu.memory_space<vmem>>, vector<4x128xbf16>,
    %c3_i32 = arith.constant 3 : i32
    %85 = arith.addi %0, %c3_i32 : i32
    %c0_i32_74 = arith.constant 0 : i32
    %86 = arith.addi %85, %c0_i32_74 : i32
    %c0_75 = arith.constant 0 : index
    %87 = arith.index_cast %86 : i32 to index
    %c0_76 = arith.constant 0 : index
    %c0_77 = arith.constant 0 : index
    %88 = vector.load %arg2[%c0_75, %87, %c0_76, %c0_77] : memref<1x5x5x128xbf16, #tpu.memory_space<vmem>>, vector<1x1x4x128xbf16>
    %89 = vector.shape_cast %88 : vector<1x1x4x128xbf16> to vector<1x4x128xbf16>
    %90 = vector.shape_cast %89 : vector<1x4x128xbf16> to vector<4x128xbf16>
    %c12 = arith.constant 12 : index
    %c0_78 = arith.constant 0 : index
    %91 = vector.load %arg7[%c12, %c0_78] : memref<16x512xbf16, #tpu.memory_space<vmem>>, vector<4x128xbf16>
    tpu.vector_store %arg7[%c12, %c0_78], %90 {strides = array<i32>} : memref<16x512xbf16, #tpu.memory_space<vmem>>, vector<4x128xbf16>,
    %c3_i32_79 = arith.constant 3 : i32
    %92 = arith.addi %0, %c3_i32_79 : i32
    %c0_i32_80 = arith.constant 0 : i32
    %93 = arith.addi %92, %c0_i32_80 : i32
    %c0_81 = arith.constant 0 : index
    %94 = arith.index_cast %93 : i32 to index
    %c1_82 = arith.constant 1 : index
    %c0_83 = arith.constant 0 : index
    %95 = vector.load %arg2[%c0_81, %94, %c1_82, %c0_83] : memref<1x5x5x128xbf16, #tpu.memory_space<vmem>>, vector<1x1x4x128xbf16>
    %96 = vector.shape_cast %95 : vector<1x1x4x128xbf16> to vector<1x4x128xbf16>
    %97 = vector.shape_cast %96 : vector<1x4x128xbf16> to vector<4x128xbf16>
    %c12_84 = arith.constant 12 : index
    %c128_85 = arith.constant 128 : index
    %98 = vector.load %arg7[%c12_84, %c128_85] : memref<16x512xbf16, #tpu.memory_space<vmem>>, vector<4x128xbf16>
    tpu.vector_store %arg7[%c12_84, %c128_85], %97 {strides = array<i32>} : memref<16x512xbf16, #tpu.memory_space<vmem>>, vector<4x128xbf16>,
    %c3_i32_86 = arith.constant 3 : i32
    %99 = arith.addi %0, %c3_i32_86 : i32
    %c1_i32_87 = arith.constant 1 : i32
    %100 = arith.addi %99, %c1_i32_87 : i32
    %c0_88 = arith.constant 0 : index
    %101 = arith.index_cast %100 : i32 to index
    %c0_89 = arith.constant 0 : index
    %c0_90 = arith.constant 0 : index
    %102 = vector.load %arg2[%c0_88, %101, %c0_89, %c0_90] : memref<1x5x5x128xbf16, #tpu.memory_space<vmem>>, vector<1x1x4x128xbf16>
    %103 = vector.shape_cast %102 : vector<1x1x4x128xbf16> to vector<1x4x128xbf16>
    %104 = vector.shape_cast %103 : vector<1x4x128xbf16> to vector<4x128xbf16>
    %c12_91 = arith.constant 12 : index
    %c256_92 = arith.constant 256 : index
    %105 = vector.load %arg7[%c12_91, %c256_92] : memref<16x512xbf16, #tpu.memory_space<vmem>>, vector<4x128xbf16>
    tpu.vector_store %arg7[%c12_91, %c256_92], %104 {strides = array<i32>} : memref<16x512xbf16, #tpu.memory_space<vmem>>, vector<4x128xbf16>,
    %c3_i32_93 = arith.constant 3 : i32
    %106 = arith.addi %0, %c3_i32_93 : i32
    %c1_i32_94 = arith.constant 1 : i32
    %107 = arith.addi %106, %c1_i32_94 : i32
    %c0_95 = arith.constant 0 : index
    %108 = arith.index_cast %107 : i32 to index
    %c1_96 = arith.constant 1 : index
    %c0_97 = arith.constant 0 : index
    %109 = vector.load %arg2[%c0_95, %108, %c1_96, %c0_97] : memref<1x5x5x128xbf16, #tpu.memory_space<vmem>>, vector<1x1x4x128xbf16>
    %110 = vector.shape_cast %109 : vector<1x1x4x128xbf16> to vector<1x4x128xbf16>
    %111 = vector.shape_cast %110 : vector<1x4x128xbf16> to vector<4x128xbf16>
    %c12_98 = arith.constant 12 : index
    %c384_99 = arith.constant 384 : index
    %112 = vector.load %arg7[%c12_98, %c384_99] : memref<16x512xbf16, #tpu.memory_space<vmem>>, vector<4x128xbf16>
    tpu.vector_store %arg7[%c12_98, %c384_99], %111 {strides = array<i32>} : memref<16x512xbf16, #tpu.memory_space<vmem>>, vector<4x128xbf16>,
    %c0_100 = arith.constant 0 : index
    %c0_101 = arith.constant 0 : index
    %113 = vector.load %arg7[%c0_100, %c0_101] : memref<16x512xbf16, #tpu.memory_space<vmem>>, vector<16x512xbf16>
    %c0_102 = arith.constant 0 : index
    %c0_103 = arith.constant 0 : index
    %114 = vector.load %arg3[%c0_102, %c0_103] : memref<512x64xbf16, #tpu.memory_space<vmem>>, vector<512x64xbf16>
    %cst = arith.constant dense<0.000000e+00> : vector<16x64xf32>
    %115 = tpu.matmul %113, %114, %cst {dimension_numbers = #tpu.dot_dimension_numbers<[1], [0], [0], [1], [0, 0, 1, 1], [], []>} : vector<16x512xbf16>, vector<512x64xbf16>, vector<16x64xf32> -> vector<16x64xf32>
    %c0_104 = arith.constant 0 : index
    %c0_105 = arith.constant 0 : index
    %116 = vector.load %arg4[%c0_104, %c0_105] : memref<1x64xf32, #tpu.memory_space<vmem>>, vector<1x64xf32>
    %117 = vector.broadcast %116 : vector<1x64xf32> to vector<16x64xf32>
    %118 = arith.addf %115, %117 : vector<16x64xf32>
    %119 = vector.shape_cast %118 : vector<16x64xf32> to vector<1x16x64xf32>
    %c0_106 = arith.constant 0 : index
    %c0_107 = arith.constant 0 : index
    %c0_108 = arith.constant 0 : index
    %120 = vector.load %arg5[%c0_106, %c0_107, %c0_108] : memref<1x16x64xf32, #tpu.memory_space<vmem>>, vector<1x16x64xf32>
    tpu.vector_store %arg5[%c0_106, %c0_107, %c0_108], %119 {strides = array<i32>} : memref<1x16x64xf32, #tpu.memory_space<vmem>>, vector<1x16x64xf32>,
    %cst_109 = arith.constant dense<0.000000e+00> : vector<64xf32>
    %121 = vector.multi_reduction <add>, %118, %cst_109 [0] : vector<16x64xf32> to vector<64xf32>
    %122 = vector.shape_cast %121 : vector<64xf32> to vector<1x64xf32>
    %c0_110 = arith.constant 0 : index
    %c0_111 = arith.constant 0 : index
    %c0_112 = arith.constant 0 : index
    %c0_113 = arith.constant 0 : index
    %123 = vector.load %arg6[%c0_110, %c0_111, %c0_112, %c0_113] : memref<1x1x2x64xf32, #tpu.memory_space<vmem>>, vector<1x1x1x64xf32>
    %124 = vector.shape_cast %123 : vector<1x1x1x64xf32> to vector<1x64xf32>
    %125 = vector.shape_cast %122 : vector<1x64xf32> to vector<1x1x1x64xf32>
    tpu.vector_store %arg6[%c0_110, %c0_111, %c0_112, %c0_113], %125 {strides = array<i32>} : memref<1x1x2x64xf32, #tpu.memory_space<vmem>>, vector<1x1x1x64xf32>,
    %126 = arith.mulf %118, %118 : vector<16x64xf32>
    %cst_114 = arith.constant dense<0.000000e+00> : vector<64xf32>
    %127 = vector.multi_reduction <add>, %126, %cst_114 [0] : vector<16x64xf32> to vector<64xf32>
    %128 = vector.shape_cast %127 : vector<64xf32> to vector<1x64xf32>
    %c0_115 = arith.constant 0 : index
    %c0_116 = arith.constant 0 : index
    %c1_117 = arith.constant 1 : index
    %c0_118 = arith.constant 0 : index
    %129 = vector.load %arg6[%c0_115, %c0_116, %c1_117, %c0_118] : memref<1x1x2x64xf32, #tpu.memory_space<vmem>>, vector<1x1x1x64xf32>
    %130 = vector.shape_cast %129 : vector<1x1x1x64xf32> to vector<1x64xf32>
    %131 = vector.shape_cast %128 : vector<1x64xf32> to vector<1x1x1x64xf32>
    tpu.vector_store %arg6[%c0_115, %c0_116, %c1_117, %c0_118], %131 {strides = array<i32>} : memref<1x1x2x64xf32, #tpu.memory_space<vmem>>, vector<1x1x1x64xf32>,
    return
  }
  func.func @transform_0(%arg0: i32, %arg1: i32) -> (i32, i32, i32, i32) {
    %c0_i32 = arith.constant 0 : i32
    %c0_i32_0 = arith.constant 0 : i32
    %c0_i32_1 = arith.constant 0 : i32
    %c0_i32_2 = arith.constant 0 : i32
    return %arg0, %c0_i32, %c0_i32_0, %c0_i32_1 : i32, i32, i32, i32
  }
  func.func @transform_1(%arg0: i32, %arg1: i32) -> (i32, i32) {
    %c0_i32 = arith.constant 0 : i32
    %c0_i32_0 = arith.constant 0 : i32
    %c0_i32_1 = arith.constant 0 : i32
    return %c0_i32, %c0_i32_0 : i32, i32
  }
  func.func @transform_2(%arg0: i32, %arg1: i32) -> (i32, i32) {
    %c0_i32 = arith.constant 0 : i32
    %c0_i32_0 = arith.constant 0 : i32
    %c0_i32_1 = arith.constant 0 : i32
    return %c0_i32, %c0_i32_0 : i32, i32
  }
  func.func @transform_3(%arg0: i32, %arg1: i32) -> (i32, i32, i32) {
    %c0_i32 = arith.constant 0 : i32
    %c0_i32_0 = arith.constant 0 : i32
    return %arg0, %arg1, %c0_i32 : i32, i32, i32
  }
  func.func @transform_4(%arg0: i32, %arg1: i32) -> (i32, i32, i32, i32) {
    %c0_i32 = arith.constant 0 : i32
    %c0_i32_0 = arith.constant 0 : i32
    %c0_i32_1 = arith.constant 0 : i32
    return %arg0, %arg1, %c0_i32, %c0_i32_0 : i32, i32, i32, i32
  }
}

module attributes {stable_mosaic.version = 11 : i64} {
  func.func @_affine_act_kernel(%arg0: i32, %arg1: memref<1x16x64xf32, #tpu.memory_space<vmem>>, %arg2: memref<1x64xf32, #tpu.memory_space<vmem>>, %arg3: memref<1x64xf32, #tpu.memory_space<vmem>>, %arg4: memref<1x16x64xbf16, #tpu.memory_space<vmem>>) attributes {dimension_semantics = [#tpu.dimension_semantics<parallel>], iteration_bounds = array<i64: 2>, scalar_prefetch = 0 : i64, scratch_operands = 0 : i64, tpu.core_type = #tpu.core_type<tc>, window_params = [{transform_indices = @transform_0, window_bounds = array<i64: 1, 16, 64>}, {pipeline_mode = #tpu.pipeline_mode<synchronous>, transform_indices = @transform_1, window_bounds = array<i64: 1, 64>}, {pipeline_mode = #tpu.pipeline_mode<synchronous>, transform_indices = @transform_2, window_bounds = array<i64: 1, 64>}, {transform_indices = @transform_3, window_bounds = array<i64: 1, 16, 64>}]} {
    %c0 = arith.constant 0 : index
    %c0_0 = arith.constant 0 : index
    %c0_1 = arith.constant 0 : index
    %0 = vector.load %arg1[%c0, %c0_0, %c0_1] : memref<1x16x64xf32, #tpu.memory_space<vmem>>, vector<1x16x64xf32>
    %c0_2 = arith.constant 0 : index
    %c0_3 = arith.constant 0 : index
    %1 = vector.load %arg2[%c0_2, %c0_3] : memref<1x64xf32, #tpu.memory_space<vmem>>, vector<1x64xf32>
    %2 = vector.shape_cast %1 : vector<1x64xf32> to vector<1x1x64xf32>
    %3 = vector.broadcast %2 : vector<1x1x64xf32> to vector<1x16x64xf32>
    %4 = arith.mulf %0, %3 : vector<1x16x64xf32>
    %c0_4 = arith.constant 0 : index
    %c0_5 = arith.constant 0 : index
    %5 = vector.load %arg3[%c0_4, %c0_5] : memref<1x64xf32, #tpu.memory_space<vmem>>, vector<1x64xf32>
    %6 = vector.shape_cast %5 : vector<1x64xf32> to vector<1x1x64xf32>
    %7 = vector.broadcast %6 : vector<1x1x64xf32> to vector<1x16x64xf32>
    %8 = arith.addf %4, %7 : vector<1x16x64xf32>
    %cst = arith.constant 2.000000e-01 : f32
    %9 = vector.broadcast %cst : f32 to vector<1x16x64xf32>
    %10 = arith.mulf %9, %8 : vector<1x16x64xf32>
    %11 = arith.maximumf %8, %10 : vector<1x16x64xf32>
    %12 = arith.truncf %11 : vector<1x16x64xf32> to vector<1x16x64xbf16>
    %c0_6 = arith.constant 0 : index
    %c0_7 = arith.constant 0 : index
    %c0_8 = arith.constant 0 : index
    %13 = vector.load %arg4[%c0_6, %c0_7, %c0_8] : memref<1x16x64xbf16, #tpu.memory_space<vmem>>, vector<1x16x64xbf16>
    tpu.vector_store %arg4[%c0_6, %c0_7, %c0_8], %12 {strides = array<i32>} : memref<1x16x64xbf16, #tpu.memory_space<vmem>>, vector<1x16x64xbf16>,
    return
  }
  func.func @transform_0(%arg0: i32) -> (i32, i32, i32) {
    %c0_i32 = arith.constant 0 : i32
    %c0_i32_0 = arith.constant 0 : i32
    %c0_i32_1 = arith.constant 0 : i32
    return %arg0, %c0_i32, %c0_i32_0 : i32, i32, i32
  }
  func.func @transform_1(%arg0: i32) -> (i32, i32) {
    %c0_i32 = arith.constant 0 : i32
    %c0_i32_0 = arith.constant 0 : i32
    %c0_i32_1 = arith.constant 0 : i32
    return %c0_i32, %c0_i32_0 : i32, i32
  }
  func.func @transform_2(%arg0: i32) -> (i32, i32) {
    %c0_i32 = arith.constant 0 : i32
    %c0_i32_0 = arith.constant 0 : i32
    %c0_i32_1 = arith.constant 0 : i32
    return %c0_i32, %c0_i32_0 : i32, i32
  }
  func.func @transform_3(%arg0: i32) -> (i32, i32, i32) {
    %c0_i32 = arith.constant 0 : i32
    %c0_i32_0 = arith.constant 0 : i32
    %c0_i32_1 = arith.constant 0 : i32
    return %arg0, %c0_i32, %c0_i32_0 : i32, i32, i32
  }
}

module attributes {stable_mosaic.version = 11 : i64} {
  func.func @_gemm_bias_kernel(%arg0: i32, %arg1: memref<2x1024xbf16, #tpu.memory_space<vmem>>, %arg2: memref<1024x64xbf16, #tpu.memory_space<vmem>>, %arg3: memref<1x64xf32, #tpu.memory_space<vmem>>, %arg4: memref<2x64xf32, #tpu.memory_space<vmem>>) attributes {dimension_semantics = [#tpu.dimension_semantics<arbitrary>], iteration_bounds = array<i64: 1>, scalar_prefetch = 0 : i64, scratch_operands = 0 : i64, tpu.core_type = #tpu.core_type<tc>, window_params = [{pipeline_mode = #tpu.pipeline_mode<synchronous>, transform_indices = @transform_0, window_bounds = array<i64: 2, 1024>}, {pipeline_mode = #tpu.pipeline_mode<synchronous>, transform_indices = @transform_1, window_bounds = array<i64: 1024, 64>}, {pipeline_mode = #tpu.pipeline_mode<synchronous>, transform_indices = @transform_2, window_bounds = array<i64: 1, 64>}, {pipeline_mode = #tpu.pipeline_mode<synchronous>, transform_indices = @transform_3, window_bounds = array<i64: 2, 64>}]} {
    %c0 = arith.constant 0 : index
    %c0_0 = arith.constant 0 : index
    %0 = vector.load %arg1[%c0, %c0_0] : memref<2x1024xbf16, #tpu.memory_space<vmem>>, vector<2x1024xbf16>
    %c0_1 = arith.constant 0 : index
    %c0_2 = arith.constant 0 : index
    %1 = vector.load %arg2[%c0_1, %c0_2] : memref<1024x64xbf16, #tpu.memory_space<vmem>>, vector<1024x64xbf16>
    %cst = arith.constant dense<0.000000e+00> : vector<2x64xf32>
    %2 = tpu.matmul %0, %1, %cst {dimension_numbers = #tpu.dot_dimension_numbers<[1], [0], [0], [1], [0, 0, 1, 1], [], []>} : vector<2x1024xbf16>, vector<1024x64xbf16>, vector<2x64xf32> -> vector<2x64xf32>
    %c0_3 = arith.constant 0 : index
    %c0_4 = arith.constant 0 : index
    %3 = vector.load %arg3[%c0_3, %c0_4] : memref<1x64xf32, #tpu.memory_space<vmem>>, vector<1x64xf32>
    %4 = vector.broadcast %3 : vector<1x64xf32> to vector<2x64xf32>
    %5 = arith.addf %2, %4 : vector<2x64xf32>
    %c0_5 = arith.constant 0 : index
    %c0_6 = arith.constant 0 : index
    %6 = vector.load %arg4[%c0_5, %c0_6] : memref<2x64xf32, #tpu.memory_space<vmem>>, vector<2x64xf32>
    tpu.vector_store %arg4[%c0_5, %c0_6], %5 {strides = array<i32>} : memref<2x64xf32, #tpu.memory_space<vmem>>, vector<2x64xf32>,
    return
  }
  func.func @transform_0(%arg0: i32) -> (i32, i32) {
    %c0_i32 = arith.constant 0 : i32
    %c0_i32_0 = arith.constant 0 : i32
    %c0_i32_1 = arith.constant 0 : i32
    return %c0_i32, %c0_i32_0 : i32, i32
  }
  func.func @transform_1(%arg0: i32) -> (i32, i32) {
    %c0_i32 = arith.constant 0 : i32
    %c0_i32_0 = arith.constant 0 : i32
    %c0_i32_1 = arith.constant 0 : i32
    return %c0_i32, %c0_i32_0 : i32, i32
  }
  func.func @transform_2(%arg0: i32) -> (i32, i32) {
    %c0_i32 = arith.constant 0 : i32
    %c0_i32_0 = arith.constant 0 : i32
    %c0_i32_1 = arith.constant 0 : i32
    return %c0_i32, %c0_i32_0 : i32, i32
  }
  func.func @transform_3(%arg0: i32) -> (i32, i32) {
    %c0_i32 = arith.constant 0 : i32
    %c0_i32_0 = arith.constant 0 : i32
    %c0_i32_1 = arith.constant 0 : i32
    return %c0_i32, %c0_i32_0 : i32, i32
  }
}

</mosaic_0001>

<llo_original>
// kernel: encoder_forward.8
$region0: #{encoder_forward.8}
  #allocation0 [shape = 'u32[]', space=smem, size = 0x4, offset = 0x4, fixed_abs, tag = 'smem constant byte address 0x4 - core index']
  #allocation1 [shape = 'u32[72,128]{1,0:T(1,128)}', space=vmem, size = 0x9000, scoped, tag = 'internal scratch']
  #allocation2 [shape = 'bf16[256,512]{1,0:T(8,128)(2,1)}', space=vmem, size = 0x40000, scoped, tag = 'scratch operand']
  %s0 = inlined_call_operand.vmem [shape: bf16[2,33,33,12], index: 0, kind: input, shape index: {}]
  %s1 = inlined_call_operand.vmem [shape: bf16[512,8], index: 1, kind: input, shape index: {}]
  %s2 = inlined_call_operand.vmem [shape: f32[1,8], index: 2, kind: input, shape index: {}]
  %s3 = inlined_call_operand.vmem [shape: bf16[2,1024,8], index: 3, kind: output, shape index: {}]
  %s4 = sld [smem:[#allocation0]]
  $region45: #{encoder_forward.8} parent=0
    _
  %s6 = ssub.s32 1, %s4
  %s7 = scalar_select 0, %s6, %s4
  loop: start=0, step=1, limit=10
  $region2: #{encoder_forward.8} parent=0 // loop_pre_header
    _
  $region3: #{encoder_forward.8} parent=0 // loop_header
    %s9 = sphi 0, %s13
    %p10 = scmp.ge.s32.totalorder %s9, 10
    %s16 = sphi 0, %s28
    %s17 = sphi 0, %s24
    %s18 = sphi 0, %s16
    %s19 = sphi 0, %s17
    %s20 = sphi 0, %s18
    %s21 = sphi 0, %s19
    %s31 = sphi 0, %s33
    %s34 = sphi 0, %s31
    %s35 = sphi 0, %s34
    %s51 = sphi 0, %s35
    %s55 = sphi 0, %s55
    %s57 = sphi 0, %s55
    %s58 = sphi 0, %s57
    %s72 = sphi 0, %s58
    %s76 = sphi 0, %s76
    %s78 = sphi 0, %s76
    %s79 = sphi 0, %s78
    %s93 = sphi 0, %s79
    %s101 = sphi 0, %s103
    %s104 = sphi 0, %s101
    %s105 = sphi 0, %s104
    %s121 = sphi 0, %s105
  $region4: #{encoder_forward.8} parent=0 // loop_header_branch
    %12 = sbr.rel (%p10) target = $region8
  $region5: #{encoder_forward.8} parent=0 // loop_body
    %s14 = ssub.s32 %s9, 1
    %s15 = ssub.s32 %s9, 2
    %s22 = sadd.s32 1, %s17
    %p23 = scmp.ge.s32.totalorder %s22, 4
    %s24 = scalar_select %p23, 0, %s22
    %s25 = sadd.s32 1, %s16
    %s26 = scalar_select %p23, %s25, %s16
    %p27 = scmp.ge.s32.totalorder %s26, 2
    %s28 = scalar_select %p27, 0, %s26
    %s29 = ssub.s32 %s16, %s28
    %p30 = scmp.eq.s32.totalorder %s29, 0
    %s32 = sadd.s32 %s31, 1
    %s33 = scalar_select %p30, %s31, %s32
    %p36 = pneg %p30
    %p37 = scmp.eq.s32.totalorder %s9, 7
    %p38 = por %p36, %p37
    %p39 = scmp.ne.s32.totalorder %s31, %s34
    %p40 = scmp.eq.s32.totalorder %s9, 0
    %p41 = por %p39, %p40
    %p42 = scmp.ne.s32.totalorder %s31, %s34
    %p43 = scmp.eq.s32.totalorder %s14, 7
    %p44 = por %p42, %p43
    %p45 = scmp.ne.s32.totalorder %s34, %s35
    %p46 = scmp.eq.s32.totalorder %s14, 0
    %p47 = por %p45, %p46
    %p48 = scmp.ne.s32.totalorder %s34, %s35
    %p49 = scmp.eq.s32.totalorder %s15, 7
    %p50 = por %p48, %p49
    %p52 = scmp.ne.s32.totalorder %s35, %s51
    %p53 = scmp.eq.s32.totalorder %s15, 0
    %p54 = por %p52, %p53
    %s56 = sadd.s32 %s55, 1
    %p59 = scmp.eq.s32.totalorder %s9, 7
    %p60 = scmp.ne.s32.totalorder %s55, %s57
    %p61 = scmp.eq.s32.totalorder %s9, 0
    %p62 = por %p60, %p61
    %p63 = scmp.ne.s32.totalorder %s55, %s57
    %p64 = scmp.eq.s32.totalorder %s14, 7
    %p65 = por %p63, %p64
    %p66 = scmp.ne.s32.totalorder %s57, %s58
    %p67 = scmp.eq.s32.totalorder %s14, 0
    %p68 = por %p66, %p67
    %p69 = scmp.ne.s32.totalorder %s57, %s58
    %p70 = scmp.eq.s32.totalorder %s15, 7
    %p71 = por %p69, %p70
    %p73 = scmp.ne.s32.totalorder %s58, %s72
    %p74 = scmp.eq.s32.totalorder %s15, 0
    %p75 = por %p73, %p74
    %s77 = sadd.s32 %s76, 1
    %p80 = scmp.eq.s32.totalorder %s9, 7
    %p81 = scmp.ne.s32.totalorder %s76, %s78
    %p82 = scmp.eq.s32.totalorder %s9, 0
    %p83 = por %p81, %p82
    %p84 = scmp.ne.s32.totalorder %s76, %s78
    %p85 = scmp.eq.s32.totalorder %s14, 7
    %p86 = por %p84, %p85
    %p87 = scmp.ne.s32.totalorder %s78, %s79
    %p88 = scmp.eq.s32.totalorder %s14, 0
    %p89 = por %p87, %p88
    %p90 = scmp.ne.s32.totalorder %s78, %s79
    %p91 = scmp.eq.s32.totalorder %s15, 7
    %p92 = por %p90, %p91
    %p94 = scmp.ne.s32.totalorder %s79, %s93
    %p95 = scmp.eq.s32.totalorder %s15, 0
    %p96 = por %p94, %p95
    %s97 = ssub.s32 %s16, %s28
    %s98 = ssub.s32 %s17, %s24
    %s99 = sor.u32 %s97, %s98
    %p100 = scmp.eq.s32.totalorder %s99, 0
    %s102 = sadd.s32 %s101, 1
    %s103 = scalar_select %p100, %s101, %s102
    %p106 = pneg %p100
    %p107 = scmp.eq.s32.totalorder %s9, 7
    %p108 = por %p106, %p107
    %p109 = scmp.ne.s32.totalorder %s101, %s104
    %p110 = scmp.eq.s32.totalorder %s9, 0
    %p111 = por %p109, %p110
    %p112 = scmp.ne.s32.totalorder %s101, %s104
    %p113 = scmp.eq.s32.totalorder %s14, 7
    %p114 = por %p112, %p113
    %p115 = scmp.ne.s32.totalorder %s104, %s105
    %p116 = scmp.eq.s32.totalorder %s14, 0
    %p117 = por %p115, %p116
    %p118 = scmp.ne.s32.totalorder %s104, %s105
    %p119 = scmp.eq.s32.totalorder %s15, 7
    %p120 = por %p118, %p119
    %p122 = scmp.ne.s32.totalorder %s105, %s121
    %p123 = scmp.eq.s32.totalorder %s15, 0
    %p124 = por %p122, %p123
    %p125 = scmp.le.s32.totalorder 1, %s9
    %p126 = scmp.lt.s32.totalorder %s9, 9
    %p127 = pnand %p125, %p126
    %p128 = pneg %p127
    // Predicated region
    $region9: #{encoder_forward.8} parent=5 // pred_check
      _
    $region10: #{encoder_forward.8} parent=5 // pred_check_branch
      %130 = sbr.rel (%p127) target = $region12
    $region11: #{encoder_forward.8} parent=5 // pred_region
      %s131 = ssub.s32 %s9, 1
      // Predicated region
      $region13: #{encoder_forward.8} parent=11 // pred_check
        %p132 = pneg %p68
      $region14: #{encoder_forward.8} parent=11 // pred_check_branch
        %134 = sbr.rel (%p132) target = $region16
      $region15: #{encoder_forward.8} parent=11 // pred_region
        _
      $region16: #{encoder_forward.8} parent=11 // pred_fallthru
        _
      // Predicated region
      $region17: #{encoder_forward.8} parent=11 // pred_check
        %p135 = pneg %p89
      $region18: #{encoder_forward.8} parent=11 // pred_check_branch
        %137 = sbr.rel (%p135) target = $region20
      $region19: #{encoder_forward.8} parent=11 // pred_region
        _
      $region20: #{encoder_forward.8} parent=11 // pred_fallthru
        _
    $region12: #{encoder_forward.8} parent=5 // pred_fallthru
      _
    %p138 = scmp.lt.s32.totalorder %s9, 8
    // Predicated region
    $region21: #{encoder_forward.8} parent=5 // pred_check
      %p139 = pneg %p138
    $region22: #{encoder_forward.8} parent=5 // pred_check_branch
      %141 = sbr.rel (%p139) target = $region24
    $region23: #{encoder_forward.8} parent=5 // pred_region
      // Predicated region
      $region25: #{encoder_forward.8} parent=23 // pred_check
        %p142 = pneg %p41
      $region26: #{encoder_forward.8} parent=23 // pred_check_branch
        %144 = sbr.rel (%p142) target = $region28
      $region27: #{encoder_forward.8} parent=23 // pred_region
        %p145 = scmp.lt.s32.totalorder %s16, 1
        %s146 = scalar_select %p145, %s16, 1
        %s147 = smul.addr %s146, 165
        %s148 = smul.addr %s147, 4
        %s149 = scalar_lea.vmem %s0, %s148
      $region28: #{encoder_forward.8} parent=23 // pred_fallthru
        _
    $region24: #{encoder_forward.8} parent=5 // pred_fallthru
      _
    %p150 = scmp.le.s32.totalorder 1, %s9
    %p151 = scmp.lt.s32.totalorder %s9, 9
    %p152 = pnand %p150, %p151
    %p153 = pneg %p152
    // Predicated region
    $region29: #{encoder_forward.8} parent=5 // pred_check
      _
    $region30: #{encoder_forward.8} parent=5 // pred_check_branch
      %155 = sbr.rel (%p152) target = $region32
    $region31: #{encoder_forward.8} parent=5 // pred_region
      %s156 = ssub.s32 %s9, 1
      %p157 = scmp.lt.s32.totalorder %s18, 1
      %s158 = scalar_select %p157, %s18, 1
      %s159 = smul.addr %s158, 165
      %s160 = smul.addr %s159, 4
      %s161 = scalar_lea.vmem %s0, %s160
      %p162 = pneg %p47
      %p163 = pneg %p44
      %p164 = pneg %p68
      %p165 = pneg %p65
      %p166 = pneg %p89
      %p167 = pneg %p86
      %p168 = pneg %p117
      %p169 = pneg %p114
      %s170 = smul.u32 32, %s19
      %p171 = scmp.lt.s32.totalorder %s18, 1
      %s172 = scalar_select %p171, %s18, 1
      %p173 = scmp.lt.s32.totalorder %s170, 127
      %s174 = scalar_select %p173, %s170, 127
      %s175 = smul.addr %s172, 128
      %s176 = sadd.s32 %s174, %s175
      %s177 = smul.addr %s176, 4
      %s178 = scalar_lea.vmem %s3, %s177
      %p179 = scmp.lt.s32.totalorder %s18, 1
      %s180 = scalar_select %p179, %s18, 1
      %s181 = smul.addr %s180, 165
      %s182 = smul.addr %s181, 4
      %s183 = scalar_lea.vmem %s0, %s182
      %s184 = smul.u32 32, %s19
      %p185 = scmp.lt.s32.totalorder %s18, 1
      %s186 = scalar_select %p185, %s18, 1
      %p187 = scmp.lt.s32.totalorder %s184, 127
      %s188 = scalar_select %p187, %s184, 127
      %s189 = smul.addr %s186, 128
      %s190 = sadd.s32 %s188, %s189
      %s191 = smul.addr %s190, 4
      %s192 = scalar_lea.vmem %s3, %s191
      %s193 = smul.u32 32, %s19
      %s195 = smul.u32 %s19, 8
      %196 = vst [vmem:[#allocation2] sm:$0xff] 0
      %197 = vst [vmem:[#allocation2 + $0x8] sm:$0xff] 0
      %198 = vst [vmem:[#allocation2 + $0x10] sm:$0xff] 0
      %199 = vst [vmem:[#allocation2 + $0x18] sm:$0xff] 0
      %200 = vst [vmem:[#allocation2 + $0x20] sm:$0xff] 0
      %201 = vst [vmem:[#allocation2 + $0x28] sm:$0xff] 0
      %202 = vst [vmem:[#allocation2 + $0x30] sm:$0xff] 0
      %203 = vst [vmem:[#allocation2 + $0x38] sm:$0xff] 0
      %204 = vst [vmem:[#allocation2 + $0x40] sm:$0xff] 0
      %205 = vst [vmem:[#allocation2 + $0x48] sm:$0xff] 0
      %206 = vst [vmem:[#allocation2 + $0x50] sm:$0xff] 0
      %207 = vst [vmem:[#allocation2 + $0x58] sm:$0xff] 0
      %208 = vst [vmem:[#allocation2 + $0x60] sm:$0xff] 0
      %209 = vst [vmem:[#allocation2 + $0x68] sm:$0xff] 0
      %210 = vst [vmem:[#allocation2 + $0x70] sm:$0xff] 0
      %211 = vst [vmem:[#allocation2 + $0x78] sm:$0xff] 0
      %212 = vst [vmem:[#allocation2 + $0x80] sm:$0xff] 0
      %213 = vst [vmem:[#allocation2 + $0x88] sm:$0xff] 0
      %214 = vst [vmem:[#allocation2 + $0x90] sm:$0xff] 0
      %215 = vst [vmem:[#allocation2 + $0x98] sm:$0xff] 0
      %216 = vst [vmem:[#allocation2 + $0xa0] sm:$0xff] 0
      %217 = vst [vmem:[#allocation2 + $0xa8] sm:$0xff] 0
      %218 = vst [vmem:[#allocation2 + $0xb0] sm:$0xff] 0
      %219 = vst [vmem:[#allocation2 + $0xb8] sm:$0xff] 0
      %220 = vst [vmem:[#allocation2 + $0xc0] sm:$0xff] 0
      %221 = vst [vmem:[#allocation2 + $0xc8] sm:$0xff] 0
      %222 = vst [vmem:[#allocation2 + $0xd0] sm:$0xff] 0
      %223 = vst [vmem:[#allocation2 + $0xd8] sm:$0xff] 0
      %224 = vst [vmem:[#allocation2 + $0xe0] sm:$0xff] 0
      %225 = vst [vmem:[#allocation2 + $0xe8] sm:$0xff] 0
      %226 = vst [vmem:[#allocation2 + $0xf0] sm:$0xff] 0
      %227 = vst [vmem:[#allocation2 + $0xf8] sm:$0xff] 0
      %228 = vst [vmem:[#allocation2 + $0x100] sm:$0xff] 0
      %229 = vst [vmem:[#allocation2 + $0x108] sm:$0xff] 0
      %230 = vst [vmem:[#allocation2 + $0x110] sm:$0xff] 0
      %231 = vst [vmem:[#allocation2 + $0x118] sm:$0xff] 0
      %232 = vst [vmem:[#allocation2 + $0x120] sm:$0xff] 0
      %233 = vst [vmem:[#allocation2 + $0x128] sm:$0xff] 0
      %234 = vst [vmem:[#allocation2 + $0x130] sm:$0xff] 0
      %235 = vst [vmem:[#allocation2 + $0x138] sm:$0xff] 0
      %236 = vst [vmem:[#allocation2 + $0x140] sm:$0xff] 0
      %237 = vst [vmem:[#allocation2 + $0x148] sm:$0xff] 0
      %238 = vst [vmem:[#allocation2 + $0x150] sm:$0xff] 0
      %239 = vst [vmem:[#allocation2 + $0x158] sm:$0xff] 0
      %240 = vst [vmem:[#allocation2 + $0x160] sm:$0xff] 0
      %241 = vst [vmem:[#allocation2 + $0x168] sm:$0xff] 0
      %242 = vst [vmem:[#allocation2 + $0x170] sm:$0xff] 0
      %243 = vst [vmem:[#allocation2 + $0x178] sm:$0xff] 0
      %244 = vst [vmem:[#allocation2 + $0x180] sm:$0xff] 0
      %245 = vst [vmem:[#allocation2 + $0x188] sm:$0xff] 0
      %246 = vst [vmem:[#allocation2 + $0x190] sm:$0xff] 0
      %247 = vst [vmem:[#allocation2 + $0x198] sm:$0xff] 0
      %248 = vst [vmem:[#allocation2 + $0x1a0] sm:$0xff] 0
      %249 = vst [vmem:[#allocation2 + $0x1a8] sm:$0xff] 0
      %250 = vst [vmem:[#allocation2 + $0x1b0] sm:$0xff] 0
      %251 = vst [vmem:[#allocation2 + $0x1b8] sm:$0xff] 0
      %252 = vst [vmem:[#allocation2 + $0x1c0] sm:$0xff] 0
      %253 = vst [vmem:[#allocation2 + $0x1c8] sm:$0xff] 0
      %254 = vst [vmem:[#allocation2 + $0x1d0] sm:$0xff] 0
      %255 = vst [vmem:[#allocation2 + $0x1d8] sm:$0xff] 0
      %256 = vst [vmem:[#allocation2 + $0x1e0] sm:$0xff] 0
      %257 = vst [vmem:[#allocation2 + $0x1e8] sm:$0xff] 0
      %258 = vst [vmem:[#allocation2 + $0x1f0] sm:$0xff] 0
      %259 = vst [vmem:[#allocation2 + $0x1f8] sm:$0xff] 0
      %s260 = smul.u32 %s195, 5
      %s261 = smul.addr %s260, 4
      %s262 = scalar_lea.vmem %s183, %s261
      %v263 = vld [vmem:[%s262] sm:$0xf]
      %v264 = vld [vmem:[%s262 + $0x4] sm:$0xf]
      %v265 = vld [vmem:[%s262 + $0x8] sm:$0xf]
      %v266 = vld [vmem:[%s262 + $0xc] sm:$0xf]
      %vm267 = vcmask 93184
      %268 = vst.msk [vmem:[#allocation2] sm:$0xf] %vm267, %v263
      %269 = vst.msk [vmem:[#allocation2 + $0x10] sm:$0xf] %vm267, %v264
      %270 = vst.msk [vmem:[#allocation2 + $0x20] sm:$0xf] %vm267, %v265
      %271 = vst.msk [vmem:[#allocation2 + $0x30] sm:$0xf] %vm267, %v266
      %v272 = vld [vmem:[%s262] sm:$0xf]
      %v273 = vld [vmem:[%s262 + $0x4] sm:$0xf]
      %v274 = vld [vmem:[%s262 + $0x8] sm:$0xf]
      %v275 = vld [vmem:[%s262 + $0xc] sm:$0xf]
      %v276 = vld [vmem:[%s262 + $0x10] sm:$0x1]
      %vm277 = vsmask.f32 3328
      %vm278 = vsmask.f32 7440
      %vm279 = vmor %vm277, %vm278
      %v281 = vshrl.u32 %v272, 16
      %v283 = vrot.slane %v281, 4
      %v284 = vshll.u32 %v272, 16
      %v286 = vrot.slane %v284, 5
      %v287 = vor.u32 %v283, %v286
      %v288 = vrot.slane %v287, 4
      %v290 = vshll.u32 %v273, 16
      %v292 = vrot.slane %v290, 5
      %v293 = vsel %vm279, %v288, %v292
      %v294 = vshrl.u32 %v273, 16
      %v296 = vrot.slane %v294, 4
      %v297 = vor.u32 %v296, %v292
      %v298 = vrot.slane %v297, 4
      %v300 = vshll.u32 %v274, 16
      %v302 = vrot.slane %v300, 5
      %v303 = vsel %vm279, %v298, %v302
      %v304 = vshrl.u32 %v274, 16
      %v306 = vrot.slane %v304, 4
      %v307 = vor.u32 %v306, %v302
      %v308 = vrot.slane %v307, 4
      %v310 = vshll.u32 %v275, 16
      %v312 = vrot.slane %v310, 5
      %v313 = vsel %vm279, %v308, %v312
      %v314 = vshrl.u32 %v275, 16
      %v316 = vrot.slane %v314, 4
      %v317 = vor.u32 %v316, %v312
      %v318 = vrot.slane %v317, 4
      %v320 = vshll.u32 %v276, 16
      %v322 = vrot.slane %v320, 5
      %v323 = vsel %vm279, %v318, %v322
      %328 = vst.msk [vmem:[#allocation2 + $0x4] sm:$0xf] %vm267, %v293
      %329 = vst.msk [vmem:[#allocation2 + $0x14] sm:$0xf] %vm267, %v303
      %330 = vst.msk [vmem:[#allocation2 + $0x24] sm:$0xf] %vm267, %v313
      %331 = vst.msk [vmem:[#allocation2 + $0x34] sm:$0xf] %vm267, %v323
      %s332 = sadd.s32 %s195, 1
      %s333 = smul.u32 %s332, 5
      %s334 = smul.addr %s333, 4
      %s335 = scalar_lea.vmem %s183, %s334
      %v336 = vld [vmem:[%s335] sm:$0xf]
      %v337 = vld [vmem:[%s335 + $0x4] sm:$0xf]
      %v338 = vld [vmem:[%s335 + $0x8] sm:$0xf]
      %v339 = vld [vmem:[%s335 + $0xc] sm:$0xf]
      %340 = vst.msk [vmem:[#allocation2 + $0x8] sm:$0xf] %vm267, %v336
      %341 = vst.msk [vmem:[#allocation2 + $0x18] sm:$0xf] %vm267, %v337
      %342 = vst.msk [vmem:[#allocation2 + $0x28] sm:$0xf] %vm267, %v338
      %343 = vst.msk [vmem:[#allocation2 + $0x38] sm:$0xf] %vm267, %v339
      %v344 = vld [vmem:[%s335] sm:$0xf]
      %v345 = vld [vmem:[%s335 + $0x4] sm:$0xf]
      %v346 = vld [vmem:[%s335 + $0x8] sm:$0xf]
      %v347 = vld [vmem:[%s335 + $0xc] sm:$0xf]
      %v348 = vld [vmem:[%s335 + $0x10] sm:$0x1]
      %v350 = vshrl.u32 %v344, 16
      %v352 = vrot.slane %v350, 4
      %v353 = vshll.u32 %v344, 16
      %v355 = vrot.slane %v353, 5
      %v356 = vor.u32 %v352, %v355
      %v357 = vrot.slane %v356, 4
      %v359 = vshll.u32 %v345, 16
      %v361 = vrot.slane %v359, 5
      %v362 = vsel %vm279, %v357, %v361
      %v363 = vshrl.u32 %v345, 16
      %v365 = vrot.slane %v363, 4
      %v366 = vor.u32 %v365, %v361
      %v367 = vrot.slane %v366, 4
      %v369 = vshll.u32 %v346, 16
      %v371 = vrot.slane %v369, 5
      %v372 = vsel %vm279, %v367, %v371
      %v373 = vshrl.u32 %v346, 16
      %v375 = vrot.slane %v373, 4
      %v376 = vor.u32 %v375, %v371
      %v377 = vrot.slane %v376, 4
      %v379 = vshll.u32 %v347, 16
      %v381 = vrot.slane %v379, 5
      %v382 = vsel %vm279, %v377, %v381
      %v383 = vshrl.u32 %v347, 16
      %v385 = vrot.slane %v383, 4
      %v386 = vor.u32 %v385, %v381
      %v387 = vrot.slane %v386, 4
      %v389 = vshll.u32 %v348, 16
      %v391 = vrot.slane %v389, 5
      %v392 = vsel %vm279, %v387, %v391
      %397 = vst.msk [vmem:[#allocation2 + $0xc] sm:$0xf] %vm267, %v362
      %398 = vst.msk [vmem:[#allocation2 + $0x1c] sm:$0xf] %vm267, %v372
      %399 = vst.msk [vmem:[#allocation2 + $0x2c] sm:$0xf] %vm267, %v382
      %400 = vst.msk [vmem:[#allocation2 + $0x3c] sm:$0xf] %vm267, %v392
      %v401 = vld [vmem:[%s335] sm:$0xf]
      %v402 = vld [vmem:[%s335 + $0x4] sm:$0xf]
      %v403 = vld [vmem:[%s335 + $0x8] sm:$0xf]
      %v404 = vld [vmem:[%s335 + $0xc] sm:$0xf]
      %405 = vst.msk [vmem:[#allocation2 + $0x40] sm:$0xf] %vm267, %v401
      %406 = vst.msk [vmem:[#allocation2 + $0x50] sm:$0xf] %vm267, %v402
      %407 = vst.msk [vmem:[#allocation2 + $0x60] sm:$0xf] %vm267, %v403
      %408 = vst.msk [vmem:[#allocation2 + $0x70] sm:$0xf] %vm267, %v404
      %v409 = vld [vmem:[%s335] sm:$0xf]
      %v410 = vld [vmem:[%s335 + $0x4] sm:$0xf]
      %v411 = vld [vmem:[%s335 + $0x8] sm:$0xf]
      %v412 = vld [vmem:[%s335 + $0xc] sm:$0xf]
      %v413 = vld [vmem:[%s335 + $0x10] sm:$0x1]
      %v415 = vshrl.u32 %v409, 16
      %v417 = vrot.slane %v415, 4
      %v418 = vshll.u32 %v409, 16
      %v420 = vrot.slane %v418, 5
      %v421 = vor.u32 %v417, %v420
      %v422 = vrot.slane %v421, 4
      %v424 = vshll.u32 %v410, 16
      %v426 = vrot.slane %v424, 5
      %v427 = vsel %vm279, %v422, %v426
      %v428 = vshrl.u32 %v410, 16
      %v430 = vrot.slane %v428, 4
      %v431 = vor.u32 %v430, %v426
      %v432 = vrot.slane %v431, 4
      %v434 = vshll.u32 %v411, 16
      %v436 = vrot.slane %v434, 5
      %v437 = vsel %vm279, %v432, %v436
      %v438 = vshrl.u32 %v411, 16
      %v440 = vrot.slane %v438, 4
      %v441 = vor.u32 %v440, %v436
      %v442 = vrot.slane %v441, 4
      %v444 = vshll.u32 %v412, 16
      %v446 = vrot.slane %v444, 5
      %v447 = vsel %vm279, %v442, %v446
      %v448 = vshrl.u32 %v412, 16
      %v450 = vrot.slane %v448, 4
      %v451 = vor.u32 %v450, %v446
      %v452 = vrot.slane %v451, 4
      %v454 = vshll.u32 %v413, 16
      %v456 = vrot.slane %v454, 5
      %v457 = vsel %vm279, %v452, %v456
      %462 = vst.msk [vmem:[#allocation2 + $0x44] sm:$0xf] %vm267, %v427
      %463 = vst.msk [vmem:[#allocation2 + $0x54] sm:$0xf] %vm267, %v437
      %464 = vst.msk [vmem:[#allocation2 + $0x64] sm:$0xf] %vm267, %v447
      %465 = vst.msk [vmem:[#allocation2 + $0x74] sm:$0xf] %vm267, %v457
      %s466 = sadd.s32 %s195, 2
      %s467 = smul.u32 %s466, 5
      %s468 = smul.addr %s467, 4
      %s469 = scalar_lea.vmem %s183, %s468
      %v470 = vld [vmem:[%s469] sm:$0xf]
      %v471 = vld [vmem:[%s469 + $0x4] sm:$0xf]
      %v472 = vld [vmem:[%s469 + $0x8] sm:$0xf]
      %v473 = vld [vmem:[%s469 + $0xc] sm:$0xf]
      %474 = vst.msk [vmem:[#allocation2 + $0x48] sm:$0xf] %vm267, %v470
      %475 = vst.msk [vmem:[#allocation2 + $0x58] sm:$0xf] %vm267, %v471
      %476 = vst.msk [vmem:[#allocation2 + $0x68] sm:$0xf] %vm267, %v472
      %477 = vst.msk [vmem:[#allocation2 + $0x78] sm:$0xf] %vm267, %v473
      %v478 = vld [vmem:[%s469] sm:$0xf]
      %v479 = vld [vmem:[%s469 + $0x4] sm:$0xf]
      %v480 = vld [vmem:[%s469 + $0x8] sm:$0xf]
      %v481 = vld [vmem:[%s469 + $0xc] sm:$0xf]
      %v482 = vld [vmem:[%s469 + $0x10] sm:$0x1]
      %v484 = vshrl.u32 %v478, 16
      %v486 = vrot.slane %v484, 4
      %v487 = vshll.u32 %v478, 16
      %v489 = vrot.slane %v487, 5
      %v490 = vor.u32 %v486, %v489
      %v491 = vrot.slane %v490, 4
      %v493 = vshll.u32 %v479, 16
      %v495 = vrot.slane %v493, 5
      %v496 = vsel %vm279, %v491, %v495
      %v497 = vshrl.u32 %v479, 16
      %v499 = vrot.slane %v497, 4
      %v500 = vor.u32 %v499, %v495
      %v501 = vrot.slane %v500, 4
      %v503 = vshll.u32 %v480, 16
      %v505 = vrot.slane %v503, 5
      %v506 = vsel %vm279, %v501, %v505
      %v507 = vshrl.u32 %v480, 16
      %v509 = vrot.slane %v507, 4
      %v510 = vor.u32 %v509, %v505
      %v511 = vrot.slane %v510, 4
      %v513 = vshll.u32 %v481, 16
      %v515 = vrot.slane %v513, 5
      %v516 = vsel %vm279, %v511, %v515
      %v517 = vshrl.u32 %v481, 16
      %v519 = vrot.slane %v517, 4
      %v520 = vor.u32 %v519, %v515
      %v521 = vrot.slane %v520, 4
      %v523 = vshll.u32 %v482, 16
      %v525 = vrot.slane %v523, 5
      %v526 = vsel %vm279, %v521, %v525
      %531 = vst.msk [vmem:[#allocation2 + $0x4c] sm:$0xf] %vm267, %v496
      %532 = vst.msk [vmem:[#allocation2 + $0x5c] sm:$0xf] %vm267, %v506
      %533 = vst.msk [vmem:[#allocation2 + $0x6c] sm:$0xf] %vm267, %v516
      %534 = vst.msk [vmem:[#allocation2 + $0x7c] sm:$0xf] %vm267, %v526
      %v535 = vld [vmem:[%s469] sm:$0xf]
      %v536 = vld [vmem:[%s469 + $0x4] sm:$0xf]
      %v537 = vld [vmem:[%s469 + $0x8] sm:$0xf]
      %v538 = vld [vmem:[%s469 + $0xc] sm:$0xf]
      %539 = vst.msk [vmem:[#allocation2 + $0x80] sm:$0xf] %vm267, %v535
      %540 = vst.msk [vmem:[#allocation2 + $0x90] sm:$0xf] %vm267, %v536
      %541 = vst.msk [vmem:[#allocation2 + $0xa0] sm:$0xf] %vm267, %v537
      %542 = vst.msk [vmem:[#allocation2 + $0xb0] sm:$0xf] %vm267, %v538
      %v543 = vld [vmem:[%s469] sm:$0xf]
      %v544 = vld [vmem:[%s469 + $0x4] sm:$0xf]
      %v545 = vld [vmem:[%s469 + $0x8] sm:$0xf]
      %v546 = vld [vmem:[%s469 + $0xc] sm:$0xf]
      %v547 = vld [vmem:[%s469 + $0x10] sm:$0x1]
      %v549 = vshrl.u32 %v543, 16
      %v551 = vrot.slane %v549, 4
      %v552 = vshll.u32 %v543, 16
      %v554 = vrot.slane %v552, 5
      %v555 = vor.u32 %v551, %v554
      %v556 = vrot.slane %v555, 4
      %v558 = vshll.u32 %v544, 16
      %v560 = vrot.slane %v558, 5
      %v561 = vsel %vm279, %v556, %v560
      %v562 = vshrl.u32 %v544, 16
      %v564 = vrot.slane %v562, 4
      %v565 = vor.u32 %v564, %v560
      %v566 = vrot.slane %v565, 4
      %v568 = vshll.u32 %v545, 16
      %v570 = vrot.slane %v568, 5
      %v571 = vsel %vm279, %v566, %v570
      %v572 = vshrl.u32 %v545, 16
      %v574 = vrot.slane %v572, 4
      %v575 = vor.u32 %v574, %v570
      %v576 = vrot.slane %v575, 4
      %v578 = vshll.u32 %v546, 16
      %v580 = vrot.slane %v578, 5
      %v581 = vsel %vm279, %v576, %v580
      %v582 = vshrl.u32 %v546, 16
      %v584 = vrot.slane %v582, 4
      %v585 = vor.u32 %v584, %v580
      %v586 = vrot.slane %v585, 4
      %v588 = vshll.u32 %v547, 16
      %v590 = vrot.slane %v588, 5
      %v591 = vsel %vm279, %v586, %v590
      %596 = vst.msk [vmem:[#allocation2 + $0x84] sm:$0xf] %vm267, %v561
      %597 = vst.msk [vmem:[#allocation2 + $0x94] sm:$0xf] %vm267, %v571
      %598 = vst.msk [vmem:[#allocation2 + $0xa4] sm:$0xf] %vm267, %v581
      %599 = vst.msk [vmem:[#allocation2 + $0xb4] sm:$0xf] %vm267, %v591
      %s600 = sadd.s32 %s195, 3
      %s601 = smul.u32 %s600, 5
      %s602 = smul.addr %s601, 4
      %s603 = scalar_lea.vmem %s183, %s602
      %v604 = vld [vmem:[%s603] sm:$0xf]
      %v605 = vld [vmem:[%s603 + $0x4] sm:$0xf]
      %v606 = vld [vmem:[%s603 + $0x8] sm:$0xf]
      %v607 = vld [vmem:[%s603 + $0xc] sm:$0xf]
      %608 = vst.msk [vmem:[#allocation2 + $0x88] sm:$0xf] %vm267, %v604
      %609 = vst.msk [vmem:[#allocation2 + $0x98] sm:$0xf] %vm267, %v605
      %610 = vst.msk [vmem:[#allocation2 + $0xa8] sm:$0xf] %vm267, %v606
      %611 = vst.msk [vmem:[#allocation2 + $0xb8] sm:$0xf] %vm267, %v607
      %v612 = vld [vmem:[%s603] sm:$0xf]
      %v613 = vld [vmem:[%s603 + $0x4] sm:$0xf]
      %v614 = vld [vmem:[%s603 + $0x8] sm:$0xf]
      %v615 = vld [vmem:[%s603 + $0xc] sm:$0xf]
      %v616 = vld [vmem:[%s603 + $0x10] sm:$0x1]
      %v618 = vshrl.u32 %v612, 16
      %v620 = vrot.slane %v618, 4
      %v621 = vshll.u32 %v612, 16
      %v623 = vrot.slane %v621, 5
      %v624 = vor.u32 %v620, %v623
      %v625 = vrot.slane %v624, 4
      %v627 = vshll.u32 %v613, 16
      %v629 = vrot.slane %v627, 5
      %v630 = vsel %vm279, %v625, %v629
      %v631 = vshrl.u32 %v613, 16
      %v633 = vrot.slane %v631, 4
      %v634 = vor.u32 %v633, %v629
      %v635 = vrot.slane %v634, 4
      %v637 = vshll.u32 %v614, 16
      %v639 = vrot.slane %v637, 5
      %v640 = vsel %vm279, %v635, %v639
      %v641 = vshrl.u32 %v614, 16
      %v643 = vrot.slane %v641, 4
      %v644 = vor.u32 %v643, %v639
      %v645 = vrot.slane %v644, 4
      %v647 = vshll.u32 %v615, 16
      %v649 = vrot.slane %v647, 5
      %v650 = vsel %vm279, %v645, %v649
      %v651 = vshrl.u32 %v615, 16
      %v653 = vrot.slane %v651, 4
      %v654 = vor.u32 %v653, %v649
      %v655 = vrot.slane %v654, 4
      %v657 = vshll.u32 %v616, 16
      %v659 = vrot.slane %v657, 5
      %v660 = vsel %vm279, %v655, %v659
      %665 = vst.msk [vmem:[#allocation2 + $0x8c] sm:$0xf] %vm267, %v630
      %666 = vst.msk [vmem:[#allocation2 + $0x9c] sm:$0xf] %vm267, %v640
      %667 = vst.msk [vmem:[#allocation2 + $0xac] sm:$0xf] %vm267, %v650
      %668 = vst.msk [vmem:[#allocation2 + $0xbc] sm:$0xf] %vm267, %v660
      %v669 = vld [vmem:[%s603] sm:$0xf]
      %v670 = vld [vmem:[%s603 + $0x4] sm:$0xf]
      %v671 = vld [vmem:[%s603 + $0x8] sm:$0xf]
      %v672 = vld [vmem:[%s603 + $0xc] sm:$0xf]
      %673 = vst.msk [vmem:[#allocation2 + $0xc0] sm:$0xf] %vm267, %v669
      %674 = vst.msk [vmem:[#allocation2 + $0xd0] sm:$0xf] %vm267, %v670
      %675 = vst.msk [vmem:[#allocation2 + $0xe0] sm:$0xf] %vm267, %v671
      %676 = vst.msk [vmem:[#allocation2 + $0xf0] sm:$0xf] %vm267, %v672
      %v677 = vld [vmem:[%s603] sm:$0xf]
      %v678 = vld [vmem:[%s603 + $0x4] sm:$0xf]
      %v679 = vld [vmem:[%s603 + $0x8] sm:$0xf]
      %v680 = vld [vmem:[%s603 + $0xc] sm:$0xf]
      %v681 = vld [vmem:[%s603 + $0x10] sm:$0x1]
      %v683 = vshrl.u32 %v677, 16
      %v685 = vrot.slane %v683, 4
      %v686 = vshll.u32 %v677, 16
      %v688 = vrot.slane %v686, 5
      %v689 = vor.u32 %v685, %v688
      %v690 = vrot.slane %v689, 4
      %v692 = vshll.u32 %v678, 16
      %v694 = vrot.slane %v692, 5
      %v695 = vsel %vm279, %v690, %v694
      %v696 = vshrl.u32 %v678, 16
      %v698 = vrot.slane %v696, 4
      %v699 = vor.u32 %v698, %v694
      %v700 = vrot.slane %v699, 4
      %v702 = vshll.u32 %v679, 16
      %v704 = vrot.slane %v702, 5
      %v705 = vsel %vm279, %v700, %v704
      %v706 = vshrl.u32 %v679, 16
      %v708 = vrot.slane %v706, 4
      %v709 = vor.u32 %v708, %v704
      %v710 = vrot.slane %v709, 4
      %v712 = vshll.u32 %v680, 16
      %v714 = vrot.slane %v712, 5
      %v715 = vsel %vm279, %v710, %v714
      %v716 = vshrl.u32 %v680, 16
      %v718 = vrot.slane %v716, 4
      %v719 = vor.u32 %v718, %v714
      %v720 = vrot.slane %v719, 4
      %v722 = vshll.u32 %v681, 16
      %v724 = vrot.slane %v722, 5
      %v725 = vsel %vm279, %v720, %v724
      %730 = vst.msk [vmem:[#allocation2 + $0xc4] sm:$0xf] %vm267, %v695
      %731 = vst.msk [vmem:[#allocation2 + $0xd4] sm:$0xf] %vm267, %v705
      %732 = vst.msk [vmem:[#allocation2 + $0xe4] sm:$0xf] %vm267, %v715
      %733 = vst.msk [vmem:[#allocation2 + $0xf4] sm:$0xf] %vm267, %v725
      %s734 = sadd.s32 %s195, 4
      %s735 = smul.u32 %s734, 5
      %s736 = smul.addr %s735, 4
      %s737 = scalar_lea.vmem %s183, %s736
      %v738 = vld [vmem:[%s737] sm:$0xf]
      %v739 = vld [vmem:[%s737 + $0x4] sm:$0xf]
      %v740 = vld [vmem:[%s737 + $0x8] sm:$0xf]
      %v741 = vld [vmem:[%s737 + $0xc] sm:$0xf]
      %742 = vst.msk [vmem:[#allocation2 + $0xc8] sm:$0xf] %vm267, %v738
      %743 = vst.msk [vmem:[#allocation2 + $0xd8] sm:$0xf] %vm267, %v739
      %744 = vst.msk [vmem:[#allocation2 + $0xe8] sm:$0xf] %vm267, %v740
      %745 = vst.msk [vmem:[#allocation2 + $0xf8] sm:$0xf] %vm267, %v741
      %v746 = vld [vmem:[%s737] sm:$0xf]
      %v747 = vld [vmem:[%s737 + $0x4] sm:$0xf]
      %v748 = vld [vmem:[%s737 + $0x8] sm:$0xf]
      %v749 = vld [vmem:[%s737 + $0xc] sm:$0xf]
      %v750 = vld [vmem:[%s737 + $0x10] sm:$0x1]
      %v752 = vshrl.u32 %v746, 16
      %v754 = vrot.slane %v752, 4
      %v755 = vshll.u32 %v746, 16
      %v757 = vrot.slane %v755, 5
      %v758 = vor.u32 %v754, %v757
      %v759 = vrot.slane %v758, 4
      %v761 = vshll.u32 %v747, 16
      %v763 = vrot.slane %v761, 5
      %v764 = vsel %vm279, %v759, %v763
      %v765 = vshrl.u32 %v747, 16
      %v767 = vrot.slane %v765, 4
      %v768 = vor.u32 %v767, %v763
      %v769 = vrot.slane %v768, 4
      %v771 = vshll.u32 %v748, 16
      %v773 = vrot.slane %v771, 5
      %v774 = vsel %vm279, %v769, %v773
      %v775 = vshrl.u32 %v748, 16
      %v777 = vrot.slane %v775, 4
      %v778 = vor.u32 %v777, %v773
      %v779 = vrot.slane %v778, 4
      %v781 = vshll.u32 %v749, 16
      %v783 = vrot.slane %v781, 5
      %v784 = vsel %vm279, %v779, %v783
      %v785 = vshrl.u32 %v749, 16
      %v787 = vrot.slane %v785, 4
      %v788 = vor.u32 %v787, %v783
      %v789 = vrot.slane %v788, 4
      %v791 = vshll.u32 %v750, 16
      %v793 = vrot.slane %v791, 5
      %v794 = vsel %vm279, %v789, %v793
      %799 = vst.msk [vmem:[#allocation2 + $0xcc] sm:$0xf] %vm267, %v764
      %800 = vst.msk [vmem:[#allocation2 + $0xdc] sm:$0xf] %vm267, %v774
      %801 = vst.msk [vmem:[#allocation2 + $0xec] sm:$0xf] %vm267, %v784
      %802 = vst.msk [vmem:[#allocation2 + $0xfc] sm:$0xf] %vm267, %v794
      %v803 = vld [vmem:[%s737] sm:$0xf]
      %v804 = vld [vmem:[%s737 + $0x4] sm:$0xf]
      %v805 = vld [vmem:[%s737 + $0x8] sm:$0xf]
      %v806 = vld [vmem:[%s737 + $0xc] sm:$0xf]
      %807 = vst.msk [vmem:[#allocation2 + $0x100] sm:$0xf] %vm267, %v803
      %808 = vst.msk [vmem:[#allocation2 + $0x110] sm:$0xf] %vm267, %v804
      %809 = vst.msk [vmem:[#allocation2 + $0x120] sm:$0xf] %vm267, %v805
      %810 = vst.msk [vmem:[#allocation2 + $0x130] sm:$0xf] %vm267, %v806
      %v811 = vld [vmem:[%s737] sm:$0xf]
      %v812 = vld [vmem:[%s737 + $0x4] sm:$0xf]
      %v813 = vld [vmem:[%s737 + $0x8] sm:$0xf]
      %v814 = vld [vmem:[%s737 + $0xc] sm:$0xf]
      %v815 = vld [vmem:[%s737 + $0x10] sm:$0x1]
      %v817 = vshrl.u32 %v811, 16
      %v819 = vrot.slane %v817, 4
      %v820 = vshll.u32 %v811, 16
      %v822 = vrot.slane %v820, 5
      %v823 = vor.u32 %v819, %v822
      %v824 = vrot.slane %v823, 4
      %v826 = vshll.u32 %v812, 16
      %v828 = vrot.slane %v826, 5
      %v829 = vsel %vm279, %v824, %v828
      %v830 = vshrl.u32 %v812, 16
      %v832 = vrot.slane %v830, 4
      %v833 = vor.u32 %v832, %v828
      %v834 = vrot.slane %v833, 4
      %v836 = vshll.u32 %v813, 16
      %v838 = vrot.slane %v836, 5
      %v839 = vsel %vm279, %v834, %v838
      %v840 = vshrl.u32 %v813, 16
      %v842 = vrot.slane %v840, 4
      %v843 = vor.u32 %v842, %v838
      %v844 = vrot.slane %v843, 4
      %v846 = vshll.u32 %v814, 16
      %v848 = vrot.slane %v846, 5
      %v849 = vsel %vm279, %v844, %v848
      %v850 = vshrl.u32 %v814, 16
      %v852 = vrot.slane %v850, 4
      %v853 = vor.u32 %v852, %v848
      %v854 = vrot.slane %v853, 4
      %v856 = vshll.u32 %v815, 16
      %v858 = vrot.slane %v856, 5
      %v859 = vsel %vm279, %v854, %v858
      %864 = vst.msk [vmem:[#allocation2 + $0x104] sm:$0xf] %vm267, %v829
      %865 = vst.msk [vmem:[#allocation2 + $0x114] sm:$0xf] %vm267, %v839
      %866 = vst.msk [vmem:[#allocation2 + $0x124] sm:$0xf] %vm267, %v849
      %867 = vst.msk [vmem:[#allocation2 + $0x134] sm:$0xf] %vm267, %v859
      %s868 = sadd.s32 %s195, 5
      %s869 = smul.u32 %s868, 5
      %s870 = smul.addr %s869, 4
      %s871 = scalar_lea.vmem %s183, %s870
      %v872 = vld [vmem:[%s871] sm:$0xf]
      %v873 = vld [vmem:[%s871 + $0x4] sm:$0xf]
      %v874 = vld [vmem:[%s871 + $0x8] sm:$0xf]
      %v875 = vld [vmem:[%s871 + $0xc] sm:$0xf]
      %876 = vst.msk [vmem:[#allocation2 + $0x108] sm:$0xf] %vm267, %v872
      %877 = vst.msk [vmem:[#allocation2 + $0x118] sm:$0xf] %vm267, %v873
      %878 = vst.msk [vmem:[#allocation2 + $0x128] sm:$0xf] %vm267, %v874
      %879 = vst.msk [vmem:[#allocation2 + $0x138] sm:$0xf] %vm267, %v875
      %v880 = vld [vmem:[%s871] sm:$0xf]
      %v881 = vld [vmem:[%s871 + $0x4] sm:$0xf]
      %v882 = vld [vmem:[%s871 + $0x8] sm:$0xf]
      %v883 = vld [vmem:[%s871 + $0xc] sm:$0xf]
      %v884 = vld [vmem:[%s871 + $0x10] sm:$0x1]
      %v886 = vshrl.u32 %v880, 16
      %v888 = vrot.slane %v886, 4
      %v889 = vshll.u32 %v880, 16
      %v891 = vrot.slane %v889, 5
      %v892 = vor.u32 %v888, %v891
      %v893 = vrot.slane %v892, 4
      %v895 = vshll.u32 %v881, 16
      %v897 = vrot.slane %v895, 5
      %v898 = vsel %vm279, %v893, %v897
      %v899 = vshrl.u32 %v881, 16
      %v901 = vrot.slane %v899, 4
      %v902 = vor.u32 %v901, %v897
      %v903 = vrot.slane %v902, 4
      %v905 = vshll.u32 %v882, 16
      %v907 = vrot.slane %v905, 5
      %v908 = vsel %vm279, %v903, %v907
      %v909 = vshrl.u32 %v882, 16
      %v911 = vrot.slane %v909, 4
      %v912 = vor.u32 %v911, %v907
      %v913 = vrot.slane %v912, 4
      %v915 = vshll.u32 %v883, 16
      %v917 = vrot.slane %v915, 5
      %v918 = vsel %vm279, %v913, %v917
      %v919 = vshrl.u32 %v883, 16
      %v921 = vrot.slane %v919, 4
      %v922 = vor.u32 %v921, %v917
      %v923 = vrot.slane %v922, 4
      %v925 = vshll.u32 %v884, 16
      %v927 = vrot.slane %v925, 5
      %v928 = vsel %vm279, %v923, %v927
      %933 = vst.msk [vmem:[#allocation2 + $0x10c] sm:$0xf] %vm267, %v898
      %934 = vst.msk [vmem:[#allocation2 + $0x11c] sm:$0xf] %vm267, %v908
      %935 = vst.msk [vmem:[#allocation2 + $0x12c] sm:$0xf] %vm267, %v918
      %936 = vst.msk [vmem:[#allocation2 + $0x13c] sm:$0xf] %vm267, %v928
      %v937 = vld [vmem:[%s871] sm:$0xf]
      %v938 = vld [vmem:[%s871 + $0x4] sm:$0xf]
      %v939 = vld [vmem:[%s871 + $0x8] sm:$0xf]
      %v940 = vld [vmem:[%s871 + $0xc] sm:$0xf]
      %941 = vst.msk [vmem:[#allocation2 + $0x140] sm:$0xf] %vm267, %v937
      %942 = vst.msk [vmem:[#allocation2 + $0x150] sm:$0xf] %vm267, %v938
      %943 = vst.msk [vmem:[#allocation2 + $0x160] sm:$0xf] %vm267, %v939
      %944 = vst.msk [vmem:[#allocation2 + $0x170] sm:$0xf] %vm267, %v940
      %v945 = vld [vmem:[%s871] sm:$0xf]
      %v946 = vld [vmem:[%s871 + $0x4] sm:$0xf]
      %v947 = vld [vmem:[%s871 + $0x8] sm:$0xf]
      %v948 = vld [vmem:[%s871 + $0xc] sm:$0xf]
      %v949 = vld [vmem:[%s871 + $0x10] sm:$0x1]
      %v951 = vshrl.u32 %v945, 16
      %v953 = vrot.slane %v951, 4
      %v954 = vshll.u32 %v945, 16
      %v956 = vrot.slane %v954, 5
      %v957 = vor.u32 %v953, %v956
      %v958 = vrot.slane %v957, 4
      %v960 = vshll.u32 %v946, 16
      %v962 = vrot.slane %v960, 5
      %v963 = vsel %vm279, %v958, %v962
      %v964 = vshrl.u32 %v946, 16
      %v966 = vrot.slane %v964, 4
      %v967 = vor.u32 %v966, %v962
      %v968 = vrot.slane %v967, 4
      %v970 = vshll.u32 %v947, 16
      %v972 = vrot.slane %v970, 5
      %v973 = vsel %vm279, %v968, %v972
      %v974 = vshrl.u32 %v947, 16
      %v976 = vrot.slane %v974, 4
      %v977 = vor.u32 %v976, %v972
      %v978 = vrot.slane %v977, 4
      %v980 = vshll.u32 %v948, 16
      %v982 = vrot.slane %v980, 5
      %v983 = vsel %vm279, %v978, %v982
      %v984 = vshrl.u32 %v948, 16
      %v986 = vrot.slane %v984, 4
      %v987 = vor.u32 %v986, %v982
      %v988 = vrot.slane %v987, 4
      %v990 = vshll.u32 %v949, 16
      %v992 = vrot.slane %v990, 5
      %v993 = vsel %vm279, %v988, %v992
      %998 = vst.msk [vmem:[#allocation2 + $0x144] sm:$0xf] %vm267, %v963
      %999 = vst.msk [vmem:[#allocation2 + $0x154] sm:$0xf] %vm267, %v973
      %1000 = vst.msk [vmem:[#allocation2 + $0x164] sm:$0xf] %vm267, %v983
      %1001 = vst.msk [vmem:[#allocation2 + $0x174] sm:$0xf] %vm267, %v993
      %s1002 = sadd.s32 %s195, 6
      %s1003 = smul.u32 %s1002, 5
      %s1004 = smul.addr %s1003, 4
      %s1005 = scalar_lea.vmem %s183, %s1004
      %v1006 = vld [vmem:[%s1005] sm:$0xf]
      %v1007 = vld [vmem:[%s1005 + $0x4] sm:$0xf]
      %v1008 = vld [vmem:[%s1005 + $0x8] sm:$0xf]
      %v1009 = vld [vmem:[%s1005 + $0xc] sm:$0xf]
      %1010 = vst.msk [vmem:[#allocation2 + $0x148] sm:$0xf] %vm267, %v1006
      %1011 = vst.msk [vmem:[#allocation2 + $0x158] sm:$0xf] %vm267, %v1007
      %1012 = vst.msk [vmem:[#allocation2 + $0x168] sm:$0xf] %vm267, %v1008
      %1013 = vst.msk [vmem:[#allocation2 + $0x178] sm:$0xf] %vm267, %v1009
      %v1014 = vld [vmem:[%s1005] sm:$0xf]
      %v1015 = vld [vmem:[%s1005 + $0x4] sm:$0xf]
      %v1016 = vld [vmem:[%s1005 + $0x8] sm:$0xf]
      %v1017 = vld [vmem:[%s1005 + $0xc] sm:$0xf]
      %v1018 = vld [vmem:[%s1005 + $0x10] sm:$0x1]
      %v1020 = vshrl.u32 %v1014, 16
      %v1022 = vrot.slane %v1020, 4
      %v1023 = vshll.u32 %v1014, 16
      %v1025 = vrot.slane %v1023, 5
      %v1026 = vor.u32 %v1022, %v1025
      %v1027 = vrot.slane %v1026, 4
      %v1029 = vshll.u32 %v1015, 16
      %v1031 = vrot.slane %v1029, 5
      %v1032 = vsel %vm279, %v1027, %v1031
      %v1033 = vshrl.u32 %v1015, 16
      %v1035 = vrot.slane %v1033, 4
      %v1036 = vor.u32 %v1035, %v1031
      %v1037 = vrot.slane %v1036, 4
      %v1039 = vshll.u32 %v1016, 16
      %v1041 = vrot.slane %v1039, 5
      %v1042 = vsel %vm279, %v1037, %v1041
      %v1043 = vshrl.u32 %v1016, 16
      %v1045 = vrot.slane %v1043, 4
      %v1046 = vor.u32 %v1045, %v1041
      %v1047 = vrot.slane %v1046, 4
      %v1049 = vshll.u32 %v1017, 16
      %v1051 = vrot.slane %v1049, 5
      %v1052 = vsel %vm279, %v1047, %v1051
      %v1053 = vshrl.u32 %v1017, 16
      %v1055 = vrot.slane %v1053, 4
      %v1056 = vor.u32 %v1055, %v1051
      %v1057 = vrot.slane %v1056, 4
      %v1059 = vshll.u32 %v1018, 16
      %v1061 = vrot.slane %v1059, 5
      %v1062 = vsel %vm279, %v1057, %v1061
      %1067 = vst.msk [vmem:[#allocation2 + $0x14c] sm:$0xf] %vm267, %v1032
      %1068 = vst.msk [vmem:[#allocation2 + $0x15c] sm:$0xf] %vm267, %v1042
      %1069 = vst.msk [vmem:[#allocation2 + $0x16c] sm:$0xf] %vm267, %v1052
      %1070 = vst.msk [vmem:[#allocation2 + $0x17c] sm:$0xf] %vm267, %v1062
      %v1071 = vld [vmem:[%s1005] sm:$0xf]
      %v1072 = vld [vmem:[%s1005 + $0x4] sm:$0xf]
      %v1073 = vld [vmem:[%s1005 + $0x8] sm:$0xf]
      %v1074 = vld [vmem:[%s1005 + $0xc] sm:$0xf]
      %1075 = vst.msk [vmem:[#allocation2 + $0x180] sm:$0xf] %vm267, %v1071
      %1076 = vst.msk [vmem:[#allocation2 + $0x190] sm:$0xf] %vm267, %v1072
      %1077 = vst.msk [vmem:[#allocation2 + $0x1a0] sm:$0xf] %vm267, %v1073
      %1078 = vst.msk [vmem:[#allocation2 + $0x1b0] sm:$0xf] %vm267, %v1074
      %v1079 = vld [vmem:[%s1005] sm:$0xf]
      %v1080 = vld [vmem:[%s1005 + $0x4] sm:$0xf]
      %v1081 = vld [vmem:[%s1005 + $0x8] sm:$0xf]
      %v1082 = vld [vmem:[%s1005 + $0xc] sm:$0xf]
      %v1083 = vld [vmem:[%s1005 + $0x10] sm:$0x1]
      %v1085 = vshrl.u32 %v1079, 16
      %v1087 = vrot.slane %v1085, 4
      %v1088 = vshll.u32 %v1079, 16
      %v1090 = vrot.slane %v1088, 5
      %v1091 = vor.u32 %v1087, %v1090
      %v1092 = vrot.slane %v1091, 4
      %v1094 = vshll.u32 %v1080, 16
      %v1096 = vrot.slane %v1094, 5
      %v1097 = vsel %vm279, %v1092, %v1096
      %v1098 = vshrl.u32 %v1080, 16
      %v1100 = vrot.slane %v1098, 4
      %v1101 = vor.u32 %v1100, %v1096
      %v1102 = vrot.slane %v1101, 4
      %v1104 = vshll.u32 %v1081, 16
      %v1106 = vrot.slane %v1104, 5
      %v1107 = vsel %vm279, %v1102, %v1106
      %v1108 = vshrl.u32 %v1081, 16
      %v1110 = vrot.slane %v1108, 4
      %v1111 = vor.u32 %v1110, %v1106
      %v1112 = vrot.slane %v1111, 4
      %v1114 = vshll.u32 %v1082, 16
      %v1116 = vrot.slane %v1114, 5
      %v1117 = vsel %vm279, %v1112, %v1116
      %v1118 = vshrl.u32 %v1082, 16
      %v1120 = vrot.slane %v1118, 4
      %v1121 = vor.u32 %v1120, %v1116
      %v1122 = vrot.slane %v1121, 4
      %v1124 = vshll.u32 %v1083, 16
      %v1126 = vrot.slane %v1124, 5
      %v1127 = vsel %vm279, %v1122, %v1126
      %1132 = vst.msk [vmem:[#allocation2 + $0x184] sm:$0xf] %vm267, %v1097
      %1133 = vst.msk [vmem:[#allocation2 + $0x194] sm:$0xf] %vm267, %v1107
      %1134 = vst.msk [vmem:[#allocation2 + $0x1a4] sm:$0xf] %vm267, %v1117
      %1135 = vst.msk [vmem:[#allocation2 + $0x1b4] sm:$0xf] %vm267, %v1127
      %s1136 = sadd.s32 %s195, 7
      %s1137 = smul.u32 %s1136, 5
      %s1138 = smul.addr %s1137, 4
      %s1139 = scalar_lea.vmem %s183, %s1138
      %v1140 = vld [vmem:[%s1139] sm:$0xf]
      %v1141 = vld [vmem:[%s1139 + $0x4] sm:$0xf]
      %v1142 = vld [vmem:[%s1139 + $0x8] sm:$0xf]
      %v1143 = vld [vmem:[%s1139 + $0xc] sm:$0xf]
      %1144 = vst.msk [vmem:[#allocation2 + $0x188] sm:$0xf] %vm267, %v1140
      %1145 = vst.msk [vmem:[#allocation2 + $0x198] sm:$0xf] %vm267, %v1141
      %1146 = vst.msk [vmem:[#allocation2 + $0x1a8] sm:$0xf] %vm267, %v1142
      %1147 = vst.msk [vmem:[#allocation2 + $0x1b8] sm:$0xf] %vm267, %v1143
      %v1148 = vld [vmem:[%s1139] sm:$0xf]
      %v1149 = vld [vmem:[%s1139 + $0x4] sm:$0xf]
      %v1150 = vld [vmem:[%s1139 + $0x8] sm:$0xf]
      %v1151 = vld [vmem:[%s1139 + $0xc] sm:$0xf]
      %v1152 = vld [vmem:[%s1139 + $0x10] sm:$0x1]
      %v1154 = vshrl.u32 %v1148, 16
      %v1156 = vrot.slane %v1154, 4
      %v1157 = vshll.u32 %v1148, 16
      %v1159 = vrot.slane %v1157, 5
      %v1160 = vor.u32 %v1156, %v1159
      %v1161 = vrot.slane %v1160, 4
      %v1163 = vshll.u32 %v1149, 16
      %v1165 = vrot.slane %v1163, 5
      %v1166 = vsel %vm279, %v1161, %v1165
      %v1167 = vshrl.u32 %v1149, 16
      %v1169 = vrot.slane %v1167, 4
      %v1170 = vor.u32 %v1169, %v1165
      %v1171 = vrot.slane %v1170, 4
      %v1173 = vshll.u32 %v1150, 16
      %v1175 = vrot.slane %v1173, 5
      %v1176 = vsel %vm279, %v1171, %v1175
      %v1177 = vshrl.u32 %v1150, 16
      %v1179 = vrot.slane %v1177, 4
      %v1180 = vor.u32 %v1179, %v1175
      %v1181 = vrot.slane %v1180, 4
      %v1183 = vshll.u32 %v1151, 16
      %v1185 = vrot.slane %v1183, 5
      %v1186 = vsel %vm279, %v1181, %v1185
      %v1187 = vshrl.u32 %v1151, 16
      %v1189 = vrot.slane %v1187, 4
      %v1190 = vor.u32 %v1189, %v1185
      %v1191 = vrot.slane %v1190, 4
      %v1193 = vshll.u32 %v1152, 16
      %v1195 = vrot.slane %v1193, 5
      %v1196 = vsel %vm279, %v1191, %v1195
      %1201 = vst.msk [vmem:[#allocation2 + $0x18c] sm:$0xf] %vm267, %v1166
      %1202 = vst.msk [vmem:[#allocation2 + $0x19c] sm:$0xf] %vm267, %v1176
      %1203 = vst.msk [vmem:[#allocation2 + $0x1ac] sm:$0xf] %vm267, %v1186
      %1204 = vst.msk [vmem:[#allocation2 + $0x1bc] sm:$0xf] %vm267, %v1196
      %v1205 = vld [vmem:[%s1139] sm:$0xf]
      %v1206 = vld [vmem:[%s1139 + $0x4] sm:$0xf]
      %v1207 = vld [vmem:[%s1139 + $0x8] sm:$0xf]
      %v1208 = vld [vmem:[%s1139 + $0xc] sm:$0xf]
      %1209 = vst.msk [vmem:[#allocation2 + $0x1c0] sm:$0xf] %vm267, %v1205
      %1210 = vst.msk [vmem:[#allocation2 + $0x1d0] sm:$0xf] %vm267, %v1206
      %1211 = vst.msk [vmem:[#allocation2 + $0x1e0] sm:$0xf] %vm267, %v1207
      %1212 = vst.msk [vmem:[#allocation2 + $0x1f0] sm:$0xf] %vm267, %v1208
      %v1213 = vld [vmem:[%s1139] sm:$0xf]
      %v1214 = vld [vmem:[%s1139 + $0x4] sm:$0xf]
      %v1215 = vld [vmem:[%s1139 + $0x8] sm:$0xf]
      %v1216 = vld [vmem:[%s1139 + $0xc] sm:$0xf]
      %v1217 = vld [vmem:[%s1139 + $0x10] sm:$0x1]
      %v1219 = vshrl.u32 %v1213, 16
      %v1221 = vrot.slane %v1219, 4
      %v1222 = vshll.u32 %v1213, 16
      %v1224 = vrot.slane %v1222, 5
      %v1225 = vor.u32 %v1221, %v1224
      %v1226 = vrot.slane %v1225, 4
      %v1228 = vshll.u32 %v1214, 16
      %v1230 = vrot.slane %v1228, 5
      %v1231 = vsel %vm279, %v1226, %v1230
      %v1232 = vshrl.u32 %v1214, 16
      %v1234 = vrot.slane %v1232, 4
      %v1235 = vor.u32 %v1234, %v1230
      %v1236 = vrot.slane %v1235, 4
      %v1238 = vshll.u32 %v1215, 16
      %v1240 = vrot.slane %v1238, 5
      %v1241 = vsel %vm279, %v1236, %v1240
      %v1242 = vshrl.u32 %v1215, 16
      %v1244 = vrot.slane %v1242, 4
      %v1245 = vor.u32 %v1244, %v1240
      %v1246 = vrot.slane %v1245, 4
      %v1248 = vshll.u32 %v1216, 16
      %v1250 = vrot.slane %v1248, 5
      %v1251 = vsel %vm279, %v1246, %v1250
      %v1252 = vshrl.u32 %v1216, 16
      %v1254 = vrot.slane %v1252, 4
      %v1255 = vor.u32 %v1254, %v1250
      %v1256 = vrot.slane %v1255, 4
      %v1258 = vshll.u32 %v1217, 16
      %v1260 = vrot.slane %v1258, 5
      %v1261 = vsel %vm279, %v1256, %v1260
      %1266 = vst.msk [vmem:[#allocation2 + $0x1c4] sm:$0xf] %vm267, %v1231
      %1267 = vst.msk [vmem:[#allocation2 + $0x1d4] sm:$0xf] %vm267, %v1241
      %1268 = vst.msk [vmem:[#allocation2 + $0x1e4] sm:$0xf] %vm267, %v1251
      %1269 = vst.msk [vmem:[#allocation2 + $0x1f4] sm:$0xf] %vm267, %v1261
      %s1270 = sadd.s32 %s195, 8
      %s1271 = smul.u32 %s1270, 5
      %s1272 = smul.addr %s1271, 4
      %s1273 = scalar_lea.vmem %s183, %s1272
      %v1274 = vld [vmem:[%s1273] sm:$0xf]
      %v1275 = vld [vmem:[%s1273 + $0x4] sm:$0xf]
      %v1276 = vld [vmem:[%s1273 + $0x8] sm:$0xf]
      %v1277 = vld [vmem:[%s1273 + $0xc] sm:$0xf]
      %1278 = vst.msk [vmem:[#allocation2 + $0x1c8] sm:$0xf] %vm267, %v1274
      %1279 = vst.msk [vmem:[#allocation2 + $0x1d8] sm:$0xf] %vm267, %v1275
      %1280 = vst.msk [vmem:[#allocation2 + $0x1e8] sm:$0xf] %vm267, %v1276
      %1281 = vst.msk [vmem:[#allocation2 + $0x1f8] sm:$0xf] %vm267, %v1277
      %v1282 = vld [vmem:[%s1273] sm:$0xf]
      %v1283 = vld [vmem:[%s1273 + $0x4] sm:$0xf]
      %v1284 = vld [vmem:[%s1273 + $0x8] sm:$0xf]
      %v1285 = vld [vmem:[%s1273 + $0xc] sm:$0xf]
      %v1286 = vld [vmem:[%s1273 + $0x10] sm:$0x1]
      %v1288 = vshrl.u32 %v1282, 16
      %v1290 = vrot.slane %v1288, 4
      %v1291 = vshll.u32 %v1282, 16
      %v1293 = vrot.slane %v1291, 5
      %v1294 = vor.u32 %v1290, %v1293
      %v1295 = vrot.slane %v1294, 4
      %v1297 = vshll.u32 %v1283, 16
      %v1299 = vrot.slane %v1297, 5
      %v1300 = vsel %vm279, %v1295, %v1299
      %v1301 = vshrl.u32 %v1283, 16
      %v1303 = vrot.slane %v1301, 4
      %v1304 = vor.u32 %v1303, %v1299
      %v1305 = vrot.slane %v1304, 4
      %v1307 = vshll.u32 %v1284, 16
      %v1309 = vrot.slane %v1307, 5
      %v1310 = vsel %vm279, %v1305, %v1309
      %v1311 = vshrl.u32 %v1284, 16
      %v1313 = vrot.slane %v1311, 4
      %v1314 = vor.u32 %v1313, %v1309
      %v1315 = vrot.slane %v1314, 4
      %v1317 = vshll.u32 %v1285, 16
      %v1319 = vrot.slane %v1317, 5
      %v1320 = vsel %vm279, %v1315, %v1319
      %v1321 = vshrl.u32 %v1285, 16
      %v1323 = vrot.slane %v1321, 4
      %v1324 = vor.u32 %v1323, %v1319
      %v1325 = vrot.slane %v1324, 4
      %v1327 = vshll.u32 %v1286, 16
      %v1329 = vrot.slane %v1327, 5
      %v1330 = vsel %vm279, %v1325, %v1329
      %1335 = vst.msk [vmem:[#allocation2 + $0x1cc] sm:$0xf] %vm267, %v1300
      %1336 = vst.msk [vmem:[#allocation2 + $0x1dc] sm:$0xf] %vm267, %v1310
      %1337 = vst.msk [vmem:[#allocation2 + $0x1ec] sm:$0xf] %vm267, %v1320
      %1338 = vst.msk [vmem:[#allocation2 + $0x1fc] sm:$0xf] %vm267, %v1330
      %v1339 = vld [vmem:[#allocation2] sm:$0xff]
      %v1340 = vld [vmem:[#allocation2 + $0x8] sm:$0xff]
      %v1341 = vld [vmem:[#allocation2 + $0x10] sm:$0xff]
      %v1342 = vld [vmem:[#allocation2 + $0x18] sm:$0xff]
      %v1343 = vld [vmem:[#allocation2 + $0x20] sm:$0xff]
      %v1344 = vld [vmem:[#allocation2 + $0x28] sm:$0xff]
      %v1345 = vld [vmem:[#allocation2 + $0x30] sm:$0xff]
      %v1346 = vld [vmem:[#allocation2 + $0x38] sm:$0xff]
      %v1347 = vld [vmem:[#allocation2 + $0x40] sm:$0xff]
      %v1348 = vld [vmem:[#allocation2 + $0x48] sm:$0xff]
      %v1349 = vld [vmem:[#allocation2 + $0x50] sm:$0xff]
      %v1350 = vld [vmem:[#allocation2 + $0x58] sm:$0xff]
      %v1351 = vld [vmem:[#allocation2 + $0x60] sm:$0xff]
      %v1352 = vld [vmem:[#allocation2 + $0x68] sm:$0xff]
      %v1353 = vld [vmem:[#allocation2 + $0x70] sm:$0xff]
      %v1354 = vld [vmem:[#allocation2 + $0x78] sm:$0xff]
      %v1355 = vld [vmem:[#allocation2 + $0x80] sm:$0xff]
      %v1356 = vld [vmem:[#allocation2 + $0x88] sm:$0xff]
      %v1357 = vld [vmem:[#allocation2 + $0x90] sm:$0xff]
      %v1358 = vld [vmem:[#allocation2 + $0x98] sm:$0xff]
      %v1359 = vld [vmem:[#allocation2 + $0xa0] sm:$0xff]
      %v1360 = vld [vmem:[#allocation2 + $0xa8] sm:$0xff]
      %v1361 = vld [vmem:[#allocation2 + $0xb0] sm:$0xff]
      %v1362 = vld [vmem:[#allocation2 + $0xb8] sm:$0xff]
      %v1363 = vld [vmem:[#allocation2 + $0xc0] sm:$0xff]
      %v1364 = vld [vmem:[#allocation2 + $0xc8] sm:$0xff]
      %v1365 = vld [vmem:[#allocation2 + $0xd0] sm:$0xff]
      %v1366 = vld [vmem:[#allocation2 + $0xd8] sm:$0xff]
      %v1367 = vld [vmem:[#allocation2 + $0xe0] sm:$0xff]
      %v1368 = vld [vmem:[#allocation2 + $0xe8] sm:$0xff]
      %v1369 = vld [vmem:[#allocation2 + $0xf0] sm:$0xff]
      %v1370 = vld [vmem:[#allocation2 + $0xf8] sm:$0xff]
      %v1371 = vld [vmem:[#allocation2 + $0x100] sm:$0xff]
      %v1372 = vld [vmem:[#allocation2 + $0x108] sm:$0xff]
      %v1373 = vld [vmem:[#allocation2 + $0x110] sm:$0xff]
      %v1374 = vld [vmem:[#allocation2 + $0x118] sm:$0xff]
      %v1375 = vld [vmem:[#allocation2 + $0x120] sm:$0xff]
      %v1376 = vld [vmem:[#allocation2 + $0x128] sm:$0xff]
      %v1377 = vld [vmem:[#allocation2 + $0x130] sm:$0xff]
      %v1378 = vld [vmem:[#allocation2 + $0x138] sm:$0xff]
      %v1379 = vld [vmem:[#allocation2 + $0x140] sm:$0xff]
      %v1380 = vld [vmem:[#allocation2 + $0x148] sm:$0xff]
      %v1381 = vld [vmem:[#allocation2 + $0x150] sm:$0xff]
      %v1382 = vld [vmem:[#allocation2 + $0x158] sm:$0xff]
      %v1383 = vld [vmem:[#allocation2 + $0x160] sm:$0xff]
      %v1384 = vld [vmem:[#allocation2 + $0x168] sm:$0xff]
      %v1385 = vld [vmem:[#allocation2 + $0x170] sm:$0xff]
      %v1386 = vld [vmem:[#allocation2 + $0x178] sm:$0xff]
      %v1387 = vld [vmem:[#allocation2 + $0x180] sm:$0xff]
      %v1388 = vld [vmem:[#allocation2 + $0x188] sm:$0xff]
      %v1389 = vld [vmem:[#allocation2 + $0x190] sm:$0xff]
      %v1390 = vld [vmem:[#allocation2 + $0x198] sm:$0xff]
      %v1391 = vld [vmem:[#allocation2 + $0x1a0] sm:$0xff]
      %v1392 = vld [vmem:[#allocation2 + $0x1a8] sm:$0xff]
      %v1393 = vld [vmem:[#allocation2 + $0x1b0] sm:$0xff]
      %v1394 = vld [vmem:[#allocation2 + $0x1b8] sm:$0xff]
      %v1395 = vld [vmem:[#allocation2 + $0x1c0] sm:$0xff]
      %v1396 = vld [vmem:[#allocation2 + $0x1c8] sm:$0xff]
      %v1397 = vld [vmem:[#allocation2 + $0x1d0] sm:$0xff]
      %v1398 = vld [vmem:[#allocation2 + $0x1d8] sm:$0xff]
      %v1399 = vld [vmem:[#allocation2 + $0x1e0] sm:$0xff]
      %v1400 = vld [vmem:[#allocation2 + $0x1e8] sm:$0xff]
      %v1401 = vld [vmem:[#allocation2 + $0x1f0] sm:$0xff]
      %v1402 = vld [vmem:[#allocation2 + $0x1f8] sm:$0xff]
      %v1403 = vld [vmem:[%s1] sm:$0xf]
      %v1404 = vld [vmem:[%s1 + $0x4] sm:$0xf]
      %v1405 = vld [vmem:[%s1 + $0x8] sm:$0xf]
      %v1406 = vld [vmem:[%s1 + $0xc] sm:$0xf]
      %v1407 = vld [vmem:[%s1 + $0x10] sm:$0xf]
      %v1408 = vld [vmem:[%s1 + $0x14] sm:$0xf]
      %v1409 = vld [vmem:[%s1 + $0x18] sm:$0xf]
      %v1410 = vld [vmem:[%s1 + $0x1c] sm:$0xf]
      %v1411 = vld [vmem:[%s1 + $0x20] sm:$0xf]
      %v1412 = vld [vmem:[%s1 + $0x24] sm:$0xf]
      %v1413 = vld [vmem:[%s1 + $0x28] sm:$0xf]
      %v1414 = vld [vmem:[%s1 + $0x2c] sm:$0xf]
      %v1415 = vld [vmem:[%s1 + $0x30] sm:$0xf]
      %v1416 = vld [vmem:[%s1 + $0x34] sm:$0xf]
      %v1417 = vld [vmem:[%s1 + $0x38] sm:$0xf]
      %v1418 = vld [vmem:[%s1 + $0x3c] sm:$0xf]
      %v1419 = vld [vmem:[%s1 + $0x40] sm:$0xf]
      %v1420 = vld [vmem:[%s1 + $0x44] sm:$0xf]
      %v1421 = vld [vmem:[%s1 + $0x48] sm:$0xf]
      %v1422 = vld [vmem:[%s1 + $0x4c] sm:$0xf]
      %v1423 = vld [vmem:[%s1 + $0x50] sm:$0xf]
      %v1424 = vld [vmem:[%s1 + $0x54] sm:$0xf]
      %v1425 = vld [vmem:[%s1 + $0x58] sm:$0xf]
      %v1426 = vld [vmem:[%s1 + $0x5c] sm:$0xf]
      %v1427 = vld [vmem:[%s1 + $0x60] sm:$0xf]
      %v1428 = vld [vmem:[%s1 + $0x64] sm:$0xf]
      %v1429 = vld [vmem:[%s1 + $0x68] sm:$0xf]
      %v1430 = vld [vmem:[%s1 + $0x6c] sm:$0xf]
      %v1431 = vld [vmem:[%s1 + $0x70] sm:$0xf]
      %v1432 = vld [vmem:[%s1 + $0x74] sm:$0xf]
      %v1433 = vld [vmem:[%s1 + $0x78] sm:$0xf]
      %v1434 = vld [vmem:[%s1 + $0x7c] sm:$0xf]
      %v1435 = vld [vmem:[%s1 + $0x80] sm:$0xf]
      %v1436 = vld [vmem:[%s1 + $0x84] sm:$0xf]
      %v1437 = vld [vmem:[%s1 + $0x88] sm:$0xf]
      %v1438 = vld [vmem:[%s1 + $0x8c] sm:$0xf]
      %v1439 = vld [vmem:[%s1 + $0x90] sm:$0xf]
      %v1440 = vld [vmem:[%s1 + $0x94] sm:$0xf]
      %v1441 = vld [vmem:[%s1 + $0x98] sm:$0xf]
      %v1442 = vld [vmem:[%s1 + $0x9c] sm:$0xf]
      %v1443 = vld [vmem:[%s1 + $0xa0] sm:$0xf]
      %v1444 = vld [vmem:[%s1 + $0xa4] sm:$0xf]
      %v1445 = vld [vmem:[%s1 + $0xa8] sm:$0xf]
      %v1446 = vld [vmem:[%s1 + $0xac] sm:$0xf]
      %v1447 = vld [vmem:[%s1 + $0xb0] sm:$0xf]
      %v1448 = vld [vmem:[%s1 + $0xb4] sm:$0xf]
      %v1449 = vld [vmem:[%s1 + $0xb8] sm:$0xf]
      %v1450 = vld [vmem:[%s1 + $0xbc] sm:$0xf]
      %v1451 = vld [vmem:[%s1 + $0xc0] sm:$0xf]
      %v1452 = vld [vmem:[%s1 + $0xc4] sm:$0xf]
      %v1453 = vld [vmem:[%s1 + $0xc8] sm:$0xf]
      %v1454 = vld [vmem:[%s1 + $0xcc] sm:$0xf]
      %v1455 = vld [vmem:[%s1 + $0xd0] sm:$0xf]
      %v1456 = vld [vmem:[%s1 + $0xd4] sm:$0xf]
      %v1457 = vld [vmem:[%s1 + $0xd8] sm:$0xf]
      %v1458 = vld [vmem:[%s1 + $0xdc] sm:$0xf]
      %v1459 = vld [vmem:[%s1 + $0xe0] sm:$0xf]
      %v1460 = vld [vmem:[%s1 + $0xe4] sm:$0xf]
      %v1461 = vld [vmem:[%s1 + $0xe8] sm:$0xf]
      %v1462 = vld [vmem:[%s1 + $0xec] sm:$0xf]
      %v1463 = vld [vmem:[%s1 + $0xf0] sm:$0xf]
      %v1464 = vld [vmem:[%s1 + $0xf4] sm:$0xf]
      %v1465 = vld [vmem:[%s1 + $0xf8] sm:$0xf]
      %v1466 = vld [vmem:[%s1 + $0xfc] sm:$0xf]
      %v1467 = vld [vmem:[%s2] sm:$0x1]
      %v1469 = vperm.slane %v1467, 0
      %v1535 = vunpack.c.l.b16 %v1339
      %v1536 = vunpack.c.h.b16 %v1339
      %v1537 = vunpack.c.l.b16 %v1340
      %v1538 = vunpack.c.h.b16 %v1340
      %v1539 = vunpack.c.l.b16 %v1341
      %v1540 = vunpack.c.h.b16 %v1341
      %v1541 = vunpack.c.l.b16 %v1342
      %v1542 = vunpack.c.h.b16 %v1342
      %v1543 = vunpack.c.l.b16 %v1343
      %v1544 = vunpack.c.h.b16 %v1343
      %v1545 = vunpack.c.l.b16 %v1344
      %v1546 = vunpack.c.h.b16 %v1344
      %v1547 = vunpack.c.l.b16 %v1345
      %v1548 = vunpack.c.h.b16 %v1345
      %v1549 = vunpack.c.l.b16 %v1346
      %v1550 = vunpack.c.h.b16 %v1346
      %v1551 = vunpack.c.l.b16 %v1347
      %v1552 = vunpack.c.h.b16 %v1347
      %v1553 = vunpack.c.l.b16 %v1348
      %v1554 = vunpack.c.h.b16 %v1348
      %v1555 = vunpack.c.l.b16 %v1349
      %v1556 = vunpack.c.h.b16 %v1349
      %v1557 = vunpack.c.l.b16 %v1350
      %v1558 = vunpack.c.h.b16 %v1350
      %v1559 = vunpack.c.l.b16 %v1351
      %v1560 = vunpack.c.h.b16 %v1351
      %v1561 = vunpack.c.l.b16 %v1352
      %v1562 = vunpack.c.h.b16 %v1352
      %v1563 = vunpack.c.l.b16 %v1353
      %v1564 = vunpack.c.h.b16 %v1353
      %v1565 = vunpack.c.l.b16 %v1354
      %v1566 = vunpack.c.h.b16 %v1354
      %v1567 = vunpack.c.l.b16 %v1355
      %v1568 = vunpack.c.h.b16 %v1355
      %v1569 = vunpack.c.l.b16 %v1356
      %v1570 = vunpack.c.h.b16 %v1356
      %v1571 = vunpack.c.l.b16 %v1357
      %v1572 = vunpack.c.h.b16 %v1357
      %v1573 = vunpack.c.l.b16 %v1358
      %v1574 = vunpack.c.h.b16 %v1358
      %v1575 = vunpack.c.l.b16 %v1359
      %v1576 = vunpack.c.h.b16 %v1359
      %v1577 = vunpack.c.l.b16 %v1360
      %v1578 = vunpack.c.h.b16 %v1360
      %v1579 = vunpack.c.l.b16 %v1361
      %v1580 = vunpack.c.h.b16 %v1361
      %v1581 = vunpack.c.l.b16 %v1362
      %v1582 = vunpack.c.h.b16 %v1362
      %v1583 = vunpack.c.l.b16 %v1363
      %v1584 = vunpack.c.h.b16 %v1363
      %v1585 = vunpack.c.l.b16 %v1364
      %v1586 = vunpack.c.h.b16 %v1364
      %v1587 = vunpack.c.l.b16 %v1365
      %v1588 = vunpack.c.h.b16 %v1365
      %v1589 = vunpack.c.l.b16 %v1366
      %v1590 = vunpack.c.h.b16 %v1366
      %v1591 = vunpack.c.l.b16 %v1367
      %v1592 = vunpack.c.h.b16 %v1367
      %v1593 = vunpack.c.l.b16 %v1368
      %v1594 = vunpack.c.h.b16 %v1368
      %v1595 = vunpack.c.l.b16 %v1369
      %v1596 = vunpack.c.h.b16 %v1369
      %v1597 = vunpack.c.l.b16 %v1370
      %v1598 = vunpack.c.h.b16 %v1370
      %v1599 = vunpack.c.l.b16 %v1371
      %v1600 = vunpack.c.h.b16 %v1371
      %v1601 = vunpack.c.l.b16 %v1372
      %v1602 = vunpack.c.h.b16 %v1372
      %v1603 = vunpack.c.l.b16 %v1373
      %v1604 = vunpack.c.h.b16 %v1373
      %v1605 = vunpack.c.l.b16 %v1374
      %v1606 = vunpack.c.h.b16 %v1374
      %v1607 = vunpack.c.l.b16 %v1375
      %v1608 = vunpack.c.h.b16 %v1375
      %v1609 = vunpack.c.l.b16 %v1376
      %v1610 = vunpack.c.h.b16 %v1376
      %v1611 = vunpack.c.l.b16 %v1377
      %v1612 = vunpack.c.h.b16 %v1377
      %v1613 = vunpack.c.l.b16 %v1378
      %v1614 = vunpack.c.h.b16 %v1378
      %v1615 = vunpack.c.l.b16 %v1379
      %v1616 = vunpack.c.h.b16 %v1379
      %v1617 = vunpack.c.l.b16 %v1380
      %v1618 = vunpack.c.h.b16 %v1380
      %v1619 = vunpack.c.l.b16 %v1381
      %v1620 = vunpack.c.h.b16 %v1381
      %v1621 = vunpack.c.l.b16 %v1382
      %v1622 = vunpack.c.h.b16 %v1382
      %v1623 = vunpack.c.l.b16 %v1383
      %v1624 = vunpack.c.h.b16 %v1383
      %v1625 = vunpack.c.l.b16 %v1384
      %v1626 = vunpack.c.h.b16 %v1384
      %v1627 = vunpack.c.l.b16 %v1385
      %v1628 = vunpack.c.h.b16 %v1385
      %v1629 = vunpack.c.l.b16 %v1386
      %v1630 = vunpack.c.h.b16 %v1386
      %v1631 = vunpack.c.l.b16 %v1387
      %v1632 = vunpack.c.h.b16 %v1387
      %v1633 = vunpack.c.l.b16 %v1388
      %v1634 = vunpack.c.h.b16 %v1388
      %v1635 = vunpack.c.l.b16 %v1389
      %v1636 = vunpack.c.h.b16 %v1389
      %v1637 = vunpack.c.l.b16 %v1390
      %v1638 = vunpack.c.h.b16 %v1390
      %v1639 = vunpack.c.l.b16 %v1391
      %v1640 = vunpack.c.h.b16 %v1391
      %v1641 = vunpack.c.l.b16 %v1392
      %v1642 = vunpack.c.h.b16 %v1392
      %v1643 = vunpack.c.l.b16 %v1393
      %v1644 = vunpack.c.h.b16 %v1393
      %v1645 = vunpack.c.l.b16 %v1394
      %v1646 = vunpack.c.h.b16 %v1394
      %v1647 = vunpack.c.l.b16 %v1395
      %v1648 = vunpack.c.h.b16 %v1395
      %v1649 = vunpack.c.l.b16 %v1396
      %v1650 = vunpack.c.h.b16 %v1396
      %v1651 = vunpack.c.l.b16 %v1397
      %v1652 = vunpack.c.h.b16 %v1397
      %v1653 = vunpack.c.l.b16 %v1398
      %v1654 = vunpack.c.h.b16 %v1398
      %v1655 = vunpack.c.l.b16 %v1399
      %v1656 = vunpack.c.h.b16 %v1399
      %v1657 = vunpack.c.l.b16 %v1400
      %v1658 = vunpack.c.h.b16 %v1400
      %v1659 = vunpack.c.l.b16 %v1401
      %v1660 = vunpack.c.h.b16 %v1401
      %v1661 = vunpack.c.l.b16 %v1402
      %v1662 = vunpack.c.h.b16 %v1402
      %v1663 = vpack.c.b16 %v1539, %v1535
      %v1664 = vpack.c.b16 %v1540, %v1536
      %v1665 = vpack.c.b16 %v1541, %v1537
      %v1666 = vpack.c.b16 %v1542, %v1538
      %v1667 = vpack.c.b16 %v1547, %v1543
      %v1668 = vpack.c.b16 %v1548, %v1544
      %v1669 = vpack.c.b16 %v1549, %v1545
      %v1670 = vpack.c.b16 %v1550, %v1546
      %v1671 = vpack.c.b16 %v1555, %v1551
      %v1672 = vpack.c.b16 %v1556, %v1552
      %v1673 = vpack.c.b16 %v1557, %v1553
      %v1674 = vpack.c.b16 %v1558, %v1554
      %v1675 = vpack.c.b16 %v1563, %v1559
      %v1676 = vpack.c.b16 %v1564, %v1560
      %v1677 = vpack.c.b16 %v1565, %v1561
      %v1678 = vpack.c.b16 %v1566, %v1562
      %v1679 = vpack.c.b16 %v1571, %v1567
      %v1680 = vpack.c.b16 %v1572, %v1568
      %v1681 = vpack.c.b16 %v1573, %v1569
      %v1682 = vpack.c.b16 %v1574, %v1570
      %v1683 = vpack.c.b16 %v1579, %v1575
      %v1684 = vpack.c.b16 %v1580, %v1576
      %v1685 = vpack.c.b16 %v1581, %v1577
      %v1686 = vpack.c.b16 %v1582, %v1578
      %v1687 = vpack.c.b16 %v1587, %v1583
      %v1688 = vpack.c.b16 %v1588, %v1584
      %v1689 = vpack.c.b16 %v1589, %v1585
      %v1690 = vpack.c.b16 %v1590, %v1586
      %v1691 = vpack.c.b16 %v1595, %v1591
      %v1692 = vpack.c.b16 %v1596, %v1592
      %v1693 = vpack.c.b16 %v1597, %v1593
      %v1694 = vpack.c.b16 %v1598, %v1594
      %v1695 = vpack.c.b16 %v1603, %v1599
      %v1696 = vpack.c.b16 %v1604, %v1600
      %v1697 = vpack.c.b16 %v1605, %v1601
      %v1698 = vpack.c.b16 %v1606, %v1602
      %v1699 = vpack.c.b16 %v1611, %v1607
      %v1700 = vpack.c.b16 %v1612, %v1608
      %v1701 = vpack.c.b16 %v1613, %v1609
      %v1702 = vpack.c.b16 %v1614, %v1610
      %v1703 = vpack.c.b16 %v1619, %v1615
      %v1704 = vpack.c.b16 %v1620, %v1616
      %v1705 = vpack.c.b16 %v1621, %v1617
      %v1706 = vpack.c.b16 %v1622, %v1618
      %v1707 = vpack.c.b16 %v1627, %v1623
      %v1708 = vpack.c.b16 %v1628, %v1624
      %v1709 = vpack.c.b16 %v1629, %v1625
      %v1710 = vpack.c.b16 %v1630, %v1626
      %v1711 = vpack.c.b16 %v1635, %v1631
      %v1712 = vpack.c.b16 %v1636, %v1632
      %v1713 = vpack.c.b16 %v1637, %v1633
      %v1714 = vpack.c.b16 %v1638, %v1634
      %v1715 = vpack.c.b16 %v1643, %v1639
      %v1716 = vpack.c.b16 %v1644, %v1640
      %v1717 = vpack.c.b16 %v1645, %v1641
      %v1718 = vpack.c.b16 %v1646, %v1642
      %v1719 = vpack.c.b16 %v1651, %v1647
      %v1720 = vpack.c.b16 %v1652, %v1648
      %v1721 = vpack.c.b16 %v1653, %v1649
      %v1722 = vpack.c.b16 %v1654, %v1650
      %v1723 = vpack.c.b16 %v1659, %v1655
      %v1724 = vpack.c.b16 %v1660, %v1656
      %v1725 = vpack.c.b16 %v1661, %v1657
      %v1726 = vpack.c.b16 %v1662, %v1658
      %v1855 = vunpack.c.l.b16 %v1403
      %v1856 = vunpack.c.l.b16 %v1404
      %v1857 = vunpack.c.l.b16 %v1405
      %v1858 = vunpack.c.l.b16 %v1406
      %v1859 = vunpack.c.l.b16 %v1407
      %v1860 = vunpack.c.l.b16 %v1408
      %v1861 = vunpack.c.l.b16 %v1409
      %v1862 = vunpack.c.l.b16 %v1410
      %v1863 = vunpack.c.l.b16 %v1411
      %v1864 = vunpack.c.l.b16 %v1412
      %v1865 = vunpack.c.l.b16 %v1413
      %v1866 = vunpack.c.l.b16 %v1414
      %v1867 = vunpack.c.l.b16 %v1415
      %v1868 = vunpack.c.l.b16 %v1416
      %v1869 = vunpack.c.l.b16 %v1417
      %v1870 = vunpack.c.l.b16 %v1418
      %v1871 = vunpack.c.l.b16 %v1419
      %v1872 = vunpack.c.l.b16 %v1420
      %v1873 = vunpack.c.l.b16 %v1421
      %v1874 = vunpack.c.l.b16 %v1422
      %v1875 = vunpack.c.l.b16 %v1423
      %v1876 = vunpack.c.l.b16 %v1424
      %v1877 = vunpack.c.l.b16 %v1425
      %v1878 = vunpack.c.l.b16 %v1426
      %v1879 = vunpack.c.l.b16 %v1427
      %v1880 = vunpack.c.l.b16 %v1428
      %v1881 = vunpack.c.l.b16 %v1429
      %v1882 = vunpack.c.l.b16 %v1430
      %v1883 = vunpack.c.l.b16 %v1431
      %v1884 = vunpack.c.l.b16 %v1432
      %v1885 = vunpack.c.l.b16 %v1433
      %v1886 = vunpack.c.l.b16 %v1434
      %v1887 = vunpack.c.l.b16 %v1435
      %v1888 = vunpack.c.l.b16 %v1436
      %v1889 = vunpack.c.l.b16 %v1437
      %v1890 = vunpack.c.l.b16 %v1438
      %v1891 = vunpack.c.l.b16 %v1439
      %v1892 = vunpack.c.l.b16 %v1440
      %v1893 = vunpack.c.l.b16 %v1441
      %v1894 = vunpack.c.l.b16 %v1442
      %v1895 = vunpack.c.l.b16 %v1443
      %v1896 = vunpack.c.l.b16 %v1444
      %v1897 = vunpack.c.l.b16 %v1445
      %v1898 = vunpack.c.l.b16 %v1446
      %v1899 = vunpack.c.l.b16 %v1447
      %v1900 = vunpack.c.l.b16 %v1448
      %v1901 = vunpack.c.l.b16 %v1449
      %v1902 = vunpack.c.l.b16 %v1450
      %v1903 = vunpack.c.l.b16 %v1451
      %v1904 = vunpack.c.l.b16 %v1452
      %v1905 = vunpack.c.l.b16 %v1453
      %v1906 = vunpack.c.l.b16 %v1454
      %v1907 = vunpack.c.l.b16 %v1455
      %v1908 = vunpack.c.l.b16 %v1456
      %v1909 = vunpack.c.l.b16 %v1457
      %v1910 = vunpack.c.l.b16 %v1458
      %v1911 = vunpack.c.l.b16 %v1459
      %v1912 = vunpack.c.l.b16 %v1460
      %v1913 = vunpack.c.l.b16 %v1461
      %v1914 = vunpack.c.l.b16 %v1462
      %v1915 = vunpack.c.l.b16 %v1463
      %v1916 = vunpack.c.l.b16 %v1464
      %v1917 = vunpack.c.l.b16 %v1465
      %v1918 = vunpack.c.l.b16 %v1466
      %v1919 = vpack.c.b16 %v1856, %v1855
      %v1920 = vpack.c.b16 %v1858, %v1857
      %v1921 = vpack.c.b16 %v1860, %v1859
      %v1922 = vpack.c.b16 %v1862, %v1861
      %v1923 = vpack.c.b16 %v1864, %v1863
      %v1924 = vpack.c.b16 %v1866, %v1865
      %v1925 = vpack.c.b16 %v1868, %v1867
      %v1926 = vpack.c.b16 %v1870, %v1869
      %v1927 = vpack.c.b16 %v1872, %v1871
      %v1928 = vpack.c.b16 %v1874, %v1873
      %v1929 = vpack.c.b16 %v1876, %v1875
      %v1930 = vpack.c.b16 %v1878, %v1877
      %v1931 = vpack.c.b16 %v1880, %v1879
      %v1932 = vpack.c.b16 %v1882, %v1881
      %v1933 = vpack.c.b16 %v1884, %v1883
      %v1934 = vpack.c.b16 %v1886, %v1885
      %v1935 = vpack.c.b16 %v1888, %v1887
      %v1936 = vpack.c.b16 %v1890, %v1889
      %v1937 = vpack.c.b16 %v1892, %v1891
      %v1938 = vpack.c.b16 %v1894, %v1893
      %v1939 = vpack.c.b16 %v1896, %v1895
      %v1940 = vpack.c.b16 %v1898, %v1897
      %v1941 = vpack.c.b16 %v1900, %v1899
      %v1942 = vpack.c.b16 %v1902, %v1901
      %v1943 = vpack.c.b16 %v1904, %v1903
      %v1944 = vpack.c.b16 %v1906, %v1905
      %v1945 = vpack.c.b16 %v1908, %v1907
      %v1946 = vpack.c.b16 %v1910, %v1909
      %v1947 = vpack.c.b16 %v1912, %v1911
      %v1948 = vpack.c.b16 %v1914, %v1913
      %v1949 = vpack.c.b16 %v1916, %v1915
      %v1950 = vpack.c.b16 %v1918, %v1917
      %1983 = vmatpush.bf16.msra.mxu0 %v1926
      %1984 = vmatpush.bf16.msra.mxu0 %v1925
      %1985 = vmatpush.bf16.msra.mxu0 %v1924
      %1986 = vmatpush.bf16.msra.mxu0 %v1923
      %1987 = vmatpush.bf16.msra.mxu0 %v1922
      %1988 = vmatpush.bf16.msra.mxu0 %v1921
      %1989 = vmatpush.bf16.msra.mxu0 %v1920
      %1990 = vmatpush.bf16.msra.mxu0 %v1919
      %1991 = vmatmul.bf16.gmra.mxu0 %v1663
      %v1992 = vpop.f32.mrf.mxu0
      %v1993 = vadd.f32 %v1469, %v1992
      %v1994 = vpop.f32.mrf.mxu0
      %v1995 = vadd.f32 %v1469, %v1994
      %1996 = vmatmul.bf16.gmra.mxu0 %v1667
      %v1997 = vpop.f32.mrf.mxu0
      %v1998 = vadd.f32 %v1469, %v1997
      %v1999 = vpop.f32.mrf.mxu0
      %v2000 = vadd.f32 %v1469, %v1999
      %2001 = vmatmul.bf16.gmra.mxu0 %v1671
      %v2002 = vpop.f32.mrf.mxu0
      %v2003 = vadd.f32 %v1469, %v2002
      %v2004 = vpop.f32.mrf.mxu0
      %v2005 = vadd.f32 %v1469, %v2004
      %2006 = vmatmul.bf16.gmra.mxu0 %v1675
      %v2007 = vpop.f32.mrf.mxu0
      %v2008 = vadd.f32 %v1469, %v2007
      %v2009 = vpop.f32.mrf.mxu0
      %v2010 = vadd.f32 %v1469, %v2009
      %2011 = vmatmul.bf16.gmra.mxu0 %v1679
      %v2012 = vpop.f32.mrf.mxu0
      %v2013 = vadd.f32 %v1469, %v2012
      %v2014 = vpop.f32.mrf.mxu0
      %v2015 = vadd.f32 %v1469, %v2014
      %2016 = vmatmul.bf16.gmra.mxu0 %v1683
      %v2017 = vpop.f32.mrf.mxu0
      %v2018 = vadd.f32 %v1469, %v2017
      %v2019 = vpop.f32.mrf.mxu0
      %v2020 = vadd.f32 %v1469, %v2019
      %2021 = vmatmul.bf16.gmra.mxu0 %v1687
      %v2022 = vpop.f32.mrf.mxu0
      %v2023 = vadd.f32 %v1469, %v2022
      %v2024 = vpop.f32.mrf.mxu0
      %v2025 = vadd.f32 %v1469, %v2024
      %2026 = vmatmul.bf16.gmra.mxu0 %v1691
      %v2027 = vpop.f32.mrf.mxu0
      %v2028 = vadd.f32 %v1469, %v2027
      %v2029 = vpop.f32.mrf.mxu0
      %v2030 = vadd.f32 %v1469, %v2029
      %2031 = vmatmul.bf16.gmra.mxu0 %v1695
      %v2032 = vpop.f32.mrf.mxu0
      %v2033 = vadd.f32 %v1469, %v2032
      %v2034 = vpop.f32.mrf.mxu0
      %v2035 = vadd.f32 %v1469, %v2034
      %2036 = vmatmul.bf16.gmra.mxu0 %v1699
      %v2037 = vpop.f32.mrf.mxu0
      %v2038 = vadd.f32 %v1469, %v2037
      %v2039 = vpop.f32.mrf.mxu0
      %v2040 = vadd.f32 %v1469, %v2039
      %2041 = vmatmul.bf16.gmra.mxu0 %v1703
      %v2042 = vpop.f32.mrf.mxu0
      %v2043 = vadd.f32 %v1469, %v2042
      %v2044 = vpop.f32.mrf.mxu0
      %v2045 = vadd.f32 %v1469, %v2044
      %2046 = vmatmul.bf16.gmra.mxu0 %v1707
      %v2047 = vpop.f32.mrf.mxu0
      %v2048 = vadd.f32 %v1469, %v2047
      %v2049 = vpop.f32.mrf.mxu0
      %v2050 = vadd.f32 %v1469, %v2049
      %2051 = vmatmul.bf16.gmra.mxu0 %v1711
      %v2052 = vpop.f32.mrf.mxu0
      %v2053 = vadd.f32 %v1469, %v2052
      %v2054 = vpop.f32.mrf.mxu0
      %v2055 = vadd.f32 %v1469, %v2054
      %2056 = vmatmul.bf16.gmra.mxu0 %v1715
      %v2057 = vpop.f32.mrf.mxu0
      %v2058 = vadd.f32 %v1469, %v2057
      %v2059 = vpop.f32.mrf.mxu0
      %v2060 = vadd.f32 %v1469, %v2059
      %2061 = vmatmul.bf16.gmra.mxu0 %v1719
      %v2062 = vpop.f32.mrf.mxu0
      %v2063 = vadd.f32 %v1469, %v2062
      %v2064 = vpop.f32.mrf.mxu0
      %v2065 = vadd.f32 %v1469, %v2064
      %2066 = vmatmul.bf16.gmra.mxu0 %v1723
      %v2067 = vpop.f32.mrf.mxu0
      %v2068 = vadd.f32 %v1469, %v2067
      %v2069 = vpop.f32.mrf.mxu0
      %v2070 = vadd.f32 %v1469, %v2069
      %2071 = vdwg.mxu0
      %2072 = vmatpush.bf16.msra.mxu0 %v1934
      %2073 = vmatpush.bf16.msra.mxu0 %v1933
      %2074 = vmatpush.bf16.msra.mxu0 %v1932
      %2075 = vmatpush.bf16.msra.mxu0 %v1931
      %2076 = vmatpush.bf16.msra.mxu0 %v1930
      %2077 = vmatpush.bf16.msra.mxu0 %v1929
      %2078 = vmatpush.bf16.msra.mxu0 %v1928
      %2079 = vmatpush.bf16.msra.mxu0 %v1927
      %2080 = vmatmul.bf16.gmra.mxu0 %v1664
      %v2081 = vpop.f32.mrf.mxu0
      %v2082 = vadd.f32 %v1993, %v2081
      %v2083 = vpop.f32.mrf.mxu0
      %v2084 = vadd.f32 %v1995, %v2083
      %2085 = vmatmul.bf16.gmra.mxu0 %v1668
      %v2086 = vpop.f32.mrf.mxu0
      %v2087 = vadd.f32 %v1998, %v2086
      %v2088 = vpop.f32.mrf.mxu0
      %v2089 = vadd.f32 %v2000, %v2088
      %2090 = vmatmul.bf16.gmra.mxu0 %v1672
      %v2091 = vpop.f32.mrf.mxu0
      %v2092 = vadd.f32 %v2003, %v2091
      %v2093 = vpop.f32.mrf.mxu0
      %v2094 = vadd.f32 %v2005, %v2093
      %2095 = vmatmul.bf16.gmra.mxu0 %v1676
      %v2096 = vpop.f32.mrf.mxu0
      %v2097 = vadd.f32 %v2008, %v2096
      %v2098 = vpop.f32.mrf.mxu0
      %v2099 = vadd.f32 %v2010, %v2098
      %2100 = vmatmul.bf16.gmra.mxu0 %v1680
      %v2101 = vpop.f32.mrf.mxu0
      %v2102 = vadd.f32 %v2013, %v2101
      %v2103 = vpop.f32.mrf.mxu0
      %v2104 = vadd.f32 %v2015, %v2103
      %2105 = vmatmul.bf16.gmra.mxu0 %v1684
      %v2106 = vpop.f32.mrf.mxu0
      %v2107 = vadd.f32 %v2018, %v2106
      %v2108 = vpop.f32.mrf.mxu0
      %v2109 = vadd.f32 %v2020, %v2108
      %2110 = vmatmul.bf16.gmra.mxu0 %v1688
      %v2111 = vpop.f32.mrf.mxu0
      %v2112 = vadd.f32 %v2023, %v2111
      %v2113 = vpop.f32.mrf.mxu0
      %v2114 = vadd.f32 %v2025, %v2113
      %2115 = vmatmul.bf16.gmra.mxu0 %v1692
      %v2116 = vpop.f32.mrf.mxu0
      %v2117 = vadd.f32 %v2028, %v2116
      %v2118 = vpop.f32.mrf.mxu0
      %v2119 = vadd.f32 %v2030, %v2118
      %2120 = vmatmul.bf16.gmra.mxu0 %v1696
      %v2121 = vpop.f32.mrf.mxu0
      %v2122 = vadd.f32 %v2033, %v2121
      %v2123 = vpop.f32.mrf.mxu0
      %v2124 = vadd.f32 %v2035, %v2123
      %2125 = vmatmul.bf16.gmra.mxu0 %v1700
      %v2126 = vpop.f32.mrf.mxu0
      %v2127 = vadd.f32 %v2038, %v2126
      %v2128 = vpop.f32.mrf.mxu0
      %v2129 = vadd.f32 %v2040, %v2128
      %2130 = vmatmul.bf16.gmra.mxu0 %v1704
      %v2131 = vpop.f32.mrf.mxu0
      %v2132 = vadd.f32 %v2043, %v2131
      %v2133 = vpop.f32.mrf.mxu0
      %v2134 = vadd.f32 %v2045, %v2133
      %2135 = vmatmul.bf16.gmra.mxu0 %v1708
      %v2136 = vpop.f32.mrf.mxu0
      %v2137 = vadd.f32 %v2048, %v2136
      %v2138 = vpop.f32.mrf.mxu0
      %v2139 = vadd.f32 %v2050, %v2138
      %2140 = vmatmul.bf16.gmra.mxu0 %v1712
      %v2141 = vpop.f32.mrf.mxu0
      %v2142 = vadd.f32 %v2053, %v2141
      %v2143 = vpop.f32.mrf.mxu0
      %v2144 = vadd.f32 %v2055, %v2143
      %2145 = vmatmul.bf16.gmra.mxu0 %v1716
      %v2146 = vpop.f32.mrf.mxu0
      %v2147 = vadd.f32 %v2058, %v2146
      %v2148 = vpop.f32.mrf.mxu0
      %v2149 = vadd.f32 %v2060, %v2148
      %2150 = vmatmul.bf16.gmra.mxu0 %v1720
      %v2151 = vpop.f32.mrf.mxu0
      %v2152 = vadd.f32 %v2063, %v2151
      %v2153 = vpop.f32.mrf.mxu0
      %v2154 = vadd.f32 %v2065, %v2153
      %2155 = vmatmul.bf16.gmra.mxu0 %v1724
      %v2156 = vpop.f32.mrf.mxu0
      %v2157 = vadd.f32 %v2068, %v2156
      %v2158 = vpop.f32.mrf.mxu0
      %v2159 = vadd.f32 %v2070, %v2158
      %2160 = vdwg.mxu0
      %2161 = vmatpush.bf16.msra.mxu0 %v1942
      %2162 = vmatpush.bf16.msra.mxu0 %v1941
      %2163 = vmatpush.bf16.msra.mxu0 %v1940
      %2164 = vmatpush.bf16.msra.mxu0 %v1939
      %2165 = vmatpush.bf16.msra.mxu0 %v1938
      %2166 = vmatpush.bf16.msra.mxu0 %v1937
      %2167 = vmatpush.bf16.msra.mxu0 %v1936
      %2168 = vmatpush.bf16.msra.mxu0 %v1935
      %2169 = vmatmul.bf16.gmra.mxu0 %v1665
      %v2170 = vpop.f32.mrf.mxu0
      %v2171 = vadd.f32 %v2082, %v2170
      %v2172 = vpop.f32.mrf.mxu0
      %v2173 = vadd.f32 %v2084, %v2172
      %2174 = vmatmul.bf16.gmra.mxu0 %v1669
      %v2175 = vpop.f32.mrf.mxu0
      %v2176 = vadd.f32 %v2087, %v2175
      %v2177 = vpop.f32.mrf.mxu0
      %v2178 = vadd.f32 %v2089, %v2177
      %2179 = vmatmul.bf16.gmra.mxu0 %v1673
      %v2180 = vpop.f32.mrf.mxu0
      %v2181 = vadd.f32 %v2092, %v2180
      %v2182 = vpop.f32.mrf.mxu0
      %v2183 = vadd.f32 %v2094, %v2182
      %2184 = vmatmul.bf16.gmra.mxu0 %v1677
      %v2185 = vpop.f32.mrf.mxu0
      %v2186 = vadd.f32 %v2097, %v2185
      %v2187 = vpop.f32.mrf.mxu0
      %v2188 = vadd.f32 %v2099, %v2187
      %2189 = vmatmul.bf16.gmra.mxu0 %v1681
      %v2190 = vpop.f32.mrf.mxu0
      %v2191 = vadd.f32 %v2102, %v2190
      %v2192 = vpop.f32.mrf.mxu0
      %v2193 = vadd.f32 %v2104, %v2192
      %2194 = vmatmul.bf16.gmra.mxu0 %v1685
      %v2195 = vpop.f32.mrf.mxu0
      %v2196 = vadd.f32 %v2107, %v2195
      %v2197 = vpop.f32.mrf.mxu0
      %v2198 = vadd.f32 %v2109, %v2197
      %2199 = vmatmul.bf16.gmra.mxu0 %v1689
      %v2200 = vpop.f32.mrf.mxu0
      %v2201 = vadd.f32 %v2112, %v2200
      %v2202 = vpop.f32.mrf.mxu0
      %v2203 = vadd.f32 %v2114, %v2202
      %2204 = vmatmul.bf16.gmra.mxu0 %v1693
      %v2205 = vpop.f32.mrf.mxu0
      %v2206 = vadd.f32 %v2117, %v2205
      %v2207 = vpop.f32.mrf.mxu0
      %v2208 = vadd.f32 %v2119, %v2207
      %2209 = vmatmul.bf16.gmra.mxu0 %v1697
      %v2210 = vpop.f32.mrf.mxu0
      %v2211 = vadd.f32 %v2122, %v2210
      %v2212 = vpop.f32.mrf.mxu0
      %v2213 = vadd.f32 %v2124, %v2212
      %2214 = vmatmul.bf16.gmra.mxu0 %v1701
      %v2215 = vpop.f32.mrf.mxu0
      %v2216 = vadd.f32 %v2127, %v2215
      %v2217 = vpop.f32.mrf.mxu0
      %v2218 = vadd.f32 %v2129, %v2217
      %2219 = vmatmul.bf16.gmra.mxu0 %v1705
      %v2220 = vpop.f32.mrf.mxu0
      %v2221 = vadd.f32 %v2132, %v2220
      %v2222 = vpop.f32.mrf.mxu0
      %v2223 = vadd.f32 %v2134, %v2222
      %2224 = vmatmul.bf16.gmra.mxu0 %v1709
      %v2225 = vpop.f32.mrf.mxu0
      %v2226 = vadd.f32 %v2137, %v2225
      %v2227 = vpop.f32.mrf.mxu0
      %v2228 = vadd.f32 %v2139, %v2227
      %2229 = vmatmul.bf16.gmra.mxu0 %v1713
      %v2230 = vpop.f32.mrf.mxu0
      %v2231 = vadd.f32 %v2142, %v2230
      %v2232 = vpop.f32.mrf.mxu0
      %v2233 = vadd.f32 %v2144, %v2232
      %2234 = vmatmul.bf16.gmra.mxu0 %v1717
      %v2235 = vpop.f32.mrf.mxu0
      %v2236 = vadd.f32 %v2147, %v2235
      %v2237 = vpop.f32.mrf.mxu0
      %v2238 = vadd.f32 %v2149, %v2237
      %2239 = vmatmul.bf16.gmra.mxu0 %v1721
      %v2240 = vpop.f32.mrf.mxu0
      %v2241 = vadd.f32 %v2152, %v2240
      %v2242 = vpop.f32.mrf.mxu0
      %v2243 = vadd.f32 %v2154, %v2242
      %2244 = vmatmul.bf16.gmra.mxu0 %v1725
      %v2245 = vpop.f32.mrf.mxu0
      %v2246 = vadd.f32 %v2157, %v2245
      %v2247 = vpop.f32.mrf.mxu0
      %v2248 = vadd.f32 %v2159, %v2247
      %2249 = vdwg.mxu0
      %2250 = vmatpush.bf16.msra.mxu0 %v1950
      %2251 = vmatpush.bf16.msra.mxu0 %v1949
      %2252 = vmatpush.bf16.msra.mxu0 %v1948
      %2253 = vmatpush.bf16.msra.mxu0 %v1947
      %2254 = vmatpush.bf16.msra.mxu0 %v1946
      %2255 = vmatpush.bf16.msra.mxu0 %v1945
      %2256 = vmatpush.bf16.msra.mxu0 %v1944
      %2257 = vmatpush.bf16.msra.mxu0 %v1943
      %2258 = vmatmul.bf16.gmra.mxu0 %v1666
      %v2259 = vpop.f32.mrf.mxu0
      %v2260 = vadd.f32 %v2171, %v2259
      %v2261 = vpop.f32.mrf.mxu0
      %v2262 = vadd.f32 %v2173, %v2261
      %2263 = vmatmul.bf16.gmra.mxu0 %v1670
      %v2264 = vpop.f32.mrf.mxu0
      %v2265 = vadd.f32 %v2176, %v2264
      %v2266 = vpop.f32.mrf.mxu0
      %v2267 = vadd.f32 %v2178, %v2266
      %2268 = vmatmul.bf16.gmra.mxu0 %v1674
      %v2269 = vpop.f32.mrf.mxu0
      %v2270 = vadd.f32 %v2181, %v2269
      %v2271 = vpop.f32.mrf.mxu0
      %v2272 = vadd.f32 %v2183, %v2271
      %2273 = vmatmul.bf16.gmra.mxu0 %v1678
      %v2274 = vpop.f32.mrf.mxu0
      %v2275 = vadd.f32 %v2186, %v2274
      %v2276 = vpop.f32.mrf.mxu0
      %v2277 = vadd.f32 %v2188, %v2276
      %2278 = vmatmul.bf16.gmra.mxu0 %v1682
      %v2279 = vpop.f32.mrf.mxu0
      %v2280 = vadd.f32 %v2191, %v2279
      %v2281 = vpop.f32.mrf.mxu0
      %v2282 = vadd.f32 %v2193, %v2281
      %2283 = vmatmul.bf16.gmra.mxu0 %v1686
      %v2284 = vpop.f32.mrf.mxu0
      %v2285 = vadd.f32 %v2196, %v2284
      %v2286 = vpop.f32.mrf.mxu0
      %v2287 = vadd.f32 %v2198, %v2286
      %2288 = vmatmul.bf16.gmra.mxu0 %v1690
      %v2289 = vpop.f32.mrf.mxu0
      %v2290 = vadd.f32 %v2201, %v2289
      %v2291 = vpop.f32.mrf.mxu0
      %v2292 = vadd.f32 %v2203, %v2291
      %2293 = vmatmul.bf16.gmra.mxu0 %v1694
      %v2294 = vpop.f32.mrf.mxu0
      %v2295 = vadd.f32 %v2206, %v2294
      %v2296 = vpop.f32.mrf.mxu0
      %v2297 = vadd.f32 %v2208, %v2296
      %2298 = vmatmul.bf16.gmra.mxu0 %v1698
      %v2299 = vpop.f32.mrf.mxu0
      %v2300 = vadd.f32 %v2211, %v2299
      %v2301 = vpop.f32.mrf.mxu0
      %v2302 = vadd.f32 %v2213, %v2301
      %2303 = vmatmul.bf16.gmra.mxu0 %v1702
      %v2304 = vpop.f32.mrf.mxu0
      %v2305 = vadd.f32 %v2216, %v2304
      %v2306 = vpop.f32.mrf.mxu0
      %v2307 = vadd.f32 %v2218, %v2306
      %2308 = vmatmul.bf16.gmra.mxu0 %v1706
      %v2309 = vpop.f32.mrf.mxu0
      %v2310 = vadd.f32 %v2221, %v2309
      %v2311 = vpop.f32.mrf.mxu0
      %v2312 = vadd.f32 %v2223, %v2311
      %2313 = vmatmul.bf16.gmra.mxu0 %v1710
      %v2314 = vpop.f32.mrf.mxu0
      %v2315 = vadd.f32 %v2226, %v2314
      %v2316 = vpop.f32.mrf.mxu0
      %v2317 = vadd.f32 %v2228, %v2316
      %2318 = vmatmul.bf16.gmra.mxu0 %v1714
      %v2319 = vpop.f32.mrf.mxu0
      %v2320 = vadd.f32 %v2231, %v2319
      %v2321 = vpop.f32.mrf.mxu0
      %v2322 = vadd.f32 %v2233, %v2321
      %2323 = vmatmul.bf16.gmra.mxu0 %v1718
      %v2324 = vpop.f32.mrf.mxu0
      %v2325 = vadd.f32 %v2236, %v2324
      %v2326 = vpop.f32.mrf.mxu0
      %v2327 = vadd.f32 %v2238, %v2326
      %2328 = vmatmul.bf16.gmra.mxu0 %v1722
      %v2329 = vpop.f32.mrf.mxu0
      %v2330 = vadd.f32 %v2241, %v2329
      %v2331 = vpop.f32.mrf.mxu0
      %v2332 = vadd.f32 %v2243, %v2331
      %2333 = vmatmul.bf16.gmra.mxu0 %v1726
      %v2334 = vpop.f32.mrf.mxu0
      %v2335 = vadd.f32 %v2246, %v2334
      %v2336 = vpop.f32.mrf.mxu0
      %v2337 = vadd.f32 %v2248, %v2336
      %2338 = vdwg.mxu0
      %v2339 = vmul.f32 %v2260, 0.2
      %v2340 = vmul.f32 %v2262, 0.2
      %v2341 = vmul.f32 %v2265, 0.2
      %v2342 = vmul.f32 %v2267, 0.2
      %v2343 = vmul.f32 %v2270, 0.2
      %v2344 = vmul.f32 %v2272, 0.2
      %v2345 = vmul.f32 %v2275, 0.2
      %v2346 = vmul.f32 %v2277, 0.2
      %v2347 = vmul.f32 %v2280, 0.2
      %v2348 = vmul.f32 %v2282, 0.2
      %v2349 = vmul.f32 %v2285, 0.2
      %v2350 = vmul.f32 %v2287, 0.2
      %v2351 = vmul.f32 %v2290, 0.2
      %v2352 = vmul.f32 %v2292, 0.2
      %v2353 = vmul.f32 %v2295, 0.2
      %v2354 = vmul.f32 %v2297, 0.2
      %v2355 = vmul.f32 %v2300, 0.2
      %v2356 = vmul.f32 %v2302, 0.2
      %v2357 = vmul.f32 %v2305, 0.2
      %v2358 = vmul.f32 %v2307, 0.2
      %v2359 = vmul.f32 %v2310, 0.2
      %v2360 = vmul.f32 %v2312, 0.2
      %v2361 = vmul.f32 %v2315, 0.2
      %v2362 = vmul.f32 %v2317, 0.2
      %v2363 = vmul.f32 %v2320, 0.2
      %v2364 = vmul.f32 %v2322, 0.2
      %v2365 = vmul.f32 %v2325, 0.2
      %v2366 = vmul.f32 %v2327, 0.2
      %v2367 = vmul.f32 %v2330, 0.2
      %v2368 = vmul.f32 %v2332, 0.2
      %v2369 = vmul.f32 %v2335, 0.2
      %v2370 = vmul.f32 %v2337, 0.2
      %v2371 = vmax.f32 %v2260, %v2339
      %v2372 = vmax.f32 %v2262, %v2340
      %v2373 = vmax.f32 %v2265, %v2341
      %v2374 = vmax.f32 %v2267, %v2342
      %v2375 = vmax.f32 %v2270, %v2343
      %v2376 = vmax.f32 %v2272, %v2344
      %v2377 = vmax.f32 %v2275, %v2345
      %v2378 = vmax.f32 %v2277, %v2346
      %v2379 = vmax.f32 %v2280, %v2347
      %v2380 = vmax.f32 %v2282, %v2348
      %v2381 = vmax.f32 %v2285, %v2349
      %v2382 = vmax.f32 %v2287, %v2350
      %v2383 = vmax.f32 %v2290, %v2351
      %v2384 = vmax.f32 %v2292, %v2352
      %v2385 = vmax.f32 %v2295, %v2353
      %v2386 = vmax.f32 %v2297, %v2354
      %v2387 = vmax.f32 %v2300, %v2355
      %v2388 = vmax.f32 %v2302, %v2356
      %v2389 = vmax.f32 %v2305, %v2357
      %v2390 = vmax.f32 %v2307, %v2358
      %v2391 = vmax.f32 %v2310, %v2359
      %v2392 = vmax.f32 %v2312, %v2360
      %v2393 = vmax.f32 %v2315, %v2361
      %v2394 = vmax.f32 %v2317, %v2362
      %v2395 = vmax.f32 %v2320, %v2363
      %v2396 = vmax.f32 %v2322, %v2364
      %v2397 = vmax.f32 %v2325, %v2365
      %v2398 = vmax.f32 %v2327, %v2366
      %v2399 = vmax.f32 %v2330, %v2367
      %v2400 = vmax.f32 %v2332, %v2368
      %v2401 = vmax.f32 %v2335, %v2369
      %v2402 = vmax.f32 %v2337, %v2370
      %v2403 = vpack.c.bf16 %v2371, %v2371
      %v2404 = vpack.c.bf16 %v2372, %v2372
      %v2405 = vpack.c.bf16 %v2373, %v2373
      %v2406 = vpack.c.bf16 %v2374, %v2374
      %v2407 = vpack.c.bf16 %v2375, %v2375
      %v2408 = vpack.c.bf16 %v2376, %v2376
      %v2409 = vpack.c.bf16 %v2377, %v2377
      %v2410 = vpack.c.bf16 %v2378, %v2378
      %v2411 = vpack.c.bf16 %v2379, %v2379
      %v2412 = vpack.c.bf16 %v2380, %v2380
      %v2413 = vpack.c.bf16 %v2381, %v2381
      %v2414 = vpack.c.bf16 %v2382, %v2382
      %v2415 = vpack.c.bf16 %v2383, %v2383
      %v2416 = vpack.c.bf16 %v2384, %v2384
      %v2417 = vpack.c.bf16 %v2385, %v2385
      %v2418 = vpack.c.bf16 %v2386, %v2386
      %v2419 = vpack.c.bf16 %v2387, %v2387
      %v2420 = vpack.c.bf16 %v2388, %v2388
      %v2421 = vpack.c.bf16 %v2389, %v2389
      %v2422 = vpack.c.bf16 %v2390, %v2390
      %v2423 = vpack.c.bf16 %v2391, %v2391
      %v2424 = vpack.c.bf16 %v2392, %v2392
      %v2425 = vpack.c.bf16 %v2393, %v2393
      %v2426 = vpack.c.bf16 %v2394, %v2394
      %v2427 = vpack.c.bf16 %v2395, %v2395
      %v2428 = vpack.c.bf16 %v2396, %v2396
      %v2429 = vpack.c.bf16 %v2397, %v2397
      %v2430 = vpack.c.bf16 %v2398, %v2398
      %v2431 = vpack.c.bf16 %v2399, %v2399
      %v2432 = vpack.c.bf16 %v2400, %v2400
      %v2433 = vpack.c.bf16 %v2401, %v2401
      %v2434 = vpack.c.bf16 %v2402, %v2402
      %vm2435 = vcmask 60416
      %2436 = vst.msk [vmem:[%s192] sm:$0xf] %vm2435, %v2403
      %2437 = vst.msk [vmem:[%s192 + $0x4] sm:$0xf] %vm2435, %v2404
      %2438 = vst.msk [vmem:[%s192 + $0x8] sm:$0xf] %vm2435, %v2405
      %2439 = vst.msk [vmem:[%s192 + $0xc] sm:$0xf] %vm2435, %v2406
      %2440 = vst.msk [vmem:[%s192 + $0x10] sm:$0xf] %vm2435, %v2407
      %2441 = vst.msk [vmem:[%s192 + $0x14] sm:$0xf] %vm2435, %v2408
      %2442 = vst.msk [vmem:[%s192 + $0x18] sm:$0xf] %vm2435, %v2409
      %2443 = vst.msk [vmem:[%s192 + $0x1c] sm:$0xf] %vm2435, %v2410
      %2444 = vst.msk [vmem:[%s192 + $0x20] sm:$0xf] %vm2435, %v2411
      %2445 = vst.msk [vmem:[%s192 + $0x24] sm:$0xf] %vm2435, %v2412
      %2446 = vst.msk [vmem:[%s192 + $0x28] sm:$0xf] %vm2435, %v2413
      %2447 = vst.msk [vmem:[%s192 + $0x2c] sm:$0xf] %vm2435, %v2414
      %2448 = vst.msk [vmem:[%s192 + $0x30] sm:$0xf] %vm2435, %v2415
      %2449 = vst.msk [vmem:[%s192 + $0x34] sm:$0xf] %vm2435, %v2416
      %2450 = vst.msk [vmem:[%s192 + $0x38] sm:$0xf] %vm2435, %v2417
      %2451 = vst.msk [vmem:[%s192 + $0x3c] sm:$0xf] %vm2435, %v2418
      %2452 = vst.msk [vmem:[%s192 + $0x40] sm:$0xf] %vm2435, %v2419
      %2453 = vst.msk [vmem:[%s192 + $0x44] sm:$0xf] %vm2435, %v2420
      %2454 = vst.msk [vmem:[%s192 + $0x48] sm:$0xf] %vm2435, %v2421
      %2455 = vst.msk [vmem:[%s192 + $0x4c] sm:$0xf] %vm2435, %v2422
      %2456 = vst.msk [vmem:[%s192 + $0x50] sm:$0xf] %vm2435, %v2423
      %2457 = vst.msk [vmem:[%s192 + $0x54] sm:$0xf] %vm2435, %v2424
      %2458 = vst.msk [vmem:[%s192 + $0x58] sm:$0xf] %vm2435, %v2425
      %2459 = vst.msk [vmem:[%s192 + $0x5c] sm:$0xf] %vm2435, %v2426
      %2460 = vst.msk [vmem:[%s192 + $0x60] sm:$0xf] %vm2435, %v2427
      %2461 = vst.msk [vmem:[%s192 + $0x64] sm:$0xf] %vm2435, %v2428
      %2462 = vst.msk [vmem:[%s192 + $0x68] sm:$0xf] %vm2435, %v2429
      %2463 = vst.msk [vmem:[%s192 + $0x6c] sm:$0xf] %vm2435, %v2430
      %2464 = vst.msk [vmem:[%s192 + $0x70] sm:$0xf] %vm2435, %v2431
      %2465 = vst.msk [vmem:[%s192 + $0x74] sm:$0xf] %vm2435, %v2432
      %2466 = vst.msk [vmem:[%s192 + $0x78] sm:$0xf] %vm2435, %v2433
      %2467 = vst.msk [vmem:[%s192 + $0x7c] sm:$0xf] %vm2435, %v2434
      %s2468 = smul.u32 32, %s19
      %p2469 = scmp.lt.s32.totalorder %s18, 1
      %s2470 = scalar_select %p2469, %s18, 1
      %p2471 = scmp.lt.s32.totalorder %s2468, 127
      %s2472 = scalar_select %p2471, %s2468, 127
      %s2473 = smul.addr %s2470, 128
      %s2474 = sadd.s32 %s2472, %s2473
      %s2475 = smul.addr %s2474, 4
      %s2476 = scalar_lea.vmem %s3, %s2475
      // Predicated region
      $region33: #{encoder_forward.8} parent=31 // pred_check
        %p2477 = pneg %p114
      $region34: #{encoder_forward.8} parent=31 // pred_check_branch
        %2479 = sbr.rel (%p2477) target = $region36
      $region35: #{encoder_forward.8} parent=31 // pred_region
        %s2480 = smul.u32 32, %s19
      $region36: #{encoder_forward.8} parent=31 // pred_fallthru
        _
    $region32: #{encoder_forward.8} parent=5 // pred_fallthru
      _
    %p2481 = scmp.le.s32.totalorder 2, %s9
    // Predicated region
    $region37: #{encoder_forward.8} parent=5 // pred_check
      %p2482 = pneg %p2481
    $region38: #{encoder_forward.8} parent=5 // pred_check_branch
      %2484 = sbr.rel (%p2482) target = $region40
    $region39: #{encoder_forward.8} parent=5 // pred_region
      %s2485 = ssub.s32 %s9, 2
      // Predicated region
      $region41: #{encoder_forward.8} parent=39 // pred_check
        %p2486 = pneg %p120
      $region42: #{encoder_forward.8} parent=39 // pred_check_branch
        %2488 = sbr.rel (%p2486) target = $region44
      $region43: #{encoder_forward.8} parent=39 // pred_region
        %s2489 = smul.u32 32, %s21
        %p2490 = scmp.lt.s32.totalorder %s20, 1
        %s2491 = scalar_select %p2490, %s20, 1
        %p2492 = scmp.lt.s32.totalorder %s2489, 127
        %s2493 = scalar_select %p2492, %s2489, 127
        %s2494 = smul.addr %s2491, 128
        %s2495 = sadd.s32 %s2493, %s2494
        %s2496 = smul.addr %s2495, 4
        %s2497 = scalar_lea.vmem %s3, %s2496
      $region44: #{encoder_forward.8} parent=39 // pred_fallthru
        _
    $region40: #{encoder_forward.8} parent=5 // pred_fallthru
      _
  $region6: #{encoder_forward.8} parent=0 // loop_footer
    %s13 = sadd.s32 1, %s9
  $region7: #{encoder_forward.8} parent=0 // loop_footer_branch
    %8 = sbr.rel target = $region3
  $region8: #{encoder_forward.8} parent=0 // loop_exit
    _

// kernel: encoder_forward.9
$region0: #{encoder_forward.9}
  #allocation0 [shape = 'u32[]', space=smem, size = 0x4, offset = 0x4, fixed_abs, tag = 'smem constant byte address 0x4 - core index']
  #allocation1 [shape = 'u32[72,128]{1,0:T(1,128)}', space=vmem, size = 0x9000, scoped, tag = 'internal scratch']
  #allocation2 [shape = 'bf16[128,512]{1,0:T(8,128)(2,1)}', space=vmem, size = 0x20000, scoped, tag = 'scratch operand']
  %s0 = inlined_call_operand.vmem [shape: bf16[2,17,17,32], index: 0, kind: input, shape index: {}]
  %s1 = inlined_call_operand.vmem [shape: bf16[512,16], index: 1, kind: input, shape index: {}]
  %s2 = inlined_call_operand.vmem [shape: f32[1,16], index: 2, kind: input, shape index: {}]
  %s3 = inlined_call_operand.vmem [shape: f32[2,256,16], index: 3, kind: output, shape index: {0}]
  %s4 = inlined_call_operand.vmem [shape: f32[2,2,2,16], index: 4, kind: output, shape index: {1}]
  %5 = xla_tuple %s3, %s4
  %s6 = sld [smem:[#allocation0]]
  $region53: #{encoder_forward.9} parent=0
    _
  %s8 = ssub.s32 1, %s6
  %s9 = scalar_select 0, %s8, %s6
  loop: start=0, step=1, limit=6
  $region2: #{encoder_forward.9} parent=0 // loop_pre_header
    _
  $region3: #{encoder_forward.9} parent=0 // loop_header
    %s11 = sphi 0, %s15
    %p12 = scmp.ge.s32.totalorder %s11, 6
    %s18 = sphi 0, %s30
    %s19 = sphi 0, %s26
    %s20 = sphi 0, %s18
    %s21 = sphi 0, %s19
    %s22 = sphi 0, %s20
    %s23 = sphi 0, %s21
    %s33 = sphi 0, %s35
    %s36 = sphi 0, %s33
    %s37 = sphi 0, %s36
    %s53 = sphi 0, %s37
    %s57 = sphi 0, %s57
    %s59 = sphi 0, %s57
    %s60 = sphi 0, %s59
    %s74 = sphi 0, %s60
    %s78 = sphi 0, %s78
    %s80 = sphi 0, %s78
    %s81 = sphi 0, %s80
    %s95 = sphi 0, %s81
    %s103 = sphi 0, %s105
    %s106 = sphi 0, %s103
    %s107 = sphi 0, %s106
    %s123 = sphi 0, %s107
    %s131 = sphi 0, %s133
    %s134 = sphi 0, %s131
    %s135 = sphi 0, %s134
    %s151 = sphi 0, %s135
  $region4: #{encoder_forward.9} parent=0 // loop_header_branch
    %14 = sbr.rel (%p12) target = $region8
  $region5: #{encoder_forward.9} parent=0 // loop_body
    %s16 = ssub.s32 %s11, 1
    %s17 = ssub.s32 %s11, 2
    %s24 = sadd.s32 1, %s19
    %p25 = scmp.ge.s32.totalorder %s24, 2
    %s26 = scalar_select %p25, 0, %s24
    %s27 = sadd.s32 1, %s18
    %s28 = scalar_select %p25, %s27, %s18
    %p29 = scmp.ge.s32.totalorder %s28, 2
    %s30 = scalar_select %p29, 0, %s28
    %s31 = ssub.s32 %s18, %s30
    %p32 = scmp.eq.s32.totalorder %s31, 0
    %s34 = sadd.s32 %s33, 1
    %s35 = scalar_select %p32, %s33, %s34
    %p38 = pneg %p32
    %p39 = scmp.eq.s32.totalorder %s11, 3
    %p40 = por %p38, %p39
    %p41 = scmp.ne.s32.totalorder %s33, %s36
    %p42 = scmp.eq.s32.totalorder %s11, 0
    %p43 = por %p41, %p42
    %p44 = scmp.ne.s32.totalorder %s33, %s36
    %p45 = scmp.eq.s32.totalorder %s16, 3
    %p46 = por %p44, %p45
    %p47 = scmp.ne.s32.totalorder %s36, %s37
    %p48 = scmp.eq.s32.totalorder %s16, 0
    %p49 = por %p47, %p48
    %p50 = scmp.ne.s32.totalorder %s36, %s37
    %p51 = scmp.eq.s32.totalorder %s17, 3
    %p52 = por %p50, %p51
    %p54 = scmp.ne.s32.totalorder %s37, %s53
    %p55 = scmp.eq.s32.totalorder %s17, 0
    %p56 = por %p54, %p55
    %s58 = sadd.s32 %s57, 1
    %p61 = scmp.eq.s32.totalorder %s11, 3
    %p62 = scmp.ne.s32.totalorder %s57, %s59
    %p63 = scmp.eq.s32.totalorder %s11, 0
    %p64 = por %p62, %p63
    %p65 = scmp.ne.s32.totalorder %s57, %s59
    %p66 = scmp.eq.s32.totalorder %s16, 3
    %p67 = por %p65, %p66
    %p68 = scmp.ne.s32.totalorder %s59, %s60
    %p69 = scmp.eq.s32.totalorder %s16, 0
    %p70 = por %p68, %p69
    %p71 = scmp.ne.s32.totalorder %s59, %s60
    %p72 = scmp.eq.s32.totalorder %s17, 3
    %p73 = por %p71, %p72
    %p75 = scmp.ne.s32.totalorder %s60, %s74
    %p76 = scmp.eq.s32.totalorder %s17, 0
    %p77 = por %p75, %p76
    %s79 = sadd.s32 %s78, 1
    %p82 = scmp.eq.s32.totalorder %s11, 3
    %p83 = scmp.ne.s32.totalorder %s78, %s80
    %p84 = scmp.eq.s32.totalorder %s11, 0
    %p85 = por %p83, %p84
    %p86 = scmp.ne.s32.totalorder %s78, %s80
    %p87 = scmp.eq.s32.totalorder %s16, 3
    %p88 = por %p86, %p87
    %p89 = scmp.ne.s32.totalorder %s80, %s81
    %p90 = scmp.eq.s32.totalorder %s16, 0
    %p91 = por %p89, %p90
    %p92 = scmp.ne.s32.totalorder %s80, %s81
    %p93 = scmp.eq.s32.totalorder %s17, 3
    %p94 = por %p92, %p93
    %p96 = scmp.ne.s32.totalorder %s81, %s95
    %p97 = scmp.eq.s32.totalorder %s17, 0
    %p98 = por %p96, %p97
    %s99 = ssub.s32 %s18, %s30
    %s100 = ssub.s32 %s19, %s26
    %s101 = sor.u32 %s99, %s100
    %p102 = scmp.eq.s32.totalorder %s101, 0
    %s104 = sadd.s32 %s103, 1
    %s105 = scalar_select %p102, %s103, %s104
    %p108 = pneg %p102
    %p109 = scmp.eq.s32.totalorder %s11, 3
    %p110 = por %p108, %p109
    %p111 = scmp.ne.s32.totalorder %s103, %s106
    %p112 = scmp.eq.s32.totalorder %s11, 0
    %p113 = por %p111, %p112
    %p114 = scmp.ne.s32.totalorder %s103, %s106
    %p115 = scmp.eq.s32.totalorder %s16, 3
    %p116 = por %p114, %p115
    %p117 = scmp.ne.s32.totalorder %s106, %s107
    %p118 = scmp.eq.s32.totalorder %s16, 0
    %p119 = por %p117, %p118
    %p120 = scmp.ne.s32.totalorder %s106, %s107
    %p121 = scmp.eq.s32.totalorder %s17, 3
    %p122 = por %p120, %p121
    %p124 = scmp.ne.s32.totalorder %s107, %s123
    %p125 = scmp.eq.s32.totalorder %s17, 0
    %p126 = por %p124, %p125
    %s127 = ssub.s32 %s18, %s30
    %s128 = ssub.s32 %s19, %s26
    %s129 = sor.u32 %s127, %s128
    %p130 = scmp.eq.s32.totalorder %s129, 0
    %s132 = sadd.s32 %s131, 1
    %s133 = scalar_select %p130, %s131, %s132
    %p136 = pneg %p130
    %p137 = scmp.eq.s32.totalorder %s11, 3
    %p138 = por %p136, %p137
    %p139 = scmp.ne.s32.totalorder %s131, %s134
    %p140 = scmp.eq.s32.totalorder %s11, 0
    %p141 = por %p139, %p140
    %p142 = scmp.ne.s32.totalorder %s131, %s134
    %p143 = scmp.eq.s32.totalorder %s16, 3
    %p144 = por %p142, %p143
    %p145 = scmp.ne.s32.totalorder %s134, %s135
    %p146 = scmp.eq.s32.totalorder %s16, 0
    %p147 = por %p145, %p146
    %p148 = scmp.ne.s32.totalorder %s134, %s135
    %p149 = scmp.eq.s32.totalorder %s17, 3
    %p150 = por %p148, %p149
    %p152 = scmp.ne.s32.totalorder %s135, %s151
    %p153 = scmp.eq.s32.totalorder %s17, 0
    %p154 = por %p152, %p153
    %p155 = scmp.le.s32.totalorder 1, %s11
    %p156 = scmp.lt.s32.totalorder %s11, 5
    %p157 = pnand %p155, %p156
    %p158 = pneg %p157
    // Predicated region
    $region9: #{encoder_forward.9} parent=5 // pred_check
      _
    $region10: #{encoder_forward.9} parent=5 // pred_check_branch
      %160 = sbr.rel (%p157) target = $region12
    $region11: #{encoder_forward.9} parent=5 // pred_region
      %s161 = ssub.s32 %s11, 1
      // Predicated region
      $region13: #{encoder_forward.9} parent=11 // pred_check
        %p162 = pneg %p70
      $region14: #{encoder_forward.9} parent=11 // pred_check_branch
        %164 = sbr.rel (%p162) target = $region16
      $region15: #{encoder_forward.9} parent=11 // pred_region
        _
      $region16: #{encoder_forward.9} parent=11 // pred_fallthru
        _
      // Predicated region
      $region17: #{encoder_forward.9} parent=11 // pred_check
        %p165 = pneg %p91
      $region18: #{encoder_forward.9} parent=11 // pred_check_branch
        %167 = sbr.rel (%p165) target = $region20
      $region19: #{encoder_forward.9} parent=11 // pred_region
        _
      $region20: #{encoder_forward.9} parent=11 // pred_fallthru
        _
    $region12: #{encoder_forward.9} parent=5 // pred_fallthru
      _
    %p168 = scmp.lt.s32.totalorder %s11, 4
    // Predicated region
    $region21: #{encoder_forward.9} parent=5 // pred_check
      %p169 = pneg %p168
    $region22: #{encoder_forward.9} parent=5 // pred_check_branch
      %171 = sbr.rel (%p169) target = $region24
    $region23: #{encoder_forward.9} parent=5 // pred_region
      // Predicated region
      $region25: #{encoder_forward.9} parent=23 // pred_check
        %p172 = pneg %p43
      $region26: #{encoder_forward.9} parent=23 // pred_check_branch
        %174 = sbr.rel (%p172) target = $region28
      $region27: #{encoder_forward.9} parent=23 // pred_region
        %p175 = scmp.lt.s32.totalorder %s18, 1
        %s176 = scalar_select %p175, %s18, 1
        %s177 = smul.addr %s176, 51
        %s178 = smul.addr %s177, 4
        %s179 = scalar_lea.vmem %s0, %s178
      $region28: #{encoder_forward.9} parent=23 // pred_fallthru
        _
    $region24: #{encoder_forward.9} parent=5 // pred_fallthru
      _
    %p180 = scmp.le.s32.totalorder 1, %s11
    %p181 = scmp.lt.s32.totalorder %s11, 5
    %p182 = pnand %p180, %p181
    %p183 = pneg %p182
    // Predicated region
    $region29: #{encoder_forward.9} parent=5 // pred_check
      _
    $region30: #{encoder_forward.9} parent=5 // pred_check_branch
      %185 = sbr.rel (%p182) target = $region32
    $region31: #{encoder_forward.9} parent=5 // pred_region
      %s186 = ssub.s32 %s11, 1
      %p187 = scmp.lt.s32.totalorder %s20, 1
      %s188 = scalar_select %p187, %s20, 1
      %s189 = smul.addr %s188, 51
      %s190 = smul.addr %s189, 4
      %s191 = scalar_lea.vmem %s0, %s190
      %p192 = pneg %p49
      %p193 = pneg %p46
      %p194 = pneg %p70
      %p195 = pneg %p67
      %p196 = pneg %p91
      %p197 = pneg %p88
      %p198 = pneg %p119
      %p199 = pneg %p116
      %s200 = smul.u32 16, %s21
      %p201 = scmp.lt.s32.totalorder %s20, 1
      %s202 = scalar_select %p201, %s20, 1
      %p203 = scmp.lt.s32.totalorder %s200, 31
      %s204 = scalar_select %p203, %s200, 31
      %s205 = smul.addr %s202, 32
      %s206 = sadd.s32 %s204, %s205
      %s207 = smul.addr %s206, 8
      %s208 = scalar_lea.vmem %s3, %s207
      %p209 = pneg %p147
      %p210 = pneg %p144
      %p211 = scmp.lt.s32.totalorder %s20, 1
      %s212 = scalar_select %p211, %s20, 1
      %p213 = scmp.lt.s32.totalorder %s21, 1
      %s214 = scalar_select %p213, %s21, 1
      %s215 = smul.addr %s212, 2
      %s216 = sadd.s32 %s214, %s215
      %s217 = smul.addr %s216, 2
      %s218 = scalar_lea.vmem %s4, %s217
      %p219 = scmp.lt.s32.totalorder %s20, 1
      %s220 = scalar_select %p219, %s20, 1
      %s221 = smul.addr %s220, 51
      %s222 = smul.addr %s221, 4
      %s223 = scalar_lea.vmem %s0, %s222
      %s224 = smul.u32 16, %s21
      %p225 = scmp.lt.s32.totalorder %s20, 1
      %s226 = scalar_select %p225, %s20, 1
      %p227 = scmp.lt.s32.totalorder %s224, 31
      %s228 = scalar_select %p227, %s224, 31
      %s229 = smul.addr %s226, 32
      %s230 = sadd.s32 %s228, %s229
      %s231 = smul.addr %s230, 8
      %s232 = scalar_lea.vmem %s3, %s231
      %s233 = smul.u32 16, %s21
      %p234 = scmp.lt.s32.totalorder %s20, 1
      %s235 = scalar_select %p234, %s20, 1
      %p236 = scmp.lt.s32.totalorder %s21, 1
      %s237 = scalar_select %p236, %s21, 1
      %s238 = smul.addr %s235, 2
      %s239 = sadd.s32 %s237, %s238
      %s240 = smul.addr %s239, 2
      %s241 = scalar_lea.vmem %s4, %s240
      %s243 = smul.u32 %s21, 8
      %244 = vst [vmem:[#allocation2] sm:$0xff] 0
      %245 = vst [vmem:[#allocation2 + $0x8] sm:$0xff] 0
      %246 = vst [vmem:[#allocation2 + $0x10] sm:$0xff] 0
      %247 = vst [vmem:[#allocation2 + $0x18] sm:$0xff] 0
      %248 = vst [vmem:[#allocation2 + $0x20] sm:$0xff] 0
      %249 = vst [vmem:[#allocation2 + $0x28] sm:$0xff] 0
      %250 = vst [vmem:[#allocation2 + $0x30] sm:$0xff] 0
      %251 = vst [vmem:[#allocation2 + $0x38] sm:$0xff] 0
      %252 = vst [vmem:[#allocation2 + $0x40] sm:$0xff] 0
      %253 = vst [vmem:[#allocation2 + $0x48] sm:$0xff] 0
      %254 = vst [vmem:[#allocation2 + $0x50] sm:$0xff] 0
      %255 = vst [vmem:[#allocation2 + $0x58] sm:$0xff] 0
      %256 = vst [vmem:[#allocation2 + $0x60] sm:$0xff] 0
      %257 = vst [vmem:[#allocation2 + $0x68] sm:$0xff] 0
      %258 = vst [vmem:[#allocation2 + $0x70] sm:$0xff] 0
      %259 = vst [vmem:[#allocation2 + $0x78] sm:$0xff] 0
      %260 = vst [vmem:[#allocation2 + $0x80] sm:$0xff] 0
      %261 = vst [vmem:[#allocation2 + $0x88] sm:$0xff] 0
      %262 = vst [vmem:[#allocation2 + $0x90] sm:$0xff] 0
      %263 = vst [vmem:[#allocation2 + $0x98] sm:$0xff] 0
      %264 = vst [vmem:[#allocation2 + $0xa0] sm:$0xff] 0
      %265 = vst [vmem:[#allocation2 + $0xa8] sm:$0xff] 0
      %266 = vst [vmem:[#allocation2 + $0xb0] sm:$0xff] 0
      %267 = vst [vmem:[#allocation2 + $0xb8] sm:$0xff] 0
      %268 = vst [vmem:[#allocation2 + $0xc0] sm:$0xff] 0
      %269 = vst [vmem:[#allocation2 + $0xc8] sm:$0xff] 0
      %270 = vst [vmem:[#allocation2 + $0xd0] sm:$0xff] 0
      %271 = vst [vmem:[#allocation2 + $0xd8] sm:$0xff] 0
      %272 = vst [vmem:[#allocation2 + $0xe0] sm:$0xff] 0
      %273 = vst [vmem:[#allocation2 + $0xe8] sm:$0xff] 0
      %274 = vst [vmem:[#allocation2 + $0xf0] sm:$0xff] 0
      %275 = vst [vmem:[#allocation2 + $0xf8] sm:$0xff] 0
      %s276 = smul.u32 %s243, 3
      %s277 = smul.addr %s276, 4
      %s278 = scalar_lea.vmem %s223, %s277
      %v279 = vld [vmem:[%s278] sm:$0xf]
      %v280 = vld [vmem:[%s278 + $0x4] sm:$0xf]
      %vm281 = vcmask 257024
      %282 = vst.msk [vmem:[#allocation2] sm:$0xf] %vm281, %v279
      %283 = vst.msk [vmem:[#allocation2 + $0x10] sm:$0xf] %vm281, %v280
      %v284 = vld [vmem:[%s278] sm:$0xf]
      %v285 = vld [vmem:[%s278 + $0x4] sm:$0xf]
      %v286 = vld [vmem:[%s278 + $0x8] sm:$0x1]
      %vm287 = vsmask.f32 3328
      %vm288 = vsmask.f32 7440
      %vm289 = vmor %vm287, %vm288
      %v291 = vshrl.u32 %v284, 16
      %v293 = vrot.slane %v291, 4
      %v294 = vshll.u32 %v284, 16
      %v296 = vrot.slane %v294, 5
      %v297 = vor.u32 %v293, %v296
      %v298 = vrot.slane %v297, 4
      %v300 = vshll.u32 %v285, 16
      %v302 = vrot.slane %v300, 5
      %v303 = vsel %vm289, %v298, %v302
      %v304 = vshrl.u32 %v285, 16
      %v306 = vrot.slane %v304, 4
      %v307 = vor.u32 %v306, %v302
      %v308 = vrot.slane %v307, 4
      %v310 = vshll.u32 %v286, 16
      %v312 = vrot.slane %v310, 5
      %v313 = vsel %vm289, %v308, %v312
      %316 = vst.msk [vmem:[#allocation2 + $0x4] sm:$0xf] %vm281, %v303
      %317 = vst.msk [vmem:[#allocation2 + $0x14] sm:$0xf] %vm281, %v313
      %s318 = sadd.s32 %s243, 1
      %s319 = smul.u32 %s318, 3
      %s320 = smul.addr %s319, 4
      %s321 = scalar_lea.vmem %s223, %s320
      %v322 = vld [vmem:[%s321] sm:$0xf]
      %v323 = vld [vmem:[%s321 + $0x4] sm:$0xf]
      %324 = vst.msk [vmem:[#allocation2 + $0x8] sm:$0xf] %vm281, %v322
      %325 = vst.msk [vmem:[#allocation2 + $0x18] sm:$0xf] %vm281, %v323
      %v326 = vld [vmem:[%s321] sm:$0xf]
      %v327 = vld [vmem:[%s321 + $0x4] sm:$0xf]
      %v328 = vld [vmem:[%s321 + $0x8] sm:$0x1]
      %v330 = vshrl.u32 %v326, 16
      %v332 = vrot.slane %v330, 4
      %v333 = vshll.u32 %v326, 16
      %v335 = vrot.slane %v333, 5
      %v336 = vor.u32 %v332, %v335
      %v337 = vrot.slane %v336, 4
      %v339 = vshll.u32 %v327, 16
      %v341 = vrot.slane %v339, 5
      %v342 = vsel %vm289, %v337, %v341
      %v343 = vshrl.u32 %v327, 16
      %v345 = vrot.slane %v343, 4
      %v346 = vor.u32 %v345, %v341
      %v347 = vrot.slane %v346, 4
      %v349 = vshll.u32 %v328, 16
      %v351 = vrot.slane %v349, 5
      %v352 = vsel %vm289, %v347, %v351
      %355 = vst.msk [vmem:[#allocation2 + $0xc] sm:$0xf] %vm281, %v342
      %356 = vst.msk [vmem:[#allocation2 + $0x1c] sm:$0xf] %vm281, %v352
      %v357 = vld [vmem:[%s321] sm:$0xf]
      %v358 = vld [vmem:[%s321 + $0x4] sm:$0xf]
      %359 = vst.msk [vmem:[#allocation2 + $0x20] sm:$0xf] %vm281, %v357
      %360 = vst.msk [vmem:[#allocation2 + $0x30] sm:$0xf] %vm281, %v358
      %v361 = vld [vmem:[%s321] sm:$0xf]
      %v362 = vld [vmem:[%s321 + $0x4] sm:$0xf]
      %v363 = vld [vmem:[%s321 + $0x8] sm:$0x1]
      %v365 = vshrl.u32 %v361, 16
      %v367 = vrot.slane %v365, 4
      %v368 = vshll.u32 %v361, 16
      %v370 = vrot.slane %v368, 5
      %v371 = vor.u32 %v367, %v370
      %v372 = vrot.slane %v371, 4
      %v374 = vshll.u32 %v362, 16
      %v376 = vrot.slane %v374, 5
      %v377 = vsel %vm289, %v372, %v376
      %v378 = vshrl.u32 %v362, 16
      %v380 = vrot.slane %v378, 4
      %v381 = vor.u32 %v380, %v376
      %v382 = vrot.slane %v381, 4
      %v384 = vshll.u32 %v363, 16
      %v386 = vrot.slane %v384, 5
      %v387 = vsel %vm289, %v382, %v386
      %390 = vst.msk [vmem:[#allocation2 + $0x24] sm:$0xf] %vm281, %v377
      %391 = vst.msk [vmem:[#allocation2 + $0x34] sm:$0xf] %vm281, %v387
      %s392 = sadd.s32 %s243, 2
      %s393 = smul.u32 %s392, 3
      %s394 = smul.addr %s393, 4
      %s395 = scalar_lea.vmem %s223, %s394
      %v396 = vld [vmem:[%s395] sm:$0xf]
      %v397 = vld [vmem:[%s395 + $0x4] sm:$0xf]
      %398 = vst.msk [vmem:[#allocation2 + $0x28] sm:$0xf] %vm281, %v396
      %399 = vst.msk [vmem:[#allocation2 + $0x38] sm:$0xf] %vm281, %v397
      %v400 = vld [vmem:[%s395] sm:$0xf]
      %v401 = vld [vmem:[%s395 + $0x4] sm:$0xf]
      %v402 = vld [vmem:[%s395 + $0x8] sm:$0x1]
      %v404 = vshrl.u32 %v400, 16
      %v406 = vrot.slane %v404, 4
      %v407 = vshll.u32 %v400, 16
      %v409 = vrot.slane %v407, 5
      %v410 = vor.u32 %v406, %v409
      %v411 = vrot.slane %v410, 4
      %v413 = vshll.u32 %v401, 16
      %v415 = vrot.slane %v413, 5
      %v416 = vsel %vm289, %v411, %v415
      %v417 = vshrl.u32 %v401, 16
      %v419 = vrot.slane %v417, 4
      %v420 = vor.u32 %v419, %v415
      %v421 = vrot.slane %v420, 4
      %v423 = vshll.u32 %v402, 16
      %v425 = vrot.slane %v423, 5
      %v426 = vsel %vm289, %v421, %v425
      %429 = vst.msk [vmem:[#allocation2 + $0x2c] sm:$0xf] %vm281, %v416
      %430 = vst.msk [vmem:[#allocation2 + $0x3c] sm:$0xf] %vm281, %v426
      %v431 = vld [vmem:[%s395] sm:$0xf]
      %v432 = vld [vmem:[%s395 + $0x4] sm:$0xf]
      %433 = vst.msk [vmem:[#allocation2 + $0x40] sm:$0xf] %vm281, %v431
      %434 = vst.msk [vmem:[#allocation2 + $0x50] sm:$0xf] %vm281, %v432
      %v435 = vld [vmem:[%s395] sm:$0xf]
      %v436 = vld [vmem:[%s395 + $0x4] sm:$0xf]
      %v437 = vld [vmem:[%s395 + $0x8] sm:$0x1]
      %v439 = vshrl.u32 %v435, 16
      %v441 = vrot.slane %v439, 4
      %v442 = vshll.u32 %v435, 16
      %v444 = vrot.slane %v442, 5
      %v445 = vor.u32 %v441, %v444
      %v446 = vrot.slane %v445, 4
      %v448 = vshll.u32 %v436, 16
      %v450 = vrot.slane %v448, 5
      %v451 = vsel %vm289, %v446, %v450
      %v452 = vshrl.u32 %v436, 16
      %v454 = vrot.slane %v452, 4
      %v455 = vor.u32 %v454, %v450
      %v456 = vrot.slane %v455, 4
      %v458 = vshll.u32 %v437, 16
      %v460 = vrot.slane %v458, 5
      %v461 = vsel %vm289, %v456, %v460
      %464 = vst.msk [vmem:[#allocation2 + $0x44] sm:$0xf] %vm281, %v451
      %465 = vst.msk [vmem:[#allocation2 + $0x54] sm:$0xf] %vm281, %v461
      %s466 = sadd.s32 %s243, 3
      %s467 = smul.u32 %s466, 3
      %s468 = smul.addr %s467, 4
      %s469 = scalar_lea.vmem %s223, %s468
      %v470 = vld [vmem:[%s469] sm:$0xf]
      %v471 = vld [vmem:[%s469 + $0x4] sm:$0xf]
      %472 = vst.msk [vmem:[#allocation2 + $0x48] sm:$0xf] %vm281, %v470
      %473 = vst.msk [vmem:[#allocation2 + $0x58] sm:$0xf] %vm281, %v471
      %v474 = vld [vmem:[%s469] sm:$0xf]
      %v475 = vld [vmem:[%s469 + $0x4] sm:$0xf]
      %v476 = vld [vmem:[%s469 + $0x8] sm:$0x1]
      %v478 = vshrl.u32 %v474, 16
      %v480 = vrot.slane %v478, 4
      %v481 = vshll.u32 %v474, 16
      %v483 = vrot.slane %v481, 5
      %v484 = vor.u32 %v480, %v483
      %v485 = vrot.slane %v484, 4
      %v487 = vshll.u32 %v475, 16
      %v489 = vrot.slane %v487, 5
      %v490 = vsel %vm289, %v485, %v489
      %v491 = vshrl.u32 %v475, 16
      %v493 = vrot.slane %v491, 4
      %v494 = vor.u32 %v493, %v489
      %v495 = vrot.slane %v494, 4
      %v497 = vshll.u32 %v476, 16
      %v499 = vrot.slane %v497, 5
      %v500 = vsel %vm289, %v495, %v499
      %503 = vst.msk [vmem:[#allocation2 + $0x4c] sm:$0xf] %vm281, %v490
      %504 = vst.msk [vmem:[#allocation2 + $0x5c] sm:$0xf] %vm281, %v500
      %v505 = vld [vmem:[%s469] sm:$0xf]
      %v506 = vld [vmem:[%s469 + $0x4] sm:$0xf]
      %507 = vst.msk [vmem:[#allocation2 + $0x60] sm:$0xf] %vm281, %v505
      %508 = vst.msk [vmem:[#allocation2 + $0x70] sm:$0xf] %vm281, %v506
      %v509 = vld [vmem:[%s469] sm:$0xf]
      %v510 = vld [vmem:[%s469 + $0x4] sm:$0xf]
      %v511 = vld [vmem:[%s469 + $0x8] sm:$0x1]
      %v513 = vshrl.u32 %v509, 16
      %v515 = vrot.slane %v513, 4
      %v516 = vshll.u32 %v509, 16
      %v518 = vrot.slane %v516, 5
      %v519 = vor.u32 %v515, %v518
      %v520 = vrot.slane %v519, 4
      %v522 = vshll.u32 %v510, 16
      %v524 = vrot.slane %v522, 5
      %v525 = vsel %vm289, %v520, %v524
      %v526 = vshrl.u32 %v510, 16
      %v528 = vrot.slane %v526, 4
      %v529 = vor.u32 %v528, %v524
      %v530 = vrot.slane %v529, 4
      %v532 = vshll.u32 %v511, 16
      %v534 = vrot.slane %v532, 5
      %v535 = vsel %vm289, %v530, %v534
      %538 = vst.msk [vmem:[#allocation2 + $0x64] sm:$0xf] %vm281, %v525
      %539 = vst.msk [vmem:[#allocation2 + $0x74] sm:$0xf] %vm281, %v535
      %s540 = sadd.s32 %s243, 4
      %s541 = smul.u32 %s540, 3
      %s542 = smul.addr %s541, 4
      %s543 = scalar_lea.vmem %s223, %s542
      %v544 = vld [vmem:[%s543] sm:$0xf]
      %v545 = vld [vmem:[%s543 + $0x4] sm:$0xf]
      %546 = vst.msk [vmem:[#allocation2 + $0x68] sm:$0xf] %vm281, %v544
      %547 = vst.msk [vmem:[#allocation2 + $0x78] sm:$0xf] %vm281, %v545
      %v548 = vld [vmem:[%s543] sm:$0xf]
      %v549 = vld [vmem:[%s543 + $0x4] sm:$0xf]
      %v550 = vld [vmem:[%s543 + $0x8] sm:$0x1]
      %v552 = vshrl.u32 %v548, 16
      %v554 = vrot.slane %v552, 4
      %v555 = vshll.u32 %v548, 16
      %v557 = vrot.slane %v555, 5
      %v558 = vor.u32 %v554, %v557
      %v559 = vrot.slane %v558, 4
      %v561 = vshll.u32 %v549, 16
      %v563 = vrot.slane %v561, 5
      %v564 = vsel %vm289, %v559, %v563
      %v565 = vshrl.u32 %v549, 16
      %v567 = vrot.slane %v565, 4
      %v568 = vor.u32 %v567, %v563
      %v569 = vrot.slane %v568, 4
      %v571 = vshll.u32 %v550, 16
      %v573 = vrot.slane %v571, 5
      %v574 = vsel %vm289, %v569, %v573
      %577 = vst.msk [vmem:[#allocation2 + $0x6c] sm:$0xf] %vm281, %v564
      %578 = vst.msk [vmem:[#allocation2 + $0x7c] sm:$0xf] %vm281, %v574
      %v579 = vld [vmem:[%s543] sm:$0xf]
      %v580 = vld [vmem:[%s543 + $0x4] sm:$0xf]
      %581 = vst.msk [vmem:[#allocation2 + $0x80] sm:$0xf] %vm281, %v579
      %582 = vst.msk [vmem:[#allocation2 + $0x90] sm:$0xf] %vm281, %v580
      %v583 = vld [vmem:[%s543] sm:$0xf]
      %v584 = vld [vmem:[%s543 + $0x4] sm:$0xf]
      %v585 = vld [vmem:[%s543 + $0x8] sm:$0x1]
      %v587 = vshrl.u32 %v583, 16
      %v589 = vrot.slane %v587, 4
      %v590 = vshll.u32 %v583, 16
      %v592 = vrot.slane %v590, 5
      %v593 = vor.u32 %v589, %v592
      %v594 = vrot.slane %v593, 4
      %v596 = vshll.u32 %v584, 16
      %v598 = vrot.slane %v596, 5
      %v599 = vsel %vm289, %v594, %v598
      %v600 = vshrl.u32 %v584, 16
      %v602 = vrot.slane %v600, 4
      %v603 = vor.u32 %v602, %v598
      %v604 = vrot.slane %v603, 4
      %v606 = vshll.u32 %v585, 16
      %v608 = vrot.slane %v606, 5
      %v609 = vsel %vm289, %v604, %v608
      %612 = vst.msk [vmem:[#allocation2 + $0x84] sm:$0xf] %vm281, %v599
      %613 = vst.msk [vmem:[#allocation2 + $0x94] sm:$0xf] %vm281, %v609
      %s614 = sadd.s32 %s243, 5
      %s615 = smul.u32 %s614, 3
      %s616 = smul.addr %s615, 4
      %s617 = scalar_lea.vmem %s223, %s616
      %v618 = vld [vmem:[%s617] sm:$0xf]
      %v619 = vld [vmem:[%s617 + $0x4] sm:$0xf]
      %620 = vst.msk [vmem:[#allocation2 + $0x88] sm:$0xf] %vm281, %v618
      %621 = vst.msk [vmem:[#allocation2 + $0x98] sm:$0xf] %vm281, %v619
      %v622 = vld [vmem:[%s617] sm:$0xf]
      %v623 = vld [vmem:[%s617 + $0x4] sm:$0xf]
      %v624 = vld [vmem:[%s617 + $0x8] sm:$0x1]
      %v626 = vshrl.u32 %v622, 16
      %v628 = vrot.slane %v626, 4
      %v629 = vshll.u32 %v622, 16
      %v631 = vrot.slane %v629, 5
      %v632 = vor.u32 %v628, %v631
      %v633 = vrot.slane %v632, 4
      %v635 = vshll.u32 %v623, 16
      %v637 = vrot.slane %v635, 5
      %v638 = vsel %vm289, %v633, %v637
      %v639 = vshrl.u32 %v623, 16
      %v641 = vrot.slane %v639, 4
      %v642 = vor.u32 %v641, %v637
      %v643 = vrot.slane %v642, 4
      %v645 = vshll.u32 %v624, 16
      %v647 = vrot.slane %v645, 5
      %v648 = vsel %vm289, %v643, %v647
      %651 = vst.msk [vmem:[#allocation2 + $0x8c] sm:$0xf] %vm281, %v638
      %652 = vst.msk [vmem:[#allocation2 + $0x9c] sm:$0xf] %vm281, %v648
      %v653 = vld [vmem:[%s617] sm:$0xf]
      %v654 = vld [vmem:[%s617 + $0x4] sm:$0xf]
      %655 = vst.msk [vmem:[#allocation2 + $0xa0] sm:$0xf] %vm281, %v653
      %656 = vst.msk [vmem:[#allocation2 + $0xb0] sm:$0xf] %vm281, %v654
      %v657 = vld [vmem:[%s617] sm:$0xf]
      %v658 = vld [vmem:[%s617 + $0x4] sm:$0xf]
      %v659 = vld [vmem:[%s617 + $0x8] sm:$0x1]
      %v661 = vshrl.u32 %v657, 16
      %v663 = vrot.slane %v661, 4
      %v664 = vshll.u32 %v657, 16
      %v666 = vrot.slane %v664, 5
      %v667 = vor.u32 %v663, %v666
      %v668 = vrot.slane %v667, 4
      %v670 = vshll.u32 %v658, 16
      %v672 = vrot.slane %v670, 5
      %v673 = vsel %vm289, %v668, %v672
      %v674 = vshrl.u32 %v658, 16
      %v676 = vrot.slane %v674, 4
      %v677 = vor.u32 %v676, %v672
      %v678 = vrot.slane %v677, 4
      %v680 = vshll.u32 %v659, 16
      %v682 = vrot.slane %v680, 5
      %v683 = vsel %vm289, %v678, %v682
      %686 = vst.msk [vmem:[#allocation2 + $0xa4] sm:$0xf] %vm281, %v673
      %687 = vst.msk [vmem:[#allocation2 + $0xb4] sm:$0xf] %vm281, %v683
      %s688 = sadd.s32 %s243, 6
      %s689 = smul.u32 %s688, 3
      %s690 = smul.addr %s689, 4
      %s691 = scalar_lea.vmem %s223, %s690
      %v692 = vld [vmem:[%s691] sm:$0xf]
      %v693 = vld [vmem:[%s691 + $0x4] sm:$0xf]
      %694 = vst.msk [vmem:[#allocation2 + $0xa8] sm:$0xf] %vm281, %v692
      %695 = vst.msk [vmem:[#allocation2 + $0xb8] sm:$0xf] %vm281, %v693
      %v696 = vld [vmem:[%s691] sm:$0xf]
      %v697 = vld [vmem:[%s691 + $0x4] sm:$0xf]
      %v698 = vld [vmem:[%s691 + $0x8] sm:$0x1]
      %v700 = vshrl.u32 %v696, 16
      %v702 = vrot.slane %v700, 4
      %v703 = vshll.u32 %v696, 16
      %v705 = vrot.slane %v703, 5
      %v706 = vor.u32 %v702, %v705
      %v707 = vrot.slane %v706, 4
      %v709 = vshll.u32 %v697, 16
      %v711 = vrot.slane %v709, 5
      %v712 = vsel %vm289, %v707, %v711
      %v713 = vshrl.u32 %v697, 16
      %v715 = vrot.slane %v713, 4
      %v716 = vor.u32 %v715, %v711
      %v717 = vrot.slane %v716, 4
      %v719 = vshll.u32 %v698, 16
      %v721 = vrot.slane %v719, 5
      %v722 = vsel %vm289, %v717, %v721
      %725 = vst.msk [vmem:[#allocation2 + $0xac] sm:$0xf] %vm281, %v712
      %726 = vst.msk [vmem:[#allocation2 + $0xbc] sm:$0xf] %vm281, %v722
      %v727 = vld [vmem:[%s691] sm:$0xf]
      %v728 = vld [vmem:[%s691 + $0x4] sm:$0xf]
      %729 = vst.msk [vmem:[#allocation2 + $0xc0] sm:$0xf] %vm281, %v727
      %730 = vst.msk [vmem:[#allocation2 + $0xd0] sm:$0xf] %vm281, %v728
      %v731 = vld [vmem:[%s691] sm:$0xf]
      %v732 = vld [vmem:[%s691 + $0x4] sm:$0xf]
      %v733 = vld [vmem:[%s691 + $0x8] sm:$0x1]
      %v735 = vshrl.u32 %v731, 16
      %v737 = vrot.slane %v735, 4
      %v738 = vshll.u32 %v731, 16
      %v740 = vrot.slane %v738, 5
      %v741 = vor.u32 %v737, %v740
      %v742 = vrot.slane %v741, 4
      %v744 = vshll.u32 %v732, 16
      %v746 = vrot.slane %v744, 5
      %v747 = vsel %vm289, %v742, %v746
      %v748 = vshrl.u32 %v732, 16
      %v750 = vrot.slane %v748, 4
      %v751 = vor.u32 %v750, %v746
      %v752 = vrot.slane %v751, 4
      %v754 = vshll.u32 %v733, 16
      %v756 = vrot.slane %v754, 5
      %v757 = vsel %vm289, %v752, %v756
      %760 = vst.msk [vmem:[#allocation2 + $0xc4] sm:$0xf] %vm281, %v747
      %761 = vst.msk [vmem:[#allocation2 + $0xd4] sm:$0xf] %vm281, %v757
      %s762 = sadd.s32 %s243, 7
      %s763 = smul.u32 %s762, 3
      %s764 = smul.addr %s763, 4
      %s765 = scalar_lea.vmem %s223, %s764
      %v766 = vld [vmem:[%s765] sm:$0xf]
      %v767 = vld [vmem:[%s765 + $0x4] sm:$0xf]
      %768 = vst.msk [vmem:[#allocation2 + $0xc8] sm:$0xf] %vm281, %v766
      %769 = vst.msk [vmem:[#allocation2 + $0xd8] sm:$0xf] %vm281, %v767
      %v770 = vld [vmem:[%s765] sm:$0xf]
      %v771 = vld [vmem:[%s765 + $0x4] sm:$0xf]
      %v772 = vld [vmem:[%s765 + $0x8] sm:$0x1]
      %v774 = vshrl.u32 %v770, 16
      %v776 = vrot.slane %v774, 4
      %v777 = vshll.u32 %v770, 16
      %v779 = vrot.slane %v777, 5
      %v780 = vor.u32 %v776, %v779
      %v781 = vrot.slane %v780, 4
      %v783 = vshll.u32 %v771, 16
      %v785 = vrot.slane %v783, 5
      %v786 = vsel %vm289, %v781, %v785
      %v787 = vshrl.u32 %v771, 16
      %v789 = vrot.slane %v787, 4
      %v790 = vor.u32 %v789, %v785
      %v791 = vrot.slane %v790, 4
      %v793 = vshll.u32 %v772, 16
      %v795 = vrot.slane %v793, 5
      %v796 = vsel %vm289, %v791, %v795
      %799 = vst.msk [vmem:[#allocation2 + $0xcc] sm:$0xf] %vm281, %v786
      %800 = vst.msk [vmem:[#allocation2 + $0xdc] sm:$0xf] %vm281, %v796
      %v801 = vld [vmem:[%s765] sm:$0xf]
      %v802 = vld [vmem:[%s765 + $0x4] sm:$0xf]
      %803 = vst.msk [vmem:[#allocation2 + $0xe0] sm:$0xf] %vm281, %v801
      %804 = vst.msk [vmem:[#allocation2 + $0xf0] sm:$0xf] %vm281, %v802
      %v805 = vld [vmem:[%s765] sm:$0xf]
      %v806 = vld [vmem:[%s765 + $0x4] sm:$0xf]
      %v807 = vld [vmem:[%s765 + $0x8] sm:$0x1]
      %v809 = vshrl.u32 %v805, 16
      %v811 = vrot.slane %v809, 4
      %v812 = vshll.u32 %v805, 16
      %v814 = vrot.slane %v812, 5
      %v815 = vor.u32 %v811, %v814
      %v816 = vrot.slane %v815, 4
      %v818 = vshll.u32 %v806, 16
      %v820 = vrot.slane %v818, 5
      %v821 = vsel %vm289, %v816, %v820
      %v822 = vshrl.u32 %v806, 16
      %v824 = vrot.slane %v822, 4
      %v825 = vor.u32 %v824, %v820
      %v826 = vrot.slane %v825, 4
      %v828 = vshll.u32 %v807, 16
      %v830 = vrot.slane %v828, 5
      %v831 = vsel %vm289, %v826, %v830
      %834 = vst.msk [vmem:[#allocation2 + $0xe4] sm:$0xf] %vm281, %v821
      %835 = vst.msk [vmem:[#allocation2 + $0xf4] sm:$0xf] %vm281, %v831
      %s836 = sadd.s32 %s243, 8
      %s837 = smul.u32 %s836, 3
      %s838 = smul.addr %s837, 4
      %s839 = scalar_lea.vmem %s223, %s838
      %v840 = vld [vmem:[%s839] sm:$0xf]
      %v841 = vld [vmem:[%s839 + $0x4] sm:$0xf]
      %842 = vst.msk [vmem:[#allocation2 + $0xe8] sm:$0xf] %vm281, %v840
      %843 = vst.msk [vmem:[#allocation2 + $0xf8] sm:$0xf] %vm281, %v841
      %v844 = vld [vmem:[%s839] sm:$0xf]
      %v845 = vld [vmem:[%s839 + $0x4] sm:$0xf]
      %v846 = vld [vmem:[%s839 + $0x8] sm:$0x1]
      %v848 = vshrl.u32 %v844, 16
      %v850 = vrot.slane %v848, 4
      %v851 = vshll.u32 %v844, 16
      %v853 = vrot.slane %v851, 5
      %v854 = vor.u32 %v850, %v853
      %v855 = vrot.slane %v854, 4
      %v857 = vshll.u32 %v845, 16
      %v859 = vrot.slane %v857, 5
      %v860 = vsel %vm289, %v855, %v859
      %v861 = vshrl.u32 %v845, 16
      %v863 = vrot.slane %v861, 4
      %v864 = vor.u32 %v863, %v859
      %v865 = vrot.slane %v864, 4
      %v867 = vshll.u32 %v846, 16
      %v869 = vrot.slane %v867, 5
      %v870 = vsel %vm289, %v865, %v869
      %873 = vst.msk [vmem:[#allocation2 + $0xec] sm:$0xf] %vm281, %v860
      %874 = vst.msk [vmem:[#allocation2 + $0xfc] sm:$0xf] %vm281, %v870
      %v875 = vld [vmem:[#allocation2] sm:$0xff]
      %v876 = vld [vmem:[#allocation2 + $0x8] sm:$0xff]
      %v877 = vld [vmem:[#allocation2 + $0x10] sm:$0xff]
      %v878 = vld [vmem:[#allocation2 + $0x18] sm:$0xff]
      %v879 = vld [vmem:[#allocation2 + $0x20] sm:$0xff]
      %v880 = vld [vmem:[#allocation2 + $0x28] sm:$0xff]
      %v881 = vld [vmem:[#allocation2 + $0x30] sm:$0xff]
      %v882 = vld [vmem:[#allocation2 + $0x38] sm:$0xff]
      %v883 = vld [vmem:[#allocation2 + $0x40] sm:$0xff]
      %v884 = vld [vmem:[#allocation2 + $0x48] sm:$0xff]
      %v885 = vld [vmem:[#allocation2 + $0x50] sm:$0xff]
      %v886 = vld [vmem:[#allocation2 + $0x58] sm:$0xff]
      %v887 = vld [vmem:[#allocation2 + $0x60] sm:$0xff]
      %v888 = vld [vmem:[#allocation2 + $0x68] sm:$0xff]
      %v889 = vld [vmem:[#allocation2 + $0x70] sm:$0xff]
      %v890 = vld [vmem:[#allocation2 + $0x78] sm:$0xff]
      %v891 = vld [vmem:[#allocation2 + $0x80] sm:$0xff]
      %v892 = vld [vmem:[#allocation2 + $0x88] sm:$0xff]
      %v893 = vld [vmem:[#allocation2 + $0x90] sm:$0xff]
      %v894 = vld [vmem:[#allocation2 + $0x98] sm:$0xff]
      %v895 = vld [vmem:[#allocation2 + $0xa0] sm:$0xff]
      %v896 = vld [vmem:[#allocation2 + $0xa8] sm:$0xff]
      %v897 = vld [vmem:[#allocation2 + $0xb0] sm:$0xff]
      %v898 = vld [vmem:[#allocation2 + $0xb8] sm:$0xff]
      %v899 = vld [vmem:[#allocation2 + $0xc0] sm:$0xff]
      %v900 = vld [vmem:[#allocation2 + $0xc8] sm:$0xff]
      %v901 = vld [vmem:[#allocation2 + $0xd0] sm:$0xff]
      %v902 = vld [vmem:[#allocation2 + $0xd8] sm:$0xff]
      %v903 = vld [vmem:[#allocation2 + $0xe0] sm:$0xff]
      %v904 = vld [vmem:[#allocation2 + $0xe8] sm:$0xff]
      %v905 = vld [vmem:[#allocation2 + $0xf0] sm:$0xff]
      %v906 = vld [vmem:[#allocation2 + $0xf8] sm:$0xff]
      %v907 = vld [vmem:[%s1] sm:$0xf]
      %v908 = vld [vmem:[%s1 + $0x4] sm:$0xf]
      %v909 = vld [vmem:[%s1 + $0x8] sm:$0xf]
      %v910 = vld [vmem:[%s1 + $0xc] sm:$0xf]
      %v911 = vld [vmem:[%s1 + $0x10] sm:$0xf]
      %v912 = vld [vmem:[%s1 + $0x14] sm:$0xf]
      %v913 = vld [vmem:[%s1 + $0x18] sm:$0xf]
      %v914 = vld [vmem:[%s1 + $0x1c] sm:$0xf]
      %v915 = vld [vmem:[%s1 + $0x20] sm:$0xf]
      %v916 = vld [vmem:[%s1 + $0x24] sm:$0xf]
      %v917 = vld [vmem:[%s1 + $0x28] sm:$0xf]
      %v918 = vld [vmem:[%s1 + $0x2c] sm:$0xf]
      %v919 = vld [vmem:[%s1 + $0x30] sm:$0xf]
      %v920 = vld [vmem:[%s1 + $0x34] sm:$0xf]
      %v921 = vld [vmem:[%s1 + $0x38] sm:$0xf]
      %v922 = vld [vmem:[%s1 + $0x3c] sm:$0xf]
      %v923 = vld [vmem:[%s1 + $0x40] sm:$0xf]
      %v924 = vld [vmem:[%s1 + $0x44] sm:$0xf]
      %v925 = vld [vmem:[%s1 + $0x48] sm:$0xf]
      %v926 = vld [vmem:[%s1 + $0x4c] sm:$0xf]
      %v927 = vld [vmem:[%s1 + $0x50] sm:$0xf]
      %v928 = vld [vmem:[%s1 + $0x54] sm:$0xf]
      %v929 = vld [vmem:[%s1 + $0x58] sm:$0xf]
      %v930 = vld [vmem:[%s1 + $0x5c] sm:$0xf]
      %v931 = vld [vmem:[%s1 + $0x60] sm:$0xf]
      %v932 = vld [vmem:[%s1 + $0x64] sm:$0xf]
      %v933 = vld [vmem:[%s1 + $0x68] sm:$0xf]
      %v934 = vld [vmem:[%s1 + $0x6c] sm:$0xf]
      %v935 = vld [vmem:[%s1 + $0x70] sm:$0xf]
      %v936 = vld [vmem:[%s1 + $0x74] sm:$0xf]
      %v937 = vld [vmem:[%s1 + $0x78] sm:$0xf]
      %v938 = vld [vmem:[%s1 + $0x7c] sm:$0xf]
      %v939 = vld [vmem:[%s1 + $0x80] sm:$0xf]
      %v940 = vld [vmem:[%s1 + $0x84] sm:$0xf]
      %v941 = vld [vmem:[%s1 + $0x88] sm:$0xf]
      %v942 = vld [vmem:[%s1 + $0x8c] sm:$0xf]
      %v943 = vld [vmem:[%s1 + $0x90] sm:$0xf]
      %v944 = vld [vmem:[%s1 + $0x94] sm:$0xf]
      %v945 = vld [vmem:[%s1 + $0x98] sm:$0xf]
      %v946 = vld [vmem:[%s1 + $0x9c] sm:$0xf]
      %v947 = vld [vmem:[%s1 + $0xa0] sm:$0xf]
      %v948 = vld [vmem:[%s1 + $0xa4] sm:$0xf]
      %v949 = vld [vmem:[%s1 + $0xa8] sm:$0xf]
      %v950 = vld [vmem:[%s1 + $0xac] sm:$0xf]
      %v951 = vld [vmem:[%s1 + $0xb0] sm:$0xf]
      %v952 = vld [vmem:[%s1 + $0xb4] sm:$0xf]
      %v953 = vld [vmem:[%s1 + $0xb8] sm:$0xf]
      %v954 = vld [vmem:[%s1 + $0xbc] sm:$0xf]
      %v955 = vld [vmem:[%s1 + $0xc0] sm:$0xf]
      %v956 = vld [vmem:[%s1 + $0xc4] sm:$0xf]
      %v957 = vld [vmem:[%s1 + $0xc8] sm:$0xf]
      %v958 = vld [vmem:[%s1 + $0xcc] sm:$0xf]
      %v959 = vld [vmem:[%s1 + $0xd0] sm:$0xf]
      %v960 = vld [vmem:[%s1 + $0xd4] sm:$0xf]
      %v961 = vld [vmem:[%s1 + $0xd8] sm:$0xf]
      %v962 = vld [vmem:[%s1 + $0xdc] sm:$0xf]
      %v963 = vld [vmem:[%s1 + $0xe0] sm:$0xf]
      %v964 = vld [vmem:[%s1 + $0xe4] sm:$0xf]
      %v965 = vld [vmem:[%s1 + $0xe8] sm:$0xf]
      %v966 = vld [vmem:[%s1 + $0xec] sm:$0xf]
      %v967 = vld [vmem:[%s1 + $0xf0] sm:$0xf]
      %v968 = vld [vmem:[%s1 + $0xf4] sm:$0xf]
      %v969 = vld [vmem:[%s1 + $0xf8] sm:$0xf]
      %v970 = vld [vmem:[%s1 + $0xfc] sm:$0xf]
      %v971 = vld [vmem:[%s2] sm:$0x1]
      %v973 = vperm.slane %v971, 0
      %v1007 = vunpack.c.l.b16 %v875
      %v1008 = vunpack.c.h.b16 %v875
      %v1009 = vunpack.c.l.b16 %v876
      %v1010 = vunpack.c.h.b16 %v876
      %v1011 = vunpack.c.l.b16 %v877
      %v1012 = vunpack.c.h.b16 %v877
      %v1013 = vunpack.c.l.b16 %v878
      %v1014 = vunpack.c.h.b16 %v878
      %v1015 = vunpack.c.l.b16 %v879
      %v1016 = vunpack.c.h.b16 %v879
      %v1017 = vunpack.c.l.b16 %v880
      %v1018 = vunpack.c.h.b16 %v880
      %v1019 = vunpack.c.l.b16 %v881
      %v1020 = vunpack.c.h.b16 %v881
      %v1021 = vunpack.c.l.b16 %v882
      %v1022 = vunpack.c.h.b16 %v882
      %v1023 = vunpack.c.l.b16 %v883
      %v1024 = vunpack.c.h.b16 %v883
      %v1025 = vunpack.c.l.b16 %v884
      %v1026 = vunpack.c.h.b16 %v884
      %v1027 = vunpack.c.l.b16 %v885
      %v1028 = vunpack.c.h.b16 %v885
      %v1029 = vunpack.c.l.b16 %v886
      %v1030 = vunpack.c.h.b16 %v886
      %v1031 = vunpack.c.l.b16 %v887
      %v1032 = vunpack.c.h.b16 %v887
      %v1033 = vunpack.c.l.b16 %v888
      %v1034 = vunpack.c.h.b16 %v888
      %v1035 = vunpack.c.l.b16 %v889
      %v1036 = vunpack.c.h.b16 %v889
      %v1037 = vunpack.c.l.b16 %v890
      %v1038 = vunpack.c.h.b16 %v890
      %v1039 = vunpack.c.l.b16 %v891
      %v1040 = vunpack.c.h.b16 %v891
      %v1041 = vunpack.c.l.b16 %v892
      %v1042 = vunpack.c.h.b16 %v892
      %v1043 = vunpack.c.l.b16 %v893
      %v1044 = vunpack.c.h.b16 %v893
      %v1045 = vunpack.c.l.b16 %v894
      %v1046 = vunpack.c.h.b16 %v894
      %v1047 = vunpack.c.l.b16 %v895
      %v1048 = vunpack.c.h.b16 %v895
      %v1049 = vunpack.c.l.b16 %v896
      %v1050 = vunpack.c.h.b16 %v896
      %v1051 = vunpack.c.l.b16 %v897
      %v1052 = vunpack.c.h.b16 %v897
      %v1053 = vunpack.c.l.b16 %v898
      %v1054 = vunpack.c.h.b16 %v898
      %v1055 = vunpack.c.l.b16 %v899
      %v1056 = vunpack.c.h.b16 %v899
      %v1057 = vunpack.c.l.b16 %v900
      %v1058 = vunpack.c.h.b16 %v900
      %v1059 = vunpack.c.l.b16 %v901
      %v1060 = vunpack.c.h.b16 %v901
      %v1061 = vunpack.c.l.b16 %v902
      %v1062 = vunpack.c.h.b16 %v902
      %v1063 = vunpack.c.l.b16 %v903
      %v1064 = vunpack.c.h.b16 %v903
      %v1065 = vunpack.c.l.b16 %v904
      %v1066 = vunpack.c.h.b16 %v904
      %v1067 = vunpack.c.l.b16 %v905
      %v1068 = vunpack.c.h.b16 %v905
      %v1069 = vunpack.c.l.b16 %v906
      %v1070 = vunpack.c.h.b16 %v906
      %v1071 = vpack.c.b16 %v1011, %v1007
      %v1072 = vpack.c.b16 %v1012, %v1008
      %v1073 = vpack.c.b16 %v1013, %v1009
      %v1074 = vpack.c.b16 %v1014, %v1010
      %v1075 = vpack.c.b16 %v1019, %v1015
      %v1076 = vpack.c.b16 %v1020, %v1016
      %v1077 = vpack.c.b16 %v1021, %v1017
      %v1078 = vpack.c.b16 %v1022, %v1018
      %v1079 = vpack.c.b16 %v1027, %v1023
      %v1080 = vpack.c.b16 %v1028, %v1024
      %v1081 = vpack.c.b16 %v1029, %v1025
      %v1082 = vpack.c.b16 %v1030, %v1026
      %v1083 = vpack.c.b16 %v1035, %v1031
      %v1084 = vpack.c.b16 %v1036, %v1032
      %v1085 = vpack.c.b16 %v1037, %v1033
      %v1086 = vpack.c.b16 %v1038, %v1034
      %v1087 = vpack.c.b16 %v1043, %v1039
      %v1088 = vpack.c.b16 %v1044, %v1040
      %v1089 = vpack.c.b16 %v1045, %v1041
      %v1090 = vpack.c.b16 %v1046, %v1042
      %v1091 = vpack.c.b16 %v1051, %v1047
      %v1092 = vpack.c.b16 %v1052, %v1048
      %v1093 = vpack.c.b16 %v1053, %v1049
      %v1094 = vpack.c.b16 %v1054, %v1050
      %v1095 = vpack.c.b16 %v1059, %v1055
      %v1096 = vpack.c.b16 %v1060, %v1056
      %v1097 = vpack.c.b16 %v1061, %v1057
      %v1098 = vpack.c.b16 %v1062, %v1058
      %v1099 = vpack.c.b16 %v1067, %v1063
      %v1100 = vpack.c.b16 %v1068, %v1064
      %v1101 = vpack.c.b16 %v1069, %v1065
      %v1102 = vpack.c.b16 %v1070, %v1066
      %v1199 = vunpack.c.l.b16 %v907
      %v1200 = vunpack.c.l.b16 %v908
      %v1201 = vunpack.c.l.b16 %v909
      %v1202 = vunpack.c.l.b16 %v910
      %v1203 = vunpack.c.l.b16 %v911
      %v1204 = vunpack.c.l.b16 %v912
      %v1205 = vunpack.c.l.b16 %v913
      %v1206 = vunpack.c.l.b16 %v914
      %v1207 = vunpack.c.l.b16 %v915
      %v1208 = vunpack.c.l.b16 %v916
      %v1209 = vunpack.c.l.b16 %v917
      %v1210 = vunpack.c.l.b16 %v918
      %v1211 = vunpack.c.l.b16 %v919
      %v1212 = vunpack.c.l.b16 %v920
      %v1213 = vunpack.c.l.b16 %v921
      %v1214 = vunpack.c.l.b16 %v922
      %v1215 = vunpack.c.l.b16 %v923
      %v1216 = vunpack.c.l.b16 %v924
      %v1217 = vunpack.c.l.b16 %v925
      %v1218 = vunpack.c.l.b16 %v926
      %v1219 = vunpack.c.l.b16 %v927
      %v1220 = vunpack.c.l.b16 %v928
      %v1221 = vunpack.c.l.b16 %v929
      %v1222 = vunpack.c.l.b16 %v930
      %v1223 = vunpack.c.l.b16 %v931
      %v1224 = vunpack.c.l.b16 %v932
      %v1225 = vunpack.c.l.b16 %v933
      %v1226 = vunpack.c.l.b16 %v934
      %v1227 = vunpack.c.l.b16 %v935
      %v1228 = vunpack.c.l.b16 %v936
      %v1229 = vunpack.c.l.b16 %v937
      %v1230 = vunpack.c.l.b16 %v938
      %v1231 = vunpack.c.l.b16 %v939
      %v1232 = vunpack.c.l.b16 %v940
      %v1233 = vunpack.c.l.b16 %v941
      %v1234 = vunpack.c.l.b16 %v942
      %v1235 = vunpack.c.l.b16 %v943
      %v1236 = vunpack.c.l.b16 %v944
      %v1237 = vunpack.c.l.b16 %v945
      %v1238 = vunpack.c.l.b16 %v946
      %v1239 = vunpack.c.l.b16 %v947
      %v1240 = vunpack.c.l.b16 %v948
      %v1241 = vunpack.c.l.b16 %v949
      %v1242 = vunpack.c.l.b16 %v950
      %v1243 = vunpack.c.l.b16 %v951
      %v1244 = vunpack.c.l.b16 %v952
      %v1245 = vunpack.c.l.b16 %v953
      %v1246 = vunpack.c.l.b16 %v954
      %v1247 = vunpack.c.l.b16 %v955
      %v1248 = vunpack.c.l.b16 %v956
      %v1249 = vunpack.c.l.b16 %v957
      %v1250 = vunpack.c.l.b16 %v958
      %v1251 = vunpack.c.l.b16 %v959
      %v1252 = vunpack.c.l.b16 %v960
      %v1253 = vunpack.c.l.b16 %v961
      %v1254 = vunpack.c.l.b16 %v962
      %v1255 = vunpack.c.l.b16 %v963
      %v1256 = vunpack.c.l.b16 %v964
      %v1257 = vunpack.c.l.b16 %v965
      %v1258 = vunpack.c.l.b16 %v966
      %v1259 = vunpack.c.l.b16 %v967
      %v1260 = vunpack.c.l.b16 %v968
      %v1261 = vunpack.c.l.b16 %v969
      %v1262 = vunpack.c.l.b16 %v970
      %v1263 = vpack.c.b16 %v1200, %v1199
      %v1264 = vpack.c.b16 %v1202, %v1201
      %v1265 = vpack.c.b16 %v1204, %v1203
      %v1266 = vpack.c.b16 %v1206, %v1205
      %v1267 = vpack.c.b16 %v1208, %v1207
      %v1268 = vpack.c.b16 %v1210, %v1209
      %v1269 = vpack.c.b16 %v1212, %v1211
      %v1270 = vpack.c.b16 %v1214, %v1213
      %v1271 = vpack.c.b16 %v1216, %v1215
      %v1272 = vpack.c.b16 %v1218, %v1217
      %v1273 = vpack.c.b16 %v1220, %v1219
      %v1274 = vpack.c.b16 %v1222, %v1221
      %v1275 = vpack.c.b16 %v1224, %v1223
      %v1276 = vpack.c.b16 %v1226, %v1225
      %v1277 = vpack.c.b16 %v1228, %v1227
      %v1278 = vpack.c.b16 %v1230, %v1229
      %v1279 = vpack.c.b16 %v1232, %v1231
      %v1280 = vpack.c.b16 %v1234, %v1233
      %v1281 = vpack.c.b16 %v1236, %v1235
      %v1282 = vpack.c.b16 %v1238, %v1237
      %v1283 = vpack.c.b16 %v1240, %v1239
      %v1284 = vpack.c.b16 %v1242, %v1241
      %v1285 = vpack.c.b16 %v1244, %v1243
      %v1286 = vpack.c.b16 %v1246, %v1245
      %v1287 = vpack.c.b16 %v1248, %v1247
      %v1288 = vpack.c.b16 %v1250, %v1249
      %v1289 = vpack.c.b16 %v1252, %v1251
      %v1290 = vpack.c.b16 %v1254, %v1253
      %v1291 = vpack.c.b16 %v1256, %v1255
      %v1292 = vpack.c.b16 %v1258, %v1257
      %v1293 = vpack.c.b16 %v1260, %v1259
      %v1294 = vpack.c.b16 %v1262, %v1261
      %1327 = vmatpush.bf16.msra.mxu0 %v1270
      %1328 = vmatpush.bf16.msra.mxu0 %v1269
      %1329 = vmatpush.bf16.msra.mxu0 %v1268
      %1330 = vmatpush.bf16.msra.mxu0 %v1267
      %1331 = vmatpush.bf16.msra.mxu0 %v1266
      %1332 = vmatpush.bf16.msra.mxu0 %v1265
      %1333 = vmatpush.bf16.msra.mxu0 %v1264
      %1334 = vmatpush.bf16.msra.mxu0 %v1263
      %1335 = vmatmul.bf16.gmra.mxu0 %v1071
      %v1336 = vpop.f32.mrf.mxu0
      %v1337 = vadd.f32 %v973, %v1336
      %v1338 = vpop.f32.mrf.mxu0
      %v1339 = vadd.f32 %v973, %v1338
      %1340 = vmatmul.bf16.gmra.mxu0 %v1075
      %v1341 = vpop.f32.mrf.mxu0
      %v1342 = vadd.f32 %v973, %v1341
      %v1343 = vpop.f32.mrf.mxu0
      %v1344 = vadd.f32 %v973, %v1343
      %1345 = vmatmul.bf16.gmra.mxu0 %v1079
      %v1346 = vpop.f32.mrf.mxu0
      %v1347 = vadd.f32 %v973, %v1346
      %v1348 = vpop.f32.mrf.mxu0
      %v1349 = vadd.f32 %v973, %v1348
      %1350 = vmatmul.bf16.gmra.mxu0 %v1083
      %v1351 = vpop.f32.mrf.mxu0
      %v1352 = vadd.f32 %v973, %v1351
      %v1353 = vpop.f32.mrf.mxu0
      %v1354 = vadd.f32 %v973, %v1353
      %1355 = vmatmul.bf16.gmra.mxu0 %v1087
      %v1356 = vpop.f32.mrf.mxu0
      %v1357 = vadd.f32 %v973, %v1356
      %v1358 = vpop.f32.mrf.mxu0
      %v1359 = vadd.f32 %v973, %v1358
      %1360 = vmatmul.bf16.gmra.mxu0 %v1091
      %v1361 = vpop.f32.mrf.mxu0
      %v1362 = vadd.f32 %v973, %v1361
      %v1363 = vpop.f32.mrf.mxu0
      %v1364 = vadd.f32 %v973, %v1363
      %1365 = vmatmul.bf16.gmra.mxu0 %v1095
      %v1366 = vpop.f32.mrf.mxu0
      %v1367 = vadd.f32 %v973, %v1366
      %v1368 = vpop.f32.mrf.mxu0
      %v1369 = vadd.f32 %v973, %v1368
      %1370 = vmatmul.bf16.gmra.mxu0 %v1099
      %v1371 = vpop.f32.mrf.mxu0
      %v1372 = vadd.f32 %v973, %v1371
      %v1373 = vpop.f32.mrf.mxu0
      %v1374 = vadd.f32 %v973, %v1373
      %1375 = vdwg.mxu0
      %1376 = vmatpush.bf16.msra.mxu0 %v1278
      %1377 = vmatpush.bf16.msra.mxu0 %v1277
      %1378 = vmatpush.bf16.msra.mxu0 %v1276
      %1379 = vmatpush.bf16.msra.mxu0 %v1275
      %1380 = vmatpush.bf16.msra.mxu0 %v1274
      %1381 = vmatpush.bf16.msra.mxu0 %v1273
      %1382 = vmatpush.bf16.msra.mxu0 %v1272
      %1383 = vmatpush.bf16.msra.mxu0 %v1271
      %1384 = vmatmul.bf16.gmra.mxu0 %v1072
      %v1385 = vpop.f32.mrf.mxu0
      %v1386 = vadd.f32 %v1337, %v1385
      %v1387 = vpop.f32.mrf.mxu0
      %v1388 = vadd.f32 %v1339, %v1387
      %1389 = vmatmul.bf16.gmra.mxu0 %v1076
      %v1390 = vpop.f32.mrf.mxu0
      %v1391 = vadd.f32 %v1342, %v1390
      %v1392 = vpop.f32.mrf.mxu0
      %v1393 = vadd.f32 %v1344, %v1392
      %1394 = vmatmul.bf16.gmra.mxu0 %v1080
      %v1395 = vpop.f32.mrf.mxu0
      %v1396 = vadd.f32 %v1347, %v1395
      %v1397 = vpop.f32.mrf.mxu0
      %v1398 = vadd.f32 %v1349, %v1397
      %1399 = vmatmul.bf16.gmra.mxu0 %v1084
      %v1400 = vpop.f32.mrf.mxu0
      %v1401 = vadd.f32 %v1352, %v1400
      %v1402 = vpop.f32.mrf.mxu0
      %v1403 = vadd.f32 %v1354, %v1402
      %1404 = vmatmul.bf16.gmra.mxu0 %v1088
      %v1405 = vpop.f32.mrf.mxu0
      %v1406 = vadd.f32 %v1357, %v1405
      %v1407 = vpop.f32.mrf.mxu0
      %v1408 = vadd.f32 %v1359, %v1407
      %1409 = vmatmul.bf16.gmra.mxu0 %v1092
      %v1410 = vpop.f32.mrf.mxu0
      %v1411 = vadd.f32 %v1362, %v1410
      %v1412 = vpop.f32.mrf.mxu0
      %v1413 = vadd.f32 %v1364, %v1412
      %1414 = vmatmul.bf16.gmra.mxu0 %v1096
      %v1415 = vpop.f32.mrf.mxu0
      %v1416 = vadd.f32 %v1367, %v1415
      %v1417 = vpop.f32.mrf.mxu0
      %v1418 = vadd.f32 %v1369, %v1417
      %1419 = vmatmul.bf16.gmra.mxu0 %v1100
      %v1420 = vpop.f32.mrf.mxu0
      %v1421 = vadd.f32 %v1372, %v1420
      %v1422 = vpop.f32.mrf.mxu0
      %v1423 = vadd.f32 %v1374, %v1422
      %1424 = vdwg.mxu0
      %1425 = vmatpush.bf16.msra.mxu0 %v1286
      %1426 = vmatpush.bf16.msra.mxu0 %v1285
      %1427 = vmatpush.bf16.msra.mxu0 %v1284
      %1428 = vmatpush.bf16.msra.mxu0 %v1283
      %1429 = vmatpush.bf16.msra.mxu0 %v1282
      %1430 = vmatpush.bf16.msra.mxu0 %v1281
      %1431 = vmatpush.bf16.msra.mxu0 %v1280
      %1432 = vmatpush.bf16.msra.mxu0 %v1279
      %1433 = vmatmul.bf16.gmra.mxu0 %v1073
      %v1434 = vpop.f32.mrf.mxu0
      %v1435 = vadd.f32 %v1386, %v1434
      %v1436 = vpop.f32.mrf.mxu0
      %v1437 = vadd.f32 %v1388, %v1436
      %1438 = vmatmul.bf16.gmra.mxu0 %v1077
      %v1439 = vpop.f32.mrf.mxu0
      %v1440 = vadd.f32 %v1391, %v1439
      %v1441 = vpop.f32.mrf.mxu0
      %v1442 = vadd.f32 %v1393, %v1441
      %1443 = vmatmul.bf16.gmra.mxu0 %v1081
      %v1444 = vpop.f32.mrf.mxu0
      %v1445 = vadd.f32 %v1396, %v1444
      %v1446 = vpop.f32.mrf.mxu0
      %v1447 = vadd.f32 %v1398, %v1446
      %1448 = vmatmul.bf16.gmra.mxu0 %v1085
      %v1449 = vpop.f32.mrf.mxu0
      %v1450 = vadd.f32 %v1401, %v1449
      %v1451 = vpop.f32.mrf.mxu0
      %v1452 = vadd.f32 %v1403, %v1451
      %1453 = vmatmul.bf16.gmra.mxu0 %v1089
      %v1454 = vpop.f32.mrf.mxu0
      %v1455 = vadd.f32 %v1406, %v1454
      %v1456 = vpop.f32.mrf.mxu0
      %v1457 = vadd.f32 %v1408, %v1456
      %1458 = vmatmul.bf16.gmra.mxu0 %v1093
      %v1459 = vpop.f32.mrf.mxu0
      %v1460 = vadd.f32 %v1411, %v1459
      %v1461 = vpop.f32.mrf.mxu0
      %v1462 = vadd.f32 %v1413, %v1461
      %1463 = vmatmul.bf16.gmra.mxu0 %v1097
      %v1464 = vpop.f32.mrf.mxu0
      %v1465 = vadd.f32 %v1416, %v1464
      %v1466 = vpop.f32.mrf.mxu0
      %v1467 = vadd.f32 %v1418, %v1466
      %1468 = vmatmul.bf16.gmra.mxu0 %v1101
      %v1469 = vpop.f32.mrf.mxu0
      %v1470 = vadd.f32 %v1421, %v1469
      %v1471 = vpop.f32.mrf.mxu0
      %v1472 = vadd.f32 %v1423, %v1471
      %1473 = vdwg.mxu0
      %1474 = vmatpush.bf16.msra.mxu0 %v1294
      %1475 = vmatpush.bf16.msra.mxu0 %v1293
      %1476 = vmatpush.bf16.msra.mxu0 %v1292
      %1477 = vmatpush.bf16.msra.mxu0 %v1291
      %1478 = vmatpush.bf16.msra.mxu0 %v1290
      %1479 = vmatpush.bf16.msra.mxu0 %v1289
      %1480 = vmatpush.bf16.msra.mxu0 %v1288
      %1481 = vmatpush.bf16.msra.mxu0 %v1287
      %1482 = vmatmul.bf16.gmra.mxu0 %v1074
      %v1483 = vpop.f32.mrf.mxu0
      %v1484 = vadd.f32 %v1435, %v1483
      %v1485 = vpop.f32.mrf.mxu0
      %v1486 = vadd.f32 %v1437, %v1485
      %1487 = vmatmul.bf16.gmra.mxu0 %v1078
      %v1488 = vpop.f32.mrf.mxu0
      %v1489 = vadd.f32 %v1440, %v1488
      %v1490 = vpop.f32.mrf.mxu0
      %v1491 = vadd.f32 %v1442, %v1490
      %1492 = vmatmul.bf16.gmra.mxu0 %v1082
      %v1493 = vpop.f32.mrf.mxu0
      %v1494 = vadd.f32 %v1445, %v1493
      %v1495 = vpop.f32.mrf.mxu0
      %v1496 = vadd.f32 %v1447, %v1495
      %1497 = vmatmul.bf16.gmra.mxu0 %v1086
      %v1498 = vpop.f32.mrf.mxu0
      %v1499 = vadd.f32 %v1450, %v1498
      %v1500 = vpop.f32.mrf.mxu0
      %v1501 = vadd.f32 %v1452, %v1500
      %1502 = vmatmul.bf16.gmra.mxu0 %v1090
      %v1503 = vpop.f32.mrf.mxu0
      %v1504 = vadd.f32 %v1455, %v1503
      %v1505 = vpop.f32.mrf.mxu0
      %v1506 = vadd.f32 %v1457, %v1505
      %1507 = vmatmul.bf16.gmra.mxu0 %v1094
      %v1508 = vpop.f32.mrf.mxu0
      %v1509 = vadd.f32 %v1460, %v1508
      %v1510 = vpop.f32.mrf.mxu0
      %v1511 = vadd.f32 %v1462, %v1510
      %1512 = vmatmul.bf16.gmra.mxu0 %v1098
      %v1513 = vpop.f32.mrf.mxu0
      %v1514 = vadd.f32 %v1465, %v1513
      %v1515 = vpop.f32.mrf.mxu0
      %v1516 = vadd.f32 %v1467, %v1515
      %1517 = vmatmul.bf16.gmra.mxu0 %v1102
      %v1518 = vpop.f32.mrf.mxu0
      %v1519 = vadd.f32 %v1470, %v1518
      %v1520 = vpop.f32.mrf.mxu0
      %v1521 = vadd.f32 %v1472, %v1520
      %1522 = vdwg.mxu0
      %vm1523 = vcmask 130048
      %1524 = vst.msk [vmem:[%s232] sm:$0xff] %vm1523, %v1484
      %1525 = vst.msk [vmem:[%s232 + $0x8] sm:$0xff] %vm1523, %v1486
      %1526 = vst.msk [vmem:[%s232 + $0x10] sm:$0xff] %vm1523, %v1489
      %1527 = vst.msk [vmem:[%s232 + $0x18] sm:$0xff] %vm1523, %v1491
      %1528 = vst.msk [vmem:[%s232 + $0x20] sm:$0xff] %vm1523, %v1494
      %1529 = vst.msk [vmem:[%s232 + $0x28] sm:$0xff] %vm1523, %v1496
      %1530 = vst.msk [vmem:[%s232 + $0x30] sm:$0xff] %vm1523, %v1499
      %1531 = vst.msk [vmem:[%s232 + $0x38] sm:$0xff] %vm1523, %v1501
      %1532 = vst.msk [vmem:[%s232 + $0x40] sm:$0xff] %vm1523, %v1504
      %1533 = vst.msk [vmem:[%s232 + $0x48] sm:$0xff] %vm1523, %v1506
      %1534 = vst.msk [vmem:[%s232 + $0x50] sm:$0xff] %vm1523, %v1509
      %1535 = vst.msk [vmem:[%s232 + $0x58] sm:$0xff] %vm1523, %v1511
      %1536 = vst.msk [vmem:[%s232 + $0x60] sm:$0xff] %vm1523, %v1514
      %1537 = vst.msk [vmem:[%s232 + $0x68] sm:$0xff] %vm1523, %v1516
      %1538 = vst.msk [vmem:[%s232 + $0x70] sm:$0xff] %vm1523, %v1519
      %1539 = vst.msk [vmem:[%s232 + $0x78] sm:$0xff] %vm1523, %v1521
      %v1540 = vsel %vm1523, %v1484, 0.0
      %v1541 = vsel %vm1523, %v1486, 0.0
      %v1542 = vadd.f32 %v1540, %v1541
      %v1543 = vsel %vm1523, %v1489, 0.0
      %v1544 = vadd.f32 %v1542, %v1543
      %v1545 = vsel %vm1523, %v1491, 0.0
      %v1546 = vadd.f32 %v1544, %v1545
      %v1547 = vsel %vm1523, %v1494, 0.0
      %v1548 = vadd.f32 %v1546, %v1547
      %v1549 = vsel %vm1523, %v1496, 0.0
      %v1550 = vadd.f32 %v1548, %v1549
      %v1551 = vsel %vm1523, %v1499, 0.0
      %v1552 = vadd.f32 %v1550, %v1551
      %v1553 = vsel %vm1523, %v1501, 0.0
      %v1554 = vadd.f32 %v1552, %v1553
      %v1555 = vsel %vm1523, %v1504, 0.0
      %v1556 = vadd.f32 %v1554, %v1555
      %v1557 = vsel %vm1523, %v1506, 0.0
      %v1558 = vadd.f32 %v1556, %v1557
      %v1559 = vsel %vm1523, %v1509, 0.0
      %v1560 = vadd.f32 %v1558, %v1559
      %v1561 = vsel %vm1523, %v1511, 0.0
      %v1562 = vadd.f32 %v1560, %v1561
      %v1563 = vsel %vm1523, %v1514, 0.0
      %v1564 = vadd.f32 %v1562, %v1563
      %v1565 = vsel %vm1523, %v1516, 0.0
      %v1566 = vadd.f32 %v1564, %v1565
      %v1567 = vsel %vm1523, %v1519, 0.0
      %v1568 = vadd.f32 %v1566, %v1567
      %v1569 = vsel %vm1523, %v1521, 0.0
      %v1570 = vadd.f32 %v1568, %v1569
      %v1571 = vrot.slane %v1570, 4
      %v1572 = vadd.f32 %v1570, %v1571
      %v1573 = vrot.slane %v1572, 2
      %v1574 = vadd.f32 %v1572, %v1573
      %v1575 = vrot.slane %v1574, 1
      %v1576 = vadd.f32 %v1574, %v1575
      %vm1577 = vcmask 122880
      %1578 = vst.msk [vmem:[%s241] sm:$0x1] %vm1577, %v1576
      %v1579 = vmul.f32 %v1484, %v1484
      %v1580 = vmul.f32 %v1486, %v1486
      %v1581 = vmul.f32 %v1489, %v1489
      %v1582 = vmul.f32 %v1491, %v1491
      %v1583 = vmul.f32 %v1494, %v1494
      %v1584 = vmul.f32 %v1496, %v1496
      %v1585 = vmul.f32 %v1499, %v1499
      %v1586 = vmul.f32 %v1501, %v1501
      %v1587 = vmul.f32 %v1504, %v1504
      %v1588 = vmul.f32 %v1506, %v1506
      %v1589 = vmul.f32 %v1509, %v1509
      %v1590 = vmul.f32 %v1511, %v1511
      %v1591 = vmul.f32 %v1514, %v1514
      %v1592 = vmul.f32 %v1516, %v1516
      %v1593 = vmul.f32 %v1519, %v1519
      %v1594 = vmul.f32 %v1521, %v1521
      %v1595 = vsel %vm1523, %v1579, 0.0
      %v1596 = vsel %vm1523, %v1580, 0.0
      %v1597 = vadd.f32 %v1595, %v1596
      %v1598 = vsel %vm1523, %v1581, 0.0
      %v1599 = vadd.f32 %v1597, %v1598
      %v1600 = vsel %vm1523, %v1582, 0.0
      %v1601 = vadd.f32 %v1599, %v1600
      %v1602 = vsel %vm1523, %v1583, 0.0
      %v1603 = vadd.f32 %v1601, %v1602
      %v1604 = vsel %vm1523, %v1584, 0.0
      %v1605 = vadd.f32 %v1603, %v1604
      %v1606 = vsel %vm1523, %v1585, 0.0
      %v1607 = vadd.f32 %v1605, %v1606
      %v1608 = vsel %vm1523, %v1586, 0.0
      %v1609 = vadd.f32 %v1607, %v1608
      %v1610 = vsel %vm1523, %v1587, 0.0
      %v1611 = vadd.f32 %v1609, %v1610
      %v1612 = vsel %vm1523, %v1588, 0.0
      %v1613 = vadd.f32 %v1611, %v1612
      %v1614 = vsel %vm1523, %v1589, 0.0
      %v1615 = vadd.f32 %v1613, %v1614
      %v1616 = vsel %vm1523, %v1590, 0.0
      %v1617 = vadd.f32 %v1615, %v1616
      %v1618 = vsel %vm1523, %v1591, 0.0
      %v1619 = vadd.f32 %v1617, %v1618
      %v1620 = vsel %vm1523, %v1592, 0.0
      %v1621 = vadd.f32 %v1619, %v1620
      %v1622 = vsel %vm1523, %v1593, 0.0
      %v1623 = vadd.f32 %v1621, %v1622
      %v1624 = vsel %vm1523, %v1594, 0.0
      %v1625 = vadd.f32 %v1623, %v1624
      %v1626 = vrot.slane %v1625, 4
      %v1627 = vadd.f32 %v1625, %v1626
      %v1628 = vrot.slane %v1627, 2
      %v1629 = vadd.f32 %v1627, %v1628
      %v1630 = vrot.slane %v1629, 1
      %v1631 = vadd.f32 %v1629, %v1630
      %1632 = vst.msk [vmem:[%s241 + $0x1] sm:$0x1] %vm1577, %v1631
      %s1633 = smul.u32 16, %s21
      %p1634 = scmp.lt.s32.totalorder %s20, 1
      %s1635 = scalar_select %p1634, %s20, 1
      %p1636 = scmp.lt.s32.totalorder %s1633, 31
      %s1637 = scalar_select %p1636, %s1633, 31
      %s1638 = smul.addr %s1635, 32
      %s1639 = sadd.s32 %s1637, %s1638
      %s1640 = smul.addr %s1639, 8
      %s1641 = scalar_lea.vmem %s3, %s1640
      %p1642 = scmp.lt.s32.totalorder %s20, 1
      %s1643 = scalar_select %p1642, %s20, 1
      %p1644 = scmp.lt.s32.totalorder %s21, 1
      %s1645 = scalar_select %p1644, %s21, 1
      %s1646 = smul.addr %s1643, 2
      %s1647 = sadd.s32 %s1645, %s1646
      %s1648 = smul.addr %s1647, 2
      %s1649 = scalar_lea.vmem %s4, %s1648
      // Predicated region
      $region33: #{encoder_forward.9} parent=31 // pred_check
        %p1650 = pneg %p116
      $region34: #{encoder_forward.9} parent=31 // pred_check_branch
        %1652 = sbr.rel (%p1650) target = $region36
      $region35: #{encoder_forward.9} parent=31 // pred_region
        %s1653 = smul.u32 16, %s21
      $region36: #{encoder_forward.9} parent=31 // pred_fallthru
        _
      // Predicated region
      $region37: #{encoder_forward.9} parent=31 // pred_check
        %p1654 = pneg %p144
      $region38: #{encoder_forward.9} parent=31 // pred_check_branch
        %1656 = sbr.rel (%p1654) target = $region40
      $region39: #{encoder_forward.9} parent=31 // pred_region
        _
      $region40: #{encoder_forward.9} parent=31 // pred_fallthru
        _
    $region32: #{encoder_forward.9} parent=5 // pred_fallthru
      _
    %p1657 = scmp.le.s32.totalorder 2, %s11
    // Predicated region
    $region41: #{encoder_forward.9} parent=5 // pred_check
      %p1658 = pneg %p1657
    $region42: #{encoder_forward.9} parent=5 // pred_check_branch
      %1660 = sbr.rel (%p1658) target = $region44
    $region43: #{encoder_forward.9} parent=5 // pred_region
      %s1661 = ssub.s32 %s11, 2
      // Predicated region
      $region45: #{encoder_forward.9} parent=43 // pred_check
        %p1662 = pneg %p122
      $region46: #{encoder_forward.9} parent=43 // pred_check_branch
        %1664 = sbr.rel (%p1662) target = $region48
      $region47: #{encoder_forward.9} parent=43 // pred_region
        %s1665 = smul.u32 16, %s23
        %p1666 = scmp.lt.s32.totalorder %s22, 1
        %s1667 = scalar_select %p1666, %s22, 1
        %p1668 = scmp.lt.s32.totalorder %s1665, 31
        %s1669 = scalar_select %p1668, %s1665, 31
        %s1670 = smul.addr %s1667, 32
        %s1671 = sadd.s32 %s1669, %s1670
        %s1672 = smul.addr %s1671, 8
        %s1673 = scalar_lea.vmem %s3, %s1672
      $region48: #{encoder_forward.9} parent=43 // pred_fallthru
        _
      // Predicated region
      $region49: #{encoder_forward.9} parent=43 // pred_check
        %p1674 = pneg %p150
      $region50: #{encoder_forward.9} parent=43 // pred_check_branch
        %1676 = sbr.rel (%p1674) target = $region52
      $region51: #{encoder_forward.9} parent=43 // pred_region
        %p1677 = scmp.lt.s32.totalorder %s22, 1
        %s1678 = scalar_select %p1677, %s22, 1
        %p1679 = scmp.lt.s32.totalorder %s23, 1
        %s1680 = scalar_select %p1679, %s23, 1
        %s1681 = smul.addr %s1678, 2
        %s1682 = sadd.s32 %s1680, %s1681
        %s1683 = smul.addr %s1682, 2
        %s1684 = scalar_lea.vmem %s4, %s1683
      $region52: #{encoder_forward.9} parent=43 // pred_fallthru
        _
    $region44: #{encoder_forward.9} parent=5 // pred_fallthru
      _
  $region6: #{encoder_forward.9} parent=0 // loop_footer
    %s15 = sadd.s32 1, %s11
  $region7: #{encoder_forward.9} parent=0 // loop_footer_branch
    %10 = sbr.rel target = $region3
  $region8: #{encoder_forward.9} parent=0 // loop_exit
    _

// kernel: encoder_forward.10
$region0: #{encoder_forward.10}
  #allocation0 [shape = 'u32[]', space=smem, size = 0x4, offset = 0x4, fixed_abs, tag = 'smem constant byte address 0x4 - core index']
  #allocation1 [shape = 'u32[72,128]{1,0:T(1,128)}', space=vmem, size = 0x9000, scoped, tag = 'internal scratch']
  %s0 = inlined_call_operand.vmem [shape: f32[2,256,16], index: 0, kind: input, shape index: {}]
  %s1 = inlined_call_operand.vmem [shape: f32[1,16], index: 1, kind: input, shape index: {}]
  %s2 = inlined_call_operand.vmem [shape: f32[1,16], index: 2, kind: input, shape index: {}]
  %s3 = inlined_call_operand.vmem [shape: bf16[2,256,16], index: 3, kind: output, shape index: {}]
  %s4 = sld [smem:[#allocation0]]
  $region45: #{encoder_forward.10} parent=0
    _
  %s6 = ssub.s32 1, %s4
  %s7 = scalar_select 0, %s6, %s4
  loop: start=0, step=1, limit=4
  $region2: #{encoder_forward.10} parent=0 // loop_pre_header
    _
  $region3: #{encoder_forward.10} parent=0 // loop_header
    %s9 = sphi 0, %s13
    %p10 = scmp.ge.s32.totalorder %s9, 4
    %s19 = sphi 0, %s21
    %s22 = sphi 0, %s19
    %s23 = sphi 0, %s22
    %s39 = sphi 0, %s23
    %s43 = sphi 0, %s43
    %s45 = sphi 0, %s43
    %s46 = sphi 0, %s45
    %s60 = sphi 0, %s46
    %s64 = sphi 0, %s64
    %s66 = sphi 0, %s64
    %s67 = sphi 0, %s66
    %s81 = sphi 0, %s67
    %s87 = sphi 0, %s89
    %s90 = sphi 0, %s87
    %s91 = sphi 0, %s90
    %s107 = sphi 0, %s91
  $region4: #{encoder_forward.10} parent=0 // loop_header_branch
    %12 = sbr.rel (%p10) target = $region8
  $region5: #{encoder_forward.10} parent=0 // loop_body
    %s14 = ssub.s32 %s9, 1
    %s15 = ssub.s32 %s9, 2
    %s16 = sadd.s32 %s9, 1
    %s17 = ssub.s32 %s9, %s16
    %p18 = scmp.eq.s32.totalorder %s17, 0
    %s20 = sadd.s32 %s19, 1
    %s21 = scalar_select %p18, %s19, %s20
    %p24 = pneg %p18
    %p25 = scmp.eq.s32.totalorder %s9, 1
    %p26 = por %p24, %p25
    %p27 = scmp.ne.s32.totalorder %s19, %s22
    %p28 = scmp.eq.s32.totalorder %s9, 0
    %p29 = por %p27, %p28
    %p30 = scmp.ne.s32.totalorder %s19, %s22
    %p31 = scmp.eq.s32.totalorder %s14, 1
    %p32 = por %p30, %p31
    %p33 = scmp.ne.s32.totalorder %s22, %s23
    %p34 = scmp.eq.s32.totalorder %s14, 0
    %p35 = por %p33, %p34
    %p36 = scmp.ne.s32.totalorder %s22, %s23
    %p37 = scmp.eq.s32.totalorder %s15, 1
    %p38 = por %p36, %p37
    %p40 = scmp.ne.s32.totalorder %s23, %s39
    %p41 = scmp.eq.s32.totalorder %s15, 0
    %p42 = por %p40, %p41
    %s44 = sadd.s32 %s43, 1
    %p47 = scmp.eq.s32.totalorder %s9, 1
    %p48 = scmp.ne.s32.totalorder %s43, %s45
    %p49 = scmp.eq.s32.totalorder %s9, 0
    %p50 = por %p48, %p49
    %p51 = scmp.ne.s32.totalorder %s43, %s45
    %p52 = scmp.eq.s32.totalorder %s14, 1
    %p53 = por %p51, %p52
    %p54 = scmp.ne.s32.totalorder %s45, %s46
    %p55 = scmp.eq.s32.totalorder %s14, 0
    %p56 = por %p54, %p55
    %p57 = scmp.ne.s32.totalorder %s45, %s46
    %p58 = scmp.eq.s32.totalorder %s15, 1
    %p59 = por %p57, %p58
    %p61 = scmp.ne.s32.totalorder %s46, %s60
    %p62 = scmp.eq.s32.totalorder %s15, 0
    %p63 = por %p61, %p62
    %s65 = sadd.s32 %s64, 1
    %p68 = scmp.eq.s32.totalorder %s9, 1
    %p69 = scmp.ne.s32.totalorder %s64, %s66
    %p70 = scmp.eq.s32.totalorder %s9, 0
    %p71 = por %p69, %p70
    %p72 = scmp.ne.s32.totalorder %s64, %s66
    %p73 = scmp.eq.s32.totalorder %s14, 1
    %p74 = por %p72, %p73
    %p75 = scmp.ne.s32.totalorder %s66, %s67
    %p76 = scmp.eq.s32.totalorder %s14, 0
    %p77 = por %p75, %p76
    %p78 = scmp.ne.s32.totalorder %s66, %s67
    %p79 = scmp.eq.s32.totalorder %s15, 1
    %p80 = por %p78, %p79
    %p82 = scmp.ne.s32.totalorder %s67, %s81
    %p83 = scmp.eq.s32.totalorder %s15, 0
    %p84 = por %p82, %p83
    %s85 = ssub.s32 %s9, %s16
    %p86 = scmp.eq.s32.totalorder %s85, 0
    %s88 = sadd.s32 %s87, 1
    %s89 = scalar_select %p86, %s87, %s88
    %p92 = pneg %p86
    %p93 = scmp.eq.s32.totalorder %s9, 1
    %p94 = por %p92, %p93
    %p95 = scmp.ne.s32.totalorder %s87, %s90
    %p96 = scmp.eq.s32.totalorder %s9, 0
    %p97 = por %p95, %p96
    %p98 = scmp.ne.s32.totalorder %s87, %s90
    %p99 = scmp.eq.s32.totalorder %s14, 1
    %p100 = por %p98, %p99
    %p101 = scmp.ne.s32.totalorder %s90, %s91
    %p102 = scmp.eq.s32.totalorder %s14, 0
    %p103 = por %p101, %p102
    %p104 = scmp.ne.s32.totalorder %s90, %s91
    %p105 = scmp.eq.s32.totalorder %s15, 1
    %p106 = por %p104, %p105
    %p108 = scmp.ne.s32.totalorder %s91, %s107
    %p109 = scmp.eq.s32.totalorder %s15, 0
    %p110 = por %p108, %p109
    %p111 = scmp.le.s32.totalorder 1, %s9
    %p112 = scmp.lt.s32.totalorder %s9, 3
    %p113 = pnand %p111, %p112
    %p114 = pneg %p113
    // Predicated region
    $region9: #{encoder_forward.10} parent=5 // pred_check
      _
    $region10: #{encoder_forward.10} parent=5 // pred_check_branch
      %116 = sbr.rel (%p113) target = $region12
    $region11: #{encoder_forward.10} parent=5 // pred_region
      %s117 = ssub.s32 %s9, 1
      // Predicated region
      $region13: #{encoder_forward.10} parent=11 // pred_check
        %p118 = pneg %p56
      $region14: #{encoder_forward.10} parent=11 // pred_check_branch
        %120 = sbr.rel (%p118) target = $region16
      $region15: #{encoder_forward.10} parent=11 // pred_region
        _
      $region16: #{encoder_forward.10} parent=11 // pred_fallthru
        _
      // Predicated region
      $region17: #{encoder_forward.10} parent=11 // pred_check
        %p121 = pneg %p77
      $region18: #{encoder_forward.10} parent=11 // pred_check_branch
        %123 = sbr.rel (%p121) target = $region20
      $region19: #{encoder_forward.10} parent=11 // pred_region
        _
      $region20: #{encoder_forward.10} parent=11 // pred_fallthru
        _
    $region12: #{encoder_forward.10} parent=5 // pred_fallthru
      _
    %p124 = scmp.lt.s32.totalorder %s9, 2
    // Predicated region
    $region21: #{encoder_forward.10} parent=5 // pred_check
      %p125 = pneg %p124
    $region22: #{encoder_forward.10} parent=5 // pred_check_branch
      %127 = sbr.rel (%p125) target = $region24
    $region23: #{encoder_forward.10} parent=5 // pred_region
      // Predicated region
      $region25: #{encoder_forward.10} parent=23 // pred_check
        %p128 = pneg %p29
      $region26: #{encoder_forward.10} parent=23 // pred_check_branch
        %130 = sbr.rel (%p128) target = $region28
      $region27: #{encoder_forward.10} parent=23 // pred_region
        %p131 = scmp.lt.s32.totalorder %s9, 1
        %s132 = scalar_select %p131, %s9, 1
        %s133 = smul.addr %s132, 32
        %s134 = smul.addr %s133, 8
        %s135 = scalar_lea.vmem %s0, %s134
      $region28: #{encoder_forward.10} parent=23 // pred_fallthru
        _
    $region24: #{encoder_forward.10} parent=5 // pred_fallthru
      _
    %p136 = scmp.le.s32.totalorder 1, %s9
    %p137 = scmp.lt.s32.totalorder %s9, 3
    %p138 = pnand %p136, %p137
    %p139 = pneg %p138
    // Predicated region
    $region29: #{encoder_forward.10} parent=5 // pred_check
      _
    $region30: #{encoder_forward.10} parent=5 // pred_check_branch
      %141 = sbr.rel (%p138) target = $region32
    $region31: #{encoder_forward.10} parent=5 // pred_region
      %s142 = ssub.s32 %s9, 1
      %p143 = scmp.lt.s32.totalorder %s14, 1
      %s144 = scalar_select %p143, %s14, 1
      %s145 = smul.addr %s144, 32
      %s146 = smul.addr %s145, 8
      %s147 = scalar_lea.vmem %s0, %s146
      %p148 = pneg %p35
      %p149 = pneg %p32
      %p150 = pneg %p56
      %p151 = pneg %p53
      %p152 = pneg %p77
      %p153 = pneg %p74
      %p154 = pneg %p103
      %p155 = pneg %p100
      %p156 = scmp.lt.s32.totalorder %s14, 1
      %s157 = scalar_select %p156, %s14, 1
      %s158 = smul.addr %s157, 32
      %s159 = smul.addr %s158, 4
      %s160 = scalar_lea.vmem %s3, %s159
      %p161 = scmp.lt.s32.totalorder %s14, 1
      %s162 = scalar_select %p161, %s14, 1
      %s163 = smul.addr %s162, 32
      %s164 = smul.addr %s163, 8
      %s165 = scalar_lea.vmem %s0, %s164
      %p166 = scmp.lt.s32.totalorder %s14, 1
      %s167 = scalar_select %p166, %s14, 1
      %s168 = smul.addr %s167, 32
      %s169 = smul.addr %s168, 4
      %s170 = scalar_lea.vmem %s3, %s169
      %v171 = vld [vmem:[%s165] sm:$0xff]
      %v172 = vld [vmem:[%s165 + $0x8] sm:$0xff]
      %v173 = vld [vmem:[%s165 + $0x10] sm:$0xff]
      %v174 = vld [vmem:[%s165 + $0x18] sm:$0xff]
      %v175 = vld [vmem:[%s165 + $0x20] sm:$0xff]
      %v176 = vld [vmem:[%s165 + $0x28] sm:$0xff]
      %v177 = vld [vmem:[%s165 + $0x30] sm:$0xff]
      %v178 = vld [vmem:[%s165 + $0x38] sm:$0xff]
      %v179 = vld [vmem:[%s165 + $0x40] sm:$0xff]
      %v180 = vld [vmem:[%s165 + $0x48] sm:$0xff]
      %v181 = vld [vmem:[%s165 + $0x50] sm:$0xff]
      %v182 = vld [vmem:[%s165 + $0x58] sm:$0xff]
      %v183 = vld [vmem:[%s165 + $0x60] sm:$0xff]
      %v184 = vld [vmem:[%s165 + $0x68] sm:$0xff]
      %v185 = vld [vmem:[%s165 + $0x70] sm:$0xff]
      %v186 = vld [vmem:[%s165 + $0x78] sm:$0xff]
      %v187 = vld [vmem:[%s165 + $0x80] sm:$0xff]
      %v188 = vld [vmem:[%s165 + $0x88] sm:$0xff]
      %v189 = vld [vmem:[%s165 + $0x90] sm:$0xff]
      %v190 = vld [vmem:[%s165 + $0x98] sm:$0xff]
      %v191 = vld [vmem:[%s165 + $0xa0] sm:$0xff]
      %v192 = vld [vmem:[%s165 + $0xa8] sm:$0xff]
      %v193 = vld [vmem:[%s165 + $0xb0] sm:$0xff]
      %v194 = vld [vmem:[%s165 + $0xb8] sm:$0xff]
      %v195 = vld [vmem:[%s165 + $0xc0] sm:$0xff]
      %v196 = vld [vmem:[%s165 + $0xc8] sm:$0xff]
      %v197 = vld [vmem:[%s165 + $0xd0] sm:$0xff]
      %v198 = vld [vmem:[%s165 + $0xd8] sm:$0xff]
      %v199 = vld [vmem:[%s165 + $0xe0] sm:$0xff]
      %v200 = vld [vmem:[%s165 + $0xe8] sm:$0xff]
      %v201 = vld [vmem:[%s165 + $0xf0] sm:$0xff]
      %v202 = vld [vmem:[%s165 + $0xf8] sm:$0xff]
      %v203 = vld [vmem:[%s1] sm:$0x1]
      %v205 = vperm.slane %v203, 0
      %v207 = vmul.f32 %v171, %v205
      %v208 = vmul.f32 %v172, %v205
      %v209 = vmul.f32 %v173, %v205
      %v210 = vmul.f32 %v174, %v205
      %v211 = vmul.f32 %v175, %v205
      %v212 = vmul.f32 %v176, %v205
      %v213 = vmul.f32 %v177, %v205
      %v214 = vmul.f32 %v178, %v205
      %v215 = vmul.f32 %v179, %v205
      %v216 = vmul.f32 %v180, %v205
      %v217 = vmul.f32 %v181, %v205
      %v218 = vmul.f32 %v182, %v205
      %v219 = vmul.f32 %v183, %v205
      %v220 = vmul.f32 %v184, %v205
      %v221 = vmul.f32 %v185, %v205
      %v222 = vmul.f32 %v186, %v205
      %v223 = vmul.f32 %v187, %v205
      %v224 = vmul.f32 %v188, %v205
      %v225 = vmul.f32 %v189, %v205
      %v226 = vmul.f32 %v190, %v205
      %v227 = vmul.f32 %v191, %v205
      %v228 = vmul.f32 %v192, %v205
      %v229 = vmul.f32 %v193, %v205
      %v230 = vmul.f32 %v194, %v205
      %v231 = vmul.f32 %v195, %v205
      %v232 = vmul.f32 %v196, %v205
      %v233 = vmul.f32 %v197, %v205
      %v234 = vmul.f32 %v198, %v205
      %v235 = vmul.f32 %v199, %v205
      %v236 = vmul.f32 %v200, %v205
      %v237 = vmul.f32 %v201, %v205
      %v238 = vmul.f32 %v202, %v205
      %v239 = vld [vmem:[%s2] sm:$0x1]
      %v241 = vperm.slane %v239, 0
      %v243 = vadd.f32 %v207, %v241
      %v244 = vadd.f32 %v208, %v241
      %v245 = vadd.f32 %v209, %v241
      %v246 = vadd.f32 %v210, %v241
      %v247 = vadd.f32 %v211, %v241
      %v248 = vadd.f32 %v212, %v241
      %v249 = vadd.f32 %v213, %v241
      %v250 = vadd.f32 %v214, %v241
      %v251 = vadd.f32 %v215, %v241
      %v252 = vadd.f32 %v216, %v241
      %v253 = vadd.f32 %v217, %v241
      %v254 = vadd.f32 %v218, %v241
      %v255 = vadd.f32 %v219, %v241
      %v256 = vadd.f32 %v220, %v241
      %v257 = vadd.f32 %v221, %v241
      %v258 = vadd.f32 %v222, %v241
      %v259 = vadd.f32 %v223, %v241
      %v260 = vadd.f32 %v224, %v241
      %v261 = vadd.f32 %v225, %v241
      %v262 = vadd.f32 %v226, %v241
      %v263 = vadd.f32 %v227, %v241
      %v264 = vadd.f32 %v228, %v241
      %v265 = vadd.f32 %v229, %v241
      %v266 = vadd.f32 %v230, %v241
      %v267 = vadd.f32 %v231, %v241
      %v268 = vadd.f32 %v232, %v241
      %v269 = vadd.f32 %v233, %v241
      %v270 = vadd.f32 %v234, %v241
      %v271 = vadd.f32 %v235, %v241
      %v272 = vadd.f32 %v236, %v241
      %v273 = vadd.f32 %v237, %v241
      %v274 = vadd.f32 %v238, %v241
      %v275 = vmul.f32 %v243, 0.2
      %v276 = vmul.f32 %v244, 0.2
      %v277 = vmul.f32 %v245, 0.2
      %v278 = vmul.f32 %v246, 0.2
      %v279 = vmul.f32 %v247, 0.2
      %v280 = vmul.f32 %v248, 0.2
      %v281 = vmul.f32 %v249, 0.2
      %v282 = vmul.f32 %v250, 0.2
      %v283 = vmul.f32 %v251, 0.2
      %v284 = vmul.f32 %v252, 0.2
      %v285 = vmul.f32 %v253, 0.2
      %v286 = vmul.f32 %v254, 0.2
      %v287 = vmul.f32 %v255, 0.2
      %v288 = vmul.f32 %v256, 0.2
      %v289 = vmul.f32 %v257, 0.2
      %v290 = vmul.f32 %v258, 0.2
      %v291 = vmul.f32 %v259, 0.2
      %v292 = vmul.f32 %v260, 0.2
      %v293 = vmul.f32 %v261, 0.2
      %v294 = vmul.f32 %v262, 0.2
      %v295 = vmul.f32 %v263, 0.2
      %v296 = vmul.f32 %v264, 0.2
      %v297 = vmul.f32 %v265, 0.2
      %v298 = vmul.f32 %v266, 0.2
      %v299 = vmul.f32 %v267, 0.2
      %v300 = vmul.f32 %v268, 0.2
      %v301 = vmul.f32 %v269, 0.2
      %v302 = vmul.f32 %v270, 0.2
      %v303 = vmul.f32 %v271, 0.2
      %v304 = vmul.f32 %v272, 0.2
      %v305 = vmul.f32 %v273, 0.2
      %v306 = vmul.f32 %v274, 0.2
      %v307 = vmax.f32 %v243, %v275
      %v308 = vmax.f32 %v244, %v276
      %v309 = vmax.f32 %v245, %v277
      %v310 = vmax.f32 %v246, %v278
      %v311 = vmax.f32 %v247, %v279
      %v312 = vmax.f32 %v248, %v280
      %v313 = vmax.f32 %v249, %v281
      %v314 = vmax.f32 %v250, %v282
      %v315 = vmax.f32 %v251, %v283
      %v316 = vmax.f32 %v252, %v284
      %v317 = vmax.f32 %v253, %v285
      %v318 = vmax.f32 %v254, %v286
      %v319 = vmax.f32 %v255, %v287
      %v320 = vmax.f32 %v256, %v288
      %v321 = vmax.f32 %v257, %v289
      %v322 = vmax.f32 %v258, %v290
      %v323 = vmax.f32 %v259, %v291
      %v324 = vmax.f32 %v260, %v292
      %v325 = vmax.f32 %v261, %v293
      %v326 = vmax.f32 %v262, %v294
      %v327 = vmax.f32 %v263, %v295
      %v328 = vmax.f32 %v264, %v296
      %v329 = vmax.f32 %v265, %v297
      %v330 = vmax.f32 %v266, %v298
      %v331 = vmax.f32 %v267, %v299
      %v332 = vmax.f32 %v268, %v300
      %v333 = vmax.f32 %v269, %v301
      %v334 = vmax.f32 %v270, %v302
      %v335 = vmax.f32 %v271, %v303
      %v336 = vmax.f32 %v272, %v304
      %v337 = vmax.f32 %v273, %v305
      %v338 = vmax.f32 %v274, %v306
      %v339 = vpack.c.bf16 %v307, %v307
      %v340 = vpack.c.bf16 %v308, %v308
      %v341 = vpack.c.bf16 %v309, %v309
      %v342 = vpack.c.bf16 %v310, %v310
      %v343 = vpack.c.bf16 %v311, %v311
      %v344 = vpack.c.bf16 %v312, %v312
      %v345 = vpack.c.bf16 %v313, %v313
      %v346 = vpack.c.bf16 %v314, %v314
      %v347 = vpack.c.bf16 %v315, %v315
      %v348 = vpack.c.bf16 %v316, %v316
      %v349 = vpack.c.bf16 %v317, %v317
      %v350 = vpack.c.bf16 %v318, %v318
      %v351 = vpack.c.bf16 %v319, %v319
      %v352 = vpack.c.bf16 %v320, %v320
      %v353 = vpack.c.bf16 %v321, %v321
      %v354 = vpack.c.bf16 %v322, %v322
      %v355 = vpack.c.bf16 %v323, %v323
      %v356 = vpack.c.bf16 %v324, %v324
      %v357 = vpack.c.bf16 %v325, %v325
      %v358 = vpack.c.bf16 %v326, %v326
      %v359 = vpack.c.bf16 %v327, %v327
      %v360 = vpack.c.bf16 %v328, %v328
      %v361 = vpack.c.bf16 %v329, %v329
      %v362 = vpack.c.bf16 %v330, %v330
      %v363 = vpack.c.bf16 %v331, %v331
      %v364 = vpack.c.bf16 %v332, %v332
      %v365 = vpack.c.bf16 %v333, %v333
      %v366 = vpack.c.bf16 %v334, %v334
      %v367 = vpack.c.bf16 %v335, %v335
      %v368 = vpack.c.bf16 %v336, %v336
      %v369 = vpack.c.bf16 %v337, %v337
      %v370 = vpack.c.bf16 %v338, %v338
      %vm371 = vcmask 125952
      %372 = vst.msk [vmem:[%s170] sm:$0xf] %vm371, %v339
      %373 = vst.msk [vmem:[%s170 + $0x4] sm:$0xf] %vm371, %v340
      %374 = vst.msk [vmem:[%s170 + $0x8] sm:$0xf] %vm371, %v341
      %375 = vst.msk [vmem:[%s170 + $0xc] sm:$0xf] %vm371, %v342
      %376 = vst.msk [vmem:[%s170 + $0x10] sm:$0xf] %vm371, %v343
      %377 = vst.msk [vmem:[%s170 + $0x14] sm:$0xf] %vm371, %v344
      %378 = vst.msk [vmem:[%s170 + $0x18] sm:$0xf] %vm371, %v345
      %379 = vst.msk [vmem:[%s170 + $0x1c] sm:$0xf] %vm371, %v346
      %380 = vst.msk [vmem:[%s170 + $0x20] sm:$0xf] %vm371, %v347
      %381 = vst.msk [vmem:[%s170 + $0x24] sm:$0xf] %vm371, %v348
      %382 = vst.msk [vmem:[%s170 + $0x28] sm:$0xf] %vm371, %v349
      %383 = vst.msk [vmem:[%s170 + $0x2c] sm:$0xf] %vm371, %v350
      %384 = vst.msk [vmem:[%s170 + $0x30] sm:$0xf] %vm371, %v351
      %385 = vst.msk [vmem:[%s170 + $0x34] sm:$0xf] %vm371, %v352
      %386 = vst.msk [vmem:[%s170 + $0x38] sm:$0xf] %vm371, %v353
      %387 = vst.msk [vmem:[%s170 + $0x3c] sm:$0xf] %vm371, %v354
      %388 = vst.msk [vmem:[%s170 + $0x40] sm:$0xf] %vm371, %v355
      %389 = vst.msk [vmem:[%s170 + $0x44] sm:$0xf] %vm371, %v356
      %390 = vst.msk [vmem:[%s170 + $0x48] sm:$0xf] %vm371, %v357
      %391 = vst.msk [vmem:[%s170 + $0x4c] sm:$0xf] %vm371, %v358
      %392 = vst.msk [vmem:[%s170 + $0x50] sm:$0xf] %vm371, %v359
      %393 = vst.msk [vmem:[%s170 + $0x54] sm:$0xf] %vm371, %v360
      %394 = vst.msk [vmem:[%s170 + $0x58] sm:$0xf] %vm371, %v361
      %395 = vst.msk [vmem:[%s170 + $0x5c] sm:$0xf] %vm371, %v362
      %396 = vst.msk [vmem:[%s170 + $0x60] sm:$0xf] %vm371, %v363
      %397 = vst.msk [vmem:[%s170 + $0x64] sm:$0xf] %vm371, %v364
      %398 = vst.msk [vmem:[%s170 + $0x68] sm:$0xf] %vm371, %v365
      %399 = vst.msk [vmem:[%s170 + $0x6c] sm:$0xf] %vm371, %v366
      %400 = vst.msk [vmem:[%s170 + $0x70] sm:$0xf] %vm371, %v367
      %401 = vst.msk [vmem:[%s170 + $0x74] sm:$0xf] %vm371, %v368
      %402 = vst.msk [vmem:[%s170 + $0x78] sm:$0xf] %vm371, %v369
      %403 = vst.msk [vmem:[%s170 + $0x7c] sm:$0xf] %vm371, %v370
      %p404 = scmp.lt.s32.totalorder %s14, 1
      %s405 = scalar_select %p404, %s14, 1
      %s406 = smul.addr %s405, 32
      %s407 = smul.addr %s406, 4
      %s408 = scalar_lea.vmem %s3, %s407
      // Predicated region
      $region33: #{encoder_forward.10} parent=31 // pred_check
        %p409 = pneg %p100
      $region34: #{encoder_forward.10} parent=31 // pred_check_branch
        %411 = sbr.rel (%p409) target = $region36
      $region35: #{encoder_forward.10} parent=31 // pred_region
        _
      $region36: #{encoder_forward.10} parent=31 // pred_fallthru
        _
    $region32: #{encoder_forward.10} parent=5 // pred_fallthru
      _
    %p412 = scmp.le.s32.totalorder 2, %s9
    // Predicated region
    $region37: #{encoder_forward.10} parent=5 // pred_check
      %p413 = pneg %p412
    $region38: #{encoder_forward.10} parent=5 // pred_check_branch
      %415 = sbr.rel (%p413) target = $region40
    $region39: #{encoder_forward.10} parent=5 // pred_region
      %s416 = ssub.s32 %s9, 2
      // Predicated region
      $region41: #{encoder_forward.10} parent=39 // pred_check
        %p417 = pneg %p106
      $region42: #{encoder_forward.10} parent=39 // pred_check_branch
        %419 = sbr.rel (%p417) target = $region44
      $region43: #{encoder_forward.10} parent=39 // pred_region
        %p420 = scmp.lt.s32.totalorder %s15, 1
        %s421 = scalar_select %p420, %s15, 1
        %s422 = smul.addr %s421, 32
        %s423 = smul.addr %s422, 4
        %s424 = scalar_lea.vmem %s3, %s423
      $region44: #{encoder_forward.10} parent=39 // pred_fallthru
        _
    $region40: #{encoder_forward.10} parent=5 // pred_fallthru
      _
  $region6: #{encoder_forward.10} parent=0 // loop_footer
    %s13 = sadd.s32 1, %s9
  $region7: #{encoder_forward.10} parent=0 // loop_footer_branch
    %8 = sbr.rel target = $region3
  $region8: #{encoder_forward.10} parent=0 // loop_exit
    _

// kernel: encoder_forward.12
$region0: #{encoder_forward.12}
  #allocation0 [shape = 'u32[]', space=smem, size = 0x4, offset = 0x4, fixed_abs, tag = 'smem constant byte address 0x4 - core index']
  #allocation1 [shape = 'u32[72,128]{1,0:T(1,128)}', space=vmem, size = 0x9000, scoped, tag = 'internal scratch']
  %s0 = inlined_call_operand.vmem [shape: f32[2,64,32], index: 0, kind: input, shape index: {}]
  %s1 = inlined_call_operand.vmem [shape: f32[1,32], index: 1, kind: input, shape index: {}]
  %s2 = inlined_call_operand.vmem [shape: f32[1,32], index: 2, kind: input, shape index: {}]
  %s3 = inlined_call_operand.vmem [shape: bf16[2,64,32], index: 3, kind: output, shape index: {}]
  %s4 = sld [smem:[#allocation0]]
  $region45: #{encoder_forward.12} parent=0
    _
  %s6 = ssub.s32 1, %s4
  %s7 = scalar_select 0, %s6, %s4
  loop: start=0, step=1, limit=4
  $region2: #{encoder_forward.12} parent=0 // loop_pre_header
    _
  $region3: #{encoder_forward.12} parent=0 // loop_header
    %s9 = sphi 0, %s13
    %p10 = scmp.ge.s32.totalorder %s9, 4
    %s19 = sphi 0, %s21
    %s22 = sphi 0, %s19
    %s23 = sphi 0, %s22
    %s39 = sphi 0, %s23
    %s43 = sphi 0, %s43
    %s45 = sphi 0, %s43
    %s46 = sphi 0, %s45
    %s60 = sphi 0, %s46
    %s64 = sphi 0, %s64
    %s66 = sphi 0, %s64
    %s67 = sphi 0, %s66
    %s81 = sphi 0, %s67
    %s87 = sphi 0, %s89
    %s90 = sphi 0, %s87
    %s91 = sphi 0, %s90
    %s107 = sphi 0, %s91
  $region4: #{encoder_forward.12} parent=0 // loop_header_branch
    %12 = sbr.rel (%p10) target = $region8
  $region5: #{encoder_forward.12} parent=0 // loop_body
    %s14 = ssub.s32 %s9, 1
    %s15 = ssub.s32 %s9, 2
    %s16 = sadd.s32 %s9, 1
    %s17 = ssub.s32 %s9, %s16
    %p18 = scmp.eq.s32.totalorder %s17, 0
    %s20 = sadd.s32 %s19, 1
    %s21 = scalar_select %p18, %s19, %s20
    %p24 = pneg %p18
    %p25 = scmp.eq.s32.totalorder %s9, 1
    %p26 = por %p24, %p25
    %p27 = scmp.ne.s32.totalorder %s19, %s22
    %p28 = scmp.eq.s32.totalorder %s9, 0
    %p29 = por %p27, %p28
    %p30 = scmp.ne.s32.totalorder %s19, %s22
    %p31 = scmp.eq.s32.totalorder %s14, 1
    %p32 = por %p30, %p31
    %p33 = scmp.ne.s32.totalorder %s22, %s23
    %p34 = scmp.eq.s32.totalorder %s14, 0
    %p35 = por %p33, %p34
    %p36 = scmp.ne.s32.totalorder %s22, %s23
    %p37 = scmp.eq.s32.totalorder %s15, 1
    %p38 = por %p36, %p37
    %p40 = scmp.ne.s32.totalorder %s23, %s39
    %p41 = scmp.eq.s32.totalorder %s15, 0
    %p42 = por %p40, %p41
    %s44 = sadd.s32 %s43, 1
    %p47 = scmp.eq.s32.totalorder %s9, 1
    %p48 = scmp.ne.s32.totalorder %s43, %s45
    %p49 = scmp.eq.s32.totalorder %s9, 0
    %p50 = por %p48, %p49
    %p51 = scmp.ne.s32.totalorder %s43, %s45
    %p52 = scmp.eq.s32.totalorder %s14, 1
    %p53 = por %p51, %p52
    %p54 = scmp.ne.s32.totalorder %s45, %s46
    %p55 = scmp.eq.s32.totalorder %s14, 0
    %p56 = por %p54, %p55
    %p57 = scmp.ne.s32.totalorder %s45, %s46
    %p58 = scmp.eq.s32.totalorder %s15, 1
    %p59 = por %p57, %p58
    %p61 = scmp.ne.s32.totalorder %s46, %s60
    %p62 = scmp.eq.s32.totalorder %s15, 0
    %p63 = por %p61, %p62
    %s65 = sadd.s32 %s64, 1
    %p68 = scmp.eq.s32.totalorder %s9, 1
    %p69 = scmp.ne.s32.totalorder %s64, %s66
    %p70 = scmp.eq.s32.totalorder %s9, 0
    %p71 = por %p69, %p70
    %p72 = scmp.ne.s32.totalorder %s64, %s66
    %p73 = scmp.eq.s32.totalorder %s14, 1
    %p74 = por %p72, %p73
    %p75 = scmp.ne.s32.totalorder %s66, %s67
    %p76 = scmp.eq.s32.totalorder %s14, 0
    %p77 = por %p75, %p76
    %p78 = scmp.ne.s32.totalorder %s66, %s67
    %p79 = scmp.eq.s32.totalorder %s15, 1
    %p80 = por %p78, %p79
    %p82 = scmp.ne.s32.totalorder %s67, %s81
    %p83 = scmp.eq.s32.totalorder %s15, 0
    %p84 = por %p82, %p83
    %s85 = ssub.s32 %s9, %s16
    %p86 = scmp.eq.s32.totalorder %s85, 0
    %s88 = sadd.s32 %s87, 1
    %s89 = scalar_select %p86, %s87, %s88
    %p92 = pneg %p86
    %p93 = scmp.eq.s32.totalorder %s9, 1
    %p94 = por %p92, %p93
    %p95 = scmp.ne.s32.totalorder %s87, %s90
    %p96 = scmp.eq.s32.totalorder %s9, 0
    %p97 = por %p95, %p96
    %p98 = scmp.ne.s32.totalorder %s87, %s90
    %p99 = scmp.eq.s32.totalorder %s14, 1
    %p100 = por %p98, %p99
    %p101 = scmp.ne.s32.totalorder %s90, %s91
    %p102 = scmp.eq.s32.totalorder %s14, 0
    %p103 = por %p101, %p102
    %p104 = scmp.ne.s32.totalorder %s90, %s91
    %p105 = scmp.eq.s32.totalorder %s15, 1
    %p106 = por %p104, %p105
    %p108 = scmp.ne.s32.totalorder %s91, %s107
    %p109 = scmp.eq.s32.totalorder %s15, 0
    %p110 = por %p108, %p109
    %p111 = scmp.le.s32.totalorder 1, %s9
    %p112 = scmp.lt.s32.totalorder %s9, 3
    %p113 = pnand %p111, %p112
    %p114 = pneg %p113
    // Predicated region
    $region9: #{encoder_forward.12} parent=5 // pred_check
      _
    $region10: #{encoder_forward.12} parent=5 // pred_check_branch
      %116 = sbr.rel (%p113) target = $region12
    $region11: #{encoder_forward.12} parent=5 // pred_region
      %s117 = ssub.s32 %s9, 1
      // Predicated region
      $region13: #{encoder_forward.12} parent=11 // pred_check
        %p118 = pneg %p56
      $region14: #{encoder_forward.12} parent=11 // pred_check_branch
        %120 = sbr.rel (%p118) target = $region16
      $region15: #{encoder_forward.12} parent=11 // pred_region
        _
      $region16: #{encoder_forward.12} parent=11 // pred_fallthru
        _
      // Predicated region
      $region17: #{encoder_forward.12} parent=11 // pred_check
        %p121 = pneg %p77
      $region18: #{encoder_forward.12} parent=11 // pred_check_branch
        %123 = sbr.rel (%p121) target = $region20
      $region19: #{encoder_forward.12} parent=11 // pred_region
        _
      $region20: #{encoder_forward.12} parent=11 // pred_fallthru
        _
    $region12: #{encoder_forward.12} parent=5 // pred_fallthru
      _
    %p124 = scmp.lt.s32.totalorder %s9, 2
    // Predicated region
    $region21: #{encoder_forward.12} parent=5 // pred_check
      %p125 = pneg %p124
    $region22: #{encoder_forward.12} parent=5 // pred_check_branch
      %127 = sbr.rel (%p125) target = $region24
    $region23: #{encoder_forward.12} parent=5 // pred_region
      // Predicated region
      $region25: #{encoder_forward.12} parent=23 // pred_check
        %p128 = pneg %p29
      $region26: #{encoder_forward.12} parent=23 // pred_check_branch
        %130 = sbr.rel (%p128) target = $region28
      $region27: #{encoder_forward.12} parent=23 // pred_region
        %p131 = scmp.lt.s32.totalorder %s9, 1
        %s132 = scalar_select %p131, %s9, 1
        %s133 = smul.addr %s132, 8
        %s134 = smul.addr %s133, 8
        %s135 = scalar_lea.vmem %s0, %s134
      $region28: #{encoder_forward.12} parent=23 // pred_fallthru
        _
    $region24: #{encoder_forward.12} parent=5 // pred_fallthru
      _
    %p136 = scmp.le.s32.totalorder 1, %s9
    %p137 = scmp.lt.s32.totalorder %s9, 3
    %p138 = pnand %p136, %p137
    %p139 = pneg %p138
    // Predicated region
    $region29: #{encoder_forward.12} parent=5 // pred_check
      _
    $region30: #{encoder_forward.12} parent=5 // pred_check_branch
      %141 = sbr.rel (%p138) target = $region32
    $region31: #{encoder_forward.12} parent=5 // pred_region
      %s142 = ssub.s32 %s9, 1
      %p143 = scmp.lt.s32.totalorder %s14, 1
      %s144 = scalar_select %p143, %s14, 1
      %s145 = smul.addr %s144, 8
      %s146 = smul.addr %s145, 8
      %s147 = scalar_lea.vmem %s0, %s146
      %p148 = pneg %p35
      %p149 = pneg %p32
      %p150 = pneg %p56
      %p151 = pneg %p53
      %p152 = pneg %p77
      %p153 = pneg %p74
      %p154 = pneg %p103
      %p155 = pneg %p100
      %p156 = scmp.lt.s32.totalorder %s14, 1
      %s157 = scalar_select %p156, %s14, 1
      %s158 = smul.addr %s157, 8
      %s159 = smul.addr %s158, 4
      %s160 = scalar_lea.vmem %s3, %s159
      %p161 = scmp.lt.s32.totalorder %s14, 1
      %s162 = scalar_select %p161, %s14, 1
      %s163 = smul.addr %s162, 8
      %s164 = smul.addr %s163, 8
      %s165 = scalar_lea.vmem %s0, %s164
      %p166 = scmp.lt.s32.totalorder %s14, 1
      %s167 = scalar_select %p166, %s14, 1
      %s168 = smul.addr %s167, 8
      %s169 = smul.addr %s168, 4
      %s170 = scalar_lea.vmem %s3, %s169
      %v171 = vld [vmem:[%s165] sm:$0xff]
      %v172 = vld [vmem:[%s165 + $0x8] sm:$0xff]
      %v173 = vld [vmem:[%s165 + $0x10] sm:$0xff]
      %v174 = vld [vmem:[%s165 + $0x18] sm:$0xff]
      %v175 = vld [vmem:[%s165 + $0x20] sm:$0xff]
      %v176 = vld [vmem:[%s165 + $0x28] sm:$0xff]
      %v177 = vld [vmem:[%s165 + $0x30] sm:$0xff]
      %v178 = vld [vmem:[%s165 + $0x38] sm:$0xff]
      %v179 = vld [vmem:[%s1] sm:$0x1]
      %v181 = vperm.slane %v179, 0
      %v183 = vmul.f32 %v171, %v181
      %v184 = vmul.f32 %v172, %v181
      %v185 = vmul.f32 %v173, %v181
      %v186 = vmul.f32 %v174, %v181
      %v187 = vmul.f32 %v175, %v181
      %v188 = vmul.f32 %v176, %v181
      %v189 = vmul.f32 %v177, %v181
      %v190 = vmul.f32 %v178, %v181
      %v191 = vld [vmem:[%s2] sm:$0x1]
      %v193 = vperm.slane %v191, 0
      %v195 = vadd.f32 %v183, %v193
      %v196 = vadd.f32 %v184, %v193
      %v197 = vadd.f32 %v185, %v193
      %v198 = vadd.f32 %v186, %v193
      %v199 = vadd.f32 %v187, %v193
      %v200 = vadd.f32 %v188, %v193
      %v201 = vadd.f32 %v189, %v193
      %v202 = vadd.f32 %v190, %v193
      %v203 = vmul.f32 %v195, 0.2
      %v204 = vmul.f32 %v196, 0.2
      %v205 = vmul.f32 %v197, 0.2
      %v206 = vmul.f32 %v198, 0.2
      %v207 = vmul.f32 %v199, 0.2
      %v208 = vmul.f32 %v200, 0.2
      %v209 = vmul.f32 %v201, 0.2
      %v210 = vmul.f32 %v202, 0.2
      %v211 = vmax.f32 %v195, %v203
      %v212 = vmax.f32 %v196, %v204
      %v213 = vmax.f32 %v197, %v205
      %v214 = vmax.f32 %v198, %v206
      %v215 = vmax.f32 %v199, %v207
      %v216 = vmax.f32 %v200, %v208
      %v217 = vmax.f32 %v201, %v209
      %v218 = vmax.f32 %v202, %v210
      %v219 = vpack.c.bf16 %v211, %v211
      %v220 = vpack.c.bf16 %v212, %v212
      %v221 = vpack.c.bf16 %v213, %v213
      %v222 = vpack.c.bf16 %v214, %v214
      %v223 = vpack.c.bf16 %v215, %v215
      %v224 = vpack.c.bf16 %v216, %v216
      %v225 = vpack.c.bf16 %v217, %v217
      %v226 = vpack.c.bf16 %v218, %v218
      %vm227 = vcmask 257024
      %228 = vst.msk [vmem:[%s170] sm:$0xf] %vm227, %v219
      %229 = vst.msk [vmem:[%s170 + $0x4] sm:$0xf] %vm227, %v220
      %230 = vst.msk [vmem:[%s170 + $0x8] sm:$0xf] %vm227, %v221
      %231 = vst.msk [vmem:[%s170 + $0xc] sm:$0xf] %vm227, %v222
      %232 = vst.msk [vmem:[%s170 + $0x10] sm:$0xf] %vm227, %v223
      %233 = vst.msk [vmem:[%s170 + $0x14] sm:$0xf] %vm227, %v224
      %234 = vst.msk [vmem:[%s170 + $0x18] sm:$0xf] %vm227, %v225
      %235 = vst.msk [vmem:[%s170 + $0x1c] sm:$0xf] %vm227, %v226
      %p236 = scmp.lt.s32.totalorder %s14, 1
      %s237 = scalar_select %p236, %s14, 1
      %s238 = smul.addr %s237, 8
      %s239 = smul.addr %s238, 4
      %s240 = scalar_lea.vmem %s3, %s239
      // Predicated region
      $region33: #{encoder_forward.12} parent=31 // pred_check
        %p241 = pneg %p100
      $region34: #{encoder_forward.12} parent=31 // pred_check_branch
        %243 = sbr.rel (%p241) target = $region36
      $region35: #{encoder_forward.12} parent=31 // pred_region
        _
      $region36: #{encoder_forward.12} parent=31 // pred_fallthru
        _
    $region32: #{encoder_forward.12} parent=5 // pred_fallthru
      _
    %p244 = scmp.le.s32.totalorder 2, %s9
    // Predicated region
    $region37: #{encoder_forward.12} parent=5 // pred_check
      %p245 = pneg %p244
    $region38: #{encoder_forward.12} parent=5 // pred_check_branch
      %247 = sbr.rel (%p245) target = $region40
    $region39: #{encoder_forward.12} parent=5 // pred_region
      %s248 = ssub.s32 %s9, 2
      // Predicated region
      $region41: #{encoder_forward.12} parent=39 // pred_check
        %p249 = pneg %p106
      $region42: #{encoder_forward.12} parent=39 // pred_check_branch
        %251 = sbr.rel (%p249) target = $region44
      $region43: #{encoder_forward.12} parent=39 // pred_region
        %p252 = scmp.lt.s32.totalorder %s15, 1
        %s253 = scalar_select %p252, %s15, 1
        %s254 = smul.addr %s253, 8
        %s255 = smul.addr %s254, 4
        %s256 = scalar_lea.vmem %s3, %s255
      $region44: #{encoder_forward.12} parent=39 // pred_fallthru
        _
    $region40: #{encoder_forward.12} parent=5 // pred_fallthru
      _
  $region6: #{encoder_forward.12} parent=0 // loop_footer
    %s13 = sadd.s32 1, %s9
  $region7: #{encoder_forward.12} parent=0 // loop_footer_branch
    %8 = sbr.rel target = $region3
  $region8: #{encoder_forward.12} parent=0 // loop_exit
    _

// kernel: encoder_forward.14
$region0: #{encoder_forward.14}
  #allocation0 [shape = 'u32[]', space=smem, size = 0x4, offset = 0x4, fixed_abs, tag = 'smem constant byte address 0x4 - core index']
  #allocation1 [shape = 'u32[72,128]{1,0:T(1,128)}', space=vmem, size = 0x9000, scoped, tag = 'internal scratch']
  %s0 = inlined_call_operand.vmem [shape: f32[2,16,64], index: 0, kind: input, shape index: {}]
  %s1 = inlined_call_operand.vmem [shape: f32[1,64], index: 1, kind: input, shape index: {}]
  %s2 = inlined_call_operand.vmem [shape: f32[1,64], index: 2, kind: input, shape index: {}]
  %s3 = inlined_call_operand.vmem [shape: bf16[2,16,64], index: 3, kind: output, shape index: {}]
  %s4 = sld [smem:[#allocation0]]
  $region45: #{encoder_forward.14} parent=0
    _
  %s6 = ssub.s32 1, %s4
  %s7 = scalar_select 0, %s6, %s4
  loop: start=0, step=1, limit=4
  $region2: #{encoder_forward.14} parent=0 // loop_pre_header
    _
  $region3: #{encoder_forward.14} parent=0 // loop_header
    %s9 = sphi 0, %s13
    %p10 = scmp.ge.s32.totalorder %s9, 4
    %s19 = sphi 0, %s21
    %s22 = sphi 0, %s19
    %s23 = sphi 0, %s22
    %s39 = sphi 0, %s23
    %s43 = sphi 0, %s43
    %s45 = sphi 0, %s43
    %s46 = sphi 0, %s45
    %s60 = sphi 0, %s46
    %s64 = sphi 0, %s64
    %s66 = sphi 0, %s64
    %s67 = sphi 0, %s66
    %s81 = sphi 0, %s67
    %s87 = sphi 0, %s89
    %s90 = sphi 0, %s87
    %s91 = sphi 0, %s90
    %s107 = sphi 0, %s91
  $region4: #{encoder_forward.14} parent=0 // loop_header_branch
    %12 = sbr.rel (%p10) target = $region8
  $region5: #{encoder_forward.14} parent=0 // loop_body
    %s14 = ssub.s32 %s9, 1
    %s15 = ssub.s32 %s9, 2
    %s16 = sadd.s32 %s9, 1
    %s17 = ssub.s32 %s9, %s16
    %p18 = scmp.eq.s32.totalorder %s17, 0
    %s20 = sadd.s32 %s19, 1
    %s21 = scalar_select %p18, %s19, %s20
    %p24 = pneg %p18
    %p25 = scmp.eq.s32.totalorder %s9, 1
    %p26 = por %p24, %p25
    %p27 = scmp.ne.s32.totalorder %s19, %s22
    %p28 = scmp.eq.s32.totalorder %s9, 0
    %p29 = por %p27, %p28
    %p30 = scmp.ne.s32.totalorder %s19, %s22
    %p31 = scmp.eq.s32.totalorder %s14, 1
    %p32 = por %p30, %p31
    %p33 = scmp.ne.s32.totalorder %s22, %s23
    %p34 = scmp.eq.s32.totalorder %s14, 0
    %p35 = por %p33, %p34
    %p36 = scmp.ne.s32.totalorder %s22, %s23
    %p37 = scmp.eq.s32.totalorder %s15, 1
    %p38 = por %p36, %p37
    %p40 = scmp.ne.s32.totalorder %s23, %s39
    %p41 = scmp.eq.s32.totalorder %s15, 0
    %p42 = por %p40, %p41
    %s44 = sadd.s32 %s43, 1
    %p47 = scmp.eq.s32.totalorder %s9, 1
    %p48 = scmp.ne.s32.totalorder %s43, %s45
    %p49 = scmp.eq.s32.totalorder %s9, 0
    %p50 = por %p48, %p49
    %p51 = scmp.ne.s32.totalorder %s43, %s45
    %p52 = scmp.eq.s32.totalorder %s14, 1
    %p53 = por %p51, %p52
    %p54 = scmp.ne.s32.totalorder %s45, %s46
    %p55 = scmp.eq.s32.totalorder %s14, 0
    %p56 = por %p54, %p55
    %p57 = scmp.ne.s32.totalorder %s45, %s46
    %p58 = scmp.eq.s32.totalorder %s15, 1
    %p59 = por %p57, %p58
    %p61 = scmp.ne.s32.totalorder %s46, %s60
    %p62 = scmp.eq.s32.totalorder %s15, 0
    %p63 = por %p61, %p62
    %s65 = sadd.s32 %s64, 1
    %p68 = scmp.eq.s32.totalorder %s9, 1
    %p69 = scmp.ne.s32.totalorder %s64, %s66
    %p70 = scmp.eq.s32.totalorder %s9, 0
    %p71 = por %p69, %p70
    %p72 = scmp.ne.s32.totalorder %s64, %s66
    %p73 = scmp.eq.s32.totalorder %s14, 1
    %p74 = por %p72, %p73
    %p75 = scmp.ne.s32.totalorder %s66, %s67
    %p76 = scmp.eq.s32.totalorder %s14, 0
    %p77 = por %p75, %p76
    %p78 = scmp.ne.s32.totalorder %s66, %s67
    %p79 = scmp.eq.s32.totalorder %s15, 1
    %p80 = por %p78, %p79
    %p82 = scmp.ne.s32.totalorder %s67, %s81
    %p83 = scmp.eq.s32.totalorder %s15, 0
    %p84 = por %p82, %p83
    %s85 = ssub.s32 %s9, %s16
    %p86 = scmp.eq.s32.totalorder %s85, 0
    %s88 = sadd.s32 %s87, 1
    %s89 = scalar_select %p86, %s87, %s88
    %p92 = pneg %p86
    %p93 = scmp.eq.s32.totalorder %s9, 1
    %p94 = por %p92, %p93
    %p95 = scmp.ne.s32.totalorder %s87, %s90
    %p96 = scmp.eq.s32.totalorder %s9, 0
    %p97 = por %p95, %p96
    %p98 = scmp.ne.s32.totalorder %s87, %s90
    %p99 = scmp.eq.s32.totalorder %s14, 1
    %p100 = por %p98, %p99
    %p101 = scmp.ne.s32.totalorder %s90, %s91
    %p102 = scmp.eq.s32.totalorder %s14, 0
    %p103 = por %p101, %p102
    %p104 = scmp.ne.s32.totalorder %s90, %s91
    %p105 = scmp.eq.s32.totalorder %s15, 1
    %p106 = por %p104, %p105
    %p108 = scmp.ne.s32.totalorder %s91, %s107
    %p109 = scmp.eq.s32.totalorder %s15, 0
    %p110 = por %p108, %p109
    %p111 = scmp.le.s32.totalorder 1, %s9
    %p112 = scmp.lt.s32.totalorder %s9, 3
    %p113 = pnand %p111, %p112
    %p114 = pneg %p113
    // Predicated region
    $region9: #{encoder_forward.14} parent=5 // pred_check
      _
    $region10: #{encoder_forward.14} parent=5 // pred_check_branch
      %116 = sbr.rel (%p113) target = $region12
    $region11: #{encoder_forward.14} parent=5 // pred_region
      %s117 = ssub.s32 %s9, 1
      // Predicated region
      $region13: #{encoder_forward.14} parent=11 // pred_check
        %p118 = pneg %p56
      $region14: #{encoder_forward.14} parent=11 // pred_check_branch
        %120 = sbr.rel (%p118) target = $region16
      $region15: #{encoder_forward.14} parent=11 // pred_region
        _
      $region16: #{encoder_forward.14} parent=11 // pred_fallthru
        _
      // Predicated region
      $region17: #{encoder_forward.14} parent=11 // pred_check
        %p121 = pneg %p77
      $region18: #{encoder_forward.14} parent=11 // pred_check_branch
        %123 = sbr.rel (%p121) target = $region20
      $region19: #{encoder_forward.14} parent=11 // pred_region
        _
      $region20: #{encoder_forward.14} parent=11 // pred_fallthru
        _
    $region12: #{encoder_forward.14} parent=5 // pred_fallthru
      _
    %p124 = scmp.lt.s32.totalorder %s9, 2
    // Predicated region
    $region21: #{encoder_forward.14} parent=5 // pred_check
      %p125 = pneg %p124
    $region22: #{encoder_forward.14} parent=5 // pred_check_branch
      %127 = sbr.rel (%p125) target = $region24
    $region23: #{encoder_forward.14} parent=5 // pred_region
      // Predicated region
      $region25: #{encoder_forward.14} parent=23 // pred_check
        %p128 = pneg %p29
      $region26: #{encoder_forward.14} parent=23 // pred_check_branch
        %130 = sbr.rel (%p128) target = $region28
      $region27: #{encoder_forward.14} parent=23 // pred_region
        %p131 = scmp.lt.s32.totalorder %s9, 1
        %s132 = scalar_select %p131, %s9, 1
        %s133 = smul.addr %s132, 2
        %s134 = smul.addr %s133, 8
        %s135 = scalar_lea.vmem %s0, %s134
      $region28: #{encoder_forward.14} parent=23 // pred_fallthru
        _
    $region24: #{encoder_forward.14} parent=5 // pred_fallthru
      _
    %p136 = scmp.le.s32.totalorder 1, %s9
    %p137 = scmp.lt.s32.totalorder %s9, 3
    %p138 = pnand %p136, %p137
    %p139 = pneg %p138
    // Predicated region
    $region29: #{encoder_forward.14} parent=5 // pred_check
      _
    $region30: #{encoder_forward.14} parent=5 // pred_check_branch
      %141 = sbr.rel (%p138) target = $region32
    $region31: #{encoder_forward.14} parent=5 // pred_region
      %s142 = ssub.s32 %s9, 1
      %p143 = scmp.lt.s32.totalorder %s14, 1
      %s144 = scalar_select %p143, %s14, 1
      %s145 = smul.addr %s144, 2
      %s146 = smul.addr %s145, 8
      %s147 = scalar_lea.vmem %s0, %s146
      %p148 = pneg %p35
      %p149 = pneg %p32
      %p150 = pneg %p56
      %p151 = pneg %p53
      %p152 = pneg %p77
      %p153 = pneg %p74
      %p154 = pneg %p103
      %p155 = pneg %p100
      %p156 = scmp.lt.s32.totalorder %s14, 1
      %s157 = scalar_select %p156, %s14, 1
      %s158 = smul.addr %s157, 2
      %s159 = smul.addr %s158, 4
      %s160 = scalar_lea.vmem %s3, %s159
      %p161 = scmp.lt.s32.totalorder %s14, 1
      %s162 = scalar_select %p161, %s14, 1
      %s163 = smul.addr %s162, 2
      %s164 = smul.addr %s163, 8
      %s165 = scalar_lea.vmem %s0, %s164
      %p166 = scmp.lt.s32.totalorder %s14, 1
      %s167 = scalar_select %p166, %s14, 1
      %s168 = smul.addr %s167, 2
      %s169 = smul.addr %s168, 4
      %s170 = scalar_lea.vmem %s3, %s169
      %v171 = vld [vmem:[%s165] sm:$0xff]
      %v172 = vld [vmem:[%s165 + $0x8] sm:$0xff]
      %v173 = vld [vmem:[%s1] sm:$0x1]
      %v175 = vperm.slane %v173, 0
      %v177 = vmul.f32 %v171, %v175
      %v178 = vmul.f32 %v172, %v175
      %v179 = vld [vmem:[%s2] sm:$0x1]
      %v181 = vperm.slane %v179, 0
      %v183 = vadd.f32 %v177, %v181
      %v184 = vadd.f32 %v178, %v181
      %v185 = vmul.f32 %v183, 0.2
      %v186 = vmul.f32 %v184, 0.2
      %v187 = vmax.f32 %v183, %v185
      %v188 = vmax.f32 %v184, %v186
      %v189 = vpack.c.bf16 %v187, %v187
      %v190 = vpack.c.bf16 %v188, %v188
      %vm191 = vcmask 519168
      %192 = vst.msk [vmem:[%s170] sm:$0xf] %vm191, %v189
      %193 = vst.msk [vmem:[%s170 + $0x4] sm:$0xf] %vm191, %v190
      %p194 = scmp.lt.s32.totalorder %s14, 1
      %s195 = scalar_select %p194, %s14, 1
      %s196 = smul.addr %s195, 2
      %s197 = smul.addr %s196, 4
      %s198 = scalar_lea.vmem %s3, %s197
      // Predicated region
      $region33: #{encoder_forward.14} parent=31 // pred_check
        %p199 = pneg %p100
      $region34: #{encoder_forward.14} parent=31 // pred_check_branch
        %201 = sbr.rel (%p199) target = $region36
      $region35: #{encoder_forward.14} parent=31 // pred_region
        _
      $region36: #{encoder_forward.14} parent=31 // pred_fallthru
        _
    $region32: #{encoder_forward.14} parent=5 // pred_fallthru
      _
    %p202 = scmp.le.s32.totalorder 2, %s9
    // Predicated region
    $region37: #{encoder_forward.14} parent=5 // pred_check
      %p203 = pneg %p202
    $region38: #{encoder_forward.14} parent=5 // pred_check_branch
      %205 = sbr.rel (%p203) target = $region40
    $region39: #{encoder_forward.14} parent=5 // pred_region
      %s206 = ssub.s32 %s9, 2
      // Predicated region
      $region41: #{encoder_forward.14} parent=39 // pred_check
        %p207 = pneg %p106
      $region42: #{encoder_forward.14} parent=39 // pred_check_branch
        %209 = sbr.rel (%p207) target = $region44
      $region43: #{encoder_forward.14} parent=39 // pred_region
        %p210 = scmp.lt.s32.totalorder %s15, 1
        %s211 = scalar_select %p210, %s15, 1
        %s212 = smul.addr %s211, 2
        %s213 = smul.addr %s212, 4
        %s214 = scalar_lea.vmem %s3, %s213
      $region44: #{encoder_forward.14} parent=39 // pred_fallthru
        _
    $region40: #{encoder_forward.14} parent=5 // pred_fallthru
      _
  $region6: #{encoder_forward.14} parent=0 // loop_footer
    %s13 = sadd.s32 1, %s9
  $region7: #{encoder_forward.14} parent=0 // loop_footer_branch
    %8 = sbr.rel target = $region3
  $region8: #{encoder_forward.14} parent=0 // loop_exit
    _

// kernel: encoder_forward.11
$region0: #{encoder_forward.11}
  #allocation0 [shape = 'u32[]', space=smem, size = 0x4, offset = 0x4, fixed_abs, tag = 'smem constant byte address 0x4 - core index']
  #allocation1 [shape = 'u32[72,128]{1,0:T(1,128)}', space=vmem, size = 0x9000, scoped, tag = 'internal scratch']
  #allocation2 [shape = 'bf16[64,512]{1,0:T(8,128)(2,1)}', space=vmem, size = 0x10000, scoped, tag = 'scratch operand']
  %s0 = inlined_call_operand.vmem [shape: bf16[2,9,9,64], index: 0, kind: input, shape index: {}]
  %s1 = inlined_call_operand.vmem [shape: bf16[512,32], index: 1, kind: input, shape index: {}]
  %s2 = inlined_call_operand.vmem [shape: f32[1,32], index: 2, kind: input, shape index: {}]
  %s3 = inlined_call_operand.vmem [shape: f32[2,64,32], index: 3, kind: output, shape index: {0}]
  %s4 = inlined_call_operand.vmem [shape: f32[2,1,2,32], index: 4, kind: output, shape index: {1}]
  %5 = xla_tuple %s3, %s4
  %s6 = sld [smem:[#allocation0]]
  $region53: #{encoder_forward.11} parent=0
    _
  %s8 = ssub.s32 1, %s6
  %s9 = scalar_select 0, %s8, %s6
  loop: start=0, step=1, limit=4
  $region2: #{encoder_forward.11} parent=0 // loop_pre_header
    _
  $region3: #{encoder_forward.11} parent=0 // loop_header
    %s11 = sphi 0, %s15
    %p12 = scmp.ge.s32.totalorder %s11, 4
    %s18 = sphi 0, %s30
    %s19 = sphi 0, %s26
    %s20 = sphi 0, %s18
    %s21 = sphi 0, %s19
    %s22 = sphi 0, %s20
    %s23 = sphi 0, %s21
    %s33 = sphi 0, %s35
    %s36 = sphi 0, %s33
    %s37 = sphi 0, %s36
    %s53 = sphi 0, %s37
    %s57 = sphi 0, %s57
    %s59 = sphi 0, %s57
    %s60 = sphi 0, %s59
    %s74 = sphi 0, %s60
    %s78 = sphi 0, %s78
    %s80 = sphi 0, %s78
    %s81 = sphi 0, %s80
    %s95 = sphi 0, %s81
    %s103 = sphi 0, %s105
    %s106 = sphi 0, %s103
    %s107 = sphi 0, %s106
    %s123 = sphi 0, %s107
    %s131 = sphi 0, %s133
    %s134 = sphi 0, %s131
    %s135 = sphi 0, %s134
    %s151 = sphi 0, %s135
  $region4: #{encoder_forward.11} parent=0 // loop_header_branch
    %14 = sbr.rel (%p12) target = $region8
  $region5: #{encoder_forward.11} parent=0 // loop_body
    %s16 = ssub.s32 %s11, 1
    %s17 = ssub.s32 %s11, 2
    %s24 = sadd.s32 1, %s19
    %p25 = scmp.ge.s32.totalorder %s24, 1
    %s26 = scalar_select %p25, 0, %s24
    %s27 = sadd.s32 1, %s18
    %s28 = scalar_select %p25, %s27, %s18
    %p29 = scmp.ge.s32.totalorder %s28, 2
    %s30 = scalar_select %p29, 0, %s28
    %s31 = ssub.s32 %s18, %s30
    %p32 = scmp.eq.s32.totalorder %s31, 0
    %s34 = sadd.s32 %s33, 1
    %s35 = scalar_select %p32, %s33, %s34
    %p38 = pneg %p32
    %p39 = scmp.eq.s32.totalorder %s11, 1
    %p40 = por %p38, %p39
    %p41 = scmp.ne.s32.totalorder %s33, %s36
    %p42 = scmp.eq.s32.totalorder %s11, 0
    %p43 = por %p41, %p42
    %p44 = scmp.ne.s32.totalorder %s33, %s36
    %p45 = scmp.eq.s32.totalorder %s16, 1
    %p46 = por %p44, %p45
    %p47 = scmp.ne.s32.totalorder %s36, %s37
    %p48 = scmp.eq.s32.totalorder %s16, 0
    %p49 = por %p47, %p48
    %p50 = scmp.ne.s32.totalorder %s36, %s37
    %p51 = scmp.eq.s32.totalorder %s17, 1
    %p52 = por %p50, %p51
    %p54 = scmp.ne.s32.totalorder %s37, %s53
    %p55 = scmp.eq.s32.totalorder %s17, 0
    %p56 = por %p54, %p55
    %s58 = sadd.s32 %s57, 1
    %p61 = scmp.eq.s32.totalorder %s11, 1
    %p62 = scmp.ne.s32.totalorder %s57, %s59
    %p63 = scmp.eq.s32.totalorder %s11, 0
    %p64 = por %p62, %p63
    %p65 = scmp.ne.s32.totalorder %s57, %s59
    %p66 = scmp.eq.s32.totalorder %s16, 1
    %p67 = por %p65, %p66
    %p68 = scmp.ne.s32.totalorder %s59, %s60
    %p69 = scmp.eq.s32.totalorder %s16, 0
    %p70 = por %p68, %p69
    %p71 = scmp.ne.s32.totalorder %s59, %s60
    %p72 = scmp.eq.s32.totalorder %s17, 1
    %p73 = por %p71, %p72
    %p75 = scmp.ne.s32.totalorder %s60, %s74
    %p76 = scmp.eq.s32.totalorder %s17, 0
    %p77 = por %p75, %p76
    %s79 = sadd.s32 %s78, 1
    %p82 = scmp.eq.s32.totalorder %s11, 1
    %p83 = scmp.ne.s32.totalorder %s78, %s80
    %p84 = scmp.eq.s32.totalorder %s11, 0
    %p85 = por %p83, %p84
    %p86 = scmp.ne.s32.totalorder %s78, %s80
    %p87 = scmp.eq.s32.totalorder %s16, 1
    %p88 = por %p86, %p87
    %p89 = scmp.ne.s32.totalorder %s80, %s81
    %p90 = scmp.eq.s32.totalorder %s16, 0
    %p91 = por %p89, %p90
    %p92 = scmp.ne.s32.totalorder %s80, %s81
    %p93 = scmp.eq.s32.totalorder %s17, 1
    %p94 = por %p92, %p93
    %p96 = scmp.ne.s32.totalorder %s81, %s95
    %p97 = scmp.eq.s32.totalorder %s17, 0
    %p98 = por %p96, %p97
    %s99 = ssub.s32 %s18, %s30
    %s100 = ssub.s32 %s19, %s26
    %s101 = sor.u32 %s99, %s100
    %p102 = scmp.eq.s32.totalorder %s101, 0
    %s104 = sadd.s32 %s103, 1
    %s105 = scalar_select %p102, %s103, %s104
    %p108 = pneg %p102
    %p109 = scmp.eq.s32.totalorder %s11, 1
    %p110 = por %p108, %p109
    %p111 = scmp.ne.s32.totalorder %s103, %s106
    %p112 = scmp.eq.s32.totalorder %s11, 0
    %p113 = por %p111, %p112
    %p114 = scmp.ne.s32.totalorder %s103, %s106
    %p115 = scmp.eq.s32.totalorder %s16, 1
    %p116 = por %p114, %p115
    %p117 = scmp.ne.s32.totalorder %s106, %s107
    %p118 = scmp.eq.s32.totalorder %s16, 0
    %p119 = por %p117, %p118
    %p120 = scmp.ne.s32.totalorder %s106, %s107
    %p121 = scmp.eq.s32.totalorder %s17, 1
    %p122 = por %p120, %p121
    %p124 = scmp.ne.s32.totalorder %s107, %s123
    %p125 = scmp.eq.s32.totalorder %s17, 0
    %p126 = por %p124, %p125
    %s127 = ssub.s32 %s18, %s30
    %s128 = ssub.s32 %s19, %s26
    %s129 = sor.u32 %s127, %s128
    %p130 = scmp.eq.s32.totalorder %s129, 0
    %s132 = sadd.s32 %s131, 1
    %s133 = scalar_select %p130, %s131, %s132
    %p136 = pneg %p130
    %p137 = scmp.eq.s32.totalorder %s11, 1
    %p138 = por %p136, %p137
    %p139 = scmp.ne.s32.totalorder %s131, %s134
    %p140 = scmp.eq.s32.totalorder %s11, 0
    %p141 = por %p139, %p140
    %p142 = scmp.ne.s32.totalorder %s131, %s134
    %p143 = scmp.eq.s32.totalorder %s16, 1
    %p144 = por %p142, %p143
    %p145 = scmp.ne.s32.totalorder %s134, %s135
    %p146 = scmp.eq.s32.totalorder %s16, 0
    %p147 = por %p145, %p146
    %p148 = scmp.ne.s32.totalorder %s134, %s135
    %p149 = scmp.eq.s32.totalorder %s17, 1
    %p150 = por %p148, %p149
    %p152 = scmp.ne.s32.totalorder %s135, %s151
    %p153 = scmp.eq.s32.totalorder %s17, 0
    %p154 = por %p152, %p153
    %p155 = scmp.le.s32.totalorder 1, %s11
    %p156 = scmp.lt.s32.totalorder %s11, 3
    %p157 = pnand %p155, %p156
    %p158 = pneg %p157
    // Predicated region
    $region9: #{encoder_forward.11} parent=5 // pred_check
      _
    $region10: #{encoder_forward.11} parent=5 // pred_check_branch
      %160 = sbr.rel (%p157) target = $region12
    $region11: #{encoder_forward.11} parent=5 // pred_region
      %s161 = ssub.s32 %s11, 1
      // Predicated region
      $region13: #{encoder_forward.11} parent=11 // pred_check
        %p162 = pneg %p70
      $region14: #{encoder_forward.11} parent=11 // pred_check_branch
        %164 = sbr.rel (%p162) target = $region16
      $region15: #{encoder_forward.11} parent=11 // pred_region
        _
      $region16: #{encoder_forward.11} parent=11 // pred_fallthru
        _
      // Predicated region
      $region17: #{encoder_forward.11} parent=11 // pred_check
        %p165 = pneg %p91
      $region18: #{encoder_forward.11} parent=11 // pred_check_branch
        %167 = sbr.rel (%p165) target = $region20
      $region19: #{encoder_forward.11} parent=11 // pred_region
        _
      $region20: #{encoder_forward.11} parent=11 // pred_fallthru
        _
    $region12: #{encoder_forward.11} parent=5 // pred_fallthru
      _
    %p168 = scmp.lt.s32.totalorder %s11, 2
    // Predicated region
    $region21: #{encoder_forward.11} parent=5 // pred_check
      %p169 = pneg %p168
    $region22: #{encoder_forward.11} parent=5 // pred_check_branch
      %171 = sbr.rel (%p169) target = $region24
    $region23: #{encoder_forward.11} parent=5 // pred_region
      // Predicated region
      $region25: #{encoder_forward.11} parent=23 // pred_check
        %p172 = pneg %p43
      $region26: #{encoder_forward.11} parent=23 // pred_check_branch
        %174 = sbr.rel (%p172) target = $region28
      $region27: #{encoder_forward.11} parent=23 // pred_region
        %p175 = scmp.lt.s32.totalorder %s18, 1
        %s176 = scalar_select %p175, %s18, 1
        %s177 = smul.addr %s176, 18
        %s178 = smul.addr %s177, 4
        %s179 = scalar_lea.vmem %s0, %s178
      $region28: #{encoder_forward.11} parent=23 // pred_fallthru
        _
    $region24: #{encoder_forward.11} parent=5 // pred_fallthru
      _
    %p180 = scmp.le.s32.totalorder 1, %s11
    %p181 = scmp.lt.s32.totalorder %s11, 3
    %p182 = pnand %p180, %p181
    %p183 = pneg %p182
    // Predicated region
    $region29: #{encoder_forward.11} parent=5 // pred_check
      _
    $region30: #{encoder_forward.11} parent=5 // pred_check_branch
      %185 = sbr.rel (%p182) target = $region32
    $region31: #{encoder_forward.11} parent=5 // pred_region
      %s186 = ssub.s32 %s11, 1
      %p187 = scmp.lt.s32.totalorder %s20, 1
      %s188 = scalar_select %p187, %s20, 1
      %s189 = smul.addr %s188, 18
      %s190 = smul.addr %s189, 4
      %s191 = scalar_lea.vmem %s0, %s190
      %p192 = pneg %p49
      %p193 = pneg %p46
      %p194 = pneg %p70
      %p195 = pneg %p67
      %p196 = pneg %p91
      %p197 = pneg %p88
      %p198 = pneg %p119
      %p199 = pneg %p116
      %s200 = smul.u32 8, %s21
      %p201 = scmp.lt.s32.totalorder %s20, 1
      %s202 = scalar_select %p201, %s20, 1
      %p203 = scmp.lt.s32.totalorder %s200, 7
      %s204 = scalar_select %p203, %s200, 7
      %s205 = smul.addr %s202, 8
      %s206 = sadd.s32 %s204, %s205
      %s207 = smul.addr %s206, 8
      %s208 = scalar_lea.vmem %s3, %s207
      %p209 = pneg %p147
      %p210 = pneg %p144
      %p211 = scmp.lt.s32.totalorder %s20, 1
      %s212 = scalar_select %p211, %s20, 1
      %p213 = scmp.lt.s32.totalorder %s21, 0
      %s214 = scalar_select %p213, %s21, 0
      %s215 = sadd.s32 %s214, %s212
      %s216 = smul.addr %s215, 2
      %s217 = scalar_lea.vmem %s4, %s216
      %p218 = scmp.lt.s32.totalorder %s20, 1
      %s219 = scalar_select %p218, %s20, 1
      %s220 = smul.addr %s219, 18
      %s221 = smul.addr %s220, 4
      %s222 = scalar_lea.vmem %s0, %s221
      %s223 = smul.u32 8, %s21
      %p224 = scmp.lt.s32.totalorder %s20, 1
      %s225 = scalar_select %p224, %s20, 1
      %p226 = scmp.lt.s32.totalorder %s223, 7
      %s227 = scalar_select %p226, %s223, 7
      %s228 = smul.addr %s225, 8
      %s229 = sadd.s32 %s227, %s228
      %s230 = smul.addr %s229, 8
      %s231 = scalar_lea.vmem %s3, %s230
      %s232 = smul.u32 8, %s21
      %p233 = scmp.lt.s32.totalorder %s20, 1
      %s234 = scalar_select %p233, %s20, 1
      %p235 = scmp.lt.s32.totalorder %s21, 0
      %s236 = scalar_select %p235, %s21, 0
      %s237 = sadd.s32 %s236, %s234
      %s238 = smul.addr %s237, 2
      %s239 = scalar_lea.vmem %s4, %s238
      %s241 = smul.u32 %s21, 8
      %242 = vst [vmem:[#allocation2] sm:$0xff] 0
      %243 = vst [vmem:[#allocation2 + $0x8] sm:$0xff] 0
      %244 = vst [vmem:[#allocation2 + $0x10] sm:$0xff] 0
      %245 = vst [vmem:[#allocation2 + $0x18] sm:$0xff] 0
      %246 = vst [vmem:[#allocation2 + $0x20] sm:$0xff] 0
      %247 = vst [vmem:[#allocation2 + $0x28] sm:$0xff] 0
      %248 = vst [vmem:[#allocation2 + $0x30] sm:$0xff] 0
      %249 = vst [vmem:[#allocation2 + $0x38] sm:$0xff] 0
      %250 = vst [vmem:[#allocation2 + $0x40] sm:$0xff] 0
      %251 = vst [vmem:[#allocation2 + $0x48] sm:$0xff] 0
      %252 = vst [vmem:[#allocation2 + $0x50] sm:$0xff] 0
      %253 = vst [vmem:[#allocation2 + $0x58] sm:$0xff] 0
      %254 = vst [vmem:[#allocation2 + $0x60] sm:$0xff] 0
      %255 = vst [vmem:[#allocation2 + $0x68] sm:$0xff] 0
      %256 = vst [vmem:[#allocation2 + $0x70] sm:$0xff] 0
      %257 = vst [vmem:[#allocation2 + $0x78] sm:$0xff] 0
      %s258 = smul.u32 %s241, 2
      %s259 = smul.addr %s258, 4
      %s260 = scalar_lea.vmem %s222, %s259
      %v261 = vld [vmem:[%s260] sm:$0xf]
      %vm262 = vcmask 519168
      %263 = vst.msk [vmem:[#allocation2] sm:$0xf] %vm262, %v261
      %v264 = vld [vmem:[%s260] sm:$0xf]
      %v265 = vld [vmem:[%s260 + $0x4] sm:$0x1]
      %vm266 = vsmask.f32 3328
      %vm267 = vsmask.f32 7440
      %vm268 = vmor %vm266, %vm267
      %v270 = vshrl.u32 %v264, 16
      %v272 = vrot.slane %v270, 4
      %v273 = vshll.u32 %v264, 16
      %v275 = vrot.slane %v273, 5
      %v276 = vor.u32 %v272, %v275
      %v277 = vrot.slane %v276, 4
      %v279 = vshll.u32 %v265, 16
      %v281 = vrot.slane %v279, 5
      %v282 = vsel %vm268, %v277, %v281
      %284 = vst.msk [vmem:[#allocation2 + $0x4] sm:$0xf] %vm262, %v282
      %s285 = sadd.s32 %s241, 1
      %s286 = smul.u32 %s285, 2
      %s287 = smul.addr %s286, 4
      %s288 = scalar_lea.vmem %s222, %s287
      %v289 = vld [vmem:[%s288] sm:$0xf]
      %290 = vst.msk [vmem:[#allocation2 + $0x8] sm:$0xf] %vm262, %v289
      %v291 = vld [vmem:[%s288] sm:$0xf]
      %v292 = vld [vmem:[%s288 + $0x4] sm:$0x1]
      %v294 = vshrl.u32 %v291, 16
      %v296 = vrot.slane %v294, 4
      %v297 = vshll.u32 %v291, 16
      %v299 = vrot.slane %v297, 5
      %v300 = vor.u32 %v296, %v299
      %v301 = vrot.slane %v300, 4
      %v303 = vshll.u32 %v292, 16
      %v305 = vrot.slane %v303, 5
      %v306 = vsel %vm268, %v301, %v305
      %308 = vst.msk [vmem:[#allocation2 + $0xc] sm:$0xf] %vm262, %v306
      %v309 = vld [vmem:[%s288] sm:$0xf]
      %310 = vst.msk [vmem:[#allocation2 + $0x10] sm:$0xf] %vm262, %v309
      %v311 = vld [vmem:[%s288] sm:$0xf]
      %v312 = vld [vmem:[%s288 + $0x4] sm:$0x1]
      %v314 = vshrl.u32 %v311, 16
      %v316 = vrot.slane %v314, 4
      %v317 = vshll.u32 %v311, 16
      %v319 = vrot.slane %v317, 5
      %v320 = vor.u32 %v316, %v319
      %v321 = vrot.slane %v320, 4
      %v323 = vshll.u32 %v312, 16
      %v325 = vrot.slane %v323, 5
      %v326 = vsel %vm268, %v321, %v325
      %328 = vst.msk [vmem:[#allocation2 + $0x14] sm:$0xf] %vm262, %v326
      %s329 = sadd.s32 %s241, 2
      %s330 = smul.u32 %s329, 2
      %s331 = smul.addr %s330, 4
      %s332 = scalar_lea.vmem %s222, %s331
      %v333 = vld [vmem:[%s332] sm:$0xf]
      %334 = vst.msk [vmem:[#allocation2 + $0x18] sm:$0xf] %vm262, %v333
      %v335 = vld [vmem:[%s332] sm:$0xf]
      %v336 = vld [vmem:[%s332 + $0x4] sm:$0x1]
      %v338 = vshrl.u32 %v335, 16
      %v340 = vrot.slane %v338, 4
      %v341 = vshll.u32 %v335, 16
      %v343 = vrot.slane %v341, 5
      %v344 = vor.u32 %v340, %v343
      %v345 = vrot.slane %v344, 4
      %v347 = vshll.u32 %v336, 16
      %v349 = vrot.slane %v347, 5
      %v350 = vsel %vm268, %v345, %v349
      %352 = vst.msk [vmem:[#allocation2 + $0x1c] sm:$0xf] %vm262, %v350
      %v353 = vld [vmem:[%s332] sm:$0xf]
      %354 = vst.msk [vmem:[#allocation2 + $0x20] sm:$0xf] %vm262, %v353
      %v355 = vld [vmem:[%s332] sm:$0xf]
      %v356 = vld [vmem:[%s332 + $0x4] sm:$0x1]
      %v358 = vshrl.u32 %v355, 16
      %v360 = vrot.slane %v358, 4
      %v361 = vshll.u32 %v355, 16
      %v363 = vrot.slane %v361, 5
      %v364 = vor.u32 %v360, %v363
      %v365 = vrot.slane %v364, 4
      %v367 = vshll.u32 %v356, 16
      %v369 = vrot.slane %v367, 5
      %v370 = vsel %vm268, %v365, %v369
      %372 = vst.msk [vmem:[#allocation2 + $0x24] sm:$0xf] %vm262, %v370
      %s373 = sadd.s32 %s241, 3
      %s374 = smul.u32 %s373, 2
      %s375 = smul.addr %s374, 4
      %s376 = scalar_lea.vmem %s222, %s375
      %v377 = vld [vmem:[%s376] sm:$0xf]
      %378 = vst.msk [vmem:[#allocation2 + $0x28] sm:$0xf] %vm262, %v377
      %v379 = vld [vmem:[%s376] sm:$0xf]
      %v380 = vld [vmem:[%s376 + $0x4] sm:$0x1]
      %v382 = vshrl.u32 %v379, 16
      %v384 = vrot.slane %v382, 4
      %v385 = vshll.u32 %v379, 16
      %v387 = vrot.slane %v385, 5
      %v388 = vor.u32 %v384, %v387
      %v389 = vrot.slane %v388, 4
      %v391 = vshll.u32 %v380, 16
      %v393 = vrot.slane %v391, 5
      %v394 = vsel %vm268, %v389, %v393
      %396 = vst.msk [vmem:[#allocation2 + $0x2c] sm:$0xf] %vm262, %v394
      %v397 = vld [vmem:[%s376] sm:$0xf]
      %398 = vst.msk [vmem:[#allocation2 + $0x30] sm:$0xf] %vm262, %v397
      %v399 = vld [vmem:[%s376] sm:$0xf]
      %v400 = vld [vmem:[%s376 + $0x4] sm:$0x1]
      %v402 = vshrl.u32 %v399, 16
      %v404 = vrot.slane %v402, 4
      %v405 = vshll.u32 %v399, 16
      %v407 = vrot.slane %v405, 5
      %v408 = vor.u32 %v404, %v407
      %v409 = vrot.slane %v408, 4
      %v411 = vshll.u32 %v400, 16
      %v413 = vrot.slane %v411, 5
      %v414 = vsel %vm268, %v409, %v413
      %416 = vst.msk [vmem:[#allocation2 + $0x34] sm:$0xf] %vm262, %v414
      %s417 = sadd.s32 %s241, 4
      %s418 = smul.u32 %s417, 2
      %s419 = smul.addr %s418, 4
      %s420 = scalar_lea.vmem %s222, %s419
      %v421 = vld [vmem:[%s420] sm:$0xf]
      %422 = vst.msk [vmem:[#allocation2 + $0x38] sm:$0xf] %vm262, %v421
      %v423 = vld [vmem:[%s420] sm:$0xf]
      %v424 = vld [vmem:[%s420 + $0x4] sm:$0x1]
      %v426 = vshrl.u32 %v423, 16
      %v428 = vrot.slane %v426, 4
      %v429 = vshll.u32 %v423, 16
      %v431 = vrot.slane %v429, 5
      %v432 = vor.u32 %v428, %v431
      %v433 = vrot.slane %v432, 4
      %v435 = vshll.u32 %v424, 16
      %v437 = vrot.slane %v435, 5
      %v438 = vsel %vm268, %v433, %v437
      %440 = vst.msk [vmem:[#allocation2 + $0x3c] sm:$0xf] %vm262, %v438
      %v441 = vld [vmem:[%s420] sm:$0xf]
      %442 = vst.msk [vmem:[#allocation2 + $0x40] sm:$0xf] %vm262, %v441
      %v443 = vld [vmem:[%s420] sm:$0xf]
      %v444 = vld [vmem:[%s420 + $0x4] sm:$0x1]
      %v446 = vshrl.u32 %v443, 16
      %v448 = vrot.slane %v446, 4
      %v449 = vshll.u32 %v443, 16
      %v451 = vrot.slane %v449, 5
      %v452 = vor.u32 %v448, %v451
      %v453 = vrot.slane %v452, 4
      %v455 = vshll.u32 %v444, 16
      %v457 = vrot.slane %v455, 5
      %v458 = vsel %vm268, %v453, %v457
      %460 = vst.msk [vmem:[#allocation2 + $0x44] sm:$0xf] %vm262, %v458
      %s461 = sadd.s32 %s241, 5
      %s462 = smul.u32 %s461, 2
      %s463 = smul.addr %s462, 4
      %s464 = scalar_lea.vmem %s222, %s463
      %v465 = vld [vmem:[%s464] sm:$0xf]
      %466 = vst.msk [vmem:[#allocation2 + $0x48] sm:$0xf] %vm262, %v465
      %v467 = vld [vmem:[%s464] sm:$0xf]
      %v468 = vld [vmem:[%s464 + $0x4] sm:$0x1]
      %v470 = vshrl.u32 %v467, 16
      %v472 = vrot.slane %v470, 4
      %v473 = vshll.u32 %v467, 16
      %v475 = vrot.slane %v473, 5
      %v476 = vor.u32 %v472, %v475
      %v477 = vrot.slane %v476, 4
      %v479 = vshll.u32 %v468, 16
      %v481 = vrot.slane %v479, 5
      %v482 = vsel %vm268, %v477, %v481
      %484 = vst.msk [vmem:[#allocation2 + $0x4c] sm:$0xf] %vm262, %v482
      %v485 = vld [vmem:[%s464] sm:$0xf]
      %486 = vst.msk [vmem:[#allocation2 + $0x50] sm:$0xf] %vm262, %v485
      %v487 = vld [vmem:[%s464] sm:$0xf]
      %v488 = vld [vmem:[%s464 + $0x4] sm:$0x1]
      %v490 = vshrl.u32 %v487, 16
      %v492 = vrot.slane %v490, 4
      %v493 = vshll.u32 %v487, 16
      %v495 = vrot.slane %v493, 5
      %v496 = vor.u32 %v492, %v495
      %v497 = vrot.slane %v496, 4
      %v499 = vshll.u32 %v488, 16
      %v501 = vrot.slane %v499, 5
      %v502 = vsel %vm268, %v497, %v501
      %504 = vst.msk [vmem:[#allocation2 + $0x54] sm:$0xf] %vm262, %v502
      %s505 = sadd.s32 %s241, 6
      %s506 = smul.u32 %s505, 2
      %s507 = smul.addr %s506, 4
      %s508 = scalar_lea.vmem %s222, %s507
      %v509 = vld [vmem:[%s508] sm:$0xf]
      %510 = vst.msk [vmem:[#allocation2 + $0x58] sm:$0xf] %vm262, %v509
      %v511 = vld [vmem:[%s508] sm:$0xf]
      %v512 = vld [vmem:[%s508 + $0x4] sm:$0x1]
      %v514 = vshrl.u32 %v511, 16
      %v516 = vrot.slane %v514, 4
      %v517 = vshll.u32 %v511, 16
      %v519 = vrot.slane %v517, 5
      %v520 = vor.u32 %v516, %v519
      %v521 = vrot.slane %v520, 4
      %v523 = vshll.u32 %v512, 16
      %v525 = vrot.slane %v523, 5
      %v526 = vsel %vm268, %v521, %v525
      %528 = vst.msk [vmem:[#allocation2 + $0x5c] sm:$0xf] %vm262, %v526
      %v529 = vld [vmem:[%s508] sm:$0xf]
      %530 = vst.msk [vmem:[#allocation2 + $0x60] sm:$0xf] %vm262, %v529
      %v531 = vld [vmem:[%s508] sm:$0xf]
      %v532 = vld [vmem:[%s508 + $0x4] sm:$0x1]
      %v534 = vshrl.u32 %v531, 16
      %v536 = vrot.slane %v534, 4
      %v537 = vshll.u32 %v531, 16
      %v539 = vrot.slane %v537, 5
      %v540 = vor.u32 %v536, %v539
      %v541 = vrot.slane %v540, 4
      %v543 = vshll.u32 %v532, 16
      %v545 = vrot.slane %v543, 5
      %v546 = vsel %vm268, %v541, %v545
      %548 = vst.msk [vmem:[#allocation2 + $0x64] sm:$0xf] %vm262, %v546
      %s549 = sadd.s32 %s241, 7
      %s550 = smul.u32 %s549, 2
      %s551 = smul.addr %s550, 4
      %s552 = scalar_lea.vmem %s222, %s551
      %v553 = vld [vmem:[%s552] sm:$0xf]
      %554 = vst.msk [vmem:[#allocation2 + $0x68] sm:$0xf] %vm262, %v553
      %v555 = vld [vmem:[%s552] sm:$0xf]
      %v556 = vld [vmem:[%s552 + $0x4] sm:$0x1]
      %v558 = vshrl.u32 %v555, 16
      %v560 = vrot.slane %v558, 4
      %v561 = vshll.u32 %v555, 16
      %v563 = vrot.slane %v561, 5
      %v564 = vor.u32 %v560, %v563
      %v565 = vrot.slane %v564, 4
      %v567 = vshll.u32 %v556, 16
      %v569 = vrot.slane %v567, 5
      %v570 = vsel %vm268, %v565, %v569
      %572 = vst.msk [vmem:[#allocation2 + $0x6c] sm:$0xf] %vm262, %v570
      %v573 = vld [vmem:[%s552] sm:$0xf]
      %574 = vst.msk [vmem:[#allocation2 + $0x70] sm:$0xf] %vm262, %v573
      %v575 = vld [vmem:[%s552] sm:$0xf]
      %v576 = vld [vmem:[%s552 + $0x4] sm:$0x1]
      %v578 = vshrl.u32 %v575, 16
      %v580 = vrot.slane %v578, 4
      %v581 = vshll.u32 %v575, 16
      %v583 = vrot.slane %v581, 5
      %v584 = vor.u32 %v580, %v583
      %v585 = vrot.slane %v584, 4
      %v587 = vshll.u32 %v576, 16
      %v589 = vrot.slane %v587, 5
      %v590 = vsel %vm268, %v585, %v589
      %592 = vst.msk [vmem:[#allocation2 + $0x74] sm:$0xf] %vm262, %v590
      %s593 = sadd.s32 %s241, 8
      %s594 = smul.u32 %s593, 2
      %s595 = smul.addr %s594, 4
      %s596 = scalar_lea.vmem %s222, %s595
      %v597 = vld [vmem:[%s596] sm:$0xf]
      %598 = vst.msk [vmem:[#allocation2 + $0x78] sm:$0xf] %vm262, %v597
      %v599 = vld [vmem:[%s596] sm:$0xf]
      %v600 = vld [vmem:[%s596 + $0x4] sm:$0x1]
      %v602 = vshrl.u32 %v599, 16
      %v604 = vrot.slane %v602, 4
      %v605 = vshll.u32 %v599, 16
      %v607 = vrot.slane %v605, 5
      %v608 = vor.u32 %v604, %v607
      %v609 = vrot.slane %v608, 4
      %v611 = vshll.u32 %v600, 16
      %v613 = vrot.slane %v611, 5
      %v614 = vsel %vm268, %v609, %v613
      %616 = vst.msk [vmem:[#allocation2 + $0x7c] sm:$0xf] %vm262, %v614
      %v617 = vld [vmem:[#allocation2] sm:$0xff]
      %v618 = vld [vmem:[#allocation2 + $0x8] sm:$0xff]
      %v619 = vld [vmem:[#allocation2 + $0x10] sm:$0xff]
      %v620 = vld [vmem:[#allocation2 + $0x18] sm:$0xff]
      %v621 = vld [vmem:[#allocation2 + $0x20] sm:$0xff]
      %v622 = vld [vmem:[#allocation2 + $0x28] sm:$0xff]
      %v623 = vld [vmem:[#allocation2 + $0x30] sm:$0xff]
      %v624 = vld [vmem:[#allocation2 + $0x38] sm:$0xff]
      %v625 = vld [vmem:[#allocation2 + $0x40] sm:$0xff]
      %v626 = vld [vmem:[#allocation2 + $0x48] sm:$0xff]
      %v627 = vld [vmem:[#allocation2 + $0x50] sm:$0xff]
      %v628 = vld [vmem:[#allocation2 + $0x58] sm:$0xff]
      %v629 = vld [vmem:[#allocation2 + $0x60] sm:$0xff]
      %v630 = vld [vmem:[#allocation2 + $0x68] sm:$0xff]
      %v631 = vld [vmem:[#allocation2 + $0x70] sm:$0xff]
      %v632 = vld [vmem:[#allocation2 + $0x78] sm:$0xff]
      %v633 = vld [vmem:[%s1] sm:$0xf]
      %v634 = vld [vmem:[%s1 + $0x4] sm:$0xf]
      %v635 = vld [vmem:[%s1 + $0x8] sm:$0xf]
      %v636 = vld [vmem:[%s1 + $0xc] sm:$0xf]
      %v637 = vld [vmem:[%s1 + $0x10] sm:$0xf]
      %v638 = vld [vmem:[%s1 + $0x14] sm:$0xf]
      %v639 = vld [vmem:[%s1 + $0x18] sm:$0xf]
      %v640 = vld [vmem:[%s1 + $0x1c] sm:$0xf]
      %v641 = vld [vmem:[%s1 + $0x20] sm:$0xf]
      %v642 = vld [vmem:[%s1 + $0x24] sm:$0xf]
      %v643 = vld [vmem:[%s1 + $0x28] sm:$0xf]
      %v644 = vld [vmem:[%s1 + $0x2c] sm:$0xf]
      %v645 = vld [vmem:[%s1 + $0x30] sm:$0xf]
      %v646 = vld [vmem:[%s1 + $0x34] sm:$0xf]
      %v647 = vld [vmem:[%s1 + $0x38] sm:$0xf]
      %v648 = vld [vmem:[%s1 + $0x3c] sm:$0xf]
      %v649 = vld [vmem:[%s1 + $0x40] sm:$0xf]
      %v650 = vld [vmem:[%s1 + $0x44] sm:$0xf]
      %v651 = vld [vmem:[%s1 + $0x48] sm:$0xf]
      %v652 = vld [vmem:[%s1 + $0x4c] sm:$0xf]
      %v653 = vld [vmem:[%s1 + $0x50] sm:$0xf]
      %v654 = vld [vmem:[%s1 + $0x54] sm:$0xf]
      %v655 = vld [vmem:[%s1 + $0x58] sm:$0xf]
      %v656 = vld [vmem:[%s1 + $0x5c] sm:$0xf]
      %v657 = vld [vmem:[%s1 + $0x60] sm:$0xf]
      %v658 = vld [vmem:[%s1 + $0x64] sm:$0xf]
      %v659 = vld [vmem:[%s1 + $0x68] sm:$0xf]
      %v660 = vld [vmem:[%s1 + $0x6c] sm:$0xf]
      %v661 = vld [vmem:[%s1 + $0x70] sm:$0xf]
      %v662 = vld [vmem:[%s1 + $0x74] sm:$0xf]
      %v663 = vld [vmem:[%s1 + $0x78] sm:$0xf]
      %v664 = vld [vmem:[%s1 + $0x7c] sm:$0xf]
      %v665 = vld [vmem:[%s1 + $0x80] sm:$0xf]
      %v666 = vld [vmem:[%s1 + $0x84] sm:$0xf]
      %v667 = vld [vmem:[%s1 + $0x88] sm:$0xf]
      %v668 = vld [vmem:[%s1 + $0x8c] sm:$0xf]
      %v669 = vld [vmem:[%s1 + $0x90] sm:$0xf]
      %v670 = vld [vmem:[%s1 + $0x94] sm:$0xf]
      %v671 = vld [vmem:[%s1 + $0x98] sm:$0xf]
      %v672 = vld [vmem:[%s1 + $0x9c] sm:$0xf]
      %v673 = vld [vmem:[%s1 + $0xa0] sm:$0xf]
      %v674 = vld [vmem:[%s1 + $0xa4] sm:$0xf]
      %v675 = vld [vmem:[%s1 + $0xa8] sm:$0xf]
      %v676 = vld [vmem:[%s1 + $0xac] sm:$0xf]
      %v677 = vld [vmem:[%s1 + $0xb0] sm:$0xf]
      %v678 = vld [vmem:[%s1 + $0xb4] sm:$0xf]
      %v679 = vld [vmem:[%s1 + $0xb8] sm:$0xf]
      %v680 = vld [vmem:[%s1 + $0xbc] sm:$0xf]
      %v681 = vld [vmem:[%s1 + $0xc0] sm:$0xf]
      %v682 = vld [vmem:[%s1 + $0xc4] sm:$0xf]
      %v683 = vld [vmem:[%s1 + $0xc8] sm:$0xf]
      %v684 = vld [vmem:[%s1 + $0xcc] sm:$0xf]
      %v685 = vld [vmem:[%s1 + $0xd0] sm:$0xf]
      %v686 = vld [vmem:[%s1 + $0xd4] sm:$0xf]
      %v687 = vld [vmem:[%s1 + $0xd8] sm:$0xf]
      %v688 = vld [vmem:[%s1 + $0xdc] sm:$0xf]
      %v689 = vld [vmem:[%s1 + $0xe0] sm:$0xf]
      %v690 = vld [vmem:[%s1 + $0xe4] sm:$0xf]
      %v691 = vld [vmem:[%s1 + $0xe8] sm:$0xf]
      %v692 = vld [vmem:[%s1 + $0xec] sm:$0xf]
      %v693 = vld [vmem:[%s1 + $0xf0] sm:$0xf]
      %v694 = vld [vmem:[%s1 + $0xf4] sm:$0xf]
      %v695 = vld [vmem:[%s1 + $0xf8] sm:$0xf]
      %v696 = vld [vmem:[%s1 + $0xfc] sm:$0xf]
      %v697 = vld [vmem:[%s2] sm:$0x1]
      %v699 = vperm.slane %v697, 0
      %v717 = vunpack.c.l.b16 %v617
      %v718 = vunpack.c.h.b16 %v617
      %v719 = vunpack.c.l.b16 %v618
      %v720 = vunpack.c.h.b16 %v618
      %v721 = vunpack.c.l.b16 %v619
      %v722 = vunpack.c.h.b16 %v619
      %v723 = vunpack.c.l.b16 %v620
      %v724 = vunpack.c.h.b16 %v620
      %v725 = vunpack.c.l.b16 %v621
      %v726 = vunpack.c.h.b16 %v621
      %v727 = vunpack.c.l.b16 %v622
      %v728 = vunpack.c.h.b16 %v622
      %v729 = vunpack.c.l.b16 %v623
      %v730 = vunpack.c.h.b16 %v623
      %v731 = vunpack.c.l.b16 %v624
      %v732 = vunpack.c.h.b16 %v624
      %v733 = vunpack.c.l.b16 %v625
      %v734 = vunpack.c.h.b16 %v625
      %v735 = vunpack.c.l.b16 %v626
      %v736 = vunpack.c.h.b16 %v626
      %v737 = vunpack.c.l.b16 %v627
      %v738 = vunpack.c.h.b16 %v627
      %v739 = vunpack.c.l.b16 %v628
      %v740 = vunpack.c.h.b16 %v628
      %v741 = vunpack.c.l.b16 %v629
      %v742 = vunpack.c.h.b16 %v629
      %v743 = vunpack.c.l.b16 %v630
      %v744 = vunpack.c.h.b16 %v630
      %v745 = vunpack.c.l.b16 %v631
      %v746 = vunpack.c.h.b16 %v631
      %v747 = vunpack.c.l.b16 %v632
      %v748 = vunpack.c.h.b16 %v632
      %v749 = vpack.c.b16 %v721, %v717
      %v750 = vpack.c.b16 %v722, %v718
      %v751 = vpack.c.b16 %v723, %v719
      %v752 = vpack.c.b16 %v724, %v720
      %v753 = vpack.c.b16 %v729, %v725
      %v754 = vpack.c.b16 %v730, %v726
      %v755 = vpack.c.b16 %v731, %v727
      %v756 = vpack.c.b16 %v732, %v728
      %v757 = vpack.c.b16 %v737, %v733
      %v758 = vpack.c.b16 %v738, %v734
      %v759 = vpack.c.b16 %v739, %v735
      %v760 = vpack.c.b16 %v740, %v736
      %v761 = vpack.c.b16 %v745, %v741
      %v762 = vpack.c.b16 %v746, %v742
      %v763 = vpack.c.b16 %v747, %v743
      %v764 = vpack.c.b16 %v748, %v744
      %v845 = vunpack.c.l.b16 %v633
      %v846 = vunpack.c.l.b16 %v634
      %v847 = vunpack.c.l.b16 %v635
      %v848 = vunpack.c.l.b16 %v636
      %v849 = vunpack.c.l.b16 %v637
      %v850 = vunpack.c.l.b16 %v638
      %v851 = vunpack.c.l.b16 %v639
      %v852 = vunpack.c.l.b16 %v640
      %v853 = vunpack.c.l.b16 %v641
      %v854 = vunpack.c.l.b16 %v642
      %v855 = vunpack.c.l.b16 %v643
      %v856 = vunpack.c.l.b16 %v644
      %v857 = vunpack.c.l.b16 %v645
      %v858 = vunpack.c.l.b16 %v646
      %v859 = vunpack.c.l.b16 %v647
      %v860 = vunpack.c.l.b16 %v648
      %v861 = vunpack.c.l.b16 %v649
      %v862 = vunpack.c.l.b16 %v650
      %v863 = vunpack.c.l.b16 %v651
      %v864 = vunpack.c.l.b16 %v652
      %v865 = vunpack.c.l.b16 %v653
      %v866 = vunpack.c.l.b16 %v654
      %v867 = vunpack.c.l.b16 %v655
      %v868 = vunpack.c.l.b16 %v656
      %v869 = vunpack.c.l.b16 %v657
      %v870 = vunpack.c.l.b16 %v658
      %v871 = vunpack.c.l.b16 %v659
      %v872 = vunpack.c.l.b16 %v660
      %v873 = vunpack.c.l.b16 %v661
      %v874 = vunpack.c.l.b16 %v662
      %v875 = vunpack.c.l.b16 %v663
      %v876 = vunpack.c.l.b16 %v664
      %v877 = vunpack.c.l.b16 %v665
      %v878 = vunpack.c.l.b16 %v666
      %v879 = vunpack.c.l.b16 %v667
      %v880 = vunpack.c.l.b16 %v668
      %v881 = vunpack.c.l.b16 %v669
      %v882 = vunpack.c.l.b16 %v670
      %v883 = vunpack.c.l.b16 %v671
      %v884 = vunpack.c.l.b16 %v672
      %v885 = vunpack.c.l.b16 %v673
      %v886 = vunpack.c.l.b16 %v674
      %v887 = vunpack.c.l.b16 %v675
      %v888 = vunpack.c.l.b16 %v676
      %v889 = vunpack.c.l.b16 %v677
      %v890 = vunpack.c.l.b16 %v678
      %v891 = vunpack.c.l.b16 %v679
      %v892 = vunpack.c.l.b16 %v680
      %v893 = vunpack.c.l.b16 %v681
      %v894 = vunpack.c.l.b16 %v682
      %v895 = vunpack.c.l.b16 %v683
      %v896 = vunpack.c.l.b16 %v684
      %v897 = vunpack.c.l.b16 %v685
      %v898 = vunpack.c.l.b16 %v686
      %v899 = vunpack.c.l.b16 %v687
      %v900 = vunpack.c.l.b16 %v688
      %v901 = vunpack.c.l.b16 %v689
      %v902 = vunpack.c.l.b16 %v690
      %v903 = vunpack.c.l.b16 %v691
      %v904 = vunpack.c.l.b16 %v692
      %v905 = vunpack.c.l.b16 %v693
      %v906 = vunpack.c.l.b16 %v694
      %v907 = vunpack.c.l.b16 %v695
      %v908 = vunpack.c.l.b16 %v696
      %v909 = vpack.c.b16 %v846, %v845
      %v910 = vpack.c.b16 %v848, %v847
      %v911 = vpack.c.b16 %v850, %v849
      %v912 = vpack.c.b16 %v852, %v851
      %v913 = vpack.c.b16 %v854, %v853
      %v914 = vpack.c.b16 %v856, %v855
      %v915 = vpack.c.b16 %v858, %v857
      %v916 = vpack.c.b16 %v860, %v859
      %v917 = vpack.c.b16 %v862, %v861
      %v918 = vpack.c.b16 %v864, %v863
      %v919 = vpack.c.b16 %v866, %v865
      %v920 = vpack.c.b16 %v868, %v867
      %v921 = vpack.c.b16 %v870, %v869
      %v922 = vpack.c.b16 %v872, %v871
      %v923 = vpack.c.b16 %v874, %v873
      %v924 = vpack.c.b16 %v876, %v875
      %v925 = vpack.c.b16 %v878, %v877
      %v926 = vpack.c.b16 %v880, %v879
      %v927 = vpack.c.b16 %v882, %v881
      %v928 = vpack.c.b16 %v884, %v883
      %v929 = vpack.c.b16 %v886, %v885
      %v930 = vpack.c.b16 %v888, %v887
      %v931 = vpack.c.b16 %v890, %v889
      %v932 = vpack.c.b16 %v892, %v891
      %v933 = vpack.c.b16 %v894, %v893
      %v934 = vpack.c.b16 %v896, %v895
      %v935 = vpack.c.b16 %v898, %v897
      %v936 = vpack.c.b16 %v900, %v899
      %v937 = vpack.c.b16 %v902, %v901
      %v938 = vpack.c.b16 %v904, %v903
      %v939 = vpack.c.b16 %v906, %v905
      %v940 = vpack.c.b16 %v908, %v907
      %973 = vmatpush.bf16.msra.mxu0 %v916
      %974 = vmatpush.bf16.msra.mxu0 %v915
      %975 = vmatpush.bf16.msra.mxu0 %v914
      %976 = vmatpush.bf16.msra.mxu0 %v913
      %977 = vmatpush.bf16.msra.mxu0 %v912
      %978 = vmatpush.bf16.msra.mxu0 %v911
      %979 = vmatpush.bf16.msra.mxu0 %v910
      %980 = vmatpush.bf16.msra.mxu0 %v909
      %981 = vmatmul.bf16.gmra.mxu0 %v749
      %v982 = vpop.f32.mrf.mxu0
      %v983 = vadd.f32 %v699, %v982
      %v984 = vpop.f32.mrf.mxu0
      %v985 = vadd.f32 %v699, %v984
      %986 = vmatmul.bf16.gmra.mxu0 %v753
      %v987 = vpop.f32.mrf.mxu0
      %v988 = vadd.f32 %v699, %v987
      %v989 = vpop.f32.mrf.mxu0
      %v990 = vadd.f32 %v699, %v989
      %991 = vmatmul.bf16.gmra.mxu0 %v757
      %v992 = vpop.f32.mrf.mxu0
      %v993 = vadd.f32 %v699, %v992
      %v994 = vpop.f32.mrf.mxu0
      %v995 = vadd.f32 %v699, %v994
      %996 = vmatmul.bf16.gmra.mxu0 %v761
      %v997 = vpop.f32.mrf.mxu0
      %v998 = vadd.f32 %v699, %v997
      %v999 = vpop.f32.mrf.mxu0
      %v1000 = vadd.f32 %v699, %v999
      %1001 = vdwg.mxu0
      %1002 = vmatpush.bf16.msra.mxu0 %v924
      %1003 = vmatpush.bf16.msra.mxu0 %v923
      %1004 = vmatpush.bf16.msra.mxu0 %v922
      %1005 = vmatpush.bf16.msra.mxu0 %v921
      %1006 = vmatpush.bf16.msra.mxu0 %v920
      %1007 = vmatpush.bf16.msra.mxu0 %v919
      %1008 = vmatpush.bf16.msra.mxu0 %v918
      %1009 = vmatpush.bf16.msra.mxu0 %v917
      %1010 = vmatmul.bf16.gmra.mxu0 %v750
      %v1011 = vpop.f32.mrf.mxu0
      %v1012 = vadd.f32 %v983, %v1011
      %v1013 = vpop.f32.mrf.mxu0
      %v1014 = vadd.f32 %v985, %v1013
      %1015 = vmatmul.bf16.gmra.mxu0 %v754
      %v1016 = vpop.f32.mrf.mxu0
      %v1017 = vadd.f32 %v988, %v1016
      %v1018 = vpop.f32.mrf.mxu0
      %v1019 = vadd.f32 %v990, %v1018
      %1020 = vmatmul.bf16.gmra.mxu0 %v758
      %v1021 = vpop.f32.mrf.mxu0
      %v1022 = vadd.f32 %v993, %v1021
      %v1023 = vpop.f32.mrf.mxu0
      %v1024 = vadd.f32 %v995, %v1023
      %1025 = vmatmul.bf16.gmra.mxu0 %v762
      %v1026 = vpop.f32.mrf.mxu0
      %v1027 = vadd.f32 %v998, %v1026
      %v1028 = vpop.f32.mrf.mxu0
      %v1029 = vadd.f32 %v1000, %v1028
      %1030 = vdwg.mxu0
      %1031 = vmatpush.bf16.msra.mxu0 %v932
      %1032 = vmatpush.bf16.msra.mxu0 %v931
      %1033 = vmatpush.bf16.msra.mxu0 %v930
      %1034 = vmatpush.bf16.msra.mxu0 %v929
      %1035 = vmatpush.bf16.msra.mxu0 %v928
      %1036 = vmatpush.bf16.msra.mxu0 %v927
      %1037 = vmatpush.bf16.msra.mxu0 %v926
      %1038 = vmatpush.bf16.msra.mxu0 %v925
      %1039 = vmatmul.bf16.gmra.mxu0 %v751
      %v1040 = vpop.f32.mrf.mxu0
      %v1041 = vadd.f32 %v1012, %v1040
      %v1042 = vpop.f32.mrf.mxu0
      %v1043 = vadd.f32 %v1014, %v1042
      %1044 = vmatmul.bf16.gmra.mxu0 %v755
      %v1045 = vpop.f32.mrf.mxu0
      %v1046 = vadd.f32 %v1017, %v1045
      %v1047 = vpop.f32.mrf.mxu0
      %v1048 = vadd.f32 %v1019, %v1047
      %1049 = vmatmul.bf16.gmra.mxu0 %v759
      %v1050 = vpop.f32.mrf.mxu0
      %v1051 = vadd.f32 %v1022, %v1050
      %v1052 = vpop.f32.mrf.mxu0
      %v1053 = vadd.f32 %v1024, %v1052
      %1054 = vmatmul.bf16.gmra.mxu0 %v763
      %v1055 = vpop.f32.mrf.mxu0
      %v1056 = vadd.f32 %v1027, %v1055
      %v1057 = vpop.f32.mrf.mxu0
      %v1058 = vadd.f32 %v1029, %v1057
      %1059 = vdwg.mxu0
      %1060 = vmatpush.bf16.msra.mxu0 %v940
      %1061 = vmatpush.bf16.msra.mxu0 %v939
      %1062 = vmatpush.bf16.msra.mxu0 %v938
      %1063 = vmatpush.bf16.msra.mxu0 %v937
      %1064 = vmatpush.bf16.msra.mxu0 %v936
      %1065 = vmatpush.bf16.msra.mxu0 %v935
      %1066 = vmatpush.bf16.msra.mxu0 %v934
      %1067 = vmatpush.bf16.msra.mxu0 %v933
      %1068 = vmatmul.bf16.gmra.mxu0 %v752
      %v1069 = vpop.f32.mrf.mxu0
      %v1070 = vadd.f32 %v1041, %v1069
      %v1071 = vpop.f32.mrf.mxu0
      %v1072 = vadd.f32 %v1043, %v1071
      %1073 = vmatmul.bf16.gmra.mxu0 %v756
      %v1074 = vpop.f32.mrf.mxu0
      %v1075 = vadd.f32 %v1046, %v1074
      %v1076 = vpop.f32.mrf.mxu0
      %v1077 = vadd.f32 %v1048, %v1076
      %1078 = vmatmul.bf16.gmra.mxu0 %v760
      %v1079 = vpop.f32.mrf.mxu0
      %v1080 = vadd.f32 %v1051, %v1079
      %v1081 = vpop.f32.mrf.mxu0
      %v1082 = vadd.f32 %v1053, %v1081
      %1083 = vmatmul.bf16.gmra.mxu0 %v764
      %v1084 = vpop.f32.mrf.mxu0
      %v1085 = vadd.f32 %v1056, %v1084
      %v1086 = vpop.f32.mrf.mxu0
      %v1087 = vadd.f32 %v1058, %v1086
      %1088 = vdwg.mxu0
      %vm1089 = vcmask 261120
      %1090 = vst.msk [vmem:[%s231] sm:$0xff] %vm1089, %v1070
      %1091 = vst.msk [vmem:[%s231 + $0x8] sm:$0xff] %vm1089, %v1072
      %1092 = vst.msk [vmem:[%s231 + $0x10] sm:$0xff] %vm1089, %v1075
      %1093 = vst.msk [vmem:[%s231 + $0x18] sm:$0xff] %vm1089, %v1077
      %1094 = vst.msk [vmem:[%s231 + $0x20] sm:$0xff] %vm1089, %v1080
      %1095 = vst.msk [vmem:[%s231 + $0x28] sm:$0xff] %vm1089, %v1082
      %1096 = vst.msk [vmem:[%s231 + $0x30] sm:$0xff] %vm1089, %v1085
      %1097 = vst.msk [vmem:[%s231 + $0x38] sm:$0xff] %vm1089, %v1087
      %v1098 = vsel %vm1089, %v1070, 0.0
      %v1099 = vsel %vm1089, %v1072, 0.0
      %v1100 = vadd.f32 %v1098, %v1099
      %v1101 = vsel %vm1089, %v1075, 0.0
      %v1102 = vadd.f32 %v1100, %v1101
      %v1103 = vsel %vm1089, %v1077, 0.0
      %v1104 = vadd.f32 %v1102, %v1103
      %v1105 = vsel %vm1089, %v1080, 0.0
      %v1106 = vadd.f32 %v1104, %v1105
      %v1107 = vsel %vm1089, %v1082, 0.0
      %v1108 = vadd.f32 %v1106, %v1107
      %v1109 = vsel %vm1089, %v1085, 0.0
      %v1110 = vadd.f32 %v1108, %v1109
      %v1111 = vsel %vm1089, %v1087, 0.0
      %v1112 = vadd.f32 %v1110, %v1111
      %v1113 = vrot.slane %v1112, 4
      %v1114 = vadd.f32 %v1112, %v1113
      %v1115 = vrot.slane %v1114, 2
      %v1116 = vadd.f32 %v1114, %v1115
      %v1117 = vrot.slane %v1116, 1
      %v1118 = vadd.f32 %v1116, %v1117
      %vm1119 = vcmask 253952
      %1120 = vst.msk [vmem:[%s239] sm:$0x1] %vm1119, %v1118
      %v1121 = vmul.f32 %v1070, %v1070
      %v1122 = vmul.f32 %v1072, %v1072
      %v1123 = vmul.f32 %v1075, %v1075
      %v1124 = vmul.f32 %v1077, %v1077
      %v1125 = vmul.f32 %v1080, %v1080
      %v1126 = vmul.f32 %v1082, %v1082
      %v1127 = vmul.f32 %v1085, %v1085
      %v1128 = vmul.f32 %v1087, %v1087
      %v1129 = vsel %vm1089, %v1121, 0.0
      %v1130 = vsel %vm1089, %v1122, 0.0
      %v1131 = vadd.f32 %v1129, %v1130
      %v1132 = vsel %vm1089, %v1123, 0.0
      %v1133 = vadd.f32 %v1131, %v1132
      %v1134 = vsel %vm1089, %v1124, 0.0
      %v1135 = vadd.f32 %v1133, %v1134
      %v1136 = vsel %vm1089, %v1125, 0.0
      %v1137 = vadd.f32 %v1135, %v1136
      %v1138 = vsel %vm1089, %v1126, 0.0
      %v1139 = vadd.f32 %v1137, %v1138
      %v1140 = vsel %vm1089, %v1127, 0.0
      %v1141 = vadd.f32 %v1139, %v1140
      %v1142 = vsel %vm1089, %v1128, 0.0
      %v1143 = vadd.f32 %v1141, %v1142
      %v1144 = vrot.slane %v1143, 4
      %v1145 = vadd.f32 %v1143, %v1144
      %v1146 = vrot.slane %v1145, 2
      %v1147 = vadd.f32 %v1145, %v1146
      %v1148 = vrot.slane %v1147, 1
      %v1149 = vadd.f32 %v1147, %v1148
      %1150 = vst.msk [vmem:[%s239 + $0x1] sm:$0x1] %vm1119, %v1149
      %s1151 = smul.u32 8, %s21
      %p1152 = scmp.lt.s32.totalorder %s20, 1
      %s1153 = scalar_select %p1152, %s20, 1
      %p1154 = scmp.lt.s32.totalorder %s1151, 7
      %s1155 = scalar_select %p1154, %s1151, 7
      %s1156 = smul.addr %s1153, 8
      %s1157 = sadd.s32 %s1155, %s1156
      %s1158 = smul.addr %s1157, 8
      %s1159 = scalar_lea.vmem %s3, %s1158
      %p1160 = scmp.lt.s32.totalorder %s20, 1
      %s1161 = scalar_select %p1160, %s20, 1
      %p1162 = scmp.lt.s32.totalorder %s21, 0
      %s1163 = scalar_select %p1162, %s21, 0
      %s1164 = sadd.s32 %s1163, %s1161
      %s1165 = smul.addr %s1164, 2
      %s1166 = scalar_lea.vmem %s4, %s1165
      // Predicated region
      $region33: #{encoder_forward.11} parent=31 // pred_check
        %p1167 = pneg %p116
      $region34: #{encoder_forward.11} parent=31 // pred_check_branch
        %1169 = sbr.rel (%p1167) target = $region36
      $region35: #{encoder_forward.11} parent=31 // pred_region
        %s1170 = smul.u32 8, %s21
      $region36: #{encoder_forward.11} parent=31 // pred_fallthru
        _
      // Predicated region
      $region37: #{encoder_forward.11} parent=31 // pred_check
        %p1171 = pneg %p144
      $region38: #{encoder_forward.11} parent=31 // pred_check_branch
        %1173 = sbr.rel (%p1171) target = $region40
      $region39: #{encoder_forward.11} parent=31 // pred_region
        _
      $region40: #{encoder_forward.11} parent=31 // pred_fallthru
        _
    $region32: #{encoder_forward.11} parent=5 // pred_fallthru
      _
    %p1174 = scmp.le.s32.totalorder 2, %s11
    // Predicated region
    $region41: #{encoder_forward.11} parent=5 // pred_check
      %p1175 = pneg %p1174
    $region42: #{encoder_forward.11} parent=5 // pred_check_branch
      %1177 = sbr.rel (%p1175) target = $region44
    $region43: #{encoder_forward.11} parent=5 // pred_region
      %s1178 = ssub.s32 %s11, 2
      // Predicated region
      $region45: #{encoder_forward.11} parent=43 // pred_check
        %p1179 = pneg %p122
      $region46: #{encoder_forward.11} parent=43 // pred_check_branch
        %1181 = sbr.rel (%p1179) target = $region48
      $region47: #{encoder_forward.11} parent=43 // pred_region
        %s1182 = smul.u32 8, %s23
        %p1183 = scmp.lt.s32.totalorder %s22, 1
        %s1184 = scalar_select %p1183, %s22, 1
        %p1185 = scmp.lt.s32.totalorder %s1182, 7
        %s1186 = scalar_select %p1185, %s1182, 7
        %s1187 = smul.addr %s1184, 8
        %s1188 = sadd.s32 %s1186, %s1187
        %s1189 = smul.addr %s1188, 8
        %s1190 = scalar_lea.vmem %s3, %s1189
      $region48: #{encoder_forward.11} parent=43 // pred_fallthru
        _
      // Predicated region
      $region49: #{encoder_forward.11} parent=43 // pred_check
        %p1191 = pneg %p150
      $region50: #{encoder_forward.11} parent=43 // pred_check_branch
        %1193 = sbr.rel (%p1191) target = $region52
      $region51: #{encoder_forward.11} parent=43 // pred_region
        %p1194 = scmp.lt.s32.totalorder %s22, 1
        %s1195 = scalar_select %p1194, %s22, 1
        %p1196 = scmp.lt.s32.totalorder %s23, 0
        %s1197 = scalar_select %p1196, %s23, 0
        %s1198 = sadd.s32 %s1197, %s1195
        %s1199 = smul.addr %s1198, 2
        %s1200 = scalar_lea.vmem %s4, %s1199
      $region52: #{encoder_forward.11} parent=43 // pred_fallthru
        _
    $region44: #{encoder_forward.11} parent=5 // pred_fallthru
      _
  $region6: #{encoder_forward.11} parent=0 // loop_footer
    %s15 = sadd.s32 1, %s11
  $region7: #{encoder_forward.11} parent=0 // loop_footer_branch
    %10 = sbr.rel target = $region3
  $region8: #{encoder_forward.11} parent=0 // loop_exit
    _

// kernel: encoder_forward.13
$region0: #{encoder_forward.13}
  #allocation0 [shape = 'u32[]', space=smem, size = 0x4, offset = 0x4, fixed_abs, tag = 'smem constant byte address 0x4 - core index']
  #allocation1 [shape = 'u32[72,128]{1,0:T(1,128)}', space=vmem, size = 0x9000, scoped, tag = 'internal scratch']
  #allocation2 [shape = 'bf16[16,512]{1,0:T(8,128)(2,1)}', space=vmem, size = 0x4000, scoped, tag = 'scratch operand']
  %s0 = inlined_call_operand.vmem [shape: bf16[2,5,5,128], index: 0, kind: input, shape index: {}]
  %s1 = inlined_call_operand.vmem [shape: bf16[512,64], index: 1, kind: input, shape index: {}]
  %s2 = inlined_call_operand.vmem [shape: f32[1,64], index: 2, kind: input, shape index: {}]
  %s3 = inlined_call_operand.vmem [shape: f32[2,16,64], index: 3, kind: output, shape index: {0}]
  %s4 = inlined_call_operand.vmem [shape: f32[2,1,2,64], index: 4, kind: output, shape index: {1}]
  %5 = xla_tuple %s3, %s4
  %s6 = sld [smem:[#allocation0]]
  $region53: #{encoder_forward.13} parent=0
    _
  %s8 = ssub.s32 1, %s6
  %s9 = scalar_select 0, %s8, %s6
  loop: start=0, step=1, limit=4
  $region2: #{encoder_forward.13} parent=0 // loop_pre_header
    _
  $region3: #{encoder_forward.13} parent=0 // loop_header
    %s11 = sphi 0, %s15
    %p12 = scmp.ge.s32.totalorder %s11, 4
    %s18 = sphi 0, %s30
    %s19 = sphi 0, %s26
    %s20 = sphi 0, %s18
    %s21 = sphi 0, %s19
    %s22 = sphi 0, %s20
    %s23 = sphi 0, %s21
    %s33 = sphi 0, %s35
    %s36 = sphi 0, %s33
    %s37 = sphi 0, %s36
    %s53 = sphi 0, %s37
    %s57 = sphi 0, %s57
    %s59 = sphi 0, %s57
    %s60 = sphi 0, %s59
    %s74 = sphi 0, %s60
    %s78 = sphi 0, %s78
    %s80 = sphi 0, %s78
    %s81 = sphi 0, %s80
    %s95 = sphi 0, %s81
    %s103 = sphi 0, %s105
    %s106 = sphi 0, %s103
    %s107 = sphi 0, %s106
    %s123 = sphi 0, %s107
    %s131 = sphi 0, %s133
    %s134 = sphi 0, %s131
    %s135 = sphi 0, %s134
    %s151 = sphi 0, %s135
  $region4: #{encoder_forward.13} parent=0 // loop_header_branch
    %14 = sbr.rel (%p12) target = $region8
  $region5: #{encoder_forward.13} parent=0 // loop_body
    %s16 = ssub.s32 %s11, 1
    %s17 = ssub.s32 %s11, 2
    %s24 = sadd.s32 1, %s19
    %p25 = scmp.ge.s32.totalorder %s24, 1
    %s26 = scalar_select %p25, 0, %s24
    %s27 = sadd.s32 1, %s18
    %s28 = scalar_select %p25, %s27, %s18
    %p29 = scmp.ge.s32.totalorder %s28, 2
    %s30 = scalar_select %p29, 0, %s28
    %s31 = ssub.s32 %s18, %s30
    %p32 = scmp.eq.s32.totalorder %s31, 0
    %s34 = sadd.s32 %s33, 1
    %s35 = scalar_select %p32, %s33, %s34
    %p38 = pneg %p32
    %p39 = scmp.eq.s32.totalorder %s11, 1
    %p40 = por %p38, %p39
    %p41 = scmp.ne.s32.totalorder %s33, %s36
    %p42 = scmp.eq.s32.totalorder %s11, 0
    %p43 = por %p41, %p42
    %p44 = scmp.ne.s32.totalorder %s33, %s36
    %p45 = scmp.eq.s32.totalorder %s16, 1
    %p46 = por %p44, %p45
    %p47 = scmp.ne.s32.totalorder %s36, %s37
    %p48 = scmp.eq.s32.totalorder %s16, 0
    %p49 = por %p47, %p48
    %p50 = scmp.ne.s32.totalorder %s36, %s37
    %p51 = scmp.eq.s32.totalorder %s17, 1
    %p52 = por %p50, %p51
    %p54 = scmp.ne.s32.totalorder %s37, %s53
    %p55 = scmp.eq.s32.totalorder %s17, 0
    %p56 = por %p54, %p55
    %s58 = sadd.s32 %s57, 1
    %p61 = scmp.eq.s32.totalorder %s11, 1
    %p62 = scmp.ne.s32.totalorder %s57, %s59
    %p63 = scmp.eq.s32.totalorder %s11, 0
    %p64 = por %p62, %p63
    %p65 = scmp.ne.s32.totalorder %s57, %s59
    %p66 = scmp.eq.s32.totalorder %s16, 1
    %p67 = por %p65, %p66
    %p68 = scmp.ne.s32.totalorder %s59, %s60
    %p69 = scmp.eq.s32.totalorder %s16, 0
    %p70 = por %p68, %p69
    %p71 = scmp.ne.s32.totalorder %s59, %s60
    %p72 = scmp.eq.s32.totalorder %s17, 1
    %p73 = por %p71, %p72
    %p75 = scmp.ne.s32.totalorder %s60, %s74
    %p76 = scmp.eq.s32.totalorder %s17, 0
    %p77 = por %p75, %p76
    %s79 = sadd.s32 %s78, 1
    %p82 = scmp.eq.s32.totalorder %s11, 1
    %p83 = scmp.ne.s32.totalorder %s78, %s80
    %p84 = scmp.eq.s32.totalorder %s11, 0
    %p85 = por %p83, %p84
    %p86 = scmp.ne.s32.totalorder %s78, %s80
    %p87 = scmp.eq.s32.totalorder %s16, 1
    %p88 = por %p86, %p87
    %p89 = scmp.ne.s32.totalorder %s80, %s81
    %p90 = scmp.eq.s32.totalorder %s16, 0
    %p91 = por %p89, %p90
    %p92 = scmp.ne.s32.totalorder %s80, %s81
    %p93 = scmp.eq.s32.totalorder %s17, 1
    %p94 = por %p92, %p93
    %p96 = scmp.ne.s32.totalorder %s81, %s95
    %p97 = scmp.eq.s32.totalorder %s17, 0
    %p98 = por %p96, %p97
    %s99 = ssub.s32 %s18, %s30
    %s100 = ssub.s32 %s19, %s26
    %s101 = sor.u32 %s99, %s100
    %p102 = scmp.eq.s32.totalorder %s101, 0
    %s104 = sadd.s32 %s103, 1
    %s105 = scalar_select %p102, %s103, %s104
    %p108 = pneg %p102
    %p109 = scmp.eq.s32.totalorder %s11, 1
    %p110 = por %p108, %p109
    %p111 = scmp.ne.s32.totalorder %s103, %s106
    %p112 = scmp.eq.s32.totalorder %s11, 0
    %p113 = por %p111, %p112
    %p114 = scmp.ne.s32.totalorder %s103, %s106
    %p115 = scmp.eq.s32.totalorder %s16, 1
    %p116 = por %p114, %p115
    %p117 = scmp.ne.s32.totalorder %s106, %s107
    %p118 = scmp.eq.s32.totalorder %s16, 0
    %p119 = por %p117, %p118
    %p120 = scmp.ne.s32.totalorder %s106, %s107
    %p121 = scmp.eq.s32.totalorder %s17, 1
    %p122 = por %p120, %p121
    %p124 = scmp.ne.s32.totalorder %s107, %s123
    %p125 = scmp.eq.s32.totalorder %s17, 0
    %p126 = por %p124, %p125
    %s127 = ssub.s32 %s18, %s30
    %s128 = ssub.s32 %s19, %s26
    %s129 = sor.u32 %s127, %s128
    %p130 = scmp.eq.s32.totalorder %s129, 0
    %s132 = sadd.s32 %s131, 1
    %s133 = scalar_select %p130, %s131, %s132
    %p136 = pneg %p130
    %p137 = scmp.eq.s32.totalorder %s11, 1
    %p138 = por %p136, %p137
    %p139 = scmp.ne.s32.totalorder %s131, %s134
    %p140 = scmp.eq.s32.totalorder %s11, 0
    %p141 = por %p139, %p140
    %p142 = scmp.ne.s32.totalorder %s131, %s134
    %p143 = scmp.eq.s32.totalorder %s16, 1
    %p144 = por %p142, %p143
    %p145 = scmp.ne.s32.totalorder %s134, %s135
    %p146 = scmp.eq.s32.totalorder %s16, 0
    %p147 = por %p145, %p146
    %p148 = scmp.ne.s32.totalorder %s134, %s135
    %p149 = scmp.eq.s32.totalorder %s17, 1
    %p150 = por %p148, %p149
    %p152 = scmp.ne.s32.totalorder %s135, %s151
    %p153 = scmp.eq.s32.totalorder %s17, 0
    %p154 = por %p152, %p153
    %p155 = scmp.le.s32.totalorder 1, %s11
    %p156 = scmp.lt.s32.totalorder %s11, 3
    %p157 = pnand %p155, %p156
    %p158 = pneg %p157
    // Predicated region
    $region9: #{encoder_forward.13} parent=5 // pred_check
      _
    $region10: #{encoder_forward.13} parent=5 // pred_check_branch
      %160 = sbr.rel (%p157) target = $region12
    $region11: #{encoder_forward.13} parent=5 // pred_region
      %s161 = ssub.s32 %s11, 1
      // Predicated region
      $region13: #{encoder_forward.13} parent=11 // pred_check
        %p162 = pneg %p70
      $region14: #{encoder_forward.13} parent=11 // pred_check_branch
        %164 = sbr.rel (%p162) target = $region16
      $region15: #{encoder_forward.13} parent=11 // pred_region
        _
      $region16: #{encoder_forward.13} parent=11 // pred_fallthru
        _
      // Predicated region
      $region17: #{encoder_forward.13} parent=11 // pred_check
        %p165 = pneg %p91
      $region18: #{encoder_forward.13} parent=11 // pred_check_branch
        %167 = sbr.rel (%p165) target = $region20
      $region19: #{encoder_forward.13} parent=11 // pred_region
        _
      $region20: #{encoder_forward.13} parent=11 // pred_fallthru
        _
    $region12: #{encoder_forward.13} parent=5 // pred_fallthru
      _
    %p168 = scmp.lt.s32.totalorder %s11, 2
    // Predicated region
    $region21: #{encoder_forward.13} parent=5 // pred_check
      %p169 = pneg %p168
    $region22: #{encoder_forward.13} parent=5 // pred_check_branch
      %171 = sbr.rel (%p169) target = $region24
    $region23: #{encoder_forward.13} parent=5 // pred_region
      // Predicated region
      $region25: #{encoder_forward.13} parent=23 // pred_check
        %p172 = pneg %p43
      $region26: #{encoder_forward.13} parent=23 // pred_check_branch
        %174 = sbr.rel (%p172) target = $region28
      $region27: #{encoder_forward.13} parent=23 // pred_region
        %p175 = scmp.lt.s32.totalorder %s18, 1
        %s176 = scalar_select %p175, %s18, 1
        %s177 = smul.addr %s176, 5
        %s178 = smul.addr %s177, 4
        %s179 = scalar_lea.vmem %s0, %s178
      $region28: #{encoder_forward.13} parent=23 // pred_fallthru
        _
    $region24: #{encoder_forward.13} parent=5 // pred_fallthru
      _
    %p180 = scmp.le.s32.totalorder 1, %s11
    %p181 = scmp.lt.s32.totalorder %s11, 3
    %p182 = pnand %p180, %p181
    %p183 = pneg %p182
    // Predicated region
    $region29: #{encoder_forward.13} parent=5 // pred_check
      _
    $region30: #{encoder_forward.13} parent=5 // pred_check_branch
      %185 = sbr.rel (%p182) target = $region32
    $region31: #{encoder_forward.13} parent=5 // pred_region
      %s186 = ssub.s32 %s11, 1
      %p187 = scmp.lt.s32.totalorder %s20, 1
      %s188 = scalar_select %p187, %s20, 1
      %s189 = smul.addr %s188, 5
      %s190 = smul.addr %s189, 4
      %s191 = scalar_lea.vmem %s0, %s190
      %p192 = pneg %p49
      %p193 = pneg %p46
      %p194 = pneg %p70
      %p195 = pneg %p67
      %p196 = pneg %p91
      %p197 = pneg %p88
      %p198 = pneg %p119
      %p199 = pneg %p116
      %s200 = smul.u32 2, %s21
      %p201 = scmp.lt.s32.totalorder %s20, 1
      %s202 = scalar_select %p201, %s20, 1
      %p203 = scmp.lt.s32.totalorder %s200, 1
      %s204 = scalar_select %p203, %s200, 1
      %s205 = smul.addr %s202, 2
      %s206 = sadd.s32 %s204, %s205
      %s207 = smul.addr %s206, 8
      %s208 = scalar_lea.vmem %s3, %s207
      %p209 = pneg %p147
      %p210 = pneg %p144
      %p211 = scmp.lt.s32.totalorder %s20, 1
      %s212 = scalar_select %p211, %s20, 1
      %p213 = scmp.lt.s32.totalorder %s21, 0
      %s214 = scalar_select %p213, %s21, 0
      %s215 = sadd.s32 %s214, %s212
      %s216 = smul.addr %s215, 2
      %s217 = scalar_lea.vmem %s4, %s216
      %p218 = scmp.lt.s32.totalorder %s20, 1
      %s219 = scalar_select %p218, %s20, 1
      %s220 = smul.addr %s219, 5
      %s221 = smul.addr %s220, 4
      %s222 = scalar_lea.vmem %s0, %s221
      %s223 = smul.u32 2, %s21
      %p224 = scmp.lt.s32.totalorder %s20, 1
      %s225 = scalar_select %p224, %s20, 1
      %p226 = scmp.lt.s32.totalorder %s223, 1
      %s227 = scalar_select %p226, %s223, 1
      %s228 = smul.addr %s225, 2
      %s229 = sadd.s32 %s227, %s228
      %s230 = smul.addr %s229, 8
      %s231 = scalar_lea.vmem %s3, %s230
      %s232 = smul.u32 2, %s21
      %p233 = scmp.lt.s32.totalorder %s20, 1
      %s234 = scalar_select %p233, %s20, 1
      %p235 = scmp.lt.s32.totalorder %s21, 0
      %s236 = scalar_select %p235, %s21, 0
      %s237 = sadd.s32 %s236, %s234
      %s238 = smul.addr %s237, 2
      %s239 = scalar_lea.vmem %s4, %s238
      %s240 = smul.u32 %s21, 4
      %s241 = smul.addr %s240, 4
      %s242 = scalar_lea.vmem %s222, %s241
      %v243 = vld [vmem:[%s242] sm:$0x3]
      %244 = vst [vmem:[#allocation2] sm:$0x3] %v243
      %v245 = vld [vmem:[%s242] sm:$0x7]
      %v247 = vshrl.u32 %v245, 16
      %v249 = vrot.slane %v247, 4
      %v250 = vshll.u32 %v245, 16
      %v252 = vrot.slane %v250, 5
      %v253 = vor.u32 %v249, %v252
      %v254 = vrot.slane %v253, 4
      %256 = vst [vmem:[#allocation2 + $0x4] sm:$0x3] %v254
      %s257 = sadd.s32 %s240, 1
      %s258 = smul.addr %s257, 4
      %s259 = scalar_lea.vmem %s222, %s258
      %v260 = vld [vmem:[%s259] sm:$0x3]
      %261 = vst [vmem:[#allocation2 + $0x8] sm:$0x3] %v260
      %v262 = vld [vmem:[%s259] sm:$0x7]
      %v264 = vshrl.u32 %v262, 16
      %v266 = vrot.slane %v264, 4
      %v267 = vshll.u32 %v262, 16
      %v269 = vrot.slane %v267, 5
      %v270 = vor.u32 %v266, %v269
      %v271 = vrot.slane %v270, 4
      %273 = vst [vmem:[#allocation2 + $0xc] sm:$0x3] %v271
      %v274 = vld [vmem:[%s259] sm:$0x3]
      %v276 = vrot.slane %v274, 6
      %278 = vst [vmem:[#allocation2] sm:$0xc] %v276
      %v279 = vld [vmem:[%s259] sm:$0x7]
      %v281 = vshrl.u32 %v279, 16
      %v283 = vrot.slane %v281, 6
      %v284 = vshll.u32 %v279, 16
      %v286 = vrot.slane %v284, 7
      %v287 = vor.u32 %v283, %v286
      %289 = vst [vmem:[#allocation2 + $0x4] sm:$0xc] %v287
      %s290 = sadd.s32 %s240, 2
      %s291 = smul.addr %s290, 4
      %s292 = scalar_lea.vmem %s222, %s291
      %v293 = vld [vmem:[%s292] sm:$0x3]
      %v295 = vrot.slane %v293, 6
      %297 = vst [vmem:[#allocation2 + $0x8] sm:$0xc] %v295
      %v298 = vld [vmem:[%s292] sm:$0x7]
      %v300 = vshrl.u32 %v298, 16
      %v302 = vrot.slane %v300, 6
      %v303 = vshll.u32 %v298, 16
      %v305 = vrot.slane %v303, 7
      %v306 = vor.u32 %v302, %v305
      %308 = vst [vmem:[#allocation2 + $0xc] sm:$0xc] %v306
      %v309 = vld [vmem:[%s292] sm:$0x3]
      %310 = vst [vmem:[#allocation2 + $0x10] sm:$0x3] %v309
      %v311 = vld [vmem:[%s292] sm:$0x7]
      %v313 = vshrl.u32 %v311, 16
      %v315 = vrot.slane %v313, 4
      %v316 = vshll.u32 %v311, 16
      %v318 = vrot.slane %v316, 5
      %v319 = vor.u32 %v315, %v318
      %v320 = vrot.slane %v319, 4
      %322 = vst [vmem:[#allocation2 + $0x14] sm:$0x3] %v320
      %s323 = sadd.s32 %s240, 3
      %s324 = smul.addr %s323, 4
      %s325 = scalar_lea.vmem %s222, %s324
      %v326 = vld [vmem:[%s325] sm:$0x3]
      %327 = vst [vmem:[#allocation2 + $0x18] sm:$0x3] %v326
      %v328 = vld [vmem:[%s325] sm:$0x7]
      %v330 = vshrl.u32 %v328, 16
      %v332 = vrot.slane %v330, 4
      %v333 = vshll.u32 %v328, 16
      %v335 = vrot.slane %v333, 5
      %v336 = vor.u32 %v332, %v335
      %v337 = vrot.slane %v336, 4
      %339 = vst [vmem:[#allocation2 + $0x1c] sm:$0x3] %v337
      %v340 = vld [vmem:[%s325] sm:$0x3]
      %v342 = vrot.slane %v340, 6
      %344 = vst [vmem:[#allocation2 + $0x10] sm:$0xc] %v342
      %v345 = vld [vmem:[%s325] sm:$0x7]
      %v347 = vshrl.u32 %v345, 16
      %v349 = vrot.slane %v347, 6
      %v350 = vshll.u32 %v345, 16
      %v352 = vrot.slane %v350, 7
      %v353 = vor.u32 %v349, %v352
      %355 = vst [vmem:[#allocation2 + $0x14] sm:$0xc] %v353
      %s356 = sadd.s32 %s240, 4
      %s357 = smul.addr %s356, 4
      %s358 = scalar_lea.vmem %s222, %s357
      %v359 = vld [vmem:[%s358] sm:$0x3]
      %v361 = vrot.slane %v359, 6
      %363 = vst [vmem:[#allocation2 + $0x18] sm:$0xc] %v361
      %v364 = vld [vmem:[%s358] sm:$0x7]
      %v366 = vshrl.u32 %v364, 16
      %v368 = vrot.slane %v366, 6
      %v369 = vshll.u32 %v364, 16
      %v371 = vrot.slane %v369, 7
      %v372 = vor.u32 %v368, %v371
      %374 = vst [vmem:[#allocation2 + $0x1c] sm:$0xc] %v372
      %v375 = vld [vmem:[#allocation2] sm:$0xff]
      %v376 = vld [vmem:[#allocation2 + $0x8] sm:$0xff]
      %v377 = vld [vmem:[#allocation2 + $0x10] sm:$0xff]
      %v378 = vld [vmem:[#allocation2 + $0x18] sm:$0xff]
      %v379 = vld [vmem:[%s1] sm:$0xf]
      %v380 = vld [vmem:[%s1 + $0x4] sm:$0xf]
      %v381 = vld [vmem:[%s1 + $0x8] sm:$0xf]
      %v382 = vld [vmem:[%s1 + $0xc] sm:$0xf]
      %v383 = vld [vmem:[%s1 + $0x10] sm:$0xf]
      %v384 = vld [vmem:[%s1 + $0x14] sm:$0xf]
      %v385 = vld [vmem:[%s1 + $0x18] sm:$0xf]
      %v386 = vld [vmem:[%s1 + $0x1c] sm:$0xf]
      %v387 = vld [vmem:[%s1 + $0x20] sm:$0xf]
      %v388 = vld [vmem:[%s1 + $0x24] sm:$0xf]
      %v389 = vld [vmem:[%s1 + $0x28] sm:$0xf]
      %v390 = vld [vmem:[%s1 + $0x2c] sm:$0xf]
      %v391 = vld [vmem:[%s1 + $0x30] sm:$0xf]
      %v392 = vld [vmem:[%s1 + $0x34] sm:$0xf]
      %v393 = vld [vmem:[%s1 + $0x38] sm:$0xf]
      %v394 = vld [vmem:[%s1 + $0x3c] sm:$0xf]
      %v395 = vld [vmem:[%s1 + $0x40] sm:$0xf]
      %v396 = vld [vmem:[%s1 + $0x44] sm:$0xf]
      %v397 = vld [vmem:[%s1 + $0x48] sm:$0xf]
      %v398 = vld [vmem:[%s1 + $0x4c] sm:$0xf]
      %v399 = vld [vmem:[%s1 + $0x50] sm:$0xf]
      %v400 = vld [vmem:[%s1 + $0x54] sm:$0xf]
      %v401 = vld [vmem:[%s1 + $0x58] sm:$0xf]
      %v402 = vld [vmem:[%s1 + $0x5c] sm:$0xf]
      %v403 = vld [vmem:[%s1 + $0x60] sm:$0xf]
      %v404 = vld [vmem:[%s1 + $0x64] sm:$0xf]
      %v405 = vld [vmem:[%s1 + $0x68] sm:$0xf]
      %v406 = vld [vmem:[%s1 + $0x6c] sm:$0xf]
      %v407 = vld [vmem:[%s1 + $0x70] sm:$0xf]
      %v408 = vld [vmem:[%s1 + $0x74] sm:$0xf]
      %v409 = vld [vmem:[%s1 + $0x78] sm:$0xf]
      %v410 = vld [vmem:[%s1 + $0x7c] sm:$0xf]
      %v411 = vld [vmem:[%s1 + $0x80] sm:$0xf]
      %v412 = vld [vmem:[%s1 + $0x84] sm:$0xf]
      %v413 = vld [vmem:[%s1 + $0x88] sm:$0xf]
      %v414 = vld [vmem:[%s1 + $0x8c] sm:$0xf]
      %v415 = vld [vmem:[%s1 + $0x90] sm:$0xf]
      %v416 = vld [vmem:[%s1 + $0x94] sm:$0xf]
      %v417 = vld [vmem:[%s1 + $0x98] sm:$0xf]
      %v418 = vld [vmem:[%s1 + $0x9c] sm:$0xf]
      %v419 = vld [vmem:[%s1 + $0xa0] sm:$0xf]
      %v420 = vld [vmem:[%s1 + $0xa4] sm:$0xf]
      %v421 = vld [vmem:[%s1 + $0xa8] sm:$0xf]
      %v422 = vld [vmem:[%s1 + $0xac] sm:$0xf]
      %v423 = vld [vmem:[%s1 + $0xb0] sm:$0xf]
      %v424 = vld [vmem:[%s1 + $0xb4] sm:$0xf]
      %v425 = vld [vmem:[%s1 + $0xb8] sm:$0xf]
      %v426 = vld [vmem:[%s1 + $0xbc] sm:$0xf]
      %v427 = vld [vmem:[%s1 + $0xc0] sm:$0xf]
      %v428 = vld [vmem:[%s1 + $0xc4] sm:$0xf]
      %v429 = vld [vmem:[%s1 + $0xc8] sm:$0xf]
      %v430 = vld [vmem:[%s1 + $0xcc] sm:$0xf]
      %v431 = vld [vmem:[%s1 + $0xd0] sm:$0xf]
      %v432 = vld [vmem:[%s1 + $0xd4] sm:$0xf]
      %v433 = vld [vmem:[%s1 + $0xd8] sm:$0xf]
      %v434 = vld [vmem:[%s1 + $0xdc] sm:$0xf]
      %v435 = vld [vmem:[%s1 + $0xe0] sm:$0xf]
      %v436 = vld [vmem:[%s1 + $0xe4] sm:$0xf]
      %v437 = vld [vmem:[%s1 + $0xe8] sm:$0xf]
      %v438 = vld [vmem:[%s1 + $0xec] sm:$0xf]
      %v439 = vld [vmem:[%s1 + $0xf0] sm:$0xf]
      %v440 = vld [vmem:[%s1 + $0xf4] sm:$0xf]
      %v441 = vld [vmem:[%s1 + $0xf8] sm:$0xf]
      %v442 = vld [vmem:[%s1 + $0xfc] sm:$0xf]
      %v443 = vld [vmem:[%s2] sm:$0x1]
      %v445 = vperm.slane %v443, 0
      %v451 = vunpack.c.l.b16 %v375
      %v452 = vunpack.c.h.b16 %v375
      %v453 = vunpack.c.l.b16 %v376
      %v454 = vunpack.c.h.b16 %v376
      %v455 = vunpack.c.l.b16 %v377
      %v456 = vunpack.c.h.b16 %v377
      %v457 = vunpack.c.l.b16 %v378
      %v458 = vunpack.c.h.b16 %v378
      %v459 = vpack.c.b16 %v455, %v451
      %v460 = vpack.c.b16 %v456, %v452
      %v461 = vpack.c.b16 %v457, %v453
      %v462 = vpack.c.b16 %v458, %v454
      %v531 = vunpack.c.l.b16 %v379
      %v532 = vunpack.c.l.b16 %v380
      %v533 = vunpack.c.l.b16 %v381
      %v534 = vunpack.c.l.b16 %v382
      %v535 = vunpack.c.l.b16 %v383
      %v536 = vunpack.c.l.b16 %v384
      %v537 = vunpack.c.l.b16 %v385
      %v538 = vunpack.c.l.b16 %v386
      %v539 = vunpack.c.l.b16 %v387
      %v540 = vunpack.c.l.b16 %v388
      %v541 = vunpack.c.l.b16 %v389
      %v542 = vunpack.c.l.b16 %v390
      %v543 = vunpack.c.l.b16 %v391
      %v544 = vunpack.c.l.b16 %v392
      %v545 = vunpack.c.l.b16 %v393
      %v546 = vunpack.c.l.b16 %v394
      %v547 = vunpack.c.l.b16 %v395
      %v548 = vunpack.c.l.b16 %v396
      %v549 = vunpack.c.l.b16 %v397
      %v550 = vunpack.c.l.b16 %v398
      %v551 = vunpack.c.l.b16 %v399
      %v552 = vunpack.c.l.b16 %v400
      %v553 = vunpack.c.l.b16 %v401
      %v554 = vunpack.c.l.b16 %v402
      %v555 = vunpack.c.l.b16 %v403
      %v556 = vunpack.c.l.b16 %v404
      %v557 = vunpack.c.l.b16 %v405
      %v558 = vunpack.c.l.b16 %v406
      %v559 = vunpack.c.l.b16 %v407
      %v560 = vunpack.c.l.b16 %v408
      %v561 = vunpack.c.l.b16 %v409
      %v562 = vunpack.c.l.b16 %v410
      %v563 = vunpack.c.l.b16 %v411
      %v564 = vunpack.c.l.b16 %v412
      %v565 = vunpack.c.l.b16 %v413
      %v566 = vunpack.c.l.b16 %v414
      %v567 = vunpack.c.l.b16 %v415
      %v568 = vunpack.c.l.b16 %v416
      %v569 = vunpack.c.l.b16 %v417
      %v570 = vunpack.c.l.b16 %v418
      %v571 = vunpack.c.l.b16 %v419
      %v572 = vunpack.c.l.b16 %v420
      %v573 = vunpack.c.l.b16 %v421
      %v574 = vunpack.c.l.b16 %v422
      %v575 = vunpack.c.l.b16 %v423
      %v576 = vunpack.c.l.b16 %v424
      %v577 = vunpack.c.l.b16 %v425
      %v578 = vunpack.c.l.b16 %v426
      %v579 = vunpack.c.l.b16 %v427
      %v580 = vunpack.c.l.b16 %v428
      %v581 = vunpack.c.l.b16 %v429
      %v582 = vunpack.c.l.b16 %v430
      %v583 = vunpack.c.l.b16 %v431
      %v584 = vunpack.c.l.b16 %v432
      %v585 = vunpack.c.l.b16 %v433
      %v586 = vunpack.c.l.b16 %v434
      %v587 = vunpack.c.l.b16 %v435
      %v588 = vunpack.c.l.b16 %v436
      %v589 = vunpack.c.l.b16 %v437
      %v590 = vunpack.c.l.b16 %v438
      %v591 = vunpack.c.l.b16 %v439
      %v592 = vunpack.c.l.b16 %v440
      %v593 = vunpack.c.l.b16 %v441
      %v594 = vunpack.c.l.b16 %v442
      %v595 = vpack.c.b16 %v532, %v531
      %v596 = vpack.c.b16 %v534, %v533
      %v597 = vpack.c.b16 %v536, %v535
      %v598 = vpack.c.b16 %v538, %v537
      %v599 = vpack.c.b16 %v540, %v539
      %v600 = vpack.c.b16 %v542, %v541
      %v601 = vpack.c.b16 %v544, %v543
      %v602 = vpack.c.b16 %v546, %v545
      %v603 = vpack.c.b16 %v548, %v547
      %v604 = vpack.c.b16 %v550, %v549
      %v605 = vpack.c.b16 %v552, %v551
      %v606 = vpack.c.b16 %v554, %v553
      %v607 = vpack.c.b16 %v556, %v555
      %v608 = vpack.c.b16 %v558, %v557
      %v609 = vpack.c.b16 %v560, %v559
      %v610 = vpack.c.b16 %v562, %v561
      %v611 = vpack.c.b16 %v564, %v563
      %v612 = vpack.c.b16 %v566, %v565
      %v613 = vpack.c.b16 %v568, %v567
      %v614 = vpack.c.b16 %v570, %v569
      %v615 = vpack.c.b16 %v572, %v571
      %v616 = vpack.c.b16 %v574, %v573
      %v617 = vpack.c.b16 %v576, %v575
      %v618 = vpack.c.b16 %v578, %v577
      %v619 = vpack.c.b16 %v580, %v579
      %v620 = vpack.c.b16 %v582, %v581
      %v621 = vpack.c.b16 %v584, %v583
      %v622 = vpack.c.b16 %v586, %v585
      %v623 = vpack.c.b16 %v588, %v587
      %v624 = vpack.c.b16 %v590, %v589
      %v625 = vpack.c.b16 %v592, %v591
      %v626 = vpack.c.b16 %v594, %v593
      %659 = vmatpush.bf16.msra.mxu0 %v602
      %660 = vmatpush.bf16.msra.mxu0 %v601
      %661 = vmatpush.bf16.msra.mxu0 %v600
      %662 = vmatpush.bf16.msra.mxu0 %v599
      %663 = vmatpush.bf16.msra.mxu0 %v598
      %664 = vmatpush.bf16.msra.mxu0 %v597
      %665 = vmatpush.bf16.msra.mxu0 %v596
      %666 = vmatpush.bf16.msra.mxu0 %v595
      %667 = vmatmul.bf16.gmra.mxu0 %v459
      %v668 = vpop.f32.mrf.mxu0
      %v669 = vadd.f32 %v445, %v668
      %v670 = vpop.f32.mrf.mxu0
      %v671 = vadd.f32 %v445, %v670
      %672 = vdwg.mxu0
      %673 = vmatpush.bf16.msra.mxu0 %v610
      %674 = vmatpush.bf16.msra.mxu0 %v609
      %675 = vmatpush.bf16.msra.mxu0 %v608
      %676 = vmatpush.bf16.msra.mxu0 %v607
      %677 = vmatpush.bf16.msra.mxu0 %v606
      %678 = vmatpush.bf16.msra.mxu0 %v605
      %679 = vmatpush.bf16.msra.mxu0 %v604
      %680 = vmatpush.bf16.msra.mxu0 %v603
      %681 = vmatmul.bf16.gmra.mxu0 %v460
      %v682 = vpop.f32.mrf.mxu0
      %v683 = vadd.f32 %v669, %v682
      %v684 = vpop.f32.mrf.mxu0
      %v685 = vadd.f32 %v671, %v684
      %686 = vdwg.mxu0
      %687 = vmatpush.bf16.msra.mxu0 %v618
      %688 = vmatpush.bf16.msra.mxu0 %v617
      %689 = vmatpush.bf16.msra.mxu0 %v616
      %690 = vmatpush.bf16.msra.mxu0 %v615
      %691 = vmatpush.bf16.msra.mxu0 %v614
      %692 = vmatpush.bf16.msra.mxu0 %v613
      %693 = vmatpush.bf16.msra.mxu0 %v612
      %694 = vmatpush.bf16.msra.mxu0 %v611
      %695 = vmatmul.bf16.gmra.mxu0 %v461
      %v696 = vpop.f32.mrf.mxu0
      %v697 = vadd.f32 %v683, %v696
      %v698 = vpop.f32.mrf.mxu0
      %v699 = vadd.f32 %v685, %v698
      %700 = vdwg.mxu0
      %701 = vmatpush.bf16.msra.mxu0 %v626
      %702 = vmatpush.bf16.msra.mxu0 %v625
      %703 = vmatpush.bf16.msra.mxu0 %v624
      %704 = vmatpush.bf16.msra.mxu0 %v623
      %705 = vmatpush.bf16.msra.mxu0 %v622
      %706 = vmatpush.bf16.msra.mxu0 %v621
      %707 = vmatpush.bf16.msra.mxu0 %v620
      %708 = vmatpush.bf16.msra.mxu0 %v619
      %709 = vmatmul.bf16.gmra.mxu0 %v462
      %v710 = vpop.f32.mrf.mxu0
      %v711 = vadd.f32 %v697, %v710
      %v712 = vpop.f32.mrf.mxu0
      %v713 = vadd.f32 %v699, %v712
      %714 = vdwg.mxu0
      %vm715 = vcmask 523264
      %716 = vst.msk [vmem:[%s231] sm:$0xff] %vm715, %v711
      %717 = vst.msk [vmem:[%s231 + $0x8] sm:$0xff] %vm715, %v713
      %v718 = vsel %vm715, %v711, 0.0
      %v719 = vsel %vm715, %v713, 0.0
      %v720 = vadd.f32 %v718, %v719
      %v721 = vrot.slane %v720, 4
      %v722 = vadd.f32 %v720, %v721
      %v723 = vrot.slane %v722, 2
      %v724 = vadd.f32 %v722, %v723
      %v725 = vrot.slane %v724, 1
      %v726 = vadd.f32 %v724, %v725
      %vm727 = vcmask 516096
      %728 = vst.msk [vmem:[%s239] sm:$0x1] %vm727, %v726
      %v729 = vmul.f32 %v711, %v711
      %v730 = vmul.f32 %v713, %v713
      %v731 = vsel %vm715, %v729, 0.0
      %v732 = vsel %vm715, %v730, 0.0
      %v733 = vadd.f32 %v731, %v732
      %v734 = vrot.slane %v733, 4
      %v735 = vadd.f32 %v733, %v734
      %v736 = vrot.slane %v735, 2
      %v737 = vadd.f32 %v735, %v736
      %v738 = vrot.slane %v737, 1
      %v739 = vadd.f32 %v737, %v738
      %740 = vst.msk [vmem:[%s239 + $0x1] sm:$0x1] %vm727, %v739
      %s741 = smul.u32 2, %s21
      %p742 = scmp.lt.s32.totalorder %s20, 1
      %s743 = scalar_select %p742, %s20, 1
      %p744 = scmp.lt.s32.totalorder %s741, 1
      %s745 = scalar_select %p744, %s741, 1
      %s746 = smul.addr %s743, 2
      %s747 = sadd.s32 %s745, %s746
      %s748 = smul.addr %s747, 8
      %s749 = scalar_lea.vmem %s3, %s748
      %p750 = scmp.lt.s32.totalorder %s20, 1
      %s751 = scalar_select %p750, %s20, 1
      %p752 = scmp.lt.s32.totalorder %s21, 0
      %s753 = scalar_select %p752, %s21, 0
      %s754 = sadd.s32 %s753, %s751
      %s755 = smul.addr %s754, 2
      %s756 = scalar_lea.vmem %s4, %s755
      // Predicated region
      $region33: #{encoder_forward.13} parent=31 // pred_check
        %p757 = pneg %p116
      $region34: #{encoder_forward.13} parent=31 // pred_check_branch
        %759 = sbr.rel (%p757) target = $region36
      $region35: #{encoder_forward.13} parent=31 // pred_region
        %s760 = smul.u32 2, %s21
      $region36: #{encoder_forward.13} parent=31 // pred_fallthru
        _
      // Predicated region
      $region37: #{encoder_forward.13} parent=31 // pred_check
        %p761 = pneg %p144
      $region38: #{encoder_forward.13} parent=31 // pred_check_branch
        %763 = sbr.rel (%p761) target = $region40
      $region39: #{encoder_forward.13} parent=31 // pred_region
        _
      $region40: #{encoder_forward.13} parent=31 // pred_fallthru
        _
    $region32: #{encoder_forward.13} parent=5 // pred_fallthru
      _
    %p764 = scmp.le.s32.totalorder 2, %s11
    // Predicated region
    $region41: #{encoder_forward.13} parent=5 // pred_check
      %p765 = pneg %p764
    $region42: #{encoder_forward.13} parent=5 // pred_check_branch
      %767 = sbr.rel (%p765) target = $region44
    $region43: #{encoder_forward.13} parent=5 // pred_region
      %s768 = ssub.s32 %s11, 2
      // Predicated region
      $region45: #{encoder_forward.13} parent=43 // pred_check
        %p769 = pneg %p122
      $region46: #{encoder_forward.13} parent=43 // pred_check_branch
        %771 = sbr.rel (%p769) target = $region48
      $region47: #{encoder_forward.13} parent=43 // pred_region
        %s772 = smul.u32 2, %s23
        %p773 = scmp.lt.s32.totalorder %s22, 1
        %s774 = scalar_select %p773, %s22, 1
        %p775 = scmp.lt.s32.totalorder %s772, 1
        %s776 = scalar_select %p775, %s772, 1
        %s777 = smul.addr %s774, 2
        %s778 = sadd.s32 %s776, %s777
        %s779 = smul.addr %s778, 8
        %s780 = scalar_lea.vmem %s3, %s779
      $region48: #{encoder_forward.13} parent=43 // pred_fallthru
        _
      // Predicated region
      $region49: #{encoder_forward.13} parent=43 // pred_check
        %p781 = pneg %p150
      $region50: #{encoder_forward.13} parent=43 // pred_check_branch
        %783 = sbr.rel (%p781) target = $region52
      $region51: #{encoder_forward.13} parent=43 // pred_region
        %p784 = scmp.lt.s32.totalorder %s22, 1
        %s785 = scalar_select %p784, %s22, 1
        %p786 = scmp.lt.s32.totalorder %s23, 0
        %s787 = scalar_select %p786, %s23, 0
        %s788 = sadd.s32 %s787, %s785
        %s789 = smul.addr %s788, 2
        %s790 = scalar_lea.vmem %s4, %s789
      $region52: #{encoder_forward.13} parent=43 // pred_fallthru
        _
    $region44: #{encoder_forward.13} parent=5 // pred_fallthru
      _
  $region6: #{encoder_forward.13} parent=0 // loop_footer
    %s15 = sadd.s32 1, %s11
  $region7: #{encoder_forward.13} parent=0 // loop_footer_branch
    %10 = sbr.rel target = $region3
  $region8: #{encoder_forward.13} parent=0 // loop_exit
    _

// kernel: encoder_forward.15
$region0: #{encoder_forward.15}
  #allocation0 [shape = 'u32[]', space=smem, size = 0x4, offset = 0x4, fixed_abs, tag = 'smem constant byte address 0x4 - core index']
  #allocation1 [shape = 'u32[72,128]{1,0:T(1,128)}', space=vmem, size = 0x9000, scoped, tag = 'internal scratch']
  %s0 = inlined_call_operand.vmem [shape: bf16[2,1024], index: 0, kind: input, shape index: {}]
  %s1 = inlined_call_operand.vmem [shape: bf16[1024,64], index: 1, kind: input, shape index: {}]
  %s2 = inlined_call_operand.vmem [shape: f32[1,64], index: 2, kind: input, shape index: {}]
  %s3 = inlined_call_operand.hbm [shape: f32[2,64], index: 3, kind: output, shape index: {}]
  %s4 = sld [smem:[#allocation0]]
  $region22: #{encoder_forward.15} parent=0
    _
  %s6 = ssub.s32 1, %s4
  %s7 = scalar_select 0, %s6, %s4
  $region1: #{encoder_forward.15} parent=0
    #allocation2 [shape = 'u8[1024]{0}', space=vmem, size = 0x400, scoped, tag = 'output window, operand 0, single buffered']
    #allocation3 [shape = 's32[1]{0}', space=sflag, size = 0x4, scoped, tag = 'scoped memory for encoder_forward.15']
    %8 = vsyncpa [#allocation3], 0
    // Predicated region
    $region2: #{encoder_forward.15} parent=1 // pred_check
      _
    $region3: #{encoder_forward.15} parent=1 // pred_check_branch
      %10 = sbr.rel (0) target = $region5
    $region4: #{encoder_forward.15} parent=1 // pred_region
      _
    $region5: #{encoder_forward.15} parent=1 // pred_fallthru
      _
    // Predicated region
    $region6: #{encoder_forward.15} parent=1 // pred_check
      _
    $region7: #{encoder_forward.15} parent=1 // pred_check_branch
      %12 = sbr.rel (0) target = $region9
    $region8: #{encoder_forward.15} parent=1 // pred_region
      _
    $region9: #{encoder_forward.15} parent=1 // pred_fallthru
      _
    // Predicated region
    $region10: #{encoder_forward.15} parent=1 // pred_check
      _
    $region11: #{encoder_forward.15} parent=1 // pred_check_branch
      %14 = sbr.rel (0) target = $region13
    $region12: #{encoder_forward.15} parent=1 // pred_region
      _
    $region13: #{encoder_forward.15} parent=1 // pred_fallthru
      _
    %v15 = vld [vmem:[%s0] sm:$0xff]
    %v16 = vld [vmem:[%s1] sm:$0xf]
    %v17 = vld [vmem:[%s1 + $0x4] sm:$0xf]
    %v18 = vld [vmem:[%s1 + $0x8] sm:$0xf]
    %v19 = vld [vmem:[%s1 + $0xc] sm:$0xf]
    %v20 = vld [vmem:[%s1 + $0x10] sm:$0xf]
    %v21 = vld [vmem:[%s1 + $0x14] sm:$0xf]
    %v22 = vld [vmem:[%s1 + $0x18] sm:$0xf]
    %v23 = vld [vmem:[%s1 + $0x1c] sm:$0xf]
    %v24 = vld [vmem:[%s1 + $0x20] sm:$0xf]
    %v25 = vld [vmem:[%s1 + $0x24] sm:$0xf]
    %v26 = vld [vmem:[%s1 + $0x28] sm:$0xf]
    %v27 = vld [vmem:[%s1 + $0x2c] sm:$0xf]
    %v28 = vld [vmem:[%s1 + $0x30] sm:$0xf]
    %v29 = vld [vmem:[%s1 + $0x34] sm:$0xf]
    %v30 = vld [vmem:[%s1 + $0x38] sm:$0xf]
    %v31 = vld [vmem:[%s1 + $0x3c] sm:$0xf]
    %v32 = vld [vmem:[%s1 + $0x40] sm:$0xf]
    %v33 = vld [vmem:[%s1 + $0x44] sm:$0xf]
    %v34 = vld [vmem:[%s1 + $0x48] sm:$0xf]
    %v35 = vld [vmem:[%s1 + $0x4c] sm:$0xf]
    %v36 = vld [vmem:[%s1 + $0x50] sm:$0xf]
    %v37 = vld [vmem:[%s1 + $0x54] sm:$0xf]
    %v38 = vld [vmem:[%s1 + $0x58] sm:$0xf]
    %v39 = vld [vmem:[%s1 + $0x5c] sm:$0xf]
    %v40 = vld [vmem:[%s1 + $0x60] sm:$0xf]
    %v41 = vld [vmem:[%s1 + $0x64] sm:$0xf]
    %v42 = vld [vmem:[%s1 + $0x68] sm:$0xf]
    %v43 = vld [vmem:[%s1 + $0x6c] sm:$0xf]
    %v44 = vld [vmem:[%s1 + $0x70] sm:$0xf]
    %v45 = vld [vmem:[%s1 + $0x74] sm:$0xf]
    %v46 = vld [vmem:[%s1 + $0x78] sm:$0xf]
    %v47 = vld [vmem:[%s1 + $0x7c] sm:$0xf]
    %v48 = vld [vmem:[%s1 + $0x80] sm:$0xf]
    %v49 = vld [vmem:[%s1 + $0x84] sm:$0xf]
    %v50 = vld [vmem:[%s1 + $0x88] sm:$0xf]
    %v51 = vld [vmem:[%s1 + $0x8c] sm:$0xf]
    %v52 = vld [vmem:[%s1 + $0x90] sm:$0xf]
    %v53 = vld [vmem:[%s1 + $0x94] sm:$0xf]
    %v54 = vld [vmem:[%s1 + $0x98] sm:$0xf]
    %v55 = vld [vmem:[%s1 + $0x9c] sm:$0xf]
    %v56 = vld [vmem:[%s1 + $0xa0] sm:$0xf]
    %v57 = vld [vmem:[%s1 + $0xa4] sm:$0xf]
    %v58 = vld [vmem:[%s1 + $0xa8] sm:$0xf]
    %v59 = vld [vmem:[%s1 + $0xac] sm:$0xf]
    %v60 = vld [vmem:[%s1 + $0xb0] sm:$0xf]
    %v61 = vld [vmem:[%s1 + $0xb4] sm:$0xf]
    %v62 = vld [vmem:[%s1 + $0xb8] sm:$0xf]
    %v63 = vld [vmem:[%s1 + $0xbc] sm:$0xf]
    %v64 = vld [vmem:[%s1 + $0xc0] sm:$0xf]
    %v65 = vld [vmem:[%s1 + $0xc4] sm:$0xf]
    %v66 = vld [vmem:[%s1 + $0xc8] sm:$0xf]
    %v67 = vld [vmem:[%s1 + $0xcc] sm:$0xf]
    %v68 = vld [vmem:[%s1 + $0xd0] sm:$0xf]
    %v69 = vld [vmem:[%s1 + $0xd4] sm:$0xf]
    %v70 = vld [vmem:[%s1 + $0xd8] sm:$0xf]
    %v71 = vld [vmem:[%s1 + $0xdc] sm:$0xf]
    %v72 = vld [vmem:[%s1 + $0xe0] sm:$0xf]
    %v73 = vld [vmem:[%s1 + $0xe4] sm:$0xf]
    %v74 = vld [vmem:[%s1 + $0xe8] sm:$0xf]
    %v75 = vld [vmem:[%s1 + $0xec] sm:$0xf]
    %v76 = vld [vmem:[%s1 + $0xf0] sm:$0xf]
    %v77 = vld [vmem:[%s1 + $0xf4] sm:$0xf]
    %v78 = vld [vmem:[%s1 + $0xf8] sm:$0xf]
    %v79 = vld [vmem:[%s1 + $0xfc] sm:$0xf]
    %v80 = vld [vmem:[%s1 + $0x100] sm:$0xf]
    %v81 = vld [vmem:[%s1 + $0x104] sm:$0xf]
    %v82 = vld [vmem:[%s1 + $0x108] sm:$0xf]
    %v83 = vld [vmem:[%s1 + $0x10c] sm:$0xf]
    %v84 = vld [vmem:[%s1 + $0x110] sm:$0xf]
    %v85 = vld [vmem:[%s1 + $0x114] sm:$0xf]
    %v86 = vld [vmem:[%s1 + $0x118] sm:$0xf]
    %v87 = vld [vmem:[%s1 + $0x11c] sm:$0xf]
    %v88 = vld [vmem:[%s1 + $0x120] sm:$0xf]
    %v89 = vld [vmem:[%s1 + $0x124] sm:$0xf]
    %v90 = vld [vmem:[%s1 + $0x128] sm:$0xf]
    %v91 = vld [vmem:[%s1 + $0x12c] sm:$0xf]
    %v92 = vld [vmem:[%s1 + $0x130] sm:$0xf]
    %v93 = vld [vmem:[%s1 + $0x134] sm:$0xf]
    %v94 = vld [vmem:[%s1 + $0x138] sm:$0xf]
    %v95 = vld [vmem:[%s1 + $0x13c] sm:$0xf]
    %v96 = vld [vmem:[%s1 + $0x140] sm:$0xf]
    %v97 = vld [vmem:[%s1 + $0x144] sm:$0xf]
    %v98 = vld [vmem:[%s1 + $0x148] sm:$0xf]
    %v99 = vld [vmem:[%s1 + $0x14c] sm:$0xf]
    %v100 = vld [vmem:[%s1 + $0x150] sm:$0xf]
    %v101 = vld [vmem:[%s1 + $0x154] sm:$0xf]
    %v102 = vld [vmem:[%s1 + $0x158] sm:$0xf]
    %v103 = vld [vmem:[%s1 + $0x15c] sm:$0xf]
    %v104 = vld [vmem:[%s1 + $0x160] sm:$0xf]
    %v105 = vld [vmem:[%s1 + $0x164] sm:$0xf]
    %v106 = vld [vmem:[%s1 + $0x168] sm:$0xf]
    %v107 = vld [vmem:[%s1 + $0x16c] sm:$0xf]
    %v108 = vld [vmem:[%s1 + $0x170] sm:$0xf]
    %v109 = vld [vmem:[%s1 + $0x174] sm:$0xf]
    %v110 = vld [vmem:[%s1 + $0x178] sm:$0xf]
    %v111 = vld [vmem:[%s1 + $0x17c] sm:$0xf]
    %v112 = vld [vmem:[%s1 + $0x180] sm:$0xf]
    %v113 = vld [vmem:[%s1 + $0x184] sm:$0xf]
    %v114 = vld [vmem:[%s1 + $0x188] sm:$0xf]
    %v115 = vld [vmem:[%s1 + $0x18c] sm:$0xf]
    %v116 = vld [vmem:[%s1 + $0x190] sm:$0xf]
    %v117 = vld [vmem:[%s1 + $0x194] sm:$0xf]
    %v118 = vld [vmem:[%s1 + $0x198] sm:$0xf]
    %v119 = vld [vmem:[%s1 + $0x19c] sm:$0xf]
    %v120 = vld [vmem:[%s1 + $0x1a0] sm:$0xf]
    %v121 = vld [vmem:[%s1 + $0x1a4] sm:$0xf]
    %v122 = vld [vmem:[%s1 + $0x1a8] sm:$0xf]
    %v123 = vld [vmem:[%s1 + $0x1ac] sm:$0xf]
    %v124 = vld [vmem:[%s1 + $0x1b0] sm:$0xf]
    %v125 = vld [vmem:[%s1 + $0x1b4] sm:$0xf]
    %v126 = vld [vmem:[%s1 + $0x1b8] sm:$0xf]
    %v127 = vld [vmem:[%s1 + $0x1bc] sm:$0xf]
    %v128 = vld [vmem:[%s1 + $0x1c0] sm:$0xf]
    %v129 = vld [vmem:[%s1 + $0x1c4] sm:$0xf]
    %v130 = vld [vmem:[%s1 + $0x1c8] sm:$0xf]
    %v131 = vld [vmem:[%s1 + $0x1cc] sm:$0xf]
    %v132 = vld [vmem:[%s1 + $0x1d0] sm:$0xf]
    %v133 = vld [vmem:[%s1 + $0x1d4] sm:$0xf]
    %v134 = vld [vmem:[%s1 + $0x1d8] sm:$0xf]
    %v135 = vld [vmem:[%s1 + $0x1dc] sm:$0xf]
    %v136 = vld [vmem:[%s1 + $0x1e0] sm:$0xf]
    %v137 = vld [vmem:[%s1 + $0x1e4] sm:$0xf]
    %v138 = vld [vmem:[%s1 + $0x1e8] sm:$0xf]
    %v139 = vld [vmem:[%s1 + $0x1ec] sm:$0xf]
    %v140 = vld [vmem:[%s1 + $0x1f0] sm:$0xf]
    %v141 = vld [vmem:[%s1 + $0x1f4] sm:$0xf]
    %v142 = vld [vmem:[%s1 + $0x1f8] sm:$0xf]
    %v143 = vld [vmem:[%s1 + $0x1fc] sm:$0xf]
    %v144 = vld [vmem:[%s2] sm:$0x1]
    %v146 = vperm.slane %v144, 0
    %149 = vst [vmem:[#allocation1] ss:$9 sm:$0xff] %v15
    %v150 = vld [vmem:[#allocation1] sm:$0xff]
    %v151 = vld [vmem:[#allocation1 + $0x9] sm:$0xff]
    %v152 = vld [vmem:[#allocation1 + $0x12] sm:$0xff]
    %v153 = vld [vmem:[#allocation1 + $0x1b] sm:$0xff]
    %v154 = vld [vmem:[#allocation1 + $0x24] sm:$0xff]
    %v155 = vld [vmem:[#allocation1 + $0x2d] sm:$0xff]
    %v156 = vld [vmem:[#allocation1 + $0x36] sm:$0xff]
    %v157 = vld [vmem:[#allocation1 + $0x3f] sm:$0xff]
    %v294 = vunpack.c.l.b16 %v16
    %v295 = vunpack.c.l.b16 %v17
    %v296 = vunpack.c.l.b16 %v18
    %v297 = vunpack.c.l.b16 %v19
    %v298 = vunpack.c.l.b16 %v20
    %v299 = vunpack.c.l.b16 %v21
    %v300 = vunpack.c.l.b16 %v22
    %v301 = vunpack.c.l.b16 %v23
    %v302 = vunpack.c.l.b16 %v24
    %v303 = vunpack.c.l.b16 %v25
    %v304 = vunpack.c.l.b16 %v26
    %v305 = vunpack.c.l.b16 %v27
    %v306 = vunpack.c.l.b16 %v28
    %v307 = vunpack.c.l.b16 %v29
    %v308 = vunpack.c.l.b16 %v30
    %v309 = vunpack.c.l.b16 %v31
    %v310 = vunpack.c.l.b16 %v32
    %v311 = vunpack.c.l.b16 %v33
    %v312 = vunpack.c.l.b16 %v34
    %v313 = vunpack.c.l.b16 %v35
    %v314 = vunpack.c.l.b16 %v36
    %v315 = vunpack.c.l.b16 %v37
    %v316 = vunpack.c.l.b16 %v38
    %v317 = vunpack.c.l.b16 %v39
    %v318 = vunpack.c.l.b16 %v40
    %v319 = vunpack.c.l.b16 %v41
    %v320 = vunpack.c.l.b16 %v42
    %v321 = vunpack.c.l.b16 %v43
    %v322 = vunpack.c.l.b16 %v44
    %v323 = vunpack.c.l.b16 %v45
    %v324 = vunpack.c.l.b16 %v46
    %v325 = vunpack.c.l.b16 %v47
    %v326 = vunpack.c.l.b16 %v48
    %v327 = vunpack.c.l.b16 %v49
    %v328 = vunpack.c.l.b16 %v50
    %v329 = vunpack.c.l.b16 %v51
    %v330 = vunpack.c.l.b16 %v52
    %v331 = vunpack.c.l.b16 %v53
    %v332 = vunpack.c.l.b16 %v54
    %v333 = vunpack.c.l.b16 %v55
    %v334 = vunpack.c.l.b16 %v56
    %v335 = vunpack.c.l.b16 %v57
    %v336 = vunpack.c.l.b16 %v58
    %v337 = vunpack.c.l.b16 %v59
    %v338 = vunpack.c.l.b16 %v60
    %v339 = vunpack.c.l.b16 %v61
    %v340 = vunpack.c.l.b16 %v62
    %v341 = vunpack.c.l.b16 %v63
    %v342 = vunpack.c.l.b16 %v64
    %v343 = vunpack.c.l.b16 %v65
    %v344 = vunpack.c.l.b16 %v66
    %v345 = vunpack.c.l.b16 %v67
    %v346 = vunpack.c.l.b16 %v68
    %v347 = vunpack.c.l.b16 %v69
    %v348 = vunpack.c.l.b16 %v70
    %v349 = vunpack.c.l.b16 %v71
    %v350 = vunpack.c.l.b16 %v72
    %v351 = vunpack.c.l.b16 %v73
    %v352 = vunpack.c.l.b16 %v74
    %v353 = vunpack.c.l.b16 %v75
    %v354 = vunpack.c.l.b16 %v76
    %v355 = vunpack.c.l.b16 %v77
    %v356 = vunpack.c.l.b16 %v78
    %v357 = vunpack.c.l.b16 %v79
    %v358 = vunpack.c.l.b16 %v80
    %v359 = vunpack.c.l.b16 %v81
    %v360 = vunpack.c.l.b16 %v82
    %v361 = vunpack.c.l.b16 %v83
    %v362 = vunpack.c.l.b16 %v84
    %v363 = vunpack.c.l.b16 %v85
    %v364 = vunpack.c.l.b16 %v86
    %v365 = vunpack.c.l.b16 %v87
    %v366 = vunpack.c.l.b16 %v88
    %v367 = vunpack.c.l.b16 %v89
    %v368 = vunpack.c.l.b16 %v90
    %v369 = vunpack.c.l.b16 %v91
    %v370 = vunpack.c.l.b16 %v92
    %v371 = vunpack.c.l.b16 %v93
    %v372 = vunpack.c.l.b16 %v94
    %v373 = vunpack.c.l.b16 %v95
    %v374 = vunpack.c.l.b16 %v96
    %v375 = vunpack.c.l.b16 %v97
    %v376 = vunpack.c.l.b16 %v98
    %v377 = vunpack.c.l.b16 %v99
    %v378 = vunpack.c.l.b16 %v100
    %v379 = vunpack.c.l.b16 %v101
    %v380 = vunpack.c.l.b16 %v102
    %v381 = vunpack.c.l.b16 %v103
    %v382 = vunpack.c.l.b16 %v104
    %v383 = vunpack.c.l.b16 %v105
    %v384 = vunpack.c.l.b16 %v106
    %v385 = vunpack.c.l.b16 %v107
    %v386 = vunpack.c.l.b16 %v108
    %v387 = vunpack.c.l.b16 %v109
    %v388 = vunpack.c.l.b16 %v110
    %v389 = vunpack.c.l.b16 %v111
    %v390 = vunpack.c.l.b16 %v112
    %v391 = vunpack.c.l.b16 %v113
    %v392 = vunpack.c.l.b16 %v114
    %v393 = vunpack.c.l.b16 %v115
    %v394 = vunpack.c.l.b16 %v116
    %v395 = vunpack.c.l.b16 %v117
    %v396 = vunpack.c.l.b16 %v118
    %v397 = vunpack.c.l.b16 %v119
    %v398 = vunpack.c.l.b16 %v120
    %v399 = vunpack.c.l.b16 %v121
    %v400 = vunpack.c.l.b16 %v122
    %v401 = vunpack.c.l.b16 %v123
    %v402 = vunpack.c.l.b16 %v124
    %v403 = vunpack.c.l.b16 %v125
    %v404 = vunpack.c.l.b16 %v126
    %v405 = vunpack.c.l.b16 %v127
    %v406 = vunpack.c.l.b16 %v128
    %v407 = vunpack.c.l.b16 %v129
    %v408 = vunpack.c.l.b16 %v130
    %v409 = vunpack.c.l.b16 %v131
    %v410 = vunpack.c.l.b16 %v132
    %v411 = vunpack.c.l.b16 %v133
    %v412 = vunpack.c.l.b16 %v134
    %v413 = vunpack.c.l.b16 %v135
    %v414 = vunpack.c.l.b16 %v136
    %v415 = vunpack.c.l.b16 %v137
    %v416 = vunpack.c.l.b16 %v138
    %v417 = vunpack.c.l.b16 %v139
    %v418 = vunpack.c.l.b16 %v140
    %v419 = vunpack.c.l.b16 %v141
    %v420 = vunpack.c.l.b16 %v142
    %v421 = vunpack.c.l.b16 %v143
    %v422 = vpack.c.b16 %v295, %v294
    %v423 = vpack.c.b16 %v297, %v296
    %v424 = vpack.c.b16 %v299, %v298
    %v425 = vpack.c.b16 %v301, %v300
    %v426 = vpack.c.b16 %v303, %v302
    %v427 = vpack.c.b16 %v305, %v304
    %v428 = vpack.c.b16 %v307, %v306
    %v429 = vpack.c.b16 %v309, %v308
    %v430 = vpack.c.b16 %v311, %v310
    %v431 = vpack.c.b16 %v313, %v312
    %v432 = vpack.c.b16 %v315, %v314
    %v433 = vpack.c.b16 %v317, %v316
    %v434 = vpack.c.b16 %v319, %v318
    %v435 = vpack.c.b16 %v321, %v320
    %v436 = vpack.c.b16 %v323, %v322
    %v437 = vpack.c.b16 %v325, %v324
    %v438 = vpack.c.b16 %v327, %v326
    %v439 = vpack.c.b16 %v329, %v328
    %v440 = vpack.c.b16 %v331, %v330
    %v441 = vpack.c.b16 %v333, %v332
    %v442 = vpack.c.b16 %v335, %v334
    %v443 = vpack.c.b16 %v337, %v336
    %v444 = vpack.c.b16 %v339, %v338
    %v445 = vpack.c.b16 %v341, %v340
    %v446 = vpack.c.b16 %v343, %v342
    %v447 = vpack.c.b16 %v345, %v344
    %v448 = vpack.c.b16 %v347, %v346
    %v449 = vpack.c.b16 %v349, %v348
    %v450 = vpack.c.b16 %v351, %v350
    %v451 = vpack.c.b16 %v353, %v352
    %v452 = vpack.c.b16 %v355, %v354
    %v453 = vpack.c.b16 %v357, %v356
    %v454 = vpack.c.b16 %v359, %v358
    %v455 = vpack.c.b16 %v361, %v360
    %v456 = vpack.c.b16 %v363, %v362
    %v457 = vpack.c.b16 %v365, %v364
    %v458 = vpack.c.b16 %v367, %v366
    %v459 = vpack.c.b16 %v369, %v368
    %v460 = vpack.c.b16 %v371, %v370
    %v461 = vpack.c.b16 %v373, %v372
    %v462 = vpack.c.b16 %v375, %v374
    %v463 = vpack.c.b16 %v377, %v376
    %v464 = vpack.c.b16 %v379, %v378
    %v465 = vpack.c.b16 %v381, %v380
    %v466 = vpack.c.b16 %v383, %v382
    %v467 = vpack.c.b16 %v385, %v384
    %v468 = vpack.c.b16 %v387, %v386
    %v469 = vpack.c.b16 %v389, %v388
    %v470 = vpack.c.b16 %v391, %v390
    %v471 = vpack.c.b16 %v393, %v392
    %v472 = vpack.c.b16 %v395, %v394
    %v473 = vpack.c.b16 %v397, %v396
    %v474 = vpack.c.b16 %v399, %v398
    %v475 = vpack.c.b16 %v401, %v400
    %v476 = vpack.c.b16 %v403, %v402
    %v477 = vpack.c.b16 %v405, %v404
    %v478 = vpack.c.b16 %v407, %v406
    %v479 = vpack.c.b16 %v409, %v408
    %v480 = vpack.c.b16 %v411, %v410
    %v481 = vpack.c.b16 %v413, %v412
    %v482 = vpack.c.b16 %v415, %v414
    %v483 = vpack.c.b16 %v417, %v416
    %v484 = vpack.c.b16 %v419, %v418
    %v485 = vpack.c.b16 %v421, %v420
    %550 = vmatpush.bf16.msra.mxu0 %v429
    %551 = vmatpush.bf16.msra.mxu0 %v428
    %552 = vmatpush.bf16.msra.mxu0 %v427
    %553 = vmatpush.bf16.msra.mxu0 %v426
    %554 = vmatpush.bf16.msra.mxu0 %v425
    %555 = vmatpush.bf16.msra.mxu0 %v424
    %556 = vmatpush.bf16.msra.mxu0 %v423
    %557 = vmatpush.bf16.msra.mxu0 %v422
    %558 = vmatmul.bf16.gmra.mxu0 %v150
    %v559 = vpop.f32.mrf.mxu0
    %v560 = vadd.f32 %v146, %v559
    %v561 = vpop.f32.mrf.mxu0
    %562 = vdwg.mxu0
    %563 = vmatpush.bf16.msra.mxu0 %v437
    %564 = vmatpush.bf16.msra.mxu0 %v436
    %565 = vmatpush.bf16.msra.mxu0 %v435
    %566 = vmatpush.bf16.msra.mxu0 %v434
    %567 = vmatpush.bf16.msra.mxu0 %v433
    %568 = vmatpush.bf16.msra.mxu0 %v432
    %569 = vmatpush.bf16.msra.mxu0 %v431
    %570 = vmatpush.bf16.msra.mxu0 %v430
    %571 = vmatmul.bf16.gmra.mxu0 %v151
    %v572 = vpop.f32.mrf.mxu0
    %v573 = vadd.f32 %v560, %v572
    %v574 = vpop.f32.mrf.mxu0
    %575 = vdwg.mxu0
    %576 = vmatpush.bf16.msra.mxu0 %v445
    %577 = vmatpush.bf16.msra.mxu0 %v444
    %578 = vmatpush.bf16.msra.mxu0 %v443
    %579 = vmatpush.bf16.msra.mxu0 %v442
    %580 = vmatpush.bf16.msra.mxu0 %v441
    %581 = vmatpush.bf16.msra.mxu0 %v440
    %582 = vmatpush.bf16.msra.mxu0 %v439
    %583 = vmatpush.bf16.msra.mxu0 %v438
    %584 = vmatmul.bf16.gmra.mxu0 %v152
    %v585 = vpop.f32.mrf.mxu0
    %v586 = vadd.f32 %v573, %v585
    %v587 = vpop.f32.mrf.mxu0
    %588 = vdwg.mxu0
    %589 = vmatpush.bf16.msra.mxu0 %v453
    %590 = vmatpush.bf16.msra.mxu0 %v452
    %591 = vmatpush.bf16.msra.mxu0 %v451
    %592 = vmatpush.bf16.msra.mxu0 %v450
    %593 = vmatpush.bf16.msra.mxu0 %v449
    %594 = vmatpush.bf16.msra.mxu0 %v448
    %595 = vmatpush.bf16.msra.mxu0 %v447
    %596 = vmatpush.bf16.msra.mxu0 %v446
    %597 = vmatmul.bf16.gmra.mxu0 %v153
    %v598 = vpop.f32.mrf.mxu0
    %v599 = vadd.f32 %v586, %v598
    %v600 = vpop.f32.mrf.mxu0
    %601 = vdwg.mxu0
    %602 = vmatpush.bf16.msra.mxu0 %v461
    %603 = vmatpush.bf16.msra.mxu0 %v460
    %604 = vmatpush.bf16.msra.mxu0 %v459
    %605 = vmatpush.bf16.msra.mxu0 %v458
    %606 = vmatpush.bf16.msra.mxu0 %v457
    %607 = vmatpush.bf16.msra.mxu0 %v456
    %608 = vmatpush.bf16.msra.mxu0 %v455
    %609 = vmatpush.bf16.msra.mxu0 %v454
    %610 = vmatmul.bf16.gmra.mxu0 %v154
    %v611 = vpop.f32.mrf.mxu0
    %v612 = vadd.f32 %v599, %v611
    %v613 = vpop.f32.mrf.mxu0
    %614 = vdwg.mxu0
    %615 = vmatpush.bf16.msra.mxu0 %v469
    %616 = vmatpush.bf16.msra.mxu0 %v468
    %617 = vmatpush.bf16.msra.mxu0 %v467
    %618 = vmatpush.bf16.msra.mxu0 %v466
    %619 = vmatpush.bf16.msra.mxu0 %v465
    %620 = vmatpush.bf16.msra.mxu0 %v464
    %621 = vmatpush.bf16.msra.mxu0 %v463
    %622 = vmatpush.bf16.msra.mxu0 %v462
    %623 = vmatmul.bf16.gmra.mxu0 %v155
    %v624 = vpop.f32.mrf.mxu0
    %v625 = vadd.f32 %v612, %v624
    %v626 = vpop.f32.mrf.mxu0
    %627 = vdwg.mxu0
    %628 = vmatpush.bf16.msra.mxu0 %v477
    %629 = vmatpush.bf16.msra.mxu0 %v476
    %630 = vmatpush.bf16.msra.mxu0 %v475
    %631 = vmatpush.bf16.msra.mxu0 %v474
    %632 = vmatpush.bf16.msra.mxu0 %v473
    %633 = vmatpush.bf16.msra.mxu0 %v472
    %634 = vmatpush.bf16.msra.mxu0 %v471
    %635 = vmatpush.bf16.msra.mxu0 %v470
    %636 = vmatmul.bf16.gmra.mxu0 %v156
    %v637 = vpop.f32.mrf.mxu0
    %v638 = vadd.f32 %v625, %v637
    %v639 = vpop.f32.mrf.mxu0
    %640 = vdwg.mxu0
    %641 = vmatpush.bf16.msra.mxu0 %v485
    %642 = vmatpush.bf16.msra.mxu0 %v484
    %643 = vmatpush.bf16.msra.mxu0 %v483
    %644 = vmatpush.bf16.msra.mxu0 %v482
    %645 = vmatpush.bf16.msra.mxu0 %v481
    %646 = vmatpush.bf16.msra.mxu0 %v480
    %647 = vmatpush.bf16.msra.mxu0 %v479
    %648 = vmatpush.bf16.msra.mxu0 %v478
    %649 = vmatmul.bf16.gmra.mxu0 %v157
    %v650 = vpop.f32.mrf.mxu0
    %v651 = vadd.f32 %v638, %v650
    %v652 = vpop.f32.mrf.mxu0
    %653 = vdwg.mxu0
    %vm654 = vcmask 517120
    %655 = vst.msk [vmem:[#allocation2] sm:$0x3] %vm654, %v651
    // Predicated region
    $region14: #{encoder_forward.15} parent=1 // pred_check
      _
    $region15: #{encoder_forward.15} parent=1 // pred_check_branch
      %657 = sbr.rel (0) target = $region17
    $region16: #{encoder_forward.15} parent=1 // pred_region
      %659 = vsyncadd [#allocation3], 0
      %s661 = sshll.u32 [#allocation2], 4
      %s662 = int_to_ptr.vmem [resolvable:$true] %s661
      %s663 = sshll.u32 %s3, 4
      %s664 = int_to_ptr.hbm [resolvable:$true] %s663
      %666 = dma.vmem_to_hbm [thread:$0]  %s662, 32, %s664, [#allocation3]
    $region17: #{encoder_forward.15} parent=1 // pred_fallthru
      _
    // Predicated region
    $region18: #{encoder_forward.15} parent=1 // pred_check
      _
    $region19: #{encoder_forward.15} parent=1 // pred_check_branch
      %668 = sbr.rel (0) target = $region21
    $region20: #{encoder_forward.15} parent=1 // pred_region
      %670 = dma.done [#allocation3], 32
    $region21: #{encoder_forward.15} parent=1 // pred_fallthru
      _
    %671 = vsyncpa [#allocation3], 1

</llo_original>
